<compile_context>
chip_gen: v7x
topology: tpu7x:2x2x1
jax: 0.10.0
libtpu: 0.0.40
codegen_flags: <defaults>
</compile_context>

<pallas_src>
import functools

import jax
import jax.numpy as jnp
from jax.experimental import pallas as pl
from jax.experimental.pallas import tpu as pltpu

LN_EPS = 1e-5  # PyTorch nn.LayerNorm default


def _layernorm(v, g, b):
    """f32 LayerNorm over the last axis; g/b are (1, C) and broadcast."""
    mu = jnp.mean(v, axis=-1, keepdims=True)
    d = v - mu
    var = jnp.mean(d * d, axis=-1, keepdims=True)
    return d * jax.lax.rsqrt(var + LN_EPS) * g + b


# ---------------------------------------------------------------------------
# Fused per-layer kernel: LN1 + QKV (once per batch element, into scratch),
# attention + projection + LN2 + MLP per query tile.
# ---------------------------------------------------------------------------
def layer_kernel(x_ref, g1_ref, be1_ref, wq_ref, wk_ref, wv_ref,
                 wp_ref, bp_ref, g2_ref, be2_ref,
                 w1_ref, b1_ref, w2_ref, b2_ref,
                 o_ref,
                 q_scr, k_scr, v_scr, ctx_scr,
                 *, num_heads, scale):
    i = pl.program_id(1)
    N = x_ref.shape[1]
    C = x_ref.shape[2]
    tq = o_ref.shape[1]
    hd = C // num_heads

    # ---- once per batch element: LN1 + head-major Q/K/V into VMEM scratch --
    @pl.when(i == 0)
    def _():
        xn = _layernorm(x_ref[0], g1_ref[...], be1_ref[...]).astype(jnp.bfloat16)
        for h in range(num_heads):
            q = jnp.dot(xn, wq_ref[h], preferred_element_type=jnp.float32)
            q_scr[h] = (q * scale).astype(jnp.bfloat16)          # scale folded into Q
            k_scr[h] = jnp.dot(xn, wk_ref[h],
                               preferred_element_type=jnp.float32).astype(jnp.bfloat16)
            v_scr[h] = jnp.dot(xn, wv_ref[h],
                               preferred_element_type=jnp.float32).astype(jnp.bfloat16)

    # ---- per query tile -----------------------------------------------------
    row0 = pl.multiple_of(i * tq, tq)
    x = x_ref[0, pl.ds(row0, tq), :]                              # (tq, C) f32

    # Per-head attention; each head's context goes to its lane slice of ctx_scr.
    for h in range(num_heads):
        qh = q_scr[h, pl.ds(row0, tq), :]                         # (tq, hd) bf16 view
        kh = k_scr[h]                                             # (N,  hd) bf16 view
        vh = v_scr[h]                                             # (N,  hd) bf16 view

        s = jax.lax.dot_general(qh, kh, (((1,), (1,)), ((), ())),
                                preferred_element_type=jnp.float32)  # (tq, N)

        # hand-rolled softmax (f32); reciprocal goes to the EUP slot
        m = jnp.max(s, axis=-1, keepdims=True)
        p = jnp.exp(s - m)
        denom = jnp.sum(p, axis=-1, keepdims=True)
        p = p * pl.reciprocal(denom, approx=True)

        oh = jnp.dot(p.astype(jnp.bfloat16), vh,
                     preferred_element_type=jnp.float32)          # (tq, hd)
        ctx_scr[:, h * hd:(h + 1) * hd] = oh.astype(jnp.bfloat16)

    # single full-contraction projection matmul + attention residual
    proj = jnp.dot(ctx_scr[...], wp_ref[...], preferred_element_type=jnp.float32)
    x = x + proj + bp_ref[...]

    # ---- MLP branch (relu); dropout p=0 -> identity --------------------------
    xn2 = _layernorm(x, g2_ref[...], be2_ref[...]).astype(jnp.bfloat16)
    hidden = jnp.dot(xn2, w1_ref[...], preferred_element_type=jnp.float32) + b1_ref[...]
    hidden = jnp.maximum(hidden, 0.0).astype(jnp.bfloat16)
    mlp = jnp.dot(hidden, w2_ref[...], preferred_element_type=jnp.float32) + b2_ref[...]

    o_ref[0] = (x + mlp).astype(o_ref.dtype)


# ---------------------------------------------------------------------------
# VMEM budgeting (generation-aware)
# ---------------------------------------------------------------------------
def _vmem_cap_bytes():
    try:
        cap = int(pltpu.get_tpu_info().vmem_capacity_bytes) * 3 // 4  # ~25% headroom
    except Exception:
        cap = 64 << 20  # unknown chip: conservative default
    return max(cap, 32 << 20)


def _vmem_estimate(N, C, Hm, tq, buffered_weights):
    wbuf = 1 if buffered_weights else 2
    weights = wbuf * (4 * C * C + 2 * C * Hm) * 2            # bf16 wq,wk,wv,wp,w1,w2
    small = wbuf * (6 * C + Hm) * 4                          # LN params + biases (f32)
    x_in = 2 * N * C * 4                                     # full-x block, double buffered
    out = 2 * tq * C * 4                                     # output tile, double buffered
    scratch = (3 * N * C + tq * C) * 2                       # q/k/v head-major + ctx (bf16)
    temps = N * C * 4 + 3 * tq * N * 4 + tq * Hm * 4 + 4 * tq * C * 4   # f32 temporaries
    return weights + small + x_in + out + scratch + temps


# ---------------------------------------------------------------------------
# Wrapper: one TransformerLayer via a single pallas_call
# ---------------------------------------------------------------------------
def run_transformer_layer(x, p, num_heads, tq=None, buffered_weights=True):
    B, N, C = x.shape
    nh = num_heads
    hd = C // nh
    Hm = p["w1"].shape[1]
    scale = hd ** (-0.5)
    cap = _vmem_cap_bytes()

    if tq is None:
        # Prefer the largest tile that divides N and whose (estimated) VMEM
        # footprint fits the generation-aware cap.
        divisors = [c for c in (512, 256, 128, 64, 32, 16, 8) if N % c == 0]
        if divisors:
            fitting = [c for c in divisors
                       if _vmem_estimate(N, C, Hm, c, buffered_weights) <= cap]
            tq = fitting[0] if fitting else divisors[-1]
        else:
            tq = N
    assert N % tq == 0 and (tq == N or tq % 8 == 0), "bad query tile size"
    nq = N // tq

    est = _vmem_estimate(N, C, Hm, tq, buffered_weights)
    vmem_limit = int(min(cap, max(2 * est, 32 << 20)))

    def const_spec(shape):
        # Grid-invariant operand: constant block index; single-buffer to save VMEM.
        rank = len(shape)

        def imap(b, i):
            return (0,) * rank

        if buffered_weights:
            return pl.BlockSpec(shape, imap, pipeline_mode=pl.Buffered(1))
        return pl.BlockSpec(shape, imap)

    out = pl.pallas_call(
        functools.partial(layer_kernel, num_heads=nh, scale=scale),
        out_shape=jax.ShapeDtypeStruct((B, N, C), x.dtype),
        grid=(B, nq),
        in_specs=[
            pl.BlockSpec((1, N, C), lambda b, i: (b, 0, 0)),   # x (full seq per batch)
            const_spec((1, C)),                                # ln1 gamma
            const_spec((1, C)),                                # ln1 beta
            const_spec((nh, C, hd)),                           # Wq head-major (bf16)
            const_spec((nh, C, hd)),                           # Wk head-major (bf16)
            const_spec((nh, C, hd)),                           # Wv head-major (bf16)
            const_spec((C, C)),                                # Wp (bf16)
            const_spec((1, C)),                                # bp
            const_spec((1, C)),                                # ln2 gamma
            const_spec((1, C)),                                # ln2 beta
            const_spec((C, Hm)),                               # W1 (bf16)
            const_spec((1, Hm)),                               # b1
            const_spec((Hm, C)),                               # W2 (bf16)
            const_spec((1, C)),                                # b2
        ],
        out_specs=pl.BlockSpec((1, tq, C), lambda b, i: (b, i, 0)),
        scratch_shapes=[
            pltpu.VMEM((nh, N, hd), jnp.bfloat16),             # Q (head-major, pre-scaled)
            pltpu.VMEM((nh, N, hd), jnp.bfloat16),             # K (head-major)
            pltpu.VMEM((nh, N, hd), jnp.bfloat16),             # V (head-major)
            pltpu.VMEM((tq, C), jnp.bfloat16),                 # per-tile attention context
        ],
        compiler_params=pltpu.CompilerParams(
            dimension_semantics=("parallel", "arbitrary"),
            vmem_limit_bytes=vmem_limit,
        ),
    )(x, p["g1"], p["be1"], p["wq"], p["wk"], p["wv"],
      p["wp"], p["bp"], p["g2"], p["be2"],
      p["w1"], p["b1"], p["w2"], p["b2"])
    return out


def transformer_forward(x, layer_params, num_heads, tq=None, buffered_weights=True):
    # enc_dec=False, y=None, mask=None -> every layer is plain self-attention.
    for p in layer_params:
        x = run_transformer_layer(x, p, num_heads, tq=tq,
                                  buffered_weights=buffered_weights)
    return x


# ---------------------------------------------------------------------------
# Parameter init (deterministic). MXU weights stored in bf16 (Q/K/V head-major
# as (num_heads, d_in, hd)); biases / LN params in f32.
# ---------------------------------------------------------------------------
def init_layer_params(key, dim_self, dim_ref, num_heads, mlp_ratio):
    hm = int(dim_self * mlp_ratio)
    hd = dim_self // num_heads
    ks = jax.random.split(key, 13)
    s = 0.02
    bf16 = jnp.bfloat16

    def head_major(w):  # (d_in, C) -> (num_heads, d_in, hd); head h == cols [h*hd:(h+1)*hd]
        d_in = w.shape[0]
        return jnp.transpose(w.reshape(d_in, num_heads, hd), (1, 0, 2))

    wq = s * jax.random.normal(ks[0], (dim_self, dim_self), jnp.float32)
    wk = s * jax.random.normal(ks[1], (dim_ref, dim_self), jnp.float32)
    wv = s * jax.random.normal(ks[2], (dim_ref, dim_self), jnp.float32)
    return {
        "g1": 1.0 + 0.01 * jax.random.normal(ks[6], (1, dim_self), jnp.float32),
        "be1": 0.01 * jax.random.normal(ks[7], (1, dim_self), jnp.float32),
        "wq": head_major(wq).astype(bf16),
        "wk": head_major(wk).astype(bf16),
        "wv": head_major(wv).astype(bf16),
        "wp": (s * jax.random.normal(ks[3], (dim_self, dim_self), jnp.float32)).astype(bf16),
        "bp": 0.01 * jax.random.normal(ks[8], (1, dim_self), jnp.float32),
        "g2": 1.0 + 0.01 * jax.random.normal(ks[9], (1, dim_self), jnp.float32),
        "be2": 0.01 * jax.random.normal(ks[10], (1, dim_self), jnp.float32),
        "w1": (s * jax.random.normal(ks[4], (dim_self, hm), jnp.float32)).astype(bf16),
        "b1": 0.01 * jax.random.normal(ks[11], (1, hm), jnp.float32),
        "w2": (s * jax.random.normal(ks[5], (hm, dim_self), jnp.float32)).astype(bf16),
        "b2": 0.01 * jax.random.normal(ks[12], (1, dim_self), jnp.float32),
    }


# ---------------------------------------------------------------------------
# Pure-JAX f32 reference (same bf16 weight values, math in f32)
# ---------------------------------------------------------------------------
def layer_ref(x, p, num_heads):
    f32 = jnp.float32

    def full(w):  # (nh, d_in, hd) -> (d_in, nh*hd)
        nh, d_in, hd = w.shape
        return jnp.transpose(w.astype(f32), (1, 0, 2)).reshape(d_in, nh * hd)

    def ln(v, g, b):
        mu = v.mean(-1, keepdims=True)
        var = ((v - mu) ** 2).mean(-1, keepdims=True)
        return (v - mu) / jnp.sqrt(var + LN_EPS) * g + b

    B, N, C = x.shape
    hd = C // num_heads
    scale = hd ** (-0.5)
    xn = ln(x, p["g1"], p["be1"])
    q = (xn @ full(p["wq"])).reshape(B, N, num_heads, hd)
    k = (xn @ full(p["wk"])).reshape(B, N, num_heads, hd)
    v = (xn @ full(p["wv"])).reshape(B, N, num_heads, hd)
    att = jnp.einsum("bnhd,bmhd->bnmh", q, k) * scale
    att = jax.nn.softmax(att, axis=2)
    out = jnp.einsum("bnmh,bmhd->bnhd", att, v).reshape(B, N, C)
    out = out @ p["wp"].astype(f32) + p["bp"]
    x = x + out
    xn2 = ln(x, p["g2"], p["be2"])
    h = jnp.maximum(xn2 @ p["w1"].astype(f32) + p["b1"], 0.0)
    return x + (h @ p["w2"].astype(f32) + p["b2"])


if __name__ == "__main__":
    # Small but lane-friendly config (C multiple of 128, hd = 128 -> lane-dense
    # head views; N multiple of 8).
    B, N = 2, 64
    dim_self, num_heads, num_layers, mlp_ratio = 256, 2, 2, 2.0
    assert dim_self % num_heads == 0

    key = jax.random.PRNGKey(0)
    xkey, *pkeys = jax.random.split(key, num_layers + 1)
    x = jax.random.normal(xkey, (B, N, dim_self), jnp.float32)

    layer_params = [
        init_layer_params(pkeys[i], dim_self, dim_self, num_heads, mlp_ratio)
        for i in range(num_layers)
    ]

    def forward(tq):
        try:
            return transformer_forward(x, layer_params, num_heads, tq=tq)
        except Exception:
            # Fallback: this jax version may reject pipeline_mode=pl.Buffered(1)
            # on grid-invariant operands; rerun with default double buffering
            # (identical numerics, slightly higher VMEM use).
            return transformer_forward(x, layer_params, num_heads, tq=tq,
                                       buffered_weights=False)

    # pure-JAX f32 reference
    ref = x
    for p in layer_params:
        ref = layer_ref(ref, p, num_heads)

    # Path 1: heuristic tile (tq == N here) -> one query tile per batch element.
    out_full = jax.block_until_ready(forward(None))
    # Path 2: tq=32 -> exercises the multi-tile "arbitrary" axis and the
    # per-batch K/V scratch carry (@pl.when(i == 0)).
    out_tiled = jax.block_until_ready(forward(32))

    for out in (out_full, out_tiled):
        assert out.shape == (B, N, dim_self)
        max_err = float(jnp.max(jnp.abs(out - ref)))
        # bf16 MXU operands + approx reciprocal softmax -> relaxed tolerance
        assert jnp.allclose(out, ref, atol=2e-2, rtol=2e-2), (
            f"mismatch vs reference (max abs err {max_err})"
        )

    print("KERNEL_OK")
</pallas_src>

<mosaic_0001>
module attributes {stable_mosaic.version = 11 : i64} {
  func.func @layer_kernel(%arg0: i32, %arg1: i32, %arg2: memref<1x64x256xf32, #tpu.memory_space<vmem>>, %arg3: memref<1x256xf32, #tpu.memory_space<vmem>>, %arg4: memref<1x256xf32, #tpu.memory_space<vmem>>, %arg5: memref<2x256x128xbf16, #tpu.memory_space<vmem>>, %arg6: memref<2x256x128xbf16, #tpu.memory_space<vmem>>, %arg7: memref<2x256x128xbf16, #tpu.memory_space<vmem>>, %arg8: memref<256x256xbf16, #tpu.memory_space<vmem>>, %arg9: memref<1x256xf32, #tpu.memory_space<vmem>>, %arg10: memref<1x256xf32, #tpu.memory_space<vmem>>, %arg11: memref<1x256xf32, #tpu.memory_space<vmem>>, %arg12: memref<256x512xbf16, #tpu.memory_space<vmem>>, %arg13: memref<1x512xf32, #tpu.memory_space<vmem>>, %arg14: memref<512x256xbf16, #tpu.memory_space<vmem>>, %arg15: memref<1x256xf32, #tpu.memory_space<vmem>>, %arg16: memref<1x64x256xf32, #tpu.memory_space<vmem>>, %arg17: memref<2x64x128xbf16, #tpu.memory_space<vmem>>, %arg18: memref<2x64x128xbf16, #tpu.memory_space<vmem>>, %arg19: memref<2x64x128xbf16, #tpu.memory_space<vmem>>, %arg20: memref<64x256xbf16, #tpu.memory_space<vmem>>) attributes {dimension_semantics = [#tpu.dimension_semantics<parallel>, #tpu.dimension_semantics<arbitrary>], iteration_bounds = array<i64: 2, 1>, scalar_prefetch = 0 : i64, scratch_operands = 4 : i64, tpu.core_type = #tpu.core_type<tc>, window_params = [{transform_indices = @transform_0, window_bounds = array<i64: 1, 64, 256>}, {pipeline_mode = #tpu.pipeline_mode<synchronous>, transform_indices = @transform_1, window_bounds = array<i64: 1, 256>}, {pipeline_mode = #tpu.pipeline_mode<synchronous>, transform_indices = @transform_2, window_bounds = array<i64: 1, 256>}, {pipeline_mode = #tpu.pipeline_mode<synchronous>, transform_indices = @transform_3, window_bounds = array<i64: 2, 256, 128>}, {pipeline_mode = #tpu.pipeline_mode<synchronous>, transform_indices = @transform_4, window_bounds = array<i64: 2, 256, 128>}, {pipeline_mode = #tpu.pipeline_mode<synchronous>, transform_indices = @transform_5, window_bounds = array<i64: 2, 256, 128>}, {pipeline_mode = #tpu.pipeline_mode<synchronous>, transform_indices = @transform_6, window_bounds = array<i64: 256, 256>}, {pipeline_mode = #tpu.pipeline_mode<synchronous>, transform_indices = @transform_7, window_bounds = array<i64: 1, 256>}, {pipeline_mode = #tpu.pipeline_mode<synchronous>, transform_indices = @transform_8, window_bounds = array<i64: 1, 256>}, {pipeline_mode = #tpu.pipeline_mode<synchronous>, transform_indices = @transform_9, window_bounds = array<i64: 1, 256>}, {pipeline_mode = #tpu.pipeline_mode<synchronous>, transform_indices = @transform_10, window_bounds = array<i64: 256, 512>}, {pipeline_mode = #tpu.pipeline_mode<synchronous>, transform_indices = @transform_11, window_bounds = array<i64: 1, 512>}, {pipeline_mode = #tpu.pipeline_mode<synchronous>, transform_indices = @transform_12, window_bounds = array<i64: 512, 256>}, {pipeline_mode = #tpu.pipeline_mode<synchronous>, transform_indices = @transform_13, window_bounds = array<i64: 1, 256>}, {transform_indices = @transform_14, window_bounds = array<i64: 1, 64, 256>}]} {
    %c0_i32 = arith.constant 0 : i32
    %0 = arith.cmpi eq, %arg1, %c0_i32 : i32
    %1 = arith.extui %0 : i1 to i32
    %c0_i32_0 = arith.constant 0 : i32
    %2 = arith.cmpi ne, %1, %c0_i32_0 : i32
    scf.if %2 {
      %c0_57 = arith.constant 0 : index
      %c0_58 = arith.constant 0 : index
      %c0_59 = arith.constant 0 : index
      %99 = vector.load %arg2[%c0_57, %c0_58, %c0_59] : memref<1x64x256xf32, #tpu.memory_space<vmem>>, vector<1x64x256xf32>
      %100 = vector.shape_cast %99 : vector<1x64x256xf32> to vector<64x256xf32>
      %c0_60 = arith.constant 0 : index
      %c0_61 = arith.constant 0 : index
      %101 = vector.load %arg3[%c0_60, %c0_61] : memref<1x256xf32, #tpu.memory_space<vmem>>, vector<1x256xf32>
      %c0_62 = arith.constant 0 : index
      %c0_63 = arith.constant 0 : index
      %102 = vector.load %arg4[%c0_62, %c0_63] : memref<1x256xf32, #tpu.memory_space<vmem>>, vector<1x256xf32>
      %cst_64 = arith.constant dense<0.000000e+00> : vector<64xf32>
      %103 = vector.multi_reduction <add>, %100, %cst_64 [1] : vector<64x256xf32> to vector<64xf32>
      %104 = vector.shape_cast %103 : vector<64xf32> to vector<64x1xf32>
      %cst_65 = arith.constant 2.560000e+02 : f32
      %105 = vector.broadcast %cst_65 : f32 to vector<64x1xf32>
      %106 = arith.divf %104, %105 : vector<64x1xf32>
      %107 = vector.broadcast %106 : vector<64x1xf32> to vector<64x256xf32>
      %108 = arith.subf %100, %107 : vector<64x256xf32>
      %109 = arith.mulf %108, %108 : vector<64x256xf32>
      %cst_66 = arith.constant dense<0.000000e+00> : vector<64xf32>
      %110 = vector.multi_reduction <add>, %109, %cst_66 [1] : vector<64x256xf32> to vector<64xf32>
      %111 = vector.shape_cast %110 : vector<64xf32> to vector<64x1xf32>
      %cst_67 = arith.constant 2.560000e+02 : f32
      %112 = vector.broadcast %cst_67 : f32 to vector<64x1xf32>
      %113 = arith.divf %111, %112 : vector<64x1xf32>
      %cst_68 = arith.constant 9.99999974E-6 : f32
      %114 = vector.broadcast %cst_68 : f32 to vector<64x1xf32>
      %115 = arith.addf %113, %114 : vector<64x1xf32>
      %116 = math.rsqrt %115 : vector<64x1xf32>
      %117 = vector.broadcast %116 : vector<64x1xf32> to vector<64x256xf32>
      %118 = arith.mulf %108, %117 : vector<64x256xf32>
      %119 = vector.broadcast %101 : vector<1x256xf32> to vector<64x256xf32>
      %120 = arith.mulf %118, %119 : vector<64x256xf32>
      %121 = vector.broadcast %102 : vector<1x256xf32> to vector<64x256xf32>
      %122 = arith.addf %120, %121 : vector<64x256xf32>
      %123 = arith.truncf %122 : vector<64x256xf32> to vector<64x256xbf16>
      %c0_69 = arith.constant 0 : index
      %c0_70 = arith.constant 0 : index
      %c0_71 = arith.constant 0 : index
      %124 = vector.load %arg5[%c0_69, %c0_70, %c0_71] : memref<2x256x128xbf16, #tpu.memory_space<vmem>>, vector<1x256x128xbf16>
      %125 = vector.shape_cast %124 : vector<1x256x128xbf16> to vector<256x128xbf16>
      %cst_72 = arith.constant dense<0.000000e+00> : vector<64x128xf32>
      %126 = tpu.matmul %123, %125, %cst_72 {dimension_numbers = #tpu.dot_dimension_numbers<[1], [0], [0], [1], [0, 0, 1, 1], [], []>} : vector<64x256xbf16>, vector<256x128xbf16>, vector<64x128xf32> -> vector<64x128xf32>
      %cst_73 = arith.constant 0.0883883461 : f32
      %127 = vector.broadcast %cst_73 : f32 to vector<64x128xf32>
      %128 = arith.mulf %126, %127 : vector<64x128xf32>
      %129 = arith.truncf %128 : vector<64x128xf32> to vector<64x128xbf16>
      %c0_74 = arith.constant 0 : index
      %c0_75 = arith.constant 0 : index
      %c0_76 = arith.constant 0 : index
      %130 = vector.load %arg17[%c0_74, %c0_75, %c0_76] : memref<2x64x128xbf16, #tpu.memory_space<vmem>>, vector<1x64x128xbf16>
      %131 = vector.shape_cast %130 : vector<1x64x128xbf16> to vector<64x128xbf16>
      %132 = vector.shape_cast %129 : vector<64x128xbf16> to vector<1x64x128xbf16>
      tpu.vector_store %arg17[%c0_74, %c0_75, %c0_76], %132 {strides = array<i32>} : memref<2x64x128xbf16, #tpu.memory_space<vmem>>, vector<1x64x128xbf16>,
      %c0_77 = arith.constant 0 : index
      %c0_78 = arith.constant 0 : index
      %c0_79 = arith.constant 0 : index
      %133 = vector.load %arg6[%c0_77, %c0_78, %c0_79] : memref<2x256x128xbf16, #tpu.memory_space<vmem>>, vector<1x256x128xbf16>
      %134 = vector.shape_cast %133 : vector<1x256x128xbf16> to vector<256x128xbf16>
      %cst_80 = arith.constant dense<0.000000e+00> : vector<64x128xf32>
      %135 = tpu.matmul %123, %134, %cst_80 {dimension_numbers = #tpu.dot_dimension_numbers<[1], [0], [0], [1], [0, 0, 1, 1], [], []>} : vector<64x256xbf16>, vector<256x128xbf16>, vector<64x128xf32> -> vector<64x128xf32>
      %136 = arith.truncf %135 : vector<64x128xf32> to vector<64x128xbf16>
      %c0_81 = arith.constant 0 : index
      %c0_82 = arith.constant 0 : index
      %c0_83 = arith.constant 0 : index
      %137 = vector.load %arg18[%c0_81, %c0_82, %c0_83] : memref<2x64x128xbf16, #tpu.memory_space<vmem>>, vector<1x64x128xbf16>
      %138 = vector.shape_cast %137 : vector<1x64x128xbf16> to vector<64x128xbf16>
      %139 = vector.shape_cast %136 : vector<64x128xbf16> to vector<1x64x128xbf16>
      tpu.vector_store %arg18[%c0_81, %c0_82, %c0_83], %139 {strides = array<i32>} : memref<2x64x128xbf16, #tpu.memory_space<vmem>>, vector<1x64x128xbf16>,
      %c0_84 = arith.constant 0 : index
      %c0_85 = arith.constant 0 : index
      %c0_86 = arith.constant 0 : index
      %140 = vector.load %arg7[%c0_84, %c0_85, %c0_86] : memref<2x256x128xbf16, #tpu.memory_space<vmem>>, vector<1x256x128xbf16>
      %141 = vector.shape_cast %140 : vector<1x256x128xbf16> to vector<256x128xbf16>
      %cst_87 = arith.constant dense<0.000000e+00> : vector<64x128xf32>
      %142 = tpu.matmul %123, %141, %cst_87 {dimension_numbers = #tpu.dot_dimension_numbers<[1], [0], [0], [1], [0, 0, 1, 1], [], []>} : vector<64x256xbf16>, vector<256x128xbf16>, vector<64x128xf32> -> vector<64x128xf32>
      %143 = arith.truncf %142 : vector<64x128xf32> to vector<64x128xbf16>
      %c0_88 = arith.constant 0 : index
      %c0_89 = arith.constant 0 : index
      %c0_90 = arith.constant 0 : index
      %144 = vector.load %arg19[%c0_88, %c0_89, %c0_90] : memref<2x64x128xbf16, #tpu.memory_space<vmem>>, vector<1x64x128xbf16>
      %145 = vector.shape_cast %144 : vector<1x64x128xbf16> to vector<64x128xbf16>
      %146 = vector.shape_cast %143 : vector<64x128xbf16> to vector<1x64x128xbf16>
      tpu.vector_store %arg19[%c0_88, %c0_89, %c0_90], %146 {strides = array<i32>} : memref<2x64x128xbf16, #tpu.memory_space<vmem>>, vector<1x64x128xbf16>,
      %c1_91 = arith.constant 1 : index
      %c0_92 = arith.constant 0 : index
      %c0_93 = arith.constant 0 : index
      %147 = vector.load %arg5[%c1_91, %c0_92, %c0_93] : memref<2x256x128xbf16, #tpu.memory_space<vmem>>, vector<1x256x128xbf16>
      %148 = vector.shape_cast %147 : vector<1x256x128xbf16> to vector<256x128xbf16>
      %cst_94 = arith.constant dense<0.000000e+00> : vector<64x128xf32>
      %149 = tpu.matmul %123, %148, %cst_94 {dimension_numbers = #tpu.dot_dimension_numbers<[1], [0], [0], [1], [0, 0, 1, 1], [], []>} : vector<64x256xbf16>, vector<256x128xbf16>, vector<64x128xf32> -> vector<64x128xf32>
      %cst_95 = arith.constant 0.0883883461 : f32
      %150 = vector.broadcast %cst_95 : f32 to vector<64x128xf32>
      %151 = arith.mulf %149, %150 : vector<64x128xf32>
      %152 = arith.truncf %151 : vector<64x128xf32> to vector<64x128xbf16>
      %c1_96 = arith.constant 1 : index
      %c0_97 = arith.constant 0 : index
      %c0_98 = arith.constant 0 : index
      %153 = vector.load %arg17[%c1_96, %c0_97, %c0_98] : memref<2x64x128xbf16, #tpu.memory_space<vmem>>, vector<1x64x128xbf16>
      %154 = vector.shape_cast %153 : vector<1x64x128xbf16> to vector<64x128xbf16>
      %155 = vector.shape_cast %152 : vector<64x128xbf16> to vector<1x64x128xbf16>
      tpu.vector_store %arg17[%c1_96, %c0_97, %c0_98], %155 {strides = array<i32>} : memref<2x64x128xbf16, #tpu.memory_space<vmem>>, vector<1x64x128xbf16>,
      %c1_99 = arith.constant 1 : index
      %c0_100 = arith.constant 0 : index
      %c0_101 = arith.constant 0 : index
      %156 = vector.load %arg6[%c1_99, %c0_100, %c0_101] : memref<2x256x128xbf16, #tpu.memory_space<vmem>>, vector<1x256x128xbf16>
      %157 = vector.shape_cast %156 : vector<1x256x128xbf16> to vector<256x128xbf16>
      %cst_102 = arith.constant dense<0.000000e+00> : vector<64x128xf32>
      %158 = tpu.matmul %123, %157, %cst_102 {dimension_numbers = #tpu.dot_dimension_numbers<[1], [0], [0], [1], [0, 0, 1, 1], [], []>} : vector<64x256xbf16>, vector<256x128xbf16>, vector<64x128xf32> -> vector<64x128xf32>
      %159 = arith.truncf %158 : vector<64x128xf32> to vector<64x128xbf16>
      %c1_103 = arith.constant 1 : index
      %c0_104 = arith.constant 0 : index
      %c0_105 = arith.constant 0 : index
      %160 = vector.load %arg18[%c1_103, %c0_104, %c0_105] : memref<2x64x128xbf16, #tpu.memory_space<vmem>>, vector<1x64x128xbf16>
      %161 = vector.shape_cast %160 : vector<1x64x128xbf16> to vector<64x128xbf16>
      %162 = vector.shape_cast %159 : vector<64x128xbf16> to vector<1x64x128xbf16>
      tpu.vector_store %arg18[%c1_103, %c0_104, %c0_105], %162 {strides = array<i32>} : memref<2x64x128xbf16, #tpu.memory_space<vmem>>, vector<1x64x128xbf16>,
      %c1_106 = arith.constant 1 : index
      %c0_107 = arith.constant 0 : index
      %c0_108 = arith.constant 0 : index
      %163 = vector.load %arg7[%c1_106, %c0_107, %c0_108] : memref<2x256x128xbf16, #tpu.memory_space<vmem>>, vector<1x256x128xbf16>
      %164 = vector.shape_cast %163 : vector<1x256x128xbf16> to vector<256x128xbf16>
      %cst_109 = arith.constant dense<0.000000e+00> : vector<64x128xf32>
      %165 = tpu.matmul %123, %164, %cst_109 {dimension_numbers = #tpu.dot_dimension_numbers<[1], [0], [0], [1], [0, 0, 1, 1], [], []>} : vector<64x256xbf16>, vector<256x128xbf16>, vector<64x128xf32> -> vector<64x128xf32>
      %166 = arith.truncf %165 : vector<64x128xf32> to vector<64x128xbf16>
      %c1_110 = arith.constant 1 : index
      %c0_111 = arith.constant 0 : index
      %c0_112 = arith.constant 0 : index
      %167 = vector.load %arg19[%c1_110, %c0_111, %c0_112] : memref<2x64x128xbf16, #tpu.memory_space<vmem>>, vector<1x64x128xbf16>
      %168 = vector.shape_cast %167 : vector<1x64x128xbf16> to vector<64x128xbf16>
      %169 = vector.shape_cast %166 : vector<64x128xbf16> to vector<1x64x128xbf16>
      tpu.vector_store %arg19[%c1_110, %c0_111, %c0_112], %169 {strides = array<i32>} : memref<2x64x128xbf16, #tpu.memory_space<vmem>>, vector<1x64x128xbf16>,
    } else {
    }
    %c64_i32 = arith.constant 64 : i32
    %3 = arith.muli %arg1, %c64_i32 : i32
    %4 = tpu.assume_multiple %3, 64 : i32
    %c0 = arith.constant 0 : index
    %5 = arith.index_cast %4 : i32 to index
    %c0_1 = arith.constant 0 : index
    %6 = vector.load %arg2[%c0, %5, %c0_1] : memref<1x64x256xf32, #tpu.memory_space<vmem>>, vector<1x64x256xf32>
    %7 = vector.shape_cast %6 : vector<1x64x256xf32> to vector<64x256xf32>
    %c0_2 = arith.constant 0 : index
    %8 = arith.index_cast %4 : i32 to index
    %c0_3 = arith.constant 0 : index
    %9 = vector.load %arg17[%c0_2, %8, %c0_3] : memref<2x64x128xbf16, #tpu.memory_space<vmem>>, vector<1x64x128xbf16>
    %10 = vector.shape_cast %9 : vector<1x64x128xbf16> to vector<64x128xbf16>
    %c0_4 = arith.constant 0 : index
    %c0_5 = arith.constant 0 : index
    %c0_6 = arith.constant 0 : index
    %11 = vector.load %arg18[%c0_4, %c0_5, %c0_6] : memref<2x64x128xbf16, #tpu.memory_space<vmem>>, vector<1x64x128xbf16>
    %12 = vector.shape_cast %11 : vector<1x64x128xbf16> to vector<64x128xbf16>
    %c0_7 = arith.constant 0 : index
    %c0_8 = arith.constant 0 : index
    %c0_9 = arith.constant 0 : index
    %13 = vector.load %arg19[%c0_7, %c0_8, %c0_9] : memref<2x64x128xbf16, #tpu.memory_space<vmem>>, vector<1x64x128xbf16>
    %14 = vector.shape_cast %13 : vector<1x64x128xbf16> to vector<64x128xbf16>
    %cst = arith.constant dense<0.000000e+00> : vector<64x64xf32>
    %15 = tpu.matmul %10, %12, %cst {dimension_numbers = #tpu.dot_dimension_numbers<[1], [1], [0], [0], [0, 0, 1, 0], [], []>} : vector<64x128xbf16>, vector<64x128xbf16>, vector<64x64xf32> -> vector<64x64xf32>
    %cst_10 = arith.constant dense<0xFF800000> : vector<64xf32>
    %16 = vector.multi_reduction <maximumf>, %15, %cst_10 [1] : vector<64x64xf32> to vector<64xf32>
    %17 = vector.shape_cast %16 : vector<64xf32> to vector<64x1xf32>
    %18 = vector.broadcast %17 : vector<64x1xf32> to vector<64x64xf32>
    %19 = arith.subf %15, %18 : vector<64x64xf32>
    %20 = math.exp %19 : vector<64x64xf32>
    %cst_11 = arith.constant dense<0.000000e+00> : vector<64xf32>
    %21 = vector.multi_reduction <add>, %20, %cst_11 [1] : vector<64x64xf32> to vector<64xf32>
    %22 = vector.shape_cast %21 : vector<64xf32> to vector<64x1xf32>
    %23 = tpu.reciprocal %22 {approx = true} : vector<64x1xf32> -> vector<64x1xf32>
    %24 = vector.broadcast %23 : vector<64x1xf32> to vector<64x64xf32>
    %25 = arith.mulf %20, %24 : vector<64x64xf32>
    %26 = arith.truncf %25 : vector<64x64xf32> to vector<64x64xbf16>
    %cst_12 = arith.constant dense<0.000000e+00> : vector<64x128xf32>
    %27 = tpu.matmul %26, %14, %cst_12 {dimension_numbers = #tpu.dot_dimension_numbers<[1], [0], [0], [1], [0, 0, 1, 1], [], []>} : vector<64x64xbf16>, vector<64x128xbf16>, vector<64x128xf32> -> vector<64x128xf32>
    %28 = arith.truncf %27 : vector<64x128xf32> to vector<64x128xbf16>
    %c0_13 = arith.constant 0 : index
    %c0_14 = arith.constant 0 : index
    %29 = vector.load %arg20[%c0_13, %c0_14] : memref<64x256xbf16, #tpu.memory_space<vmem>>, vector<64x128xbf16>
    tpu.vector_store %arg20[%c0_13, %c0_14], %28 {strides = array<i32>} : memref<64x256xbf16, #tpu.memory_space<vmem>>, vector<64x128xbf16>,
    %c1 = arith.constant 1 : index
    %30 = arith.index_cast %4 : i32 to index
    %c0_15 = arith.constant 0 : index
    %31 = vector.load %arg17[%c1, %30, %c0_15] : memref<2x64x128xbf16, #tpu.memory_space<vmem>>, vector<1x64x128xbf16>
    %32 = vector.shape_cast %31 : vector<1x64x128xbf16> to vector<64x128xbf16>
    %c1_16 = arith.constant 1 : index
    %c0_17 = arith.constant 0 : index
    %c0_18 = arith.constant 0 : index
    %33 = vector.load %arg18[%c1_16, %c0_17, %c0_18] : memref<2x64x128xbf16, #tpu.memory_space<vmem>>, vector<1x64x128xbf16>
    %34 = vector.shape_cast %33 : vector<1x64x128xbf16> to vector<64x128xbf16>
    %c1_19 = arith.constant 1 : index
    %c0_20 = arith.constant 0 : index
    %c0_21 = arith.constant 0 : index
    %35 = vector.load %arg19[%c1_19, %c0_20, %c0_21] : memref<2x64x128xbf16, #tpu.memory_space<vmem>>, vector<1x64x128xbf16>
    %36 = vector.shape_cast %35 : vector<1x64x128xbf16> to vector<64x128xbf16>
    %cst_22 = arith.constant dense<0.000000e+00> : vector<64x64xf32>
    %37 = tpu.matmul %32, %34, %cst_22 {dimension_numbers = #tpu.dot_dimension_numbers<[1], [1], [0], [0], [0, 0, 1, 0], [], []>} : vector<64x128xbf16>, vector<64x128xbf16>, vector<64x64xf32> -> vector<64x64xf32>
    %cst_23 = arith.constant dense<0xFF800000> : vector<64xf32>
    %38 = vector.multi_reduction <maximumf>, %37, %cst_23 [1] : vector<64x64xf32> to vector<64xf32>
    %39 = vector.shape_cast %38 : vector<64xf32> to vector<64x1xf32>
    %40 = vector.broadcast %39 : vector<64x1xf32> to vector<64x64xf32>
    %41 = arith.subf %37, %40 : vector<64x64xf32>
    %42 = math.exp %41 : vector<64x64xf32>
    %cst_24 = arith.constant dense<0.000000e+00> : vector<64xf32>
    %43 = vector.multi_reduction <add>, %42, %cst_24 [1] : vector<64x64xf32> to vector<64xf32>
    %44 = vector.shape_cast %43 : vector<64xf32> to vector<64x1xf32>
    %45 = tpu.reciprocal %44 {approx = true} : vector<64x1xf32> -> vector<64x1xf32>
    %46 = vector.broadcast %45 : vector<64x1xf32> to vector<64x64xf32>
    %47 = arith.mulf %42, %46 : vector<64x64xf32>
    %48 = arith.truncf %47 : vector<64x64xf32> to vector<64x64xbf16>
    %cst_25 = arith.constant dense<0.000000e+00> : vector<64x128xf32>
    %49 = tpu.matmul %48, %36, %cst_25 {dimension_numbers = #tpu.dot_dimension_numbers<[1], [0], [0], [1], [0, 0, 1, 1], [], []>} : vector<64x64xbf16>, vector<64x128xbf16>, vector<64x128xf32> -> vector<64x128xf32>
    %50 = arith.truncf %49 : vector<64x128xf32> to vector<64x128xbf16>
    %c0_26 = arith.constant 0 : index
    %c128 = arith.constant 128 : index
    %51 = vector.load %arg20[%c0_26, %c128] : memref<64x256xbf16, #tpu.memory_space<vmem>>, vector<64x128xbf16>
    tpu.vector_store %arg20[%c0_26, %c128], %50 {strides = array<i32>} : memref<64x256xbf16, #tpu.memory_space<vmem>>, vector<64x128xbf16>,
    %c0_27 = arith.constant 0 : index
    %c0_28 = arith.constant 0 : index
    %52 = vector.load %arg20[%c0_27, %c0_28] : memref<64x256xbf16, #tpu.memory_space<vmem>>, vector<64x256xbf16>
    %c0_29 = arith.constant 0 : index
    %c0_30 = arith.constant 0 : index
    %53 = vector.load %arg8[%c0_29, %c0_30] : memref<256x256xbf16, #tpu.memory_space<vmem>>, vector<256x256xbf16>
    %cst_31 = arith.constant dense<0.000000e+00> : vector<64x256xf32>
    %54 = tpu.matmul %52, %53, %cst_31 {dimension_numbers = #tpu.dot_dimension_numbers<[1], [0], [0], [1], [0, 0, 1, 1], [], []>} : vector<64x256xbf16>, vector<256x256xbf16>, vector<64x256xf32> -> vector<64x256xf32>
    %55 = arith.addf %7, %54 : vector<64x256xf32>
    %c0_32 = arith.constant 0 : index
    %c0_33 = arith.constant 0 : index
    %56 = vector.load %arg9[%c0_32, %c0_33] : memref<1x256xf32, #tpu.memory_space<vmem>>, vector<1x256xf32>
    %57 = vector.broadcast %56 : vector<1x256xf32> to vector<64x256xf32>
    %58 = arith.addf %55, %57 : vector<64x256xf32>
    %c0_34 = arith.constant 0 : index
    %c0_35 = arith.constant 0 : index
    %59 = vector.load %arg10[%c0_34, %c0_35] : memref<1x256xf32, #tpu.memory_space<vmem>>, vector<1x256xf32>
    %c0_36 = arith.constant 0 : index
    %c0_37 = arith.constant 0 : index
    %60 = vector.load %arg11[%c0_36, %c0_37] : memref<1x256xf32, #tpu.memory_space<vmem>>, vector<1x256xf32>
    %cst_38 = arith.constant dense<0.000000e+00> : vector<64xf32>
    %61 = vector.multi_reduction <add>, %58, %cst_38 [1] : vector<64x256xf32> to vector<64xf32>
    %62 = vector.shape_cast %61 : vector<64xf32> to vector<64x1xf32>
    %cst_39 = arith.constant 2.560000e+02 : f32
    %63 = vector.broadcast %cst_39 : f32 to vector<64x1xf32>
    %64 = arith.divf %62, %63 : vector<64x1xf32>
    %65 = vector.broadcast %64 : vector<64x1xf32> to vector<64x256xf32>
    %66 = arith.subf %58, %65 : vector<64x256xf32>
    %67 = arith.mulf %66, %66 : vector<64x256xf32>
    %cst_40 = arith.constant dense<0.000000e+00> : vector<64xf32>
    %68 = vector.multi_reduction <add>, %67, %cst_40 [1] : vector<64x256xf32> to vector<64xf32>
    %69 = vector.shape_cast %68 : vector<64xf32> to vector<64x1xf32>
    %cst_41 = arith.constant 2.560000e+02 : f32
    %70 = vector.broadcast %cst_41 : f32 to vector<64x1xf32>
    %71 = arith.divf %69, %70 : vector<64x1xf32>
    %cst_42 = arith.constant 9.99999974E-6 : f32
    %72 = vector.broadcast %cst_42 : f32 to vector<64x1xf32>
    %73 = arith.addf %71, %72 : vector<64x1xf32>
    %74 = math.rsqrt %73 : vector<64x1xf32>
    %75 = vector.broadcast %74 : vector<64x1xf32> to vector<64x256xf32>
    %76 = arith.mulf %66, %75 : vector<64x256xf32>
    %77 = vector.broadcast %59 : vector<1x256xf32> to vector<64x256xf32>
    %78 = arith.mulf %76, %77 : vector<64x256xf32>
    %79 = vector.broadcast %60 : vector<1x256xf32> to vector<64x256xf32>
    %80 = arith.addf %78, %79 : vector<64x256xf32>
    %81 = arith.truncf %80 : vector<64x256xf32> to vector<64x256xbf16>
    %c0_43 = arith.constant 0 : index
    %c0_44 = arith.constant 0 : index
    %82 = vector.load %arg12[%c0_43, %c0_44] : memref<256x512xbf16, #tpu.memory_space<vmem>>, vector<256x512xbf16>
    %cst_45 = arith.constant dense<0.000000e+00> : vector<64x512xf32>
    %83 = tpu.matmul %81, %82, %cst_45 {dimension_numbers = #tpu.dot_dimension_numbers<[1], [0], [0], [1], [0, 0, 1, 1], [], []>} : vector<64x256xbf16>, vector<256x512xbf16>, vector<64x512xf32> -> vector<64x512xf32>
    %c0_46 = arith.constant 0 : index
    %c0_47 = arith.constant 0 : index
    %84 = vector.load %arg13[%c0_46, %c0_47] : memref<1x512xf32, #tpu.memory_space<vmem>>, vector<1x512xf32>
    %85 = vector.broadcast %84 : vector<1x512xf32> to vector<64x512xf32>
    %86 = arith.addf %83, %85 : vector<64x512xf32>
    %cst_48 = arith.constant 0.000000e+00 : f32
    %87 = vector.broadcast %cst_48 : f32 to vector<64x512xf32>
    %88 = arith.maximumf %86, %87 : vector<64x512xf32>
    %89 = arith.truncf %88 : vector<64x512xf32> to vector<64x512xbf16>
    %c0_49 = arith.constant 0 : index
    %c0_50 = arith.constant 0 : index
    %90 = vector.load %arg14[%c0_49, %c0_50] : memref<512x256xbf16, #tpu.memory_space<vmem>>, vector<512x256xbf16>
    %cst_51 = arith.constant dense<0.000000e+00> : vector<64x256xf32>
    %91 = tpu.matmul %89, %90, %cst_51 {dimension_numbers = #tpu.dot_dimension_numbers<[1], [0], [0], [1], [0, 0, 1, 1], [], []>} : vector<64x512xbf16>, vector<512x256xbf16>, vector<64x256xf32> -> vector<64x256xf32>
    %c0_52 = arith.constant 0 : index
    %c0_53 = arith.constant 0 : index
    %92 = vector.load %arg15[%c0_52, %c0_53] : memref<1x256xf32, #tpu.memory_space<vmem>>, vector<1x256xf32>
    %93 = vector.broadcast %92 : vector<1x256xf32> to vector<64x256xf32>
    %94 = arith.addf %91, %93 : vector<64x256xf32>
    %95 = arith.addf %58, %94 : vector<64x256xf32>
    %c0_54 = arith.constant 0 : index
    %c0_55 = arith.constant 0 : index
    %c0_56 = arith.constant 0 : index
    %96 = vector.load %arg16[%c0_54, %c0_55, %c0_56] : memref<1x64x256xf32, #tpu.memory_space<vmem>>, vector<1x64x256xf32>
    %97 = vector.shape_cast %96 : vector<1x64x256xf32> to vector<64x256xf32>
    %98 = vector.shape_cast %95 : vector<64x256xf32> to vector<1x64x256xf32>
    tpu.vector_store %arg16[%c0_54, %c0_55, %c0_56], %98 {strides = array<i32>} : memref<1x64x256xf32, #tpu.memory_space<vmem>>, vector<1x64x256xf32>,
    return
  }
  func.func @transform_0(%arg0: i32, %arg1: i32) -> (i32, i32, i32) {
    %c0_i32 = arith.constant 0 : i32
    %c0_i32_0 = arith.constant 0 : i32
    %c0_i32_1 = arith.constant 0 : i32
    return %arg0, %c0_i32, %c0_i32_0 : i32, i32, i32
  }
  func.func @transform_1(%arg0: i32, %arg1: i32) -> (i32, i32) {
    %c0_i32 = arith.constant 0 : i32
    %c0_i32_0 = arith.constant 0 : i32
    %c0_i32_1 = arith.constant 0 : i32
    return %c0_i32, %c0_i32_0 : i32, i32
  }
  func.func @transform_2(%arg0: i32, %arg1: i32) -> (i32, i32) {
    %c0_i32 = arith.constant 0 : i32
    %c0_i32_0 = arith.constant 0 : i32
    %c0_i32_1 = arith.constant 0 : i32
    return %c0_i32, %c0_i32_0 : i32, i32
  }
  func.func @transform_3(%arg0: i32, %arg1: i32) -> (i32, i32, i32) {
    %c0_i32 = arith.constant 0 : i32
    %c0_i32_0 = arith.constant 0 : i32
    %c0_i32_1 = arith.constant 0 : i32
    %c0_i32_2 = arith.constant 0 : i32
    return %c0_i32, %c0_i32_0, %c0_i32_1 : i32, i32, i32
  }
  func.func @transform_4(%arg0: i32, %arg1: i32) -> (i32, i32, i32) {
    %c0_i32 = arith.constant 0 : i32
    %c0_i32_0 = arith.constant 0 : i32
    %c0_i32_1 = arith.constant 0 : i32
    %c0_i32_2 = arith.constant 0 : i32
    return %c0_i32, %c0_i32_0, %c0_i32_1 : i32, i32, i32
  }
  func.func @transform_5(%arg0: i32, %arg1: i32) -> (i32, i32, i32) {
    %c0_i32 = arith.constant 0 : i32
    %c0_i32_0 = arith.constant 0 : i32
    %c0_i32_1 = arith.constant 0 : i32
    %c0_i32_2 = arith.constant 0 : i32
    return %c0_i32, %c0_i32_0, %c0_i32_1 : i32, i32, i32
  }
  func.func @transform_6(%arg0: i32, %arg1: i32) -> (i32, i32) {
    %c0_i32 = arith.constant 0 : i32
    %c0_i32_0 = arith.constant 0 : i32
    %c0_i32_1 = arith.constant 0 : i32
    return %c0_i32, %c0_i32_0 : i32, i32
  }
  func.func @transform_7(%arg0: i32, %arg1: i32) -> (i32, i32) {
    %c0_i32 = arith.constant 0 : i32
    %c0_i32_0 = arith.constant 0 : i32
    %c0_i32_1 = arith.constant 0 : i32
    return %c0_i32, %c0_i32_0 : i32, i32
  }
  func.func @transform_8(%arg0: i32, %arg1: i32) -> (i32, i32) {
    %c0_i32 = arith.constant 0 : i32
    %c0_i32_0 = arith.constant 0 : i32
    %c0_i32_1 = arith.constant 0 : i32
    return %c0_i32, %c0_i32_0 : i32, i32
  }
  func.func @transform_9(%arg0: i32, %arg1: i32) -> (i32, i32) {
    %c0_i32 = arith.constant 0 : i32
    %c0_i32_0 = arith.constant 0 : i32
    %c0_i32_1 = arith.constant 0 : i32
    return %c0_i32, %c0_i32_0 : i32, i32
  }
  func.func @transform_10(%arg0: i32, %arg1: i32) -> (i32, i32) {
    %c0_i32 = arith.constant 0 : i32
    %c0_i32_0 = arith.constant 0 : i32
    %c0_i32_1 = arith.constant 0 : i32
    return %c0_i32, %c0_i32_0 : i32, i32
  }
  func.func @transform_11(%arg0: i32, %arg1: i32) -> (i32, i32) {
    %c0_i32 = arith.constant 0 : i32
    %c0_i32_0 = arith.constant 0 : i32
    %c0_i32_1 = arith.constant 0 : i32
    return %c0_i32, %c0_i32_0 : i32, i32
  }
  func.func @transform_12(%arg0: i32, %arg1: i32) -> (i32, i32) {
    %c0_i32 = arith.constant 0 : i32
    %c0_i32_0 = arith.constant 0 : i32
    %c0_i32_1 = arith.constant 0 : i32
    return %c0_i32, %c0_i32_0 : i32, i32
  }
  func.func @transform_13(%arg0: i32, %arg1: i32) -> (i32, i32) {
    %c0_i32 = arith.constant 0 : i32
    %c0_i32_0 = arith.constant 0 : i32
    %c0_i32_1 = arith.constant 0 : i32
    return %c0_i32, %c0_i32_0 : i32, i32
  }
  func.func @transform_14(%arg0: i32, %arg1: i32) -> (i32, i32, i32) {
    %c0_i32 = arith.constant 0 : i32
    %c0_i32_0 = arith.constant 0 : i32
    return %arg0, %arg1, %c0_i32 : i32, i32, i32
  }
}

module attributes {stable_mosaic.version = 11 : i64} {
  func.func @layer_kernel(%arg0: i32, %arg1: i32, %arg2: memref<1x64x256xf32, #tpu.memory_space<vmem>>, %arg3: memref<1x256xf32, #tpu.memory_space<vmem>>, %arg4: memref<1x256xf32, #tpu.memory_space<vmem>>, %arg5: memref<2x256x128xbf16, #tpu.memory_space<vmem>>, %arg6: memref<2x256x128xbf16, #tpu.memory_space<vmem>>, %arg7: memref<2x256x128xbf16, #tpu.memory_space<vmem>>, %arg8: memref<256x256xbf16, #tpu.memory_space<vmem>>, %arg9: memref<1x256xf32, #tpu.memory_space<vmem>>, %arg10: memref<1x256xf32, #tpu.memory_space<vmem>>, %arg11: memref<1x256xf32, #tpu.memory_space<vmem>>, %arg12: memref<256x512xbf16, #tpu.memory_space<vmem>>, %arg13: memref<1x512xf32, #tpu.memory_space<vmem>>, %arg14: memref<512x256xbf16, #tpu.memory_space<vmem>>, %arg15: memref<1x256xf32, #tpu.memory_space<vmem>>, %arg16: memref<1x64x256xf32, #tpu.memory_space<vmem>>, %arg17: memref<2x64x128xbf16, #tpu.memory_space<vmem>>, %arg18: memref<2x64x128xbf16, #tpu.memory_space<vmem>>, %arg19: memref<2x64x128xbf16, #tpu.memory_space<vmem>>, %arg20: memref<64x256xbf16, #tpu.memory_space<vmem>>) attributes {dimension_semantics = [#tpu.dimension_semantics<parallel>, #tpu.dimension_semantics<arbitrary>], iteration_bounds = array<i64: 2, 1>, scalar_prefetch = 0 : i64, scratch_operands = 4 : i64, tpu.core_type = #tpu.core_type<tc>, window_params = [{transform_indices = @transform_0, window_bounds = array<i64: 1, 64, 256>}, {pipeline_mode = #tpu.pipeline_mode<synchronous>, transform_indices = @transform_1, window_bounds = array<i64: 1, 256>}, {pipeline_mode = #tpu.pipeline_mode<synchronous>, transform_indices = @transform_2, window_bounds = array<i64: 1, 256>}, {pipeline_mode = #tpu.pipeline_mode<synchronous>, transform_indices = @transform_3, window_bounds = array<i64: 2, 256, 128>}, {pipeline_mode = #tpu.pipeline_mode<synchronous>, transform_indices = @transform_4, window_bounds = array<i64: 2, 256, 128>}, {pipeline_mode = #tpu.pipeline_mode<synchronous>, transform_indices = @transform_5, window_bounds = array<i64: 2, 256, 128>}, {pipeline_mode = #tpu.pipeline_mode<synchronous>, transform_indices = @transform_6, window_bounds = array<i64: 256, 256>}, {pipeline_mode = #tpu.pipeline_mode<synchronous>, transform_indices = @transform_7, window_bounds = array<i64: 1, 256>}, {pipeline_mode = #tpu.pipeline_mode<synchronous>, transform_indices = @transform_8, window_bounds = array<i64: 1, 256>}, {pipeline_mode = #tpu.pipeline_mode<synchronous>, transform_indices = @transform_9, window_bounds = array<i64: 1, 256>}, {pipeline_mode = #tpu.pipeline_mode<synchronous>, transform_indices = @transform_10, window_bounds = array<i64: 256, 512>}, {pipeline_mode = #tpu.pipeline_mode<synchronous>, transform_indices = @transform_11, window_bounds = array<i64: 1, 512>}, {pipeline_mode = #tpu.pipeline_mode<synchronous>, transform_indices = @transform_12, window_bounds = array<i64: 512, 256>}, {pipeline_mode = #tpu.pipeline_mode<synchronous>, transform_indices = @transform_13, window_bounds = array<i64: 1, 256>}, {transform_indices = @transform_14, window_bounds = array<i64: 1, 64, 256>}]} {
    %c0_i32 = arith.constant 0 : i32
    %0 = arith.cmpi eq, %arg1, %c0_i32 : i32
    %1 = arith.extui %0 : i1 to i32
    %c0_i32_0 = arith.constant 0 : i32
    %2 = arith.cmpi ne, %1, %c0_i32_0 : i32
    scf.if %2 {
      %c0_57 = arith.constant 0 : index
      %c0_58 = arith.constant 0 : index
      %c0_59 = arith.constant 0 : index
      %99 = vector.load %arg2[%c0_57, %c0_58, %c0_59] : memref<1x64x256xf32, #tpu.memory_space<vmem>>, vector<1x64x256xf32>
      %100 = vector.shape_cast %99 : vector<1x64x256xf32> to vector<64x256xf32>
      %c0_60 = arith.constant 0 : index
      %c0_61 = arith.constant 0 : index
      %101 = vector.load %arg3[%c0_60, %c0_61] : memref<1x256xf32, #tpu.memory_space<vmem>>, vector<1x256xf32>
      %c0_62 = arith.constant 0 : index
      %c0_63 = arith.constant 0 : index
      %102 = vector.load %arg4[%c0_62, %c0_63] : memref<1x256xf32, #tpu.memory_space<vmem>>, vector<1x256xf32>
      %cst_64 = arith.constant dense<0.000000e+00> : vector<64xf32>
      %103 = vector.multi_reduction <add>, %100, %cst_64 [1] : vector<64x256xf32> to vector<64xf32>
      %104 = vector.shape_cast %103 : vector<64xf32> to vector<64x1xf32>
      %cst_65 = arith.constant 2.560000e+02 : f32
      %105 = vector.broadcast %cst_65 : f32 to vector<64x1xf32>
      %106 = arith.divf %104, %105 : vector<64x1xf32>
      %107 = vector.broadcast %106 : vector<64x1xf32> to vector<64x256xf32>
      %108 = arith.subf %100, %107 : vector<64x256xf32>
      %109 = arith.mulf %108, %108 : vector<64x256xf32>
      %cst_66 = arith.constant dense<0.000000e+00> : vector<64xf32>
      %110 = vector.multi_reduction <add>, %109, %cst_66 [1] : vector<64x256xf32> to vector<64xf32>
      %111 = vector.shape_cast %110 : vector<64xf32> to vector<64x1xf32>
      %cst_67 = arith.constant 2.560000e+02 : f32
      %112 = vector.broadcast %cst_67 : f32 to vector<64x1xf32>
      %113 = arith.divf %111, %112 : vector<64x1xf32>
      %cst_68 = arith.constant 9.99999974E-6 : f32
      %114 = vector.broadcast %cst_68 : f32 to vector<64x1xf32>
      %115 = arith.addf %113, %114 : vector<64x1xf32>
      %116 = math.rsqrt %115 : vector<64x1xf32>
      %117 = vector.broadcast %116 : vector<64x1xf32> to vector<64x256xf32>
      %118 = arith.mulf %108, %117 : vector<64x256xf32>
      %119 = vector.broadcast %101 : vector<1x256xf32> to vector<64x256xf32>
      %120 = arith.mulf %118, %119 : vector<64x256xf32>
      %121 = vector.broadcast %102 : vector<1x256xf32> to vector<64x256xf32>
      %122 = arith.addf %120, %121 : vector<64x256xf32>
      %123 = arith.truncf %122 : vector<64x256xf32> to vector<64x256xbf16>
      %c0_69 = arith.constant 0 : index
      %c0_70 = arith.constant 0 : index
      %c0_71 = arith.constant 0 : index
      %124 = vector.load %arg5[%c0_69, %c0_70, %c0_71] : memref<2x256x128xbf16, #tpu.memory_space<vmem>>, vector<1x256x128xbf16>
      %125 = vector.shape_cast %124 : vector<1x256x128xbf16> to vector<256x128xbf16>
      %cst_72 = arith.constant dense<0.000000e+00> : vector<64x128xf32>
      %126 = tpu.matmul %123, %125, %cst_72 {dimension_numbers = #tpu.dot_dimension_numbers<[1], [0], [0], [1], [0, 0, 1, 1], [], []>} : vector<64x256xbf16>, vector<256x128xbf16>, vector<64x128xf32> -> vector<64x128xf32>
      %cst_73 = arith.constant 0.0883883461 : f32
      %127 = vector.broadcast %cst_73 : f32 to vector<64x128xf32>
      %128 = arith.mulf %126, %127 : vector<64x128xf32>
      %129 = arith.truncf %128 : vector<64x128xf32> to vector<64x128xbf16>
      %c0_74 = arith.constant 0 : index
      %c0_75 = arith.constant 0 : index
      %c0_76 = arith.constant 0 : index
      %130 = vector.load %arg17[%c0_74, %c0_75, %c0_76] : memref<2x64x128xbf16, #tpu.memory_space<vmem>>, vector<1x64x128xbf16>
      %131 = vector.shape_cast %130 : vector<1x64x128xbf16> to vector<64x128xbf16>
      %132 = vector.shape_cast %129 : vector<64x128xbf16> to vector<1x64x128xbf16>
      tpu.vector_store %arg17[%c0_74, %c0_75, %c0_76], %132 {strides = array<i32>} : memref<2x64x128xbf16, #tpu.memory_space<vmem>>, vector<1x64x128xbf16>,
      %c0_77 = arith.constant 0 : index
      %c0_78 = arith.constant 0 : index
      %c0_79 = arith.constant 0 : index
      %133 = vector.load %arg6[%c0_77, %c0_78, %c0_79] : memref<2x256x128xbf16, #tpu.memory_space<vmem>>, vector<1x256x128xbf16>
      %134 = vector.shape_cast %133 : vector<1x256x128xbf16> to vector<256x128xbf16>
      %cst_80 = arith.constant dense<0.000000e+00> : vector<64x128xf32>
      %135 = tpu.matmul %123, %134, %cst_80 {dimension_numbers = #tpu.dot_dimension_numbers<[1], [0], [0], [1], [0, 0, 1, 1], [], []>} : vector<64x256xbf16>, vector<256x128xbf16>, vector<64x128xf32> -> vector<64x128xf32>
      %136 = arith.truncf %135 : vector<64x128xf32> to vector<64x128xbf16>
      %c0_81 = arith.constant 0 : index
      %c0_82 = arith.constant 0 : index
      %c0_83 = arith.constant 0 : index
      %137 = vector.load %arg18[%c0_81, %c0_82, %c0_83] : memref<2x64x128xbf16, #tpu.memory_space<vmem>>, vector<1x64x128xbf16>
      %138 = vector.shape_cast %137 : vector<1x64x128xbf16> to vector<64x128xbf16>
      %139 = vector.shape_cast %136 : vector<64x128xbf16> to vector<1x64x128xbf16>
      tpu.vector_store %arg18[%c0_81, %c0_82, %c0_83], %139 {strides = array<i32>} : memref<2x64x128xbf16, #tpu.memory_space<vmem>>, vector<1x64x128xbf16>,
      %c0_84 = arith.constant 0 : index
      %c0_85 = arith.constant 0 : index
      %c0_86 = arith.constant 0 : index
      %140 = vector.load %arg7[%c0_84, %c0_85, %c0_86] : memref<2x256x128xbf16, #tpu.memory_space<vmem>>, vector<1x256x128xbf16>
      %141 = vector.shape_cast %140 : vector<1x256x128xbf16> to vector<256x128xbf16>
      %cst_87 = arith.constant dense<0.000000e+00> : vector<64x128xf32>
      %142 = tpu.matmul %123, %141, %cst_87 {dimension_numbers = #tpu.dot_dimension_numbers<[1], [0], [0], [1], [0, 0, 1, 1], [], []>} : vector<64x256xbf16>, vector<256x128xbf16>, vector<64x128xf32> -> vector<64x128xf32>
      %143 = arith.truncf %142 : vector<64x128xf32> to vector<64x128xbf16>
      %c0_88 = arith.constant 0 : index
      %c0_89 = arith.constant 0 : index
      %c0_90 = arith.constant 0 : index
      %144 = vector.load %arg19[%c0_88, %c0_89, %c0_90] : memref<2x64x128xbf16, #tpu.memory_space<vmem>>, vector<1x64x128xbf16>
      %145 = vector.shape_cast %144 : vector<1x64x128xbf16> to vector<64x128xbf16>
      %146 = vector.shape_cast %143 : vector<64x128xbf16> to vector<1x64x128xbf16>
      tpu.vector_store %arg19[%c0_88, %c0_89, %c0_90], %146 {strides = array<i32>} : memref<2x64x128xbf16, #tpu.memory_space<vmem>>, vector<1x64x128xbf16>,
      %c1_91 = arith.constant 1 : index
      %c0_92 = arith.constant 0 : index
      %c0_93 = arith.constant 0 : index
      %147 = vector.load %arg5[%c1_91, %c0_92, %c0_93] : memref<2x256x128xbf16, #tpu.memory_space<vmem>>, vector<1x256x128xbf16>
      %148 = vector.shape_cast %147 : vector<1x256x128xbf16> to vector<256x128xbf16>
      %cst_94 = arith.constant dense<0.000000e+00> : vector<64x128xf32>
      %149 = tpu.matmul %123, %148, %cst_94 {dimension_numbers = #tpu.dot_dimension_numbers<[1], [0], [0], [1], [0, 0, 1, 1], [], []>} : vector<64x256xbf16>, vector<256x128xbf16>, vector<64x128xf32> -> vector<64x128xf32>
      %cst_95 = arith.constant 0.0883883461 : f32
      %150 = vector.broadcast %cst_95 : f32 to vector<64x128xf32>
      %151 = arith.mulf %149, %150 : vector<64x128xf32>
      %152 = arith.truncf %151 : vector<64x128xf32> to vector<64x128xbf16>
      %c1_96 = arith.constant 1 : index
      %c0_97 = arith.constant 0 : index
      %c0_98 = arith.constant 0 : index
      %153 = vector.load %arg17[%c1_96, %c0_97, %c0_98] : memref<2x64x128xbf16, #tpu.memory_space<vmem>>, vector<1x64x128xbf16>
      %154 = vector.shape_cast %153 : vector<1x64x128xbf16> to vector<64x128xbf16>
      %155 = vector.shape_cast %152 : vector<64x128xbf16> to vector<1x64x128xbf16>
      tpu.vector_store %arg17[%c1_96, %c0_97, %c0_98], %155 {strides = array<i32>} : memref<2x64x128xbf16, #tpu.memory_space<vmem>>, vector<1x64x128xbf16>,
      %c1_99 = arith.constant 1 : index
      %c0_100 = arith.constant 0 : index
      %c0_101 = arith.constant 0 : index
      %156 = vector.load %arg6[%c1_99, %c0_100, %c0_101] : memref<2x256x128xbf16, #tpu.memory_space<vmem>>, vector<1x256x128xbf16>
      %157 = vector.shape_cast %156 : vector<1x256x128xbf16> to vector<256x128xbf16>
      %cst_102 = arith.constant dense<0.000000e+00> : vector<64x128xf32>
      %158 = tpu.matmul %123, %157, %cst_102 {dimension_numbers = #tpu.dot_dimension_numbers<[1], [0], [0], [1], [0, 0, 1, 1], [], []>} : vector<64x256xbf16>, vector<256x128xbf16>, vector<64x128xf32> -> vector<64x128xf32>
      %159 = arith.truncf %158 : vector<64x128xf32> to vector<64x128xbf16>
      %c1_103 = arith.constant 1 : index
      %c0_104 = arith.constant 0 : index
      %c0_105 = arith.constant 0 : index
      %160 = vector.load %arg18[%c1_103, %c0_104, %c0_105] : memref<2x64x128xbf16, #tpu.memory_space<vmem>>, vector<1x64x128xbf16>
      %161 = vector.shape_cast %160 : vector<1x64x128xbf16> to vector<64x128xbf16>
      %162 = vector.shape_cast %159 : vector<64x128xbf16> to vector<1x64x128xbf16>
      tpu.vector_store %arg18[%c1_103, %c0_104, %c0_105], %162 {strides = array<i32>} : memref<2x64x128xbf16, #tpu.memory_space<vmem>>, vector<1x64x128xbf16>,
      %c1_106 = arith.constant 1 : index
      %c0_107 = arith.constant 0 : index
      %c0_108 = arith.constant 0 : index
      %163 = vector.load %arg7[%c1_106, %c0_107, %c0_108] : memref<2x256x128xbf16, #tpu.memory_space<vmem>>, vector<1x256x128xbf16>
      %164 = vector.shape_cast %163 : vector<1x256x128xbf16> to vector<256x128xbf16>
      %cst_109 = arith.constant dense<0.000000e+00> : vector<64x128xf32>
      %165 = tpu.matmul %123, %164, %cst_109 {dimension_numbers = #tpu.dot_dimension_numbers<[1], [0], [0], [1], [0, 0, 1, 1], [], []>} : vector<64x256xbf16>, vector<256x128xbf16>, vector<64x128xf32> -> vector<64x128xf32>
      %166 = arith.truncf %165 : vector<64x128xf32> to vector<64x128xbf16>
      %c1_110 = arith.constant 1 : index
      %c0_111 = arith.constant 0 : index
      %c0_112 = arith.constant 0 : index
      %167 = vector.load %arg19[%c1_110, %c0_111, %c0_112] : memref<2x64x128xbf16, #tpu.memory_space<vmem>>, vector<1x64x128xbf16>
      %168 = vector.shape_cast %167 : vector<1x64x128xbf16> to vector<64x128xbf16>
      %169 = vector.shape_cast %166 : vector<64x128xbf16> to vector<1x64x128xbf16>
      tpu.vector_store %arg19[%c1_110, %c0_111, %c0_112], %169 {strides = array<i32>} : memref<2x64x128xbf16, #tpu.memory_space<vmem>>, vector<1x64x128xbf16>,
    } else {
    }
    %c64_i32 = arith.constant 64 : i32
    %3 = arith.muli %arg1, %c64_i32 : i32
    %4 = tpu.assume_multiple %3, 64 : i32
    %c0 = arith.constant 0 : index
    %5 = arith.index_cast %4 : i32 to index
    %c0_1 = arith.constant 0 : index
    %6 = vector.load %arg2[%c0, %5, %c0_1] : memref<1x64x256xf32, #tpu.memory_space<vmem>>, vector<1x64x256xf32>
    %7 = vector.shape_cast %6 : vector<1x64x256xf32> to vector<64x256xf32>
    %c0_2 = arith.constant 0 : index
    %8 = arith.index_cast %4 : i32 to index
    %c0_3 = arith.constant 0 : index
    %9 = vector.load %arg17[%c0_2, %8, %c0_3] : memref<2x64x128xbf16, #tpu.memory_space<vmem>>, vector<1x64x128xbf16>
    %10 = vector.shape_cast %9 : vector<1x64x128xbf16> to vector<64x128xbf16>
    %c0_4 = arith.constant 0 : index
    %c0_5 = arith.constant 0 : index
    %c0_6 = arith.constant 0 : index
    %11 = vector.load %arg18[%c0_4, %c0_5, %c0_6] : memref<2x64x128xbf16, #tpu.memory_space<vmem>>, vector<1x64x128xbf16>
    %12 = vector.shape_cast %11 : vector<1x64x128xbf16> to vector<64x128xbf16>
    %c0_7 = arith.constant 0 : index
    %c0_8 = arith.constant 0 : index
    %c0_9 = arith.constant 0 : index
    %13 = vector.load %arg19[%c0_7, %c0_8, %c0_9] : memref<2x64x128xbf16, #tpu.memory_space<vmem>>, vector<1x64x128xbf16>
    %14 = vector.shape_cast %13 : vector<1x64x128xbf16> to vector<64x128xbf16>
    %cst = arith.constant dense<0.000000e+00> : vector<64x64xf32>
    %15 = tpu.matmul %10, %12, %cst {dimension_numbers = #tpu.dot_dimension_numbers<[1], [1], [0], [0], [0, 0, 1, 0], [], []>} : vector<64x128xbf16>, vector<64x128xbf16>, vector<64x64xf32> -> vector<64x64xf32>
    %cst_10 = arith.constant dense<0xFF800000> : vector<64xf32>
    %16 = vector.multi_reduction <maximumf>, %15, %cst_10 [1] : vector<64x64xf32> to vector<64xf32>
    %17 = vector.shape_cast %16 : vector<64xf32> to vector<64x1xf32>
    %18 = vector.broadcast %17 : vector<64x1xf32> to vector<64x64xf32>
    %19 = arith.subf %15, %18 : vector<64x64xf32>
    %20 = math.exp %19 : vector<64x64xf32>
    %cst_11 = arith.constant dense<0.000000e+00> : vector<64xf32>
    %21 = vector.multi_reduction <add>, %20, %cst_11 [1] : vector<64x64xf32> to vector<64xf32>
    %22 = vector.shape_cast %21 : vector<64xf32> to vector<64x1xf32>
    %23 = tpu.reciprocal %22 {approx = true} : vector<64x1xf32> -> vector<64x1xf32>
    %24 = vector.broadcast %23 : vector<64x1xf32> to vector<64x64xf32>
    %25 = arith.mulf %20, %24 : vector<64x64xf32>
    %26 = arith.truncf %25 : vector<64x64xf32> to vector<64x64xbf16>
    %cst_12 = arith.constant dense<0.000000e+00> : vector<64x128xf32>
    %27 = tpu.matmul %26, %14, %cst_12 {dimension_numbers = #tpu.dot_dimension_numbers<[1], [0], [0], [1], [0, 0, 1, 1], [], []>} : vector<64x64xbf16>, vector<64x128xbf16>, vector<64x128xf32> -> vector<64x128xf32>
    %28 = arith.truncf %27 : vector<64x128xf32> to vector<64x128xbf16>
    %c0_13 = arith.constant 0 : index
    %c0_14 = arith.constant 0 : index
    %29 = vector.load %arg20[%c0_13, %c0_14] : memref<64x256xbf16, #tpu.memory_space<vmem>>, vector<64x128xbf16>
    tpu.vector_store %arg20[%c0_13, %c0_14], %28 {strides = array<i32>} : memref<64x256xbf16, #tpu.memory_space<vmem>>, vector<64x128xbf16>,
    %c1 = arith.constant 1 : index
    %30 = arith.index_cast %4 : i32 to index
    %c0_15 = arith.constant 0 : index
    %31 = vector.load %arg17[%c1, %30, %c0_15] : memref<2x64x128xbf16, #tpu.memory_space<vmem>>, vector<1x64x128xbf16>
    %32 = vector.shape_cast %31 : vector<1x64x128xbf16> to vector<64x128xbf16>
    %c1_16 = arith.constant 1 : index
    %c0_17 = arith.constant 0 : index
    %c0_18 = arith.constant 0 : index
    %33 = vector.load %arg18[%c1_16, %c0_17, %c0_18] : memref<2x64x128xbf16, #tpu.memory_space<vmem>>, vector<1x64x128xbf16>
    %34 = vector.shape_cast %33 : vector<1x64x128xbf16> to vector<64x128xbf16>
    %c1_19 = arith.constant 1 : index
    %c0_20 = arith.constant 0 : index
    %c0_21 = arith.constant 0 : index
    %35 = vector.load %arg19[%c1_19, %c0_20, %c0_21] : memref<2x64x128xbf16, #tpu.memory_space<vmem>>, vector<1x64x128xbf16>
    %36 = vector.shape_cast %35 : vector<1x64x128xbf16> to vector<64x128xbf16>
    %cst_22 = arith.constant dense<0.000000e+00> : vector<64x64xf32>
    %37 = tpu.matmul %32, %34, %cst_22 {dimension_numbers = #tpu.dot_dimension_numbers<[1], [1], [0], [0], [0, 0, 1, 0], [], []>} : vector<64x128xbf16>, vector<64x128xbf16>, vector<64x64xf32> -> vector<64x64xf32>
    %cst_23 = arith.constant dense<0xFF800000> : vector<64xf32>
    %38 = vector.multi_reduction <maximumf>, %37, %cst_23 [1] : vector<64x64xf32> to vector<64xf32>
    %39 = vector.shape_cast %38 : vector<64xf32> to vector<64x1xf32>
    %40 = vector.broadcast %39 : vector<64x1xf32> to vector<64x64xf32>
    %41 = arith.subf %37, %40 : vector<64x64xf32>
    %42 = math.exp %41 : vector<64x64xf32>
    %cst_24 = arith.constant dense<0.000000e+00> : vector<64xf32>
    %43 = vector.multi_reduction <add>, %42, %cst_24 [1] : vector<64x64xf32> to vector<64xf32>
    %44 = vector.shape_cast %43 : vector<64xf32> to vector<64x1xf32>
    %45 = tpu.reciprocal %44 {approx = true} : vector<64x1xf32> -> vector<64x1xf32>
    %46 = vector.broadcast %45 : vector<64x1xf32> to vector<64x64xf32>
    %47 = arith.mulf %42, %46 : vector<64x64xf32>
    %48 = arith.truncf %47 : vector<64x64xf32> to vector<64x64xbf16>
    %cst_25 = arith.constant dense<0.000000e+00> : vector<64x128xf32>
    %49 = tpu.matmul %48, %36, %cst_25 {dimension_numbers = #tpu.dot_dimension_numbers<[1], [0], [0], [1], [0, 0, 1, 1], [], []>} : vector<64x64xbf16>, vector<64x128xbf16>, vector<64x128xf32> -> vector<64x128xf32>
    %50 = arith.truncf %49 : vector<64x128xf32> to vector<64x128xbf16>
    %c0_26 = arith.constant 0 : index
    %c128 = arith.constant 128 : index
    %51 = vector.load %arg20[%c0_26, %c128] : memref<64x256xbf16, #tpu.memory_space<vmem>>, vector<64x128xbf16>
    tpu.vector_store %arg20[%c0_26, %c128], %50 {strides = array<i32>} : memref<64x256xbf16, #tpu.memory_space<vmem>>, vector<64x128xbf16>,
    %c0_27 = arith.constant 0 : index
    %c0_28 = arith.constant 0 : index
    %52 = vector.load %arg20[%c0_27, %c0_28] : memref<64x256xbf16, #tpu.memory_space<vmem>>, vector<64x256xbf16>
    %c0_29 = arith.constant 0 : index
    %c0_30 = arith.constant 0 : index
    %53 = vector.load %arg8[%c0_29, %c0_30] : memref<256x256xbf16, #tpu.memory_space<vmem>>, vector<256x256xbf16>
    %cst_31 = arith.constant dense<0.000000e+00> : vector<64x256xf32>
    %54 = tpu.matmul %52, %53, %cst_31 {dimension_numbers = #tpu.dot_dimension_numbers<[1], [0], [0], [1], [0, 0, 1, 1], [], []>} : vector<64x256xbf16>, vector<256x256xbf16>, vector<64x256xf32> -> vector<64x256xf32>
    %55 = arith.addf %7, %54 : vector<64x256xf32>
    %c0_32 = arith.constant 0 : index
    %c0_33 = arith.constant 0 : index
    %56 = vector.load %arg9[%c0_32, %c0_33] : memref<1x256xf32, #tpu.memory_space<vmem>>, vector<1x256xf32>
    %57 = vector.broadcast %56 : vector<1x256xf32> to vector<64x256xf32>
    %58 = arith.addf %55, %57 : vector<64x256xf32>
    %c0_34 = arith.constant 0 : index
    %c0_35 = arith.constant 0 : index
    %59 = vector.load %arg10[%c0_34, %c0_35] : memref<1x256xf32, #tpu.memory_space<vmem>>, vector<1x256xf32>
    %c0_36 = arith.constant 0 : index
    %c0_37 = arith.constant 0 : index
    %60 = vector.load %arg11[%c0_36, %c0_37] : memref<1x256xf32, #tpu.memory_space<vmem>>, vector<1x256xf32>
    %cst_38 = arith.constant dense<0.000000e+00> : vector<64xf32>
    %61 = vector.multi_reduction <add>, %58, %cst_38 [1] : vector<64x256xf32> to vector<64xf32>
    %62 = vector.shape_cast %61 : vector<64xf32> to vector<64x1xf32>
    %cst_39 = arith.constant 2.560000e+02 : f32
    %63 = vector.broadcast %cst_39 : f32 to vector<64x1xf32>
    %64 = arith.divf %62, %63 : vector<64x1xf32>
    %65 = vector.broadcast %64 : vector<64x1xf32> to vector<64x256xf32>
    %66 = arith.subf %58, %65 : vector<64x256xf32>
    %67 = arith.mulf %66, %66 : vector<64x256xf32>
    %cst_40 = arith.constant dense<0.000000e+00> : vector<64xf32>
    %68 = vector.multi_reduction <add>, %67, %cst_40 [1] : vector<64x256xf32> to vector<64xf32>
    %69 = vector.shape_cast %68 : vector<64xf32> to vector<64x1xf32>
    %cst_41 = arith.constant 2.560000e+02 : f32
    %70 = vector.broadcast %cst_41 : f32 to vector<64x1xf32>
    %71 = arith.divf %69, %70 : vector<64x1xf32>
    %cst_42 = arith.constant 9.99999974E-6 : f32
    %72 = vector.broadcast %cst_42 : f32 to vector<64x1xf32>
    %73 = arith.addf %71, %72 : vector<64x1xf32>
    %74 = math.rsqrt %73 : vector<64x1xf32>
    %75 = vector.broadcast %74 : vector<64x1xf32> to vector<64x256xf32>
    %76 = arith.mulf %66, %75 : vector<64x256xf32>
    %77 = vector.broadcast %59 : vector<1x256xf32> to vector<64x256xf32>
    %78 = arith.mulf %76, %77 : vector<64x256xf32>
    %79 = vector.broadcast %60 : vector<1x256xf32> to vector<64x256xf32>
    %80 = arith.addf %78, %79 : vector<64x256xf32>
    %81 = arith.truncf %80 : vector<64x256xf32> to vector<64x256xbf16>
    %c0_43 = arith.constant 0 : index
    %c0_44 = arith.constant 0 : index
    %82 = vector.load %arg12[%c0_43, %c0_44] : memref<256x512xbf16, #tpu.memory_space<vmem>>, vector<256x512xbf16>
    %cst_45 = arith.constant dense<0.000000e+00> : vector<64x512xf32>
    %83 = tpu.matmul %81, %82, %cst_45 {dimension_numbers = #tpu.dot_dimension_numbers<[1], [0], [0], [1], [0, 0, 1, 1], [], []>} : vector<64x256xbf16>, vector<256x512xbf16>, vector<64x512xf32> -> vector<64x512xf32>
    %c0_46 = arith.constant 0 : index
    %c0_47 = arith.constant 0 : index
    %84 = vector.load %arg13[%c0_46, %c0_47] : memref<1x512xf32, #tpu.memory_space<vmem>>, vector<1x512xf32>
    %85 = vector.broadcast %84 : vector<1x512xf32> to vector<64x512xf32>
    %86 = arith.addf %83, %85 : vector<64x512xf32>
    %cst_48 = arith.constant 0.000000e+00 : f32
    %87 = vector.broadcast %cst_48 : f32 to vector<64x512xf32>
    %88 = arith.maximumf %86, %87 : vector<64x512xf32>
    %89 = arith.truncf %88 : vector<64x512xf32> to vector<64x512xbf16>
    %c0_49 = arith.constant 0 : index
    %c0_50 = arith.constant 0 : index
    %90 = vector.load %arg14[%c0_49, %c0_50] : memref<512x256xbf16, #tpu.memory_space<vmem>>, vector<512x256xbf16>
    %cst_51 = arith.constant dense<0.000000e+00> : vector<64x256xf32>
    %91 = tpu.matmul %89, %90, %cst_51 {dimension_numbers = #tpu.dot_dimension_numbers<[1], [0], [0], [1], [0, 0, 1, 1], [], []>} : vector<64x512xbf16>, vector<512x256xbf16>, vector<64x256xf32> -> vector<64x256xf32>
    %c0_52 = arith.constant 0 : index
    %c0_53 = arith.constant 0 : index
    %92 = vector.load %arg15[%c0_52, %c0_53] : memref<1x256xf32, #tpu.memory_space<vmem>>, vector<1x256xf32>
    %93 = vector.broadcast %92 : vector<1x256xf32> to vector<64x256xf32>
    %94 = arith.addf %91, %93 : vector<64x256xf32>
    %95 = arith.addf %58, %94 : vector<64x256xf32>
    %c0_54 = arith.constant 0 : index
    %c0_55 = arith.constant 0 : index
    %c0_56 = arith.constant 0 : index
    %96 = vector.load %arg16[%c0_54, %c0_55, %c0_56] : memref<1x64x256xf32, #tpu.memory_space<vmem>>, vector<1x64x256xf32>
    %97 = vector.shape_cast %96 : vector<1x64x256xf32> to vector<64x256xf32>
    %98 = vector.shape_cast %95 : vector<64x256xf32> to vector<1x64x256xf32>
    tpu.vector_store %arg16[%c0_54, %c0_55, %c0_56], %98 {strides = array<i32>} : memref<1x64x256xf32, #tpu.memory_space<vmem>>, vector<1x64x256xf32>,
    return
  }
  func.func @transform_0(%arg0: i32, %arg1: i32) -> (i32, i32, i32) {
    %c0_i32 = arith.constant 0 : i32
    %c0_i32_0 = arith.constant 0 : i32
    %c0_i32_1 = arith.constant 0 : i32
    return %arg0, %c0_i32, %c0_i32_0 : i32, i32, i32
  }
  func.func @transform_1(%arg0: i32, %arg1: i32) -> (i32, i32) {
    %c0_i32 = arith.constant 0 : i32
    %c0_i32_0 = arith.constant 0 : i32
    %c0_i32_1 = arith.constant 0 : i32
    return %c0_i32, %c0_i32_0 : i32, i32
  }
  func.func @transform_2(%arg0: i32, %arg1: i32) -> (i32, i32) {
    %c0_i32 = arith.constant 0 : i32
    %c0_i32_0 = arith.constant 0 : i32
    %c0_i32_1 = arith.constant 0 : i32
    return %c0_i32, %c0_i32_0 : i32, i32
  }
  func.func @transform_3(%arg0: i32, %arg1: i32) -> (i32, i32, i32) {
    %c0_i32 = arith.constant 0 : i32
    %c0_i32_0 = arith.constant 0 : i32
    %c0_i32_1 = arith.constant 0 : i32
    %c0_i32_2 = arith.constant 0 : i32
    return %c0_i32, %c0_i32_0, %c0_i32_1 : i32, i32, i32
  }
  func.func @transform_4(%arg0: i32, %arg1: i32) -> (i32, i32, i32) {
    %c0_i32 = arith.constant 0 : i32
    %c0_i32_0 = arith.constant 0 : i32
    %c0_i32_1 = arith.constant 0 : i32
    %c0_i32_2 = arith.constant 0 : i32
    return %c0_i32, %c0_i32_0, %c0_i32_1 : i32, i32, i32
  }
  func.func @transform_5(%arg0: i32, %arg1: i32) -> (i32, i32, i32) {
    %c0_i32 = arith.constant 0 : i32
    %c0_i32_0 = arith.constant 0 : i32
    %c0_i32_1 = arith.constant 0 : i32
    %c0_i32_2 = arith.constant 0 : i32
    return %c0_i32, %c0_i32_0, %c0_i32_1 : i32, i32, i32
  }
  func.func @transform_6(%arg0: i32, %arg1: i32) -> (i32, i32) {
    %c0_i32 = arith.constant 0 : i32
    %c0_i32_0 = arith.constant 0 : i32
    %c0_i32_1 = arith.constant 0 : i32
    return %c0_i32, %c0_i32_0 : i32, i32
  }
  func.func @transform_7(%arg0: i32, %arg1: i32) -> (i32, i32) {
    %c0_i32 = arith.constant 0 : i32
    %c0_i32_0 = arith.constant 0 : i32
    %c0_i32_1 = arith.constant 0 : i32
    return %c0_i32, %c0_i32_0 : i32, i32
  }
  func.func @transform_8(%arg0: i32, %arg1: i32) -> (i32, i32) {
    %c0_i32 = arith.constant 0 : i32
    %c0_i32_0 = arith.constant 0 : i32
    %c0_i32_1 = arith.constant 0 : i32
    return %c0_i32, %c0_i32_0 : i32, i32
  }
  func.func @transform_9(%arg0: i32, %arg1: i32) -> (i32, i32) {
    %c0_i32 = arith.constant 0 : i32
    %c0_i32_0 = arith.constant 0 : i32
    %c0_i32_1 = arith.constant 0 : i32
    return %c0_i32, %c0_i32_0 : i32, i32
  }
  func.func @transform_10(%arg0: i32, %arg1: i32) -> (i32, i32) {
    %c0_i32 = arith.constant 0 : i32
    %c0_i32_0 = arith.constant 0 : i32
    %c0_i32_1 = arith.constant 0 : i32
    return %c0_i32, %c0_i32_0 : i32, i32
  }
  func.func @transform_11(%arg0: i32, %arg1: i32) -> (i32, i32) {
    %c0_i32 = arith.constant 0 : i32
    %c0_i32_0 = arith.constant 0 : i32
    %c0_i32_1 = arith.constant 0 : i32
    return %c0_i32, %c0_i32_0 : i32, i32
  }
  func.func @transform_12(%arg0: i32, %arg1: i32) -> (i32, i32) {
    %c0_i32 = arith.constant 0 : i32
    %c0_i32_0 = arith.constant 0 : i32
    %c0_i32_1 = arith.constant 0 : i32
    return %c0_i32, %c0_i32_0 : i32, i32
  }
  func.func @transform_13(%arg0: i32, %arg1: i32) -> (i32, i32) {
    %c0_i32 = arith.constant 0 : i32
    %c0_i32_0 = arith.constant 0 : i32
    %c0_i32_1 = arith.constant 0 : i32
    return %c0_i32, %c0_i32_0 : i32, i32
  }
  func.func @transform_14(%arg0: i32, %arg1: i32) -> (i32, i32, i32) {
    %c0_i32 = arith.constant 0 : i32
    %c0_i32_0 = arith.constant 0 : i32
    return %arg0, %arg1, %c0_i32 : i32, i32, i32
  }
}

</mosaic_0001>

<llo_original>
// kernel: tpu_custom_call.1
$region0: #{tpu_custom_call.1}
  #allocation0 [shape = 'u32[]', space=smem, size = 0x4, offset = 0x4, fixed_abs, tag = 'smem constant byte address 0x4 - core index']
  #allocation1 [shape = 'u32[144,128]{1,0:T(1,128)}', space=vmem, size = 0x12000, scoped, tag = 'internal scratch']
  #allocation2 [shape = 'bf16[2,64,128]{2,1,0:T(16,128)(2,1)}', space=vmem, size = 0x8000, scoped, tag = 'scratch operand']
  #allocation3 [shape = 'bf16[2,64,128]{2,1,0:T(16,128)(2,1)}', space=vmem, size = 0x8000, scoped, tag = 'scratch operand']
  #allocation4 [shape = 'bf16[2,64,128]{2,1,0:T(16,128)(2,1)}', space=vmem, size = 0x8000, scoped, tag = 'scratch operand']
  #allocation5 [shape = 'bf16[64,256]{1,0:T(16,128)(2,1)}', space=vmem, size = 0x8000, scoped, tag = 'scratch operand']
  %s0 = inlined_call_operand.hbm [shape: f32[2,64,256], index: 0, kind: input, shape index: {}]
  %s1 = inlined_call_operand.vmem [shape: f32[1,256], index: 1, kind: input, shape index: {}]
  %s2 = inlined_call_operand.hbm [shape: f32[1,256], index: 2, kind: input, shape index: {}]
  %s3 = inlined_call_operand.hbm [shape: bf16[2,256,128], index: 3, kind: input, shape index: {}]
  %s4 = inlined_call_operand.hbm [shape: bf16[2,256,128], index: 4, kind: input, shape index: {}]
  %s5 = inlined_call_operand.hbm [shape: bf16[2,256,128], index: 5, kind: input, shape index: {}]
  %s6 = inlined_call_operand.hbm [shape: bf16[256,256], index: 6, kind: input, shape index: {}]
  %s7 = inlined_call_operand.vmem [shape: f32[1,256], index: 7, kind: input, shape index: {}]
  %s8 = inlined_call_operand.vmem [shape: f32[1,256], index: 8, kind: input, shape index: {}]
  %s9 = inlined_call_operand.vmem [shape: f32[1,256], index: 9, kind: input, shape index: {}]
  %s10 = inlined_call_operand.hbm [shape: bf16[256,512], index: 10, kind: input, shape index: {}]
  %s11 = inlined_call_operand.vmem [shape: f32[1,512], index: 11, kind: input, shape index: {}]
  %s12 = inlined_call_operand.hbm [shape: bf16[512,256], index: 12, kind: input, shape index: {}]
  %s13 = inlined_call_operand.vmem [shape: f32[1,256], index: 13, kind: input, shape index: {}]
  %s14 = inlined_call_operand.hbm [shape: f32[2,64,256], index: 14, kind: output, shape index: {}]
  %s15 = sld [smem:[#allocation0]]
  $region125: #{tpu_custom_call.1} parent=0
    _
  %s17 = ssub.s32 1, %s15
  %s18 = scalar_select 0, %s17, %s15
  $region1: #{tpu_custom_call.1} parent=0
    #allocation6 [shape = 'u8[131072]{0}', space=vmem, size = 0x20000, scoped, tag = 'input window, operand 0']
    #allocation7 [shape = 's32[2]{0}', space=sflag, size = 0x8, scoped, tag = 'scoped memory for tpu_custom_call.1']
    #allocation8 [shape = 's32[2]{0}', space=sflag, size = 0x8, scoped, tag = 'scoped memory for tpu_custom_call.1']
    #allocation9 [shape = 'u8[1024]{0}', space=vmem, size = 0x400, scoped, tag = 'input window, operand 2, single buffered']
    #allocation10 [shape = 's32[1]{0}', space=sflag, size = 0x4, scoped, tag = 'scoped memory for tpu_custom_call.1']
    #allocation11 [shape = 'u8[131072]{0}', space=vmem, size = 0x20000, scoped, tag = 'input window, operand 3, single buffered']
    #allocation12 [shape = 'u8[131072]{0}', space=vmem, size = 0x20000, scoped, tag = 'input window, operand 4, single buffered']
    #allocation13 [shape = 's32[1]{0}', space=sflag, size = 0x4, scoped, tag = 'scoped memory for tpu_custom_call.1']
    #allocation14 [shape = 'u8[131072]{0}', space=vmem, size = 0x20000, scoped, tag = 'input window, operand 5, single buffered']
    #allocation15 [shape = 'u8[131072]{0}', space=vmem, size = 0x20000, scoped, tag = 'input window, operand 6, single buffered']
    #allocation16 [shape = 's32[1]{0}', space=sflag, size = 0x4, scoped, tag = 'scoped memory for tpu_custom_call.1']
    #allocation17 [shape = 'u8[262144]{0}', space=vmem, size = 0x40000, scoped, tag = 'input window, operand 10, single buffered']
    #allocation18 [shape = 'u8[262144]{0}', space=vmem, size = 0x40000, scoped, tag = 'input window, operand 12, single buffered']
    #allocation19 [shape = 's32[1]{0}', space=sflag, size = 0x4, scoped, tag = 'scoped memory for tpu_custom_call.1']
    #allocation20 [shape = 'u8[131072]{0}', space=vmem, size = 0x20000, scoped, tag = 'output window, operand 0']
    %19 = vsyncpa [#allocation7], 0
    %s20 = scalar_lea.sflag [#allocation7], 1
    %21 = vsyncpa %s20, 0
    %22 = vsyncpa [#allocation10], 0
    %23 = vsyncpa [#allocation13], 0
    %24 = vsyncpa [#allocation16], 0
    %25 = vsyncpa [#allocation19], 0
    %26 = vsyncpa [#allocation8], 0
    %s27 = scalar_lea.sflag [#allocation8], 1
    %28 = vsyncpa %s27, 0
    loop: start=0, step=1, limit=4
    $region2: #{tpu_custom_call.1} parent=1 // loop_pre_header
      _
    $region3: #{tpu_custom_call.1} parent=1 // loop_header
      %s30 = sphi 0, %s34
      %p31 = scmp.ge.s32.totalorder %s30, 4
      %s37 = sphi 0, %s49
      %s38 = sphi 0, %s45
      %s39 = sphi 0, %s37
      %s40 = sphi 0, %s38
      %s41 = sphi 0, %s39
      %s42 = sphi 0, %s40
      %s52 = sphi 0, %s54
      %s55 = sphi 0, %s52
      %s56 = sphi 0, %s55
      %s72 = sphi 0, %s56
      %s76 = sphi 0, %s76
      %s78 = sphi 0, %s76
      %s79 = sphi 0, %s78
      %s93 = sphi 0, %s79
      %s97 = sphi 0, %s97
      %s99 = sphi 0, %s97
      %s100 = sphi 0, %s99
      %s114 = sphi 0, %s100
      %s118 = sphi 0, %s118
      %s120 = sphi 0, %s118
      %s121 = sphi 0, %s120
      %s135 = sphi 0, %s121
      %s139 = sphi 0, %s139
      %s141 = sphi 0, %s139
      %s142 = sphi 0, %s141
      %s156 = sphi 0, %s142
      %s160 = sphi 0, %s160
      %s162 = sphi 0, %s160
      %s163 = sphi 0, %s162
      %s177 = sphi 0, %s163
      %s181 = sphi 0, %s181
      %s183 = sphi 0, %s181
      %s184 = sphi 0, %s183
      %s198 = sphi 0, %s184
      %s202 = sphi 0, %s202
      %s204 = sphi 0, %s202
      %s205 = sphi 0, %s204
      %s219 = sphi 0, %s205
      %s223 = sphi 0, %s223
      %s225 = sphi 0, %s223
      %s226 = sphi 0, %s225
      %s240 = sphi 0, %s226
      %s244 = sphi 0, %s244
      %s246 = sphi 0, %s244
      %s247 = sphi 0, %s246
      %s261 = sphi 0, %s247
      %s265 = sphi 0, %s265
      %s267 = sphi 0, %s265
      %s268 = sphi 0, %s267
      %s282 = sphi 0, %s268
      %s286 = sphi 0, %s286
      %s288 = sphi 0, %s286
      %s289 = sphi 0, %s288
      %s303 = sphi 0, %s289
      %s307 = sphi 0, %s307
      %s309 = sphi 0, %s307
      %s310 = sphi 0, %s309
      %s324 = sphi 0, %s310
      %s328 = sphi 0, %s328
      %s330 = sphi 0, %s328
      %s331 = sphi 0, %s330
      %s345 = sphi 0, %s331
      %s353 = sphi 0, %s355
      %s356 = sphi 0, %s353
      %s357 = sphi 0, %s356
      %s373 = sphi 0, %s357
    $region4: #{tpu_custom_call.1} parent=1 // loop_header_branch
      %33 = sbr.rel (%p31) target = $region8
    $region5: #{tpu_custom_call.1} parent=1 // loop_body
      %s35 = ssub.s32 %s30, 1
      %s36 = ssub.s32 %s30, 2
      %s43 = sadd.s32 1, %s38
      %p44 = scmp.ge.s32.totalorder %s43, 1
      %s45 = scalar_select %p44, 0, %s43
      %s46 = sadd.s32 1, %s37
      %s47 = scalar_select %p44, %s46, %s37
      %p48 = scmp.ge.s32.totalorder %s47, 2
      %s49 = scalar_select %p48, 0, %s47
      %s50 = ssub.s32 %s37, %s49
      %p51 = scmp.eq.s32.totalorder %s50, 0
      %s53 = sadd.s32 %s52, 1
      %s54 = scalar_select %p51, %s52, %s53
      %p57 = pneg %p51
      %p58 = scmp.eq.s32.totalorder %s30, 1
      %p59 = por %p57, %p58
      %p60 = scmp.ne.s32.totalorder %s52, %s55
      %p61 = scmp.eq.s32.totalorder %s30, 0
      %p62 = por %p60, %p61
      %p63 = scmp.ne.s32.totalorder %s52, %s55
      %p64 = scmp.eq.s32.totalorder %s35, 1
      %p65 = por %p63, %p64
      %p66 = scmp.ne.s32.totalorder %s55, %s56
      %p67 = scmp.eq.s32.totalorder %s35, 0
      %p68 = por %p66, %p67
      %p69 = scmp.ne.s32.totalorder %s55, %s56
      %p70 = scmp.eq.s32.totalorder %s36, 1
      %p71 = por %p69, %p70
      %p73 = scmp.ne.s32.totalorder %s56, %s72
      %p74 = scmp.eq.s32.totalorder %s36, 0
      %p75 = por %p73, %p74
      %s77 = sadd.s32 %s76, 1
      %p80 = scmp.eq.s32.totalorder %s30, 1
      %p81 = scmp.ne.s32.totalorder %s76, %s78
      %p82 = scmp.eq.s32.totalorder %s30, 0
      %p83 = por %p81, %p82
      %p84 = scmp.ne.s32.totalorder %s76, %s78
      %p85 = scmp.eq.s32.totalorder %s35, 1
      %p86 = por %p84, %p85
      %p87 = scmp.ne.s32.totalorder %s78, %s79
      %p88 = scmp.eq.s32.totalorder %s35, 0
      %p89 = por %p87, %p88
      %p90 = scmp.ne.s32.totalorder %s78, %s79
      %p91 = scmp.eq.s32.totalorder %s36, 1
      %p92 = por %p90, %p91
      %p94 = scmp.ne.s32.totalorder %s79, %s93
      %p95 = scmp.eq.s32.totalorder %s36, 0
      %p96 = por %p94, %p95
      %s98 = sadd.s32 %s97, 1
      %p101 = scmp.eq.s32.totalorder %s30, 1
      %p102 = scmp.ne.s32.totalorder %s97, %s99
      %p103 = scmp.eq.s32.totalorder %s30, 0
      %p104 = por %p102, %p103
      %p105 = scmp.ne.s32.totalorder %s97, %s99
      %p106 = scmp.eq.s32.totalorder %s35, 1
      %p107 = por %p105, %p106
      %p108 = scmp.ne.s32.totalorder %s99, %s100
      %p109 = scmp.eq.s32.totalorder %s35, 0
      %p110 = por %p108, %p109
      %p111 = scmp.ne.s32.totalorder %s99, %s100
      %p112 = scmp.eq.s32.totalorder %s36, 1
      %p113 = por %p111, %p112
      %p115 = scmp.ne.s32.totalorder %s100, %s114
      %p116 = scmp.eq.s32.totalorder %s36, 0
      %p117 = por %p115, %p116
      %s119 = sadd.s32 %s118, 1
      %p122 = scmp.eq.s32.totalorder %s30, 1
      %p123 = scmp.ne.s32.totalorder %s118, %s120
      %p124 = scmp.eq.s32.totalorder %s30, 0
      %p125 = por %p123, %p124
      %p126 = scmp.ne.s32.totalorder %s118, %s120
      %p127 = scmp.eq.s32.totalorder %s35, 1
      %p128 = por %p126, %p127
      %p129 = scmp.ne.s32.totalorder %s120, %s121
      %p130 = scmp.eq.s32.totalorder %s35, 0
      %p131 = por %p129, %p130
      %p132 = scmp.ne.s32.totalorder %s120, %s121
      %p133 = scmp.eq.s32.totalorder %s36, 1
      %p134 = por %p132, %p133
      %p136 = scmp.ne.s32.totalorder %s121, %s135
      %p137 = scmp.eq.s32.totalorder %s36, 0
      %p138 = por %p136, %p137
      %s140 = sadd.s32 %s139, 1
      %p143 = scmp.eq.s32.totalorder %s30, 1
      %p144 = scmp.ne.s32.totalorder %s139, %s141
      %p145 = scmp.eq.s32.totalorder %s30, 0
      %p146 = por %p144, %p145
      %p147 = scmp.ne.s32.totalorder %s139, %s141
      %p148 = scmp.eq.s32.totalorder %s35, 1
      %p149 = por %p147, %p148
      %p150 = scmp.ne.s32.totalorder %s141, %s142
      %p151 = scmp.eq.s32.totalorder %s35, 0
      %p152 = por %p150, %p151
      %p153 = scmp.ne.s32.totalorder %s141, %s142
      %p154 = scmp.eq.s32.totalorder %s36, 1
      %p155 = por %p153, %p154
      %p157 = scmp.ne.s32.totalorder %s142, %s156
      %p158 = scmp.eq.s32.totalorder %s36, 0
      %p159 = por %p157, %p158
      %s161 = sadd.s32 %s160, 1
      %p164 = scmp.eq.s32.totalorder %s30, 1
      %p165 = scmp.ne.s32.totalorder %s160, %s162
      %p166 = scmp.eq.s32.totalorder %s30, 0
      %p167 = por %p165, %p166
      %p168 = scmp.ne.s32.totalorder %s160, %s162
      %p169 = scmp.eq.s32.totalorder %s35, 1
      %p170 = por %p168, %p169
      %p171 = scmp.ne.s32.totalorder %s162, %s163
      %p172 = scmp.eq.s32.totalorder %s35, 0
      %p173 = por %p171, %p172
      %p174 = scmp.ne.s32.totalorder %s162, %s163
      %p175 = scmp.eq.s32.totalorder %s36, 1
      %p176 = por %p174, %p175
      %p178 = scmp.ne.s32.totalorder %s163, %s177
      %p179 = scmp.eq.s32.totalorder %s36, 0
      %p180 = por %p178, %p179
      %s182 = sadd.s32 %s181, 1
      %p185 = scmp.eq.s32.totalorder %s30, 1
      %p186 = scmp.ne.s32.totalorder %s181, %s183
      %p187 = scmp.eq.s32.totalorder %s30, 0
      %p188 = por %p186, %p187
      %p189 = scmp.ne.s32.totalorder %s181, %s183
      %p190 = scmp.eq.s32.totalorder %s35, 1
      %p191 = por %p189, %p190
      %p192 = scmp.ne.s32.totalorder %s183, %s184
      %p193 = scmp.eq.s32.totalorder %s35, 0
      %p194 = por %p192, %p193
      %p195 = scmp.ne.s32.totalorder %s183, %s184
      %p196 = scmp.eq.s32.totalorder %s36, 1
      %p197 = por %p195, %p196
      %p199 = scmp.ne.s32.totalorder %s184, %s198
      %p200 = scmp.eq.s32.totalorder %s36, 0
      %p201 = por %p199, %p200
      %s203 = sadd.s32 %s202, 1
      %p206 = scmp.eq.s32.totalorder %s30, 1
      %p207 = scmp.ne.s32.totalorder %s202, %s204
      %p208 = scmp.eq.s32.totalorder %s30, 0
      %p209 = por %p207, %p208
      %p210 = scmp.ne.s32.totalorder %s202, %s204
      %p211 = scmp.eq.s32.totalorder %s35, 1
      %p212 = por %p210, %p211
      %p213 = scmp.ne.s32.totalorder %s204, %s205
      %p214 = scmp.eq.s32.totalorder %s35, 0
      %p215 = por %p213, %p214
      %p216 = scmp.ne.s32.totalorder %s204, %s205
      %p217 = scmp.eq.s32.totalorder %s36, 1
      %p218 = por %p216, %p217
      %p220 = scmp.ne.s32.totalorder %s205, %s219
      %p221 = scmp.eq.s32.totalorder %s36, 0
      %p222 = por %p220, %p221
      %s224 = sadd.s32 %s223, 1
      %p227 = scmp.eq.s32.totalorder %s30, 1
      %p228 = scmp.ne.s32.totalorder %s223, %s225
      %p229 = scmp.eq.s32.totalorder %s30, 0
      %p230 = por %p228, %p229
      %p231 = scmp.ne.s32.totalorder %s223, %s225
      %p232 = scmp.eq.s32.totalorder %s35, 1
      %p233 = por %p231, %p232
      %p234 = scmp.ne.s32.totalorder %s225, %s226
      %p235 = scmp.eq.s32.totalorder %s35, 0
      %p236 = por %p234, %p235
      %p237 = scmp.ne.s32.totalorder %s225, %s226
      %p238 = scmp.eq.s32.totalorder %s36, 1
      %p239 = por %p237, %p238
      %p241 = scmp.ne.s32.totalorder %s226, %s240
      %p242 = scmp.eq.s32.totalorder %s36, 0
      %p243 = por %p241, %p242
      %s245 = sadd.s32 %s244, 1
      %p248 = scmp.eq.s32.totalorder %s30, 1
      %p249 = scmp.ne.s32.totalorder %s244, %s246
      %p250 = scmp.eq.s32.totalorder %s30, 0
      %p251 = por %p249, %p250
      %p252 = scmp.ne.s32.totalorder %s244, %s246
      %p253 = scmp.eq.s32.totalorder %s35, 1
      %p254 = por %p252, %p253
      %p255 = scmp.ne.s32.totalorder %s246, %s247
      %p256 = scmp.eq.s32.totalorder %s35, 0
      %p257 = por %p255, %p256
      %p258 = scmp.ne.s32.totalorder %s246, %s247
      %p259 = scmp.eq.s32.totalorder %s36, 1
      %p260 = por %p258, %p259
      %p262 = scmp.ne.s32.totalorder %s247, %s261
      %p263 = scmp.eq.s32.totalorder %s36, 0
      %p264 = por %p262, %p263
      %s266 = sadd.s32 %s265, 1
      %p269 = scmp.eq.s32.totalorder %s30, 1
      %p270 = scmp.ne.s32.totalorder %s265, %s267
      %p271 = scmp.eq.s32.totalorder %s30, 0
      %p272 = por %p270, %p271
      %p273 = scmp.ne.s32.totalorder %s265, %s267
      %p274 = scmp.eq.s32.totalorder %s35, 1
      %p275 = por %p273, %p274
      %p276 = scmp.ne.s32.totalorder %s267, %s268
      %p277 = scmp.eq.s32.totalorder %s35, 0
      %p278 = por %p276, %p277
      %p279 = scmp.ne.s32.totalorder %s267, %s268
      %p280 = scmp.eq.s32.totalorder %s36, 1
      %p281 = por %p279, %p280
      %p283 = scmp.ne.s32.totalorder %s268, %s282
      %p284 = scmp.eq.s32.totalorder %s36, 0
      %p285 = por %p283, %p284
      %s287 = sadd.s32 %s286, 1
      %p290 = scmp.eq.s32.totalorder %s30, 1
      %p291 = scmp.ne.s32.totalorder %s286, %s288
      %p292 = scmp.eq.s32.totalorder %s30, 0
      %p293 = por %p291, %p292
      %p294 = scmp.ne.s32.totalorder %s286, %s288
      %p295 = scmp.eq.s32.totalorder %s35, 1
      %p296 = por %p294, %p295
      %p297 = scmp.ne.s32.totalorder %s288, %s289
      %p298 = scmp.eq.s32.totalorder %s35, 0
      %p299 = por %p297, %p298
      %p300 = scmp.ne.s32.totalorder %s288, %s289
      %p301 = scmp.eq.s32.totalorder %s36, 1
      %p302 = por %p300, %p301
      %p304 = scmp.ne.s32.totalorder %s289, %s303
      %p305 = scmp.eq.s32.totalorder %s36, 0
      %p306 = por %p304, %p305
      %s308 = sadd.s32 %s307, 1
      %p311 = scmp.eq.s32.totalorder %s30, 1
      %p312 = scmp.ne.s32.totalorder %s307, %s309
      %p313 = scmp.eq.s32.totalorder %s30, 0
      %p314 = por %p312, %p313
      %p315 = scmp.ne.s32.totalorder %s307, %s309
      %p316 = scmp.eq.s32.totalorder %s35, 1
      %p317 = por %p315, %p316
      %p318 = scmp.ne.s32.totalorder %s309, %s310
      %p319 = scmp.eq.s32.totalorder %s35, 0
      %p320 = por %p318, %p319
      %p321 = scmp.ne.s32.totalorder %s309, %s310
      %p322 = scmp.eq.s32.totalorder %s36, 1
      %p323 = por %p321, %p322
      %p325 = scmp.ne.s32.totalorder %s310, %s324
      %p326 = scmp.eq.s32.totalorder %s36, 0
      %p327 = por %p325, %p326
      %s329 = sadd.s32 %s328, 1
      %p332 = scmp.eq.s32.totalorder %s30, 1
      %p333 = scmp.ne.s32.totalorder %s328, %s330
      %p334 = scmp.eq.s32.totalorder %s30, 0
      %p335 = por %p333, %p334
      %p336 = scmp.ne.s32.totalorder %s328, %s330
      %p337 = scmp.eq.s32.totalorder %s35, 1
      %p338 = por %p336, %p337
      %p339 = scmp.ne.s32.totalorder %s330, %s331
      %p340 = scmp.eq.s32.totalorder %s35, 0
      %p341 = por %p339, %p340
      %p342 = scmp.ne.s32.totalorder %s330, %s331
      %p343 = scmp.eq.s32.totalorder %s36, 1
      %p344 = por %p342, %p343
      %p346 = scmp.ne.s32.totalorder %s331, %s345
      %p347 = scmp.eq.s32.totalorder %s36, 0
      %p348 = por %p346, %p347
      %s349 = ssub.s32 %s37, %s49
      %s350 = ssub.s32 %s38, %s45
      %s351 = sor.u32 %s349, %s350
      %p352 = scmp.eq.s32.totalorder %s351, 0
      %s354 = sadd.s32 %s353, 1
      %s355 = scalar_select %p352, %s353, %s354
      %p358 = pneg %p352
      %p359 = scmp.eq.s32.totalorder %s30, 1
      %p360 = por %p358, %p359
      %p361 = scmp.ne.s32.totalorder %s353, %s356
      %p362 = scmp.eq.s32.totalorder %s30, 0
      %p363 = por %p361, %p362
      %p364 = scmp.ne.s32.totalorder %s353, %s356
      %p365 = scmp.eq.s32.totalorder %s35, 1
      %p366 = por %p364, %p365
      %p367 = scmp.ne.s32.totalorder %s356, %s357
      %p368 = scmp.eq.s32.totalorder %s35, 0
      %p369 = por %p367, %p368
      %p370 = scmp.ne.s32.totalorder %s356, %s357
      %p371 = scmp.eq.s32.totalorder %s36, 1
      %p372 = por %p370, %p371
      %p374 = scmp.ne.s32.totalorder %s357, %s373
      %p375 = scmp.eq.s32.totalorder %s36, 0
      %p376 = por %p374, %p375
      %p377 = scmp.le.s32.totalorder 1, %s30
      %p378 = scmp.lt.s32.totalorder %s30, 3
      %p379 = pnand %p377, %p378
      %p380 = pneg %p379
      // Predicated region
      $region9: #{tpu_custom_call.1} parent=5 // pred_check
        _
      $region10: #{tpu_custom_call.1} parent=5 // pred_check_branch
        %382 = sbr.rel (%p379) target = $region12
      $region11: #{tpu_custom_call.1} parent=5 // pred_region
        %s383 = ssub.s32 %s30, 1
        // Predicated region
        $region13: #{tpu_custom_call.1} parent=11 // pred_check
          %p384 = pneg %p89
        $region14: #{tpu_custom_call.1} parent=11 // pred_check_branch
          %386 = sbr.rel (%p384) target = $region16
        $region15: #{tpu_custom_call.1} parent=11 // pred_region
          _
        $region16: #{tpu_custom_call.1} parent=11 // pred_fallthru
          _
        // Predicated region
        $region17: #{tpu_custom_call.1} parent=11 // pred_check
          %p387 = pneg %p110
        $region18: #{tpu_custom_call.1} parent=11 // pred_check_branch
          %389 = sbr.rel (%p387) target = $region20
        $region19: #{tpu_custom_call.1} parent=11 // pred_region
          %s391 = ssub.s32 32, 32
          %392 = vsyncadd [#allocation10], %s391
          %s394 = sshll.u32 [#allocation9], 4
          %s395 = int_to_ptr.vmem [resolvable:$true] %s394
          %397 = dma.hbm_to_vmem [thread:$0]  %s2, 32, %s395, [#allocation10]
        $region20: #{tpu_custom_call.1} parent=11 // pred_fallthru
          _
        // Predicated region
        $region21: #{tpu_custom_call.1} parent=11 // pred_check
          %p398 = pneg %p131
        $region22: #{tpu_custom_call.1} parent=11 // pred_check_branch
          %400 = sbr.rel (%p398) target = $region24
        $region23: #{tpu_custom_call.1} parent=11 // pred_region
          %s402 = ssub.s32 4096, 4096
          %403 = vsyncadd [#allocation10], %s402
          %s404 = sshll.u32 [#allocation11], 4
          %s405 = int_to_ptr.vmem [resolvable:$true] %s404
          %410 = dma.hbm_to_vmem [thread:$0]  %s3, 4096, %s405, [#allocation10], 64, 64, 4
        $region24: #{tpu_custom_call.1} parent=11 // pred_fallthru
          _
        // Predicated region
        $region25: #{tpu_custom_call.1} parent=11 // pred_check
          %p411 = pneg %p152
        $region26: #{tpu_custom_call.1} parent=11 // pred_check_branch
          %413 = sbr.rel (%p411) target = $region28
        $region27: #{tpu_custom_call.1} parent=11 // pred_region
          %s415 = ssub.s32 4096, 4096
          %416 = vsyncadd [#allocation13], %s415
          %s417 = sshll.u32 [#allocation12], 4
          %s418 = int_to_ptr.vmem [resolvable:$true] %s417
          %423 = dma.hbm_to_vmem [thread:$0]  %s4, 4096, %s418, [#allocation13], 64, 64, 4
        $region28: #{tpu_custom_call.1} parent=11 // pred_fallthru
          _
        // Predicated region
        $region29: #{tpu_custom_call.1} parent=11 // pred_check
          %p424 = pneg %p173
        $region30: #{tpu_custom_call.1} parent=11 // pred_check_branch
          %426 = sbr.rel (%p424) target = $region32
        $region31: #{tpu_custom_call.1} parent=11 // pred_region
          %s428 = ssub.s32 4096, 4096
          %429 = vsyncadd [#allocation13], %s428
          %s430 = sshll.u32 [#allocation14], 4
          %s431 = int_to_ptr.vmem [resolvable:$true] %s430
          %436 = dma.hbm_to_vmem [thread:$0]  %s5, 4096, %s431, [#allocation13], 64, 64, 4
        $region32: #{tpu_custom_call.1} parent=11 // pred_fallthru
          _
        // Predicated region
        $region33: #{tpu_custom_call.1} parent=11 // pred_check
          %p437 = pneg %p194
        $region34: #{tpu_custom_call.1} parent=11 // pred_check_branch
          %439 = sbr.rel (%p437) target = $region36
        $region35: #{tpu_custom_call.1} parent=11 // pred_region
          %s441 = ssub.s32 4096, 4096
          %442 = vsyncadd [#allocation16], %s441
          %s443 = sshll.u32 [#allocation15], 4
          %s444 = int_to_ptr.vmem [resolvable:$true] %s443
          %449 = dma.hbm_to_vmem [thread:$0]  %s6, 4096, %s444, [#allocation16], 128, 128, 8
        $region36: #{tpu_custom_call.1} parent=11 // pred_fallthru
          _
        // Predicated region
        $region37: #{tpu_custom_call.1} parent=11 // pred_check
          %p450 = pneg %p215
        $region38: #{tpu_custom_call.1} parent=11 // pred_check_branch
          %452 = sbr.rel (%p450) target = $region40
        $region39: #{tpu_custom_call.1} parent=11 // pred_region
          _
        $region40: #{tpu_custom_call.1} parent=11 // pred_fallthru
          _
        // Predicated region
        $region41: #{tpu_custom_call.1} parent=11 // pred_check
          %p453 = pneg %p236
        $region42: #{tpu_custom_call.1} parent=11 // pred_check_branch
          %455 = sbr.rel (%p453) target = $region44
        $region43: #{tpu_custom_call.1} parent=11 // pred_region
          _
        $region44: #{tpu_custom_call.1} parent=11 // pred_fallthru
          _
        // Predicated region
        $region45: #{tpu_custom_call.1} parent=11 // pred_check
          %p456 = pneg %p257
        $region46: #{tpu_custom_call.1} parent=11 // pred_check_branch
          %458 = sbr.rel (%p456) target = $region48
        $region47: #{tpu_custom_call.1} parent=11 // pred_region
          _
        $region48: #{tpu_custom_call.1} parent=11 // pred_fallthru
          _
        // Predicated region
        $region49: #{tpu_custom_call.1} parent=11 // pred_check
          %p459 = pneg %p278
        $region50: #{tpu_custom_call.1} parent=11 // pred_check_branch
          %461 = sbr.rel (%p459) target = $region52
        $region51: #{tpu_custom_call.1} parent=11 // pred_region
          %s463 = ssub.s32 8192, 8192
          %464 = vsyncadd [#allocation16], %s463
          %s465 = sshll.u32 [#allocation17], 4
          %s466 = int_to_ptr.vmem [resolvable:$true] %s465
          %471 = dma.hbm_to_vmem [thread:$0]  %s10, 8192, %s466, [#allocation16], 256, 256, 16
        $region52: #{tpu_custom_call.1} parent=11 // pred_fallthru
          _
        // Predicated region
        $region53: #{tpu_custom_call.1} parent=11 // pred_check
          %p472 = pneg %p299
        $region54: #{tpu_custom_call.1} parent=11 // pred_check_branch
          %474 = sbr.rel (%p472) target = $region56
        $region55: #{tpu_custom_call.1} parent=11 // pred_region
          _
        $region56: #{tpu_custom_call.1} parent=11 // pred_fallthru
          _
        // Predicated region
        $region57: #{tpu_custom_call.1} parent=11 // pred_check
          %p475 = pneg %p320
        $region58: #{tpu_custom_call.1} parent=11 // pred_check_branch
          %477 = sbr.rel (%p475) target = $region60
        $region59: #{tpu_custom_call.1} parent=11 // pred_region
          %s479 = ssub.s32 8192, 8192
          %480 = vsyncadd [#allocation19], %s479
          %s481 = sshll.u32 [#allocation18], 4
          %s482 = int_to_ptr.vmem [resolvable:$true] %s481
          %487 = dma.hbm_to_vmem [thread:$0]  %s12, 8192, %s482, [#allocation19], 128, 128, 8
        $region60: #{tpu_custom_call.1} parent=11 // pred_fallthru
          _
        // Predicated region
        $region61: #{tpu_custom_call.1} parent=11 // pred_check
          %p488 = pneg %p341
        $region62: #{tpu_custom_call.1} parent=11 // pred_check_branch
          %490 = sbr.rel (%p488) target = $region64
        $region63: #{tpu_custom_call.1} parent=11 // pred_region
          _
        $region64: #{tpu_custom_call.1} parent=11 // pred_fallthru
          _
      $region12: #{tpu_custom_call.1} parent=5 // pred_fallthru
        _
      %p491 = scmp.lt.s32.totalorder %s30, 2
      // Predicated region
      $region65: #{tpu_custom_call.1} parent=5 // pred_check
        %p492 = pneg %p491
      $region66: #{tpu_custom_call.1} parent=5 // pred_check_branch
        %494 = sbr.rel (%p492) target = $region68
      $region67: #{tpu_custom_call.1} parent=5 // pred_region
        // Predicated region
        $region69: #{tpu_custom_call.1} parent=67 // pred_check
          %p495 = pneg %p62
        $region70: #{tpu_custom_call.1} parent=67 // pred_check_branch
          %497 = sbr.rel (%p495) target = $region72
        $region71: #{tpu_custom_call.1} parent=67 // pred_region
          %s498 = sand.u32 %s52, 1
          %s499 = scalar_lea.sflag [#allocation7], %s498
          %s500 = sand.u32 %s52, 1
          %s501 = smul.addr %s500, 128
          %s502 = scalar_lea.vmem [#allocation6], %s501
          %s504 = ssub.s32 2048, 2048
          %505 = vsyncadd %s499, %s504
          %s506 = smul.addr %s37, 16
          %s507 = smul.addr %s506, 128
          %s508 = scalar_lea.hbm %s0, %s507
          %s509 = sshll.u32 %s502, 4
          %s510 = int_to_ptr.vmem [resolvable:$true] %s509
          %515 = dma.hbm_to_vmem [thread:$0]  %s508, 2048, %s510, %s499, 256, 256, 16
        $region72: #{tpu_custom_call.1} parent=67 // pred_fallthru
          _
      $region68: #{tpu_custom_call.1} parent=5 // pred_fallthru
        _
      %p516 = scmp.le.s32.totalorder 1, %s30
      %p517 = scmp.lt.s32.totalorder %s30, 3
      %p518 = pnand %p516, %p517
      %p519 = pneg %p518
      // Predicated region
      $region73: #{tpu_custom_call.1} parent=5 // pred_check
        _
      $region74: #{tpu_custom_call.1} parent=5 // pred_check_branch
        %521 = sbr.rel (%p518) target = $region76
      $region75: #{tpu_custom_call.1} parent=5 // pred_region
        %s522 = ssub.s32 %s30, 1
        %s523 = sand.u32 %s55, 1
        %s524 = scalar_lea.sflag [#allocation7], %s523
        %s525 = sand.u32 %s55, 1
        %s526 = smul.addr %s525, 128
        %s527 = scalar_lea.vmem [#allocation6], %s526
        // Predicated region
        $region77: #{tpu_custom_call.1} parent=75 // pred_check
          %p528 = pneg %p68
        $region78: #{tpu_custom_call.1} parent=75 // pred_check_branch
          %530 = sbr.rel (%p528) target = $region80
        $region79: #{tpu_custom_call.1} parent=75 // pred_region
          %531 = dma.done %s524, 2048
        $region80: #{tpu_custom_call.1} parent=75 // pred_fallthru
          _
        // Predicated region
        $region81: #{tpu_custom_call.1} parent=75 // pred_check
          %p532 = pneg %p110
        $region82: #{tpu_custom_call.1} parent=75 // pred_check_branch
          %534 = sbr.rel (%p532) target = $region84
        $region83: #{tpu_custom_call.1} parent=75 // pred_region
          %535 = dma.done [#allocation10], 32
        $region84: #{tpu_custom_call.1} parent=75 // pred_fallthru
          _
        // Predicated region
        $region85: #{tpu_custom_call.1} parent=75 // pred_check
          %p536 = pneg %p131
        $region86: #{tpu_custom_call.1} parent=75 // pred_check_branch
          %538 = sbr.rel (%p536) target = $region88
        $region87: #{tpu_custom_call.1} parent=75 // pred_region
          %539 = dma.done [#allocation10], 4096
        $region88: #{tpu_custom_call.1} parent=75 // pred_fallthru
          _
        // Predicated region
        $region89: #{tpu_custom_call.1} parent=75 // pred_check
          %p540 = pneg %p152
        $region90: #{tpu_custom_call.1} parent=75 // pred_check_branch
          %542 = sbr.rel (%p540) target = $region92
        $region91: #{tpu_custom_call.1} parent=75 // pred_region
          %543 = dma.done [#allocation13], 4096
        $region92: #{tpu_custom_call.1} parent=75 // pred_fallthru
          _
        // Predicated region
        $region93: #{tpu_custom_call.1} parent=75 // pred_check
          %p544 = pneg %p173
        $region94: #{tpu_custom_call.1} parent=75 // pred_check_branch
          %546 = sbr.rel (%p544) target = $region96
        $region95: #{tpu_custom_call.1} parent=75 // pred_region
          %547 = dma.done [#allocation13], 4096
        $region96: #{tpu_custom_call.1} parent=75 // pred_fallthru
          _
        // Predicated region
        $region97: #{tpu_custom_call.1} parent=75 // pred_check
          %p548 = pneg %p194
        $region98: #{tpu_custom_call.1} parent=75 // pred_check_branch
          %550 = sbr.rel (%p548) target = $region100
        $region99: #{tpu_custom_call.1} parent=75 // pred_region
          %551 = dma.done [#allocation16], 4096
        $region100: #{tpu_custom_call.1} parent=75 // pred_fallthru
          _
        // Predicated region
        $region101: #{tpu_custom_call.1} parent=75 // pred_check
          %p552 = pneg %p278
        $region102: #{tpu_custom_call.1} parent=75 // pred_check_branch
          %554 = sbr.rel (%p552) target = $region104
        $region103: #{tpu_custom_call.1} parent=75 // pred_region
          %555 = dma.done [#allocation16], 8192
        $region104: #{tpu_custom_call.1} parent=75 // pred_fallthru
          _
        // Predicated region
        $region105: #{tpu_custom_call.1} parent=75 // pred_check
          %p556 = pneg %p320
        $region106: #{tpu_custom_call.1} parent=75 // pred_check_branch
          %558 = sbr.rel (%p556) target = $region108
        $region107: #{tpu_custom_call.1} parent=75 // pred_region
          %559 = dma.done [#allocation19], 8192
        $region108: #{tpu_custom_call.1} parent=75 // pred_fallthru
          _
        %s560 = sand.u32 %s55, 1
        %s561 = scalar_lea.sflag [#allocation7], %s560
        %s562 = sand.u32 %s55, 1
        %s563 = smul.addr %s562, 128
        %s564 = scalar_lea.vmem [#allocation6], %s563
        %p565 = pneg %p68
        %p566 = pneg %p65
        %p567 = pneg %p89
        %p568 = pneg %p86
        %p569 = pneg %p110
        %p570 = pneg %p107
        %p571 = pneg %p131
        %p572 = pneg %p128
        %p573 = pneg %p152
        %p574 = pneg %p149
        %p575 = pneg %p173
        %p576 = pneg %p170
        %p577 = pneg %p194
        %p578 = pneg %p191
        %p579 = pneg %p215
        %p580 = pneg %p212
        %p581 = pneg %p236
        %p582 = pneg %p233
        %p583 = pneg %p257
        %p584 = pneg %p254
        %p585 = pneg %p278
        %p586 = pneg %p275
        %p587 = pneg %p299
        %p588 = pneg %p296
        %p589 = pneg %p320
        %p590 = pneg %p317
        %p591 = pneg %p341
        %p592 = pneg %p338
        %p593 = pneg %p369
        %p594 = pneg %p366
        %s595 = sand.u32 %s356, 1
        %s596 = scalar_lea.sflag [#allocation8], %s595
        %s597 = sand.u32 %s356, 1
        %s598 = smul.addr %s597, 128
        %s599 = scalar_lea.vmem [#allocation20], %s598
        %s600 = smul.u32 8, %s40
        %p602 = scmp.eq.s32.totalorder %s40, 0
        // Predicated region
        $region109: #{tpu_custom_call.1} parent=75 // pred_check
          %p603 = pneg %p602
        $region110: #{tpu_custom_call.1} parent=75 // pred_check_branch
          %605 = sbr.rel (%p603) target = $region112
        $region111: #{tpu_custom_call.1} parent=75 // pred_region
          %v606 = vld [vmem:[%s527] sm:$0xff]
          %v607 = vld [vmem:[%s527 + $0x8] sm:$0xff]
          %v608 = vld [vmem:[%s527 + $0x10] sm:$0xff]
          %v609 = vld [vmem:[%s527 + $0x18] sm:$0xff]
          %v610 = vld [vmem:[%s527 + $0x20] sm:$0xff]
          %v611 = vld [vmem:[%s527 + $0x28] sm:$0xff]
          %v612 = vld [vmem:[%s527 + $0x30] sm:$0xff]
          %v613 = vld [vmem:[%s527 + $0x38] sm:$0xff]
          %v614 = vld [vmem:[%s527 + $0x40] sm:$0xff]
          %v615 = vld [vmem:[%s527 + $0x48] sm:$0xff]
          %v616 = vld [vmem:[%s527 + $0x50] sm:$0xff]
          %v617 = vld [vmem:[%s527 + $0x58] sm:$0xff]
          %v618 = vld [vmem:[%s527 + $0x60] sm:$0xff]
          %v619 = vld [vmem:[%s527 + $0x68] sm:$0xff]
          %v620 = vld [vmem:[%s527 + $0x70] sm:$0xff]
          %v621 = vld [vmem:[%s527 + $0x78] sm:$0xff]
          %v622 = vld [vmem:[%s1] sm:$0x3]
          %v623 = vld [vmem:[#allocation9] sm:$0x3]
          %v624 = vadd.f32 %v606, %v607
          %625 = vadd.xlane.f32.xlu0 %v624
          %v626 = vpop.xlane.xlu0 %625
          %v627 = vadd.f32 %v608, %v609
          %628 = vadd.xlane.f32.xlu0 %v627
          %v629 = vpop.xlane.xlu0 %628
          %v630 = vadd.f32 %v610, %v611
          %631 = vadd.xlane.f32.xlu0 %v630
          %v632 = vpop.xlane.xlu0 %631
          %v633 = vadd.f32 %v612, %v613
          %634 = vadd.xlane.f32.xlu0 %v633
          %v635 = vpop.xlane.xlu0 %634
          %v636 = vadd.f32 %v614, %v615
          %637 = vadd.xlane.f32.xlu0 %v636
          %v638 = vpop.xlane.xlu0 %637
          %v639 = vadd.f32 %v616, %v617
          %640 = vadd.xlane.f32.xlu0 %v639
          %v641 = vpop.xlane.xlu0 %640
          %v642 = vadd.f32 %v618, %v619
          %643 = vadd.xlane.f32.xlu0 %v642
          %v644 = vpop.xlane.xlu0 %643
          %v645 = vadd.f32 %v620, %v621
          %646 = vadd.xlane.f32.xlu0 %v645
          %v647 = vpop.xlane.xlu0 %646
          %v648 = vrcp.pop 256.0
          %v649 = vmul.f32 %v626, %v648
          %v650 = vmul.f32 %v629, %v648
          %v651 = vmul.f32 %v632, %v648
          %v652 = vmul.f32 %v635, %v648
          %v653 = vmul.f32 %v638, %v648
          %v654 = vmul.f32 %v641, %v648
          %v655 = vmul.f32 %v644, %v648
          %v656 = vmul.f32 %v647, %v648
          %v657 = vsub.f32 %v606, %v649
          %v658 = vsub.f32 %v607, %v649
          %v659 = vsub.f32 %v608, %v650
          %v660 = vsub.f32 %v609, %v650
          %v661 = vsub.f32 %v610, %v651
          %v662 = vsub.f32 %v611, %v651
          %v663 = vsub.f32 %v612, %v652
          %v664 = vsub.f32 %v613, %v652
          %v665 = vsub.f32 %v614, %v653
          %v666 = vsub.f32 %v615, %v653
          %v667 = vsub.f32 %v616, %v654
          %v668 = vsub.f32 %v617, %v654
          %v669 = vsub.f32 %v618, %v655
          %v670 = vsub.f32 %v619, %v655
          %v671 = vsub.f32 %v620, %v656
          %v672 = vsub.f32 %v621, %v656
          %v673 = vmul.f32 %v657, %v657
          %v674 = vmul.f32 %v658, %v658
          %v675 = vmul.f32 %v659, %v659
          %v676 = vmul.f32 %v660, %v660
          %v677 = vmul.f32 %v661, %v661
          %v678 = vmul.f32 %v662, %v662
          %v679 = vmul.f32 %v663, %v663
          %v680 = vmul.f32 %v664, %v664
          %v681 = vmul.f32 %v665, %v665
          %v682 = vmul.f32 %v666, %v666
          %v683 = vmul.f32 %v667, %v667
          %v684 = vmul.f32 %v668, %v668
          %v685 = vmul.f32 %v669, %v669
          %v686 = vmul.f32 %v670, %v670
          %v687 = vmul.f32 %v671, %v671
          %v688 = vmul.f32 %v672, %v672
          %v689 = vadd.f32 %v673, %v674
          %690 = vadd.xlane.f32.xlu0 %v689
          %v691 = vpop.xlane.xlu0 %690
          %v692 = vadd.f32 %v675, %v676
          %693 = vadd.xlane.f32.xlu0 %v692
          %v694 = vpop.xlane.xlu0 %693
          %v695 = vadd.f32 %v677, %v678
          %696 = vadd.xlane.f32.xlu0 %v695
          %v697 = vpop.xlane.xlu0 %696
          %v698 = vadd.f32 %v679, %v680
          %699 = vadd.xlane.f32.xlu0 %v698
          %v700 = vpop.xlane.xlu0 %699
          %v701 = vadd.f32 %v681, %v682
          %702 = vadd.xlane.f32.xlu0 %v701
          %v703 = vpop.xlane.xlu0 %702
          %v704 = vadd.f32 %v683, %v684
          %705 = vadd.xlane.f32.xlu0 %v704
          %v706 = vpop.xlane.xlu0 %705
          %v707 = vadd.f32 %v685, %v686
          %708 = vadd.xlane.f32.xlu0 %v707
          %v709 = vpop.xlane.xlu0 %708
          %v710 = vadd.f32 %v687, %v688
          %711 = vadd.xlane.f32.xlu0 %v710
          %v712 = vpop.xlane.xlu0 %711
          %v713 = vmul.f32 %v691, %v648
          %v714 = vmul.f32 %v694, %v648
          %v715 = vmul.f32 %v697, %v648
          %v716 = vmul.f32 %v700, %v648
          %v717 = vmul.f32 %v703, %v648
          %v718 = vmul.f32 %v706, %v648
          %v719 = vmul.f32 %v709, %v648
          %v720 = vmul.f32 %v712, %v648
          %v721 = vadd.f32 %v713, 1e-05
          %v722 = vadd.f32 %v714, 1e-05
          %v723 = vadd.f32 %v715, 1e-05
          %v724 = vadd.f32 %v716, 1e-05
          %v725 = vadd.f32 %v717, 1e-05
          %v726 = vadd.f32 %v718, 1e-05
          %v727 = vadd.f32 %v719, 1e-05
          %v728 = vadd.f32 %v720, 1e-05
          %v729 = vrsqrt.pop %v721
          %v730 = vrsqrt.pop %v722
          %v731 = vrsqrt.pop %v723
          %v732 = vrsqrt.pop %v724
          %v733 = vrsqrt.pop %v725
          %v734 = vrsqrt.pop %v726
          %v735 = vrsqrt.pop %v727
          %v736 = vrsqrt.pop %v728
          %v737 = vmul.f32 %v657, %v729
          %v738 = vmul.f32 %v658, %v729
          %v739 = vmul.f32 %v659, %v730
          %v740 = vmul.f32 %v660, %v730
          %v741 = vmul.f32 %v661, %v731
          %v742 = vmul.f32 %v662, %v731
          %v743 = vmul.f32 %v663, %v732
          %v744 = vmul.f32 %v664, %v732
          %v745 = vmul.f32 %v665, %v733
          %v746 = vmul.f32 %v666, %v733
          %v747 = vmul.f32 %v667, %v734
          %v748 = vmul.f32 %v668, %v734
          %v749 = vmul.f32 %v669, %v735
          %v750 = vmul.f32 %v670, %v735
          %v751 = vmul.f32 %v671, %v736
          %v752 = vmul.f32 %v672, %v736
          %v754 = vlaneseq
          %v755 = vshrl.u32 %v754, 7
          %v756 = vsub.s32 0, %v755
          %v757 = vrot.slane %v622, %v756
          %v758 = vlaneseq
          %v759 = vshrl.u32 %v758, 7
          %v760 = vsub.s32 1, %v759
          %v761 = vrot.slane %v622, %v760
          %v764 = vmul.f32 %v737, %v757
          %v765 = vmul.f32 %v738, %v761
          %v766 = vmul.f32 %v739, %v757
          %v767 = vmul.f32 %v740, %v761
          %v768 = vmul.f32 %v741, %v757
          %v769 = vmul.f32 %v742, %v761
          %v770 = vmul.f32 %v743, %v757
          %v771 = vmul.f32 %v744, %v761
          %v772 = vmul.f32 %v745, %v757
          %v773 = vmul.f32 %v746, %v761
          %v774 = vmul.f32 %v747, %v757
          %v775 = vmul.f32 %v748, %v761
          %v776 = vmul.f32 %v749, %v757
          %v777 = vmul.f32 %v750, %v761
          %v778 = vmul.f32 %v751, %v757
          %v779 = vmul.f32 %v752, %v761
          %v781 = vlaneseq
          %v782 = vshrl.u32 %v781, 7
          %v783 = vsub.s32 0, %v782
          %v784 = vrot.slane %v623, %v783
          %v785 = vlaneseq
          %v786 = vshrl.u32 %v785, 7
          %v787 = vsub.s32 1, %v786
          %v788 = vrot.slane %v623, %v787
          %v791 = vadd.f32 %v764, %v784
          %v792 = vadd.f32 %v765, %v788
          %v793 = vadd.f32 %v766, %v784
          %v794 = vadd.f32 %v767, %v788
          %v795 = vadd.f32 %v768, %v784
          %v796 = vadd.f32 %v769, %v788
          %v797 = vadd.f32 %v770, %v784
          %v798 = vadd.f32 %v771, %v788
          %v799 = vadd.f32 %v772, %v784
          %v800 = vadd.f32 %v773, %v788
          %v801 = vadd.f32 %v774, %v784
          %v802 = vadd.f32 %v775, %v788
          %v803 = vadd.f32 %v776, %v784
          %v804 = vadd.f32 %v777, %v788
          %v805 = vadd.f32 %v778, %v784
          %v806 = vadd.f32 %v779, %v788
          %v807 = vpack.c.bf16 %v793, %v791
          %v808 = vpack.c.bf16 %v794, %v792
          %v809 = vpack.c.bf16 %v797, %v795
          %v810 = vpack.c.bf16 %v798, %v796
          %v811 = vpack.c.bf16 %v801, %v799
          %v812 = vpack.c.bf16 %v802, %v800
          %v813 = vpack.c.bf16 %v805, %v803
          %v814 = vpack.c.bf16 %v806, %v804
          %v815 = vld [vmem:[#allocation11] sm:$0xf]
          %v816 = vld [vmem:[#allocation11 + $0x4] sm:$0xf]
          %v817 = vld [vmem:[#allocation11 + $0x8] sm:$0xf]
          %v818 = vld [vmem:[#allocation11 + $0xc] sm:$0xf]
          %v819 = vld [vmem:[#allocation11 + $0x10] sm:$0xf]
          %v820 = vld [vmem:[#allocation11 + $0x14] sm:$0xf]
          %v821 = vld [vmem:[#allocation11 + $0x18] sm:$0xf]
          %v822 = vld [vmem:[#allocation11 + $0x1c] sm:$0xf]
          %v823 = vld [vmem:[#allocation11 + $0x20] sm:$0xf]
          %v824 = vld [vmem:[#allocation11 + $0x24] sm:$0xf]
          %v825 = vld [vmem:[#allocation11 + $0x28] sm:$0xf]
          %v826 = vld [vmem:[#allocation11 + $0x2c] sm:$0xf]
          %v827 = vld [vmem:[#allocation11 + $0x30] sm:$0xf]
          %v828 = vld [vmem:[#allocation11 + $0x34] sm:$0xf]
          %v829 = vld [vmem:[#allocation11 + $0x38] sm:$0xf]
          %v830 = vld [vmem:[#allocation11 + $0x3c] sm:$0xf]
          %v831 = vld [vmem:[#allocation11 + $0x40] sm:$0xf]
          %v832 = vld [vmem:[#allocation11 + $0x44] sm:$0xf]
          %v833 = vld [vmem:[#allocation11 + $0x48] sm:$0xf]
          %v834 = vld [vmem:[#allocation11 + $0x4c] sm:$0xf]
          %v835 = vld [vmem:[#allocation11 + $0x50] sm:$0xf]
          %v836 = vld [vmem:[#allocation11 + $0x54] sm:$0xf]
          %v837 = vld [vmem:[#allocation11 + $0x58] sm:$0xf]
          %v838 = vld [vmem:[#allocation11 + $0x5c] sm:$0xf]
          %v839 = vld [vmem:[#allocation11 + $0x60] sm:$0xf]
          %v840 = vld [vmem:[#allocation11 + $0x64] sm:$0xf]
          %v841 = vld [vmem:[#allocation11 + $0x68] sm:$0xf]
          %v842 = vld [vmem:[#allocation11 + $0x6c] sm:$0xf]
          %v843 = vld [vmem:[#allocation11 + $0x70] sm:$0xf]
          %v844 = vld [vmem:[#allocation11 + $0x74] sm:$0xf]
          %v845 = vld [vmem:[#allocation11 + $0x78] sm:$0xf]
          %v846 = vld [vmem:[#allocation11 + $0x7c] sm:$0xf]
          %v879 = vunpack.c.l.b16 %v815
          %v880 = vunpack.c.l.b16 %v816
          %v881 = vunpack.c.l.b16 %v817
          %v882 = vunpack.c.l.b16 %v818
          %v883 = vunpack.c.l.b16 %v819
          %v884 = vunpack.c.l.b16 %v820
          %v885 = vunpack.c.l.b16 %v821
          %v886 = vunpack.c.l.b16 %v822
          %v887 = vunpack.c.l.b16 %v823
          %v888 = vunpack.c.l.b16 %v824
          %v889 = vunpack.c.l.b16 %v825
          %v890 = vunpack.c.l.b16 %v826
          %v891 = vunpack.c.l.b16 %v827
          %v892 = vunpack.c.l.b16 %v828
          %v893 = vunpack.c.l.b16 %v829
          %v894 = vunpack.c.l.b16 %v830
          %v895 = vunpack.c.l.b16 %v831
          %v896 = vunpack.c.l.b16 %v832
          %v897 = vunpack.c.l.b16 %v833
          %v898 = vunpack.c.l.b16 %v834
          %v899 = vunpack.c.l.b16 %v835
          %v900 = vunpack.c.l.b16 %v836
          %v901 = vunpack.c.l.b16 %v837
          %v902 = vunpack.c.l.b16 %v838
          %v903 = vunpack.c.l.b16 %v839
          %v904 = vunpack.c.l.b16 %v840
          %v905 = vunpack.c.l.b16 %v841
          %v906 = vunpack.c.l.b16 %v842
          %v907 = vunpack.c.l.b16 %v843
          %v908 = vunpack.c.l.b16 %v844
          %v909 = vunpack.c.l.b16 %v845
          %v910 = vunpack.c.l.b16 %v846
          %v911 = vpack.c.b16 %v880, %v879
          %v912 = vpack.c.b16 %v882, %v881
          %v913 = vpack.c.b16 %v884, %v883
          %v914 = vpack.c.b16 %v886, %v885
          %v915 = vpack.c.b16 %v888, %v887
          %v916 = vpack.c.b16 %v890, %v889
          %v917 = vpack.c.b16 %v892, %v891
          %v918 = vpack.c.b16 %v894, %v893
          %v919 = vpack.c.b16 %v896, %v895
          %v920 = vpack.c.b16 %v898, %v897
          %v921 = vpack.c.b16 %v900, %v899
          %v922 = vpack.c.b16 %v902, %v901
          %v923 = vpack.c.b16 %v904, %v903
          %v924 = vpack.c.b16 %v906, %v905
          %v925 = vpack.c.b16 %v908, %v907
          %v926 = vpack.c.b16 %v910, %v909
          %943 = vmatprep.subr.bf16.mxu0 0
          %944 = vmatpush1.bf16.msra.mxu0 %v911
          %945 = vmatprep.subr.bf16.mxu0 0
          %946 = vmatpush1.bf16.msra.mxu0 %v912
          %947 = vmatprep.subr.bf16.mxu0 0
          %948 = vmatpush1.bf16.msra.mxu0 %v913
          %949 = vmatprep.subr.bf16.mxu0 0
          %950 = vmatpush1.bf16.msra.mxu0 %v914
          %951 = vmatprep.subr.bf16.mxu0 0
          %952 = vmatpush1.bf16.msra.mxu0 %v915
          %953 = vmatprep.subr.bf16.mxu0 0
          %954 = vmatpush1.bf16.msra.mxu0 %v916
          %955 = vmatprep.subr.bf16.mxu0 0
          %956 = vmatpush1.bf16.msra.mxu0 %v917
          %957 = vmatprep.subr.bf16.mxu0 0
          %958 = vmatpush1.bf16.msra.mxu0 %v918
          %959 = vmatprep.subr.bf16.mxu0 0
          %960 = vmatpush1.bf16.msra.mxu0 %v919
          %961 = vmatprep.subr.bf16.mxu0 0
          %962 = vmatpush1.bf16.msra.mxu0 %v920
          %963 = vmatprep.subr.bf16.mxu0 0
          %964 = vmatpush1.bf16.msra.mxu0 %v921
          %965 = vmatprep.subr.bf16.mxu0 0
          %966 = vmatpush1.bf16.msra.mxu0 %v922
          %967 = vmatprep.subr.bf16.mxu0 0
          %968 = vmatpush1.bf16.msra.mxu0 %v923
          %969 = vmatprep.subr.bf16.mxu0 0
          %970 = vmatpush1.bf16.msra.mxu0 %v924
          %971 = vmatprep.subr.bf16.mxu0 0
          %972 = vmatpush1.bf16.msra.mxu0 %v925
          %973 = vmatprep.subr.bf16.mxu0 0
          %974 = vmatpush1.bf16.msra.mxu0 %v926
          %975 = vmatprep.mubr.bf16.mxu0 %v808
          %976 = vmatmul.mubr.bf16.gmra.mrb[0].mxu0 %v807
          %v977 = vpop.f32.mrb[0].mxu0
          %v978 = vadd.f32 0.0, %v977
          %v979 = vpop.f32.mrb[0].mxu0
          %v980 = vpop.f32.mrb[0].mxu0
          %v981 = vadd.f32 0.0, %v980
          %v982 = vpop.f32.mrb[0].mxu0
          %983 = vmatprep.mubr.bf16.mxu0 %v810
          %984 = vmatmul.mubr.bf16.gmra.mrb[0].mxu0 %v809
          %v985 = vpop.f32.mrb[0].mxu0
          %v986 = vadd.f32 0.0, %v985
          %v987 = vpop.f32.mrb[0].mxu0
          %v988 = vpop.f32.mrb[0].mxu0
          %v989 = vadd.f32 0.0, %v988
          %v990 = vpop.f32.mrb[0].mxu0
          %991 = vmatprep.mubr.bf16.mxu0 %v812
          %992 = vmatmul.mubr.bf16.gmra.mrb[0].mxu0 %v811
          %v993 = vpop.f32.mrb[0].mxu0
          %v994 = vadd.f32 0.0, %v993
          %v995 = vpop.f32.mrb[0].mxu0
          %v996 = vpop.f32.mrb[0].mxu0
          %v997 = vadd.f32 0.0, %v996
          %v998 = vpop.f32.mrb[0].mxu0
          %999 = vmatprep.mubr.bf16.mxu0 %v814
          %1000 = vmatmul.mubr.bf16.gmra.mrb[0].mxu0 %v813
          %v1001 = vpop.f32.mrb[0].mxu0
          %v1002 = vadd.f32 0.0, %v1001
          %v1003 = vpop.f32.mrb[0].mxu0
          %v1004 = vpop.f32.mrb[0].mxu0
          %v1005 = vadd.f32 0.0, %v1004
          %v1006 = vpop.f32.mrb[0].mxu0
          %1007 = vdwg.mxu0
          %v1008 = vmul.f32 %v978, 0.088388346
          %v1009 = vmul.f32 %v981, 0.088388346
          %v1010 = vmul.f32 %v986, 0.088388346
          %v1011 = vmul.f32 %v989, 0.088388346
          %v1012 = vmul.f32 %v994, 0.088388346
          %v1013 = vmul.f32 %v997, 0.088388346
          %v1014 = vmul.f32 %v1002, 0.088388346
          %v1015 = vmul.f32 %v1005, 0.088388346
          %v1016 = vpack.c.bf16 %v1009, %v1008
          %v1017 = vpack.c.bf16 %v1011, %v1010
          %v1018 = vpack.c.bf16 %v1013, %v1012
          %v1019 = vpack.c.bf16 %v1015, %v1014
          %1020 = vst [vmem:[#allocation2] sm:$0xff] %v1016
          %1021 = vst [vmem:[#allocation2 + $0x8] sm:$0xff] %v1017
          %1022 = vst [vmem:[#allocation2 + $0x10] sm:$0xff] %v1018
          %1023 = vst [vmem:[#allocation2 + $0x18] sm:$0xff] %v1019
          %v1024 = vld [vmem:[#allocation12] sm:$0xf]
          %v1025 = vld [vmem:[#allocation12 + $0x4] sm:$0xf]
          %v1026 = vld [vmem:[#allocation12 + $0x8] sm:$0xf]
          %v1027 = vld [vmem:[#allocation12 + $0xc] sm:$0xf]
          %v1028 = vld [vmem:[#allocation12 + $0x10] sm:$0xf]
          %v1029 = vld [vmem:[#allocation12 + $0x14] sm:$0xf]
          %v1030 = vld [vmem:[#allocation12 + $0x18] sm:$0xf]
          %v1031 = vld [vmem:[#allocation12 + $0x1c] sm:$0xf]
          %v1032 = vld [vmem:[#allocation12 + $0x20] sm:$0xf]
          %v1033 = vld [vmem:[#allocation12 + $0x24] sm:$0xf]
          %v1034 = vld [vmem:[#allocation12 + $0x28] sm:$0xf]
          %v1035 = vld [vmem:[#allocation12 + $0x2c] sm:$0xf]
          %v1036 = vld [vmem:[#allocation12 + $0x30] sm:$0xf]
          %v1037 = vld [vmem:[#allocation12 + $0x34] sm:$0xf]
          %v1038 = vld [vmem:[#allocation12 + $0x38] sm:$0xf]
          %v1039 = vld [vmem:[#allocation12 + $0x3c] sm:$0xf]
          %v1040 = vld [vmem:[#allocation12 + $0x40] sm:$0xf]
          %v1041 = vld [vmem:[#allocation12 + $0x44] sm:$0xf]
          %v1042 = vld [vmem:[#allocation12 + $0x48] sm:$0xf]
          %v1043 = vld [vmem:[#allocation12 + $0x4c] sm:$0xf]
          %v1044 = vld [vmem:[#allocation12 + $0x50] sm:$0xf]
          %v1045 = vld [vmem:[#allocation12 + $0x54] sm:$0xf]
          %v1046 = vld [vmem:[#allocation12 + $0x58] sm:$0xf]
          %v1047 = vld [vmem:[#allocation12 + $0x5c] sm:$0xf]
          %v1048 = vld [vmem:[#allocation12 + $0x60] sm:$0xf]
          %v1049 = vld [vmem:[#allocation12 + $0x64] sm:$0xf]
          %v1050 = vld [vmem:[#allocation12 + $0x68] sm:$0xf]
          %v1051 = vld [vmem:[#allocation12 + $0x6c] sm:$0xf]
          %v1052 = vld [vmem:[#allocation12 + $0x70] sm:$0xf]
          %v1053 = vld [vmem:[#allocation12 + $0x74] sm:$0xf]
          %v1054 = vld [vmem:[#allocation12 + $0x78] sm:$0xf]
          %v1055 = vld [vmem:[#allocation12 + $0x7c] sm:$0xf]
          %v1088 = vunpack.c.l.b16 %v1024
          %v1089 = vunpack.c.l.b16 %v1025
          %v1090 = vunpack.c.l.b16 %v1026
          %v1091 = vunpack.c.l.b16 %v1027
          %v1092 = vunpack.c.l.b16 %v1028
          %v1093 = vunpack.c.l.b16 %v1029
          %v1094 = vunpack.c.l.b16 %v1030
          %v1095 = vunpack.c.l.b16 %v1031
          %v1096 = vunpack.c.l.b16 %v1032
          %v1097 = vunpack.c.l.b16 %v1033
          %v1098 = vunpack.c.l.b16 %v1034
          %v1099 = vunpack.c.l.b16 %v1035
          %v1100 = vunpack.c.l.b16 %v1036
          %v1101 = vunpack.c.l.b16 %v1037
          %v1102 = vunpack.c.l.b16 %v1038
          %v1103 = vunpack.c.l.b16 %v1039
          %v1104 = vunpack.c.l.b16 %v1040
          %v1105 = vunpack.c.l.b16 %v1041
          %v1106 = vunpack.c.l.b16 %v1042
          %v1107 = vunpack.c.l.b16 %v1043
          %v1108 = vunpack.c.l.b16 %v1044
          %v1109 = vunpack.c.l.b16 %v1045
          %v1110 = vunpack.c.l.b16 %v1046
          %v1111 = vunpack.c.l.b16 %v1047
          %v1112 = vunpack.c.l.b16 %v1048
          %v1113 = vunpack.c.l.b16 %v1049
          %v1114 = vunpack.c.l.b16 %v1050
          %v1115 = vunpack.c.l.b16 %v1051
          %v1116 = vunpack.c.l.b16 %v1052
          %v1117 = vunpack.c.l.b16 %v1053
          %v1118 = vunpack.c.l.b16 %v1054
          %v1119 = vunpack.c.l.b16 %v1055
          %v1120 = vpack.c.b16 %v1089, %v1088
          %v1121 = vpack.c.b16 %v1091, %v1090
          %v1122 = vpack.c.b16 %v1093, %v1092
          %v1123 = vpack.c.b16 %v1095, %v1094
          %v1124 = vpack.c.b16 %v1097, %v1096
          %v1125 = vpack.c.b16 %v1099, %v1098
          %v1126 = vpack.c.b16 %v1101, %v1100
          %v1127 = vpack.c.b16 %v1103, %v1102
          %v1128 = vpack.c.b16 %v1105, %v1104
          %v1129 = vpack.c.b16 %v1107, %v1106
          %v1130 = vpack.c.b16 %v1109, %v1108
          %v1131 = vpack.c.b16 %v1111, %v1110
          %v1132 = vpack.c.b16 %v1113, %v1112
          %v1133 = vpack.c.b16 %v1115, %v1114
          %v1134 = vpack.c.b16 %v1117, %v1116
          %v1135 = vpack.c.b16 %v1119, %v1118
          %1152 = vmatprep.subr.bf16.mxu0 0
          %1153 = vmatpush1.bf16.msra.mxu0 %v1120
          %1154 = vmatprep.subr.bf16.mxu0 0
          %1155 = vmatpush1.bf16.msra.mxu0 %v1121
          %1156 = vmatprep.subr.bf16.mxu0 0
          %1157 = vmatpush1.bf16.msra.mxu0 %v1122
          %1158 = vmatprep.subr.bf16.mxu0 0
          %1159 = vmatpush1.bf16.msra.mxu0 %v1123
          %1160 = vmatprep.subr.bf16.mxu0 0
          %1161 = vmatpush1.bf16.msra.mxu0 %v1124
          %1162 = vmatprep.subr.bf16.mxu0 0
          %1163 = vmatpush1.bf16.msra.mxu0 %v1125
          %1164 = vmatprep.subr.bf16.mxu0 0
          %1165 = vmatpush1.bf16.msra.mxu0 %v1126
          %1166 = vmatprep.subr.bf16.mxu0 0
          %1167 = vmatpush1.bf16.msra.mxu0 %v1127
          %1168 = vmatprep.subr.bf16.mxu0 0
          %1169 = vmatpush1.bf16.msra.mxu0 %v1128
          %1170 = vmatprep.subr.bf16.mxu0 0
          %1171 = vmatpush1.bf16.msra.mxu0 %v1129
          %1172 = vmatprep.subr.bf16.mxu0 0
          %1173 = vmatpush1.bf16.msra.mxu0 %v1130
          %1174 = vmatprep.subr.bf16.mxu0 0
          %1175 = vmatpush1.bf16.msra.mxu0 %v1131
          %1176 = vmatprep.subr.bf16.mxu0 0
          %1177 = vmatpush1.bf16.msra.mxu0 %v1132
          %1178 = vmatprep.subr.bf16.mxu0 0
          %1179 = vmatpush1.bf16.msra.mxu0 %v1133
          %1180 = vmatprep.subr.bf16.mxu0 0
          %1181 = vmatpush1.bf16.msra.mxu0 %v1134
          %1182 = vmatprep.subr.bf16.mxu0 0
          %1183 = vmatpush1.bf16.msra.mxu0 %v1135
          %1184 = vmatprep.mubr.bf16.mxu0 %v808
          %1185 = vmatmul.mubr.bf16.gmra.mrb[0].mxu0 %v807
          %v1186 = vpop.f32.mrb[0].mxu0
          %v1187 = vadd.f32 0.0, %v1186
          %v1188 = vpop.f32.mrb[0].mxu0
          %v1189 = vpop.f32.mrb[0].mxu0
          %v1190 = vadd.f32 0.0, %v1189
          %v1191 = vpop.f32.mrb[0].mxu0
          %1192 = vmatprep.mubr.bf16.mxu0 %v810
          %1193 = vmatmul.mubr.bf16.gmra.mrb[0].mxu0 %v809
          %v1194 = vpop.f32.mrb[0].mxu0
          %v1195 = vadd.f32 0.0, %v1194
          %v1196 = vpop.f32.mrb[0].mxu0
          %v1197 = vpop.f32.mrb[0].mxu0
          %v1198 = vadd.f32 0.0, %v1197
          %v1199 = vpop.f32.mrb[0].mxu0
          %1200 = vmatprep.mubr.bf16.mxu0 %v812
          %1201 = vmatmul.mubr.bf16.gmra.mrb[0].mxu0 %v811
          %v1202 = vpop.f32.mrb[0].mxu0
          %v1203 = vadd.f32 0.0, %v1202
          %v1204 = vpop.f32.mrb[0].mxu0
          %v1205 = vpop.f32.mrb[0].mxu0
          %v1206 = vadd.f32 0.0, %v1205
          %v1207 = vpop.f32.mrb[0].mxu0
          %1208 = vmatprep.mubr.bf16.mxu0 %v814
          %1209 = vmatmul.mubr.bf16.gmra.mrb[0].mxu0 %v813
          %v1210 = vpop.f32.mrb[0].mxu0
          %v1211 = vadd.f32 0.0, %v1210
          %v1212 = vpop.f32.mrb[0].mxu0
          %v1213 = vpop.f32.mrb[0].mxu0
          %v1214 = vadd.f32 0.0, %v1213
          %v1215 = vpop.f32.mrb[0].mxu0
          %1216 = vdwg.mxu0
          %v1217 = vpack.c.bf16 %v1190, %v1187
          %v1218 = vpack.c.bf16 %v1198, %v1195
          %v1219 = vpack.c.bf16 %v1206, %v1203
          %v1220 = vpack.c.bf16 %v1214, %v1211
          %1221 = vst [vmem:[#allocation3] sm:$0xff] %v1217
          %1222 = vst [vmem:[#allocation3 + $0x8] sm:$0xff] %v1218
          %1223 = vst [vmem:[#allocation3 + $0x10] sm:$0xff] %v1219
          %1224 = vst [vmem:[#allocation3 + $0x18] sm:$0xff] %v1220
          %v1225 = vld [vmem:[#allocation14] sm:$0xf]
          %v1226 = vld [vmem:[#allocation14 + $0x4] sm:$0xf]
          %v1227 = vld [vmem:[#allocation14 + $0x8] sm:$0xf]
          %v1228 = vld [vmem:[#allocation14 + $0xc] sm:$0xf]
          %v1229 = vld [vmem:[#allocation14 + $0x10] sm:$0xf]
          %v1230 = vld [vmem:[#allocation14 + $0x14] sm:$0xf]
          %v1231 = vld [vmem:[#allocation14 + $0x18] sm:$0xf]
          %v1232 = vld [vmem:[#allocation14 + $0x1c] sm:$0xf]
          %v1233 = vld [vmem:[#allocation14 + $0x20] sm:$0xf]
          %v1234 = vld [vmem:[#allocation14 + $0x24] sm:$0xf]
          %v1235 = vld [vmem:[#allocation14 + $0x28] sm:$0xf]
          %v1236 = vld [vmem:[#allocation14 + $0x2c] sm:$0xf]
          %v1237 = vld [vmem:[#allocation14 + $0x30] sm:$0xf]
          %v1238 = vld [vmem:[#allocation14 + $0x34] sm:$0xf]
          %v1239 = vld [vmem:[#allocation14 + $0x38] sm:$0xf]
          %v1240 = vld [vmem:[#allocation14 + $0x3c] sm:$0xf]
          %v1241 = vld [vmem:[#allocation14 + $0x40] sm:$0xf]
          %v1242 = vld [vmem:[#allocation14 + $0x44] sm:$0xf]
          %v1243 = vld [vmem:[#allocation14 + $0x48] sm:$0xf]
          %v1244 = vld [vmem:[#allocation14 + $0x4c] sm:$0xf]
          %v1245 = vld [vmem:[#allocation14 + $0x50] sm:$0xf]
          %v1246 = vld [vmem:[#allocation14 + $0x54] sm:$0xf]
          %v1247 = vld [vmem:[#allocation14 + $0x58] sm:$0xf]
          %v1248 = vld [vmem:[#allocation14 + $0x5c] sm:$0xf]
          %v1249 = vld [vmem:[#allocation14 + $0x60] sm:$0xf]
          %v1250 = vld [vmem:[#allocation14 + $0x64] sm:$0xf]
          %v1251 = vld [vmem:[#allocation14 + $0x68] sm:$0xf]
          %v1252 = vld [vmem:[#allocation14 + $0x6c] sm:$0xf]
          %v1253 = vld [vmem:[#allocation14 + $0x70] sm:$0xf]
          %v1254 = vld [vmem:[#allocation14 + $0x74] sm:$0xf]
          %v1255 = vld [vmem:[#allocation14 + $0x78] sm:$0xf]
          %v1256 = vld [vmem:[#allocation14 + $0x7c] sm:$0xf]
          %v1289 = vunpack.c.l.b16 %v1225
          %v1290 = vunpack.c.l.b16 %v1226
          %v1291 = vunpack.c.l.b16 %v1227
          %v1292 = vunpack.c.l.b16 %v1228
          %v1293 = vunpack.c.l.b16 %v1229
          %v1294 = vunpack.c.l.b16 %v1230
          %v1295 = vunpack.c.l.b16 %v1231
          %v1296 = vunpack.c.l.b16 %v1232
          %v1297 = vunpack.c.l.b16 %v1233
          %v1298 = vunpack.c.l.b16 %v1234
          %v1299 = vunpack.c.l.b16 %v1235
          %v1300 = vunpack.c.l.b16 %v1236
          %v1301 = vunpack.c.l.b16 %v1237
          %v1302 = vunpack.c.l.b16 %v1238
          %v1303 = vunpack.c.l.b16 %v1239
          %v1304 = vunpack.c.l.b16 %v1240
          %v1305 = vunpack.c.l.b16 %v1241
          %v1306 = vunpack.c.l.b16 %v1242
          %v1307 = vunpack.c.l.b16 %v1243
          %v1308 = vunpack.c.l.b16 %v1244
          %v1309 = vunpack.c.l.b16 %v1245
          %v1310 = vunpack.c.l.b16 %v1246
          %v1311 = vunpack.c.l.b16 %v1247
          %v1312 = vunpack.c.l.b16 %v1248
          %v1313 = vunpack.c.l.b16 %v1249
          %v1314 = vunpack.c.l.b16 %v1250
          %v1315 = vunpack.c.l.b16 %v1251
          %v1316 = vunpack.c.l.b16 %v1252
          %v1317 = vunpack.c.l.b16 %v1253
          %v1318 = vunpack.c.l.b16 %v1254
          %v1319 = vunpack.c.l.b16 %v1255
          %v1320 = vunpack.c.l.b16 %v1256
          %v1321 = vpack.c.b16 %v1290, %v1289
          %v1322 = vpack.c.b16 %v1292, %v1291
          %v1323 = vpack.c.b16 %v1294, %v1293
          %v1324 = vpack.c.b16 %v1296, %v1295
          %v1325 = vpack.c.b16 %v1298, %v1297
          %v1326 = vpack.c.b16 %v1300, %v1299
          %v1327 = vpack.c.b16 %v1302, %v1301
          %v1328 = vpack.c.b16 %v1304, %v1303
          %v1329 = vpack.c.b16 %v1306, %v1305
          %v1330 = vpack.c.b16 %v1308, %v1307
          %v1331 = vpack.c.b16 %v1310, %v1309
          %v1332 = vpack.c.b16 %v1312, %v1311
          %v1333 = vpack.c.b16 %v1314, %v1313
          %v1334 = vpack.c.b16 %v1316, %v1315
          %v1335 = vpack.c.b16 %v1318, %v1317
          %v1336 = vpack.c.b16 %v1320, %v1319
          %1353 = vmatprep.subr.bf16.mxu0 0
          %1354 = vmatpush1.bf16.msra.mxu0 %v1321
          %1355 = vmatprep.subr.bf16.mxu0 0
          %1356 = vmatpush1.bf16.msra.mxu0 %v1322
          %1357 = vmatprep.subr.bf16.mxu0 0
          %1358 = vmatpush1.bf16.msra.mxu0 %v1323
          %1359 = vmatprep.subr.bf16.mxu0 0
          %1360 = vmatpush1.bf16.msra.mxu0 %v1324
          %1361 = vmatprep.subr.bf16.mxu0 0
          %1362 = vmatpush1.bf16.msra.mxu0 %v1325
          %1363 = vmatprep.subr.bf16.mxu0 0
          %1364 = vmatpush1.bf16.msra.mxu0 %v1326
          %1365 = vmatprep.subr.bf16.mxu0 0
          %1366 = vmatpush1.bf16.msra.mxu0 %v1327
          %1367 = vmatprep.subr.bf16.mxu0 0
          %1368 = vmatpush1.bf16.msra.mxu0 %v1328
          %1369 = vmatprep.subr.bf16.mxu0 0
          %1370 = vmatpush1.bf16.msra.mxu0 %v1329
          %1371 = vmatprep.subr.bf16.mxu0 0
          %1372 = vmatpush1.bf16.msra.mxu0 %v1330
          %1373 = vmatprep.subr.bf16.mxu0 0
          %1374 = vmatpush1.bf16.msra.mxu0 %v1331
          %1375 = vmatprep.subr.bf16.mxu0 0
          %1376 = vmatpush1.bf16.msra.mxu0 %v1332
          %1377 = vmatprep.subr.bf16.mxu0 0
          %1378 = vmatpush1.bf16.msra.mxu0 %v1333
          %1379 = vmatprep.subr.bf16.mxu0 0
          %1380 = vmatpush1.bf16.msra.mxu0 %v1334
          %1381 = vmatprep.subr.bf16.mxu0 0
          %1382 = vmatpush1.bf16.msra.mxu0 %v1335
          %1383 = vmatprep.subr.bf16.mxu0 0
          %1384 = vmatpush1.bf16.msra.mxu0 %v1336
          %1385 = vmatprep.mubr.bf16.mxu0 %v808
          %1386 = vmatmul.mubr.bf16.gmra.mrb[0].mxu0 %v807
          %v1387 = vpop.f32.mrb[0].mxu0
          %v1388 = vadd.f32 0.0, %v1387
          %v1389 = vpop.f32.mrb[0].mxu0
          %v1390 = vpop.f32.mrb[0].mxu0
          %v1391 = vadd.f32 0.0, %v1390
          %v1392 = vpop.f32.mrb[0].mxu0
          %1393 = vmatprep.mubr.bf16.mxu0 %v810
          %1394 = vmatmul.mubr.bf16.gmra.mrb[0].mxu0 %v809
          %v1395 = vpop.f32.mrb[0].mxu0
          %v1396 = vadd.f32 0.0, %v1395
          %v1397 = vpop.f32.mrb[0].mxu0
          %v1398 = vpop.f32.mrb[0].mxu0
          %v1399 = vadd.f32 0.0, %v1398
          %v1400 = vpop.f32.mrb[0].mxu0
          %1401 = vmatprep.mubr.bf16.mxu0 %v812
          %1402 = vmatmul.mubr.bf16.gmra.mrb[0].mxu0 %v811
          %v1403 = vpop.f32.mrb[0].mxu0
          %v1404 = vadd.f32 0.0, %v1403
          %v1405 = vpop.f32.mrb[0].mxu0
          %v1406 = vpop.f32.mrb[0].mxu0
          %v1407 = vadd.f32 0.0, %v1406
          %v1408 = vpop.f32.mrb[0].mxu0
          %1409 = vmatprep.mubr.bf16.mxu0 %v814
          %1410 = vmatmul.mubr.bf16.gmra.mrb[0].mxu0 %v813
          %v1411 = vpop.f32.mrb[0].mxu0
          %v1412 = vadd.f32 0.0, %v1411
          %v1413 = vpop.f32.mrb[0].mxu0
          %v1414 = vpop.f32.mrb[0].mxu0
          %v1415 = vadd.f32 0.0, %v1414
          %v1416 = vpop.f32.mrb[0].mxu0
          %1417 = vdwg.mxu0
          %v1418 = vpack.c.bf16 %v1391, %v1388
          %v1419 = vpack.c.bf16 %v1399, %v1396
          %v1420 = vpack.c.bf16 %v1407, %v1404
          %v1421 = vpack.c.bf16 %v1415, %v1412
          %1422 = vst [vmem:[#allocation4] sm:$0xff] %v1418
          %1423 = vst [vmem:[#allocation4 + $0x8] sm:$0xff] %v1419
          %1424 = vst [vmem:[#allocation4 + $0x10] sm:$0xff] %v1420
          %1425 = vst [vmem:[#allocation4 + $0x18] sm:$0xff] %v1421
          %s1426 = scalar_lea.vmem [#allocation11], 128
          %v1427 = vld [vmem:[%s1426] sm:$0xf]
          %v1428 = vld [vmem:[%s1426 + $0x4] sm:$0xf]
          %v1429 = vld [vmem:[%s1426 + $0x8] sm:$0xf]
          %v1430 = vld [vmem:[%s1426 + $0xc] sm:$0xf]
          %v1431 = vld [vmem:[%s1426 + $0x10] sm:$0xf]
          %v1432 = vld [vmem:[%s1426 + $0x14] sm:$0xf]
          %v1433 = vld [vmem:[%s1426 + $0x18] sm:$0xf]
          %v1434 = vld [vmem:[%s1426 + $0x1c] sm:$0xf]
          %v1435 = vld [vmem:[%s1426 + $0x20] sm:$0xf]
          %v1436 = vld [vmem:[%s1426 + $0x24] sm:$0xf]
          %v1437 = vld [vmem:[%s1426 + $0x28] sm:$0xf]
          %v1438 = vld [vmem:[%s1426 + $0x2c] sm:$0xf]
          %v1439 = vld [vmem:[%s1426 + $0x30] sm:$0xf]
          %v1440 = vld [vmem:[%s1426 + $0x34] sm:$0xf]
          %v1441 = vld [vmem:[%s1426 + $0x38] sm:$0xf]
          %v1442 = vld [vmem:[%s1426 + $0x3c] sm:$0xf]
          %v1443 = vld [vmem:[%s1426 + $0x40] sm:$0xf]
          %v1444 = vld [vmem:[%s1426 + $0x44] sm:$0xf]
          %v1445 = vld [vmem:[%s1426 + $0x48] sm:$0xf]
          %v1446 = vld [vmem:[%s1426 + $0x4c] sm:$0xf]
          %v1447 = vld [vmem:[%s1426 + $0x50] sm:$0xf]
          %v1448 = vld [vmem:[%s1426 + $0x54] sm:$0xf]
          %v1449 = vld [vmem:[%s1426 + $0x58] sm:$0xf]
          %v1450 = vld [vmem:[%s1426 + $0x5c] sm:$0xf]
          %v1451 = vld [vmem:[%s1426 + $0x60] sm:$0xf]
          %v1452 = vld [vmem:[%s1426 + $0x64] sm:$0xf]
          %v1453 = vld [vmem:[%s1426 + $0x68] sm:$0xf]
          %v1454 = vld [vmem:[%s1426 + $0x6c] sm:$0xf]
          %v1455 = vld [vmem:[%s1426 + $0x70] sm:$0xf]
          %v1456 = vld [vmem:[%s1426 + $0x74] sm:$0xf]
          %v1457 = vld [vmem:[%s1426 + $0x78] sm:$0xf]
          %v1458 = vld [vmem:[%s1426 + $0x7c] sm:$0xf]
          %v1491 = vunpack.c.l.b16 %v1427
          %v1492 = vunpack.c.l.b16 %v1428
          %v1493 = vunpack.c.l.b16 %v1429
          %v1494 = vunpack.c.l.b16 %v1430
          %v1495 = vunpack.c.l.b16 %v1431
          %v1496 = vunpack.c.l.b16 %v1432
          %v1497 = vunpack.c.l.b16 %v1433
          %v1498 = vunpack.c.l.b16 %v1434
          %v1499 = vunpack.c.l.b16 %v1435
          %v1500 = vunpack.c.l.b16 %v1436
          %v1501 = vunpack.c.l.b16 %v1437
          %v1502 = vunpack.c.l.b16 %v1438
          %v1503 = vunpack.c.l.b16 %v1439
          %v1504 = vunpack.c.l.b16 %v1440
          %v1505 = vunpack.c.l.b16 %v1441
          %v1506 = vunpack.c.l.b16 %v1442
          %v1507 = vunpack.c.l.b16 %v1443
          %v1508 = vunpack.c.l.b16 %v1444
          %v1509 = vunpack.c.l.b16 %v1445
          %v1510 = vunpack.c.l.b16 %v1446
          %v1511 = vunpack.c.l.b16 %v1447
          %v1512 = vunpack.c.l.b16 %v1448
          %v1513 = vunpack.c.l.b16 %v1449
          %v1514 = vunpack.c.l.b16 %v1450
          %v1515 = vunpack.c.l.b16 %v1451
          %v1516 = vunpack.c.l.b16 %v1452
          %v1517 = vunpack.c.l.b16 %v1453
          %v1518 = vunpack.c.l.b16 %v1454
          %v1519 = vunpack.c.l.b16 %v1455
          %v1520 = vunpack.c.l.b16 %v1456
          %v1521 = vunpack.c.l.b16 %v1457
          %v1522 = vunpack.c.l.b16 %v1458
          %v1523 = vpack.c.b16 %v1492, %v1491
          %v1524 = vpack.c.b16 %v1494, %v1493
          %v1525 = vpack.c.b16 %v1496, %v1495
          %v1526 = vpack.c.b16 %v1498, %v1497
          %v1527 = vpack.c.b16 %v1500, %v1499
          %v1528 = vpack.c.b16 %v1502, %v1501
          %v1529 = vpack.c.b16 %v1504, %v1503
          %v1530 = vpack.c.b16 %v1506, %v1505
          %v1531 = vpack.c.b16 %v1508, %v1507
          %v1532 = vpack.c.b16 %v1510, %v1509
          %v1533 = vpack.c.b16 %v1512, %v1511
          %v1534 = vpack.c.b16 %v1514, %v1513
          %v1535 = vpack.c.b16 %v1516, %v1515
          %v1536 = vpack.c.b16 %v1518, %v1517
          %v1537 = vpack.c.b16 %v1520, %v1519
          %v1538 = vpack.c.b16 %v1522, %v1521
          %1555 = vmatprep.subr.bf16.mxu0 0
          %1556 = vmatpush1.bf16.msra.mxu0 %v1523
          %1557 = vmatprep.subr.bf16.mxu0 0
          %1558 = vmatpush1.bf16.msra.mxu0 %v1524
          %1559 = vmatprep.subr.bf16.mxu0 0
          %1560 = vmatpush1.bf16.msra.mxu0 %v1525
          %1561 = vmatprep.subr.bf16.mxu0 0
          %1562 = vmatpush1.bf16.msra.mxu0 %v1526
          %1563 = vmatprep.subr.bf16.mxu0 0
          %1564 = vmatpush1.bf16.msra.mxu0 %v1527
          %1565 = vmatprep.subr.bf16.mxu0 0
          %1566 = vmatpush1.bf16.msra.mxu0 %v1528
          %1567 = vmatprep.subr.bf16.mxu0 0
          %1568 = vmatpush1.bf16.msra.mxu0 %v1529
          %1569 = vmatprep.subr.bf16.mxu0 0
          %1570 = vmatpush1.bf16.msra.mxu0 %v1530
          %1571 = vmatprep.subr.bf16.mxu0 0
          %1572 = vmatpush1.bf16.msra.mxu0 %v1531
          %1573 = vmatprep.subr.bf16.mxu0 0
          %1574 = vmatpush1.bf16.msra.mxu0 %v1532
          %1575 = vmatprep.subr.bf16.mxu0 0
          %1576 = vmatpush1.bf16.msra.mxu0 %v1533
          %1577 = vmatprep.subr.bf16.mxu0 0
          %1578 = vmatpush1.bf16.msra.mxu0 %v1534
          %1579 = vmatprep.subr.bf16.mxu0 0
          %1580 = vmatpush1.bf16.msra.mxu0 %v1535
          %1581 = vmatprep.subr.bf16.mxu0 0
          %1582 = vmatpush1.bf16.msra.mxu0 %v1536
          %1583 = vmatprep.subr.bf16.mxu0 0
          %1584 = vmatpush1.bf16.msra.mxu0 %v1537
          %1585 = vmatprep.subr.bf16.mxu0 0
          %1586 = vmatpush1.bf16.msra.mxu0 %v1538
          %1587 = vmatprep.mubr.bf16.mxu0 %v808
          %1588 = vmatmul.mubr.bf16.gmra.mrb[0].mxu0 %v807
          %v1589 = vpop.f32.mrb[0].mxu0
          %v1590 = vadd.f32 0.0, %v1589
          %v1591 = vpop.f32.mrb[0].mxu0
          %v1592 = vpop.f32.mrb[0].mxu0
          %v1593 = vadd.f32 0.0, %v1592
          %v1594 = vpop.f32.mrb[0].mxu0
          %1595 = vmatprep.mubr.bf16.mxu0 %v810
          %1596 = vmatmul.mubr.bf16.gmra.mrb[0].mxu0 %v809
          %v1597 = vpop.f32.mrb[0].mxu0
          %v1598 = vadd.f32 0.0, %v1597
          %v1599 = vpop.f32.mrb[0].mxu0
          %v1600 = vpop.f32.mrb[0].mxu0
          %v1601 = vadd.f32 0.0, %v1600
          %v1602 = vpop.f32.mrb[0].mxu0
          %1603 = vmatprep.mubr.bf16.mxu0 %v812
          %1604 = vmatmul.mubr.bf16.gmra.mrb[0].mxu0 %v811
          %v1605 = vpop.f32.mrb[0].mxu0
          %v1606 = vadd.f32 0.0, %v1605
          %v1607 = vpop.f32.mrb[0].mxu0
          %v1608 = vpop.f32.mrb[0].mxu0
          %v1609 = vadd.f32 0.0, %v1608
          %v1610 = vpop.f32.mrb[0].mxu0
          %1611 = vmatprep.mubr.bf16.mxu0 %v814
          %1612 = vmatmul.mubr.bf16.gmra.mrb[0].mxu0 %v813
          %v1613 = vpop.f32.mrb[0].mxu0
          %v1614 = vadd.f32 0.0, %v1613
          %v1615 = vpop.f32.mrb[0].mxu0
          %v1616 = vpop.f32.mrb[0].mxu0
          %v1617 = vadd.f32 0.0, %v1616
          %v1618 = vpop.f32.mrb[0].mxu0
          %1619 = vdwg.mxu0
          %v1620 = vmul.f32 %v1590, 0.088388346
          %v1621 = vmul.f32 %v1593, 0.088388346
          %v1622 = vmul.f32 %v1598, 0.088388346
          %v1623 = vmul.f32 %v1601, 0.088388346
          %v1624 = vmul.f32 %v1606, 0.088388346
          %v1625 = vmul.f32 %v1609, 0.088388346
          %v1626 = vmul.f32 %v1614, 0.088388346
          %v1627 = vmul.f32 %v1617, 0.088388346
          %v1628 = vpack.c.bf16 %v1621, %v1620
          %v1629 = vpack.c.bf16 %v1623, %v1622
          %v1630 = vpack.c.bf16 %v1625, %v1624
          %v1631 = vpack.c.bf16 %v1627, %v1626
          %s1632 = scalar_lea.vmem [#allocation2], 32
          %1633 = vst [vmem:[%s1632] sm:$0xff] %v1628
          %1634 = vst [vmem:[%s1632 + $0x8] sm:$0xff] %v1629
          %1635 = vst [vmem:[%s1632 + $0x10] sm:$0xff] %v1630
          %1636 = vst [vmem:[%s1632 + $0x18] sm:$0xff] %v1631
          %s1637 = scalar_lea.vmem [#allocation12], 128
          %v1638 = vld [vmem:[%s1637] sm:$0xf]
          %v1639 = vld [vmem:[%s1637 + $0x4] sm:$0xf]
          %v1640 = vld [vmem:[%s1637 + $0x8] sm:$0xf]
          %v1641 = vld [vmem:[%s1637 + $0xc] sm:$0xf]
          %v1642 = vld [vmem:[%s1637 + $0x10] sm:$0xf]
          %v1643 = vld [vmem:[%s1637 + $0x14] sm:$0xf]
          %v1644 = vld [vmem:[%s1637 + $0x18] sm:$0xf]
          %v1645 = vld [vmem:[%s1637 + $0x1c] sm:$0xf]
          %v1646 = vld [vmem:[%s1637 + $0x20] sm:$0xf]
          %v1647 = vld [vmem:[%s1637 + $0x24] sm:$0xf]
          %v1648 = vld [vmem:[%s1637 + $0x28] sm:$0xf]
          %v1649 = vld [vmem:[%s1637 + $0x2c] sm:$0xf]
          %v1650 = vld [vmem:[%s1637 + $0x30] sm:$0xf]
          %v1651 = vld [vmem:[%s1637 + $0x34] sm:$0xf]
          %v1652 = vld [vmem:[%s1637 + $0x38] sm:$0xf]
          %v1653 = vld [vmem:[%s1637 + $0x3c] sm:$0xf]
          %v1654 = vld [vmem:[%s1637 + $0x40] sm:$0xf]
          %v1655 = vld [vmem:[%s1637 + $0x44] sm:$0xf]
          %v1656 = vld [vmem:[%s1637 + $0x48] sm:$0xf]
          %v1657 = vld [vmem:[%s1637 + $0x4c] sm:$0xf]
          %v1658 = vld [vmem:[%s1637 + $0x50] sm:$0xf]
          %v1659 = vld [vmem:[%s1637 + $0x54] sm:$0xf]
          %v1660 = vld [vmem:[%s1637 + $0x58] sm:$0xf]
          %v1661 = vld [vmem:[%s1637 + $0x5c] sm:$0xf]
          %v1662 = vld [vmem:[%s1637 + $0x60] sm:$0xf]
          %v1663 = vld [vmem:[%s1637 + $0x64] sm:$0xf]
          %v1664 = vld [vmem:[%s1637 + $0x68] sm:$0xf]
          %v1665 = vld [vmem:[%s1637 + $0x6c] sm:$0xf]
          %v1666 = vld [vmem:[%s1637 + $0x70] sm:$0xf]
          %v1667 = vld [vmem:[%s1637 + $0x74] sm:$0xf]
          %v1668 = vld [vmem:[%s1637 + $0x78] sm:$0xf]
          %v1669 = vld [vmem:[%s1637 + $0x7c] sm:$0xf]
          %v1702 = vunpack.c.l.b16 %v1638
          %v1703 = vunpack.c.l.b16 %v1639
          %v1704 = vunpack.c.l.b16 %v1640
          %v1705 = vunpack.c.l.b16 %v1641
          %v1706 = vunpack.c.l.b16 %v1642
          %v1707 = vunpack.c.l.b16 %v1643
          %v1708 = vunpack.c.l.b16 %v1644
          %v1709 = vunpack.c.l.b16 %v1645
          %v1710 = vunpack.c.l.b16 %v1646
          %v1711 = vunpack.c.l.b16 %v1647
          %v1712 = vunpack.c.l.b16 %v1648
          %v1713 = vunpack.c.l.b16 %v1649
          %v1714 = vunpack.c.l.b16 %v1650
          %v1715 = vunpack.c.l.b16 %v1651
          %v1716 = vunpack.c.l.b16 %v1652
          %v1717 = vunpack.c.l.b16 %v1653
          %v1718 = vunpack.c.l.b16 %v1654
          %v1719 = vunpack.c.l.b16 %v1655
          %v1720 = vunpack.c.l.b16 %v1656
          %v1721 = vunpack.c.l.b16 %v1657
          %v1722 = vunpack.c.l.b16 %v1658
          %v1723 = vunpack.c.l.b16 %v1659
          %v1724 = vunpack.c.l.b16 %v1660
          %v1725 = vunpack.c.l.b16 %v1661
          %v1726 = vunpack.c.l.b16 %v1662
          %v1727 = vunpack.c.l.b16 %v1663
          %v1728 = vunpack.c.l.b16 %v1664
          %v1729 = vunpack.c.l.b16 %v1665
          %v1730 = vunpack.c.l.b16 %v1666
          %v1731 = vunpack.c.l.b16 %v1667
          %v1732 = vunpack.c.l.b16 %v1668
          %v1733 = vunpack.c.l.b16 %v1669
          %v1734 = vpack.c.b16 %v1703, %v1702
          %v1735 = vpack.c.b16 %v1705, %v1704
          %v1736 = vpack.c.b16 %v1707, %v1706
          %v1737 = vpack.c.b16 %v1709, %v1708
          %v1738 = vpack.c.b16 %v1711, %v1710
          %v1739 = vpack.c.b16 %v1713, %v1712
          %v1740 = vpack.c.b16 %v1715, %v1714
          %v1741 = vpack.c.b16 %v1717, %v1716
          %v1742 = vpack.c.b16 %v1719, %v1718
          %v1743 = vpack.c.b16 %v1721, %v1720
          %v1744 = vpack.c.b16 %v1723, %v1722
          %v1745 = vpack.c.b16 %v1725, %v1724
          %v1746 = vpack.c.b16 %v1727, %v1726
          %v1747 = vpack.c.b16 %v1729, %v1728
          %v1748 = vpack.c.b16 %v1731, %v1730
          %v1749 = vpack.c.b16 %v1733, %v1732
          %1766 = vmatprep.subr.bf16.mxu0 0
          %1767 = vmatpush1.bf16.msra.mxu0 %v1734
          %1768 = vmatprep.subr.bf16.mxu0 0
          %1769 = vmatpush1.bf16.msra.mxu0 %v1735
          %1770 = vmatprep.subr.bf16.mxu0 0
          %1771 = vmatpush1.bf16.msra.mxu0 %v1736
          %1772 = vmatprep.subr.bf16.mxu0 0
          %1773 = vmatpush1.bf16.msra.mxu0 %v1737
          %1774 = vmatprep.subr.bf16.mxu0 0
          %1775 = vmatpush1.bf16.msra.mxu0 %v1738
          %1776 = vmatprep.subr.bf16.mxu0 0
          %1777 = vmatpush1.bf16.msra.mxu0 %v1739
          %1778 = vmatprep.subr.bf16.mxu0 0
          %1779 = vmatpush1.bf16.msra.mxu0 %v1740
          %1780 = vmatprep.subr.bf16.mxu0 0
          %1781 = vmatpush1.bf16.msra.mxu0 %v1741
          %1782 = vmatprep.subr.bf16.mxu0 0
          %1783 = vmatpush1.bf16.msra.mxu0 %v1742
          %1784 = vmatprep.subr.bf16.mxu0 0
          %1785 = vmatpush1.bf16.msra.mxu0 %v1743
          %1786 = vmatprep.subr.bf16.mxu0 0
          %1787 = vmatpush1.bf16.msra.mxu0 %v1744
          %1788 = vmatprep.subr.bf16.mxu0 0
          %1789 = vmatpush1.bf16.msra.mxu0 %v1745
          %1790 = vmatprep.subr.bf16.mxu0 0
          %1791 = vmatpush1.bf16.msra.mxu0 %v1746
          %1792 = vmatprep.subr.bf16.mxu0 0
          %1793 = vmatpush1.bf16.msra.mxu0 %v1747
          %1794 = vmatprep.subr.bf16.mxu0 0
          %1795 = vmatpush1.bf16.msra.mxu0 %v1748
          %1796 = vmatprep.subr.bf16.mxu0 0
          %1797 = vmatpush1.bf16.msra.mxu0 %v1749
          %1798 = vmatprep.mubr.bf16.mxu0 %v808
          %1799 = vmatmul.mubr.bf16.gmra.mrb[0].mxu0 %v807
          %v1800 = vpop.f32.mrb[0].mxu0
          %v1801 = vadd.f32 0.0, %v1800
          %v1802 = vpop.f32.mrb[0].mxu0
          %v1803 = vpop.f32.mrb[0].mxu0
          %v1804 = vadd.f32 0.0, %v1803
          %v1805 = vpop.f32.mrb[0].mxu0
          %1806 = vmatprep.mubr.bf16.mxu0 %v810
          %1807 = vmatmul.mubr.bf16.gmra.mrb[0].mxu0 %v809
          %v1808 = vpop.f32.mrb[0].mxu0
          %v1809 = vadd.f32 0.0, %v1808
          %v1810 = vpop.f32.mrb[0].mxu0
          %v1811 = vpop.f32.mrb[0].mxu0
          %v1812 = vadd.f32 0.0, %v1811
          %v1813 = vpop.f32.mrb[0].mxu0
          %1814 = vmatprep.mubr.bf16.mxu0 %v812
          %1815 = vmatmul.mubr.bf16.gmra.mrb[0].mxu0 %v811
          %v1816 = vpop.f32.mrb[0].mxu0
          %v1817 = vadd.f32 0.0, %v1816
          %v1818 = vpop.f32.mrb[0].mxu0
          %v1819 = vpop.f32.mrb[0].mxu0
          %v1820 = vadd.f32 0.0, %v1819
          %v1821 = vpop.f32.mrb[0].mxu0
          %1822 = vmatprep.mubr.bf16.mxu0 %v814
          %1823 = vmatmul.mubr.bf16.gmra.mrb[0].mxu0 %v813
          %v1824 = vpop.f32.mrb[0].mxu0
          %v1825 = vadd.f32 0.0, %v1824
          %v1826 = vpop.f32.mrb[0].mxu0
          %v1827 = vpop.f32.mrb[0].mxu0
          %v1828 = vadd.f32 0.0, %v1827
          %v1829 = vpop.f32.mrb[0].mxu0
          %1830 = vdwg.mxu0
          %v1831 = vpack.c.bf16 %v1804, %v1801
          %v1832 = vpack.c.bf16 %v1812, %v1809
          %v1833 = vpack.c.bf16 %v1820, %v1817
          %v1834 = vpack.c.bf16 %v1828, %v1825
          %s1835 = scalar_lea.vmem [#allocation3], 32
          %1836 = vst [vmem:[%s1835] sm:$0xff] %v1831
          %1837 = vst [vmem:[%s1835 + $0x8] sm:$0xff] %v1832
          %1838 = vst [vmem:[%s1835 + $0x10] sm:$0xff] %v1833
          %1839 = vst [vmem:[%s1835 + $0x18] sm:$0xff] %v1834
          %s1840 = scalar_lea.vmem [#allocation14], 128
          %v1841 = vld [vmem:[%s1840] sm:$0xf]
          %v1842 = vld [vmem:[%s1840 + $0x4] sm:$0xf]
          %v1843 = vld [vmem:[%s1840 + $0x8] sm:$0xf]
          %v1844 = vld [vmem:[%s1840 + $0xc] sm:$0xf]
          %v1845 = vld [vmem:[%s1840 + $0x10] sm:$0xf]
          %v1846 = vld [vmem:[%s1840 + $0x14] sm:$0xf]
          %v1847 = vld [vmem:[%s1840 + $0x18] sm:$0xf]
          %v1848 = vld [vmem:[%s1840 + $0x1c] sm:$0xf]
          %v1849 = vld [vmem:[%s1840 + $0x20] sm:$0xf]
          %v1850 = vld [vmem:[%s1840 + $0x24] sm:$0xf]
          %v1851 = vld [vmem:[%s1840 + $0x28] sm:$0xf]
          %v1852 = vld [vmem:[%s1840 + $0x2c] sm:$0xf]
          %v1853 = vld [vmem:[%s1840 + $0x30] sm:$0xf]
          %v1854 = vld [vmem:[%s1840 + $0x34] sm:$0xf]
          %v1855 = vld [vmem:[%s1840 + $0x38] sm:$0xf]
          %v1856 = vld [vmem:[%s1840 + $0x3c] sm:$0xf]
          %v1857 = vld [vmem:[%s1840 + $0x40] sm:$0xf]
          %v1858 = vld [vmem:[%s1840 + $0x44] sm:$0xf]
          %v1859 = vld [vmem:[%s1840 + $0x48] sm:$0xf]
          %v1860 = vld [vmem:[%s1840 + $0x4c] sm:$0xf]
          %v1861 = vld [vmem:[%s1840 + $0x50] sm:$0xf]
          %v1862 = vld [vmem:[%s1840 + $0x54] sm:$0xf]
          %v1863 = vld [vmem:[%s1840 + $0x58] sm:$0xf]
          %v1864 = vld [vmem:[%s1840 + $0x5c] sm:$0xf]
          %v1865 = vld [vmem:[%s1840 + $0x60] sm:$0xf]
          %v1866 = vld [vmem:[%s1840 + $0x64] sm:$0xf]
          %v1867 = vld [vmem:[%s1840 + $0x68] sm:$0xf]
          %v1868 = vld [vmem:[%s1840 + $0x6c] sm:$0xf]
          %v1869 = vld [vmem:[%s1840 + $0x70] sm:$0xf]
          %v1870 = vld [vmem:[%s1840 + $0x74] sm:$0xf]
          %v1871 = vld [vmem:[%s1840 + $0x78] sm:$0xf]
          %v1872 = vld [vmem:[%s1840 + $0x7c] sm:$0xf]
          %v1905 = vunpack.c.l.b16 %v1841
          %v1906 = vunpack.c.l.b16 %v1842
          %v1907 = vunpack.c.l.b16 %v1843
          %v1908 = vunpack.c.l.b16 %v1844
          %v1909 = vunpack.c.l.b16 %v1845
          %v1910 = vunpack.c.l.b16 %v1846
          %v1911 = vunpack.c.l.b16 %v1847
          %v1912 = vunpack.c.l.b16 %v1848
          %v1913 = vunpack.c.l.b16 %v1849
          %v1914 = vunpack.c.l.b16 %v1850
          %v1915 = vunpack.c.l.b16 %v1851
          %v1916 = vunpack.c.l.b16 %v1852
          %v1917 = vunpack.c.l.b16 %v1853
          %v1918 = vunpack.c.l.b16 %v1854
          %v1919 = vunpack.c.l.b16 %v1855
          %v1920 = vunpack.c.l.b16 %v1856
          %v1921 = vunpack.c.l.b16 %v1857
          %v1922 = vunpack.c.l.b16 %v1858
          %v1923 = vunpack.c.l.b16 %v1859
          %v1924 = vunpack.c.l.b16 %v1860
          %v1925 = vunpack.c.l.b16 %v1861
          %v1926 = vunpack.c.l.b16 %v1862
          %v1927 = vunpack.c.l.b16 %v1863
          %v1928 = vunpack.c.l.b16 %v1864
          %v1929 = vunpack.c.l.b16 %v1865
          %v1930 = vunpack.c.l.b16 %v1866
          %v1931 = vunpack.c.l.b16 %v1867
          %v1932 = vunpack.c.l.b16 %v1868
          %v1933 = vunpack.c.l.b16 %v1869
          %v1934 = vunpack.c.l.b16 %v1870
          %v1935 = vunpack.c.l.b16 %v1871
          %v1936 = vunpack.c.l.b16 %v1872
          %v1937 = vpack.c.b16 %v1906, %v1905
          %v1938 = vpack.c.b16 %v1908, %v1907
          %v1939 = vpack.c.b16 %v1910, %v1909
          %v1940 = vpack.c.b16 %v1912, %v1911
          %v1941 = vpack.c.b16 %v1914, %v1913
          %v1942 = vpack.c.b16 %v1916, %v1915
          %v1943 = vpack.c.b16 %v1918, %v1917
          %v1944 = vpack.c.b16 %v1920, %v1919
          %v1945 = vpack.c.b16 %v1922, %v1921
          %v1946 = vpack.c.b16 %v1924, %v1923
          %v1947 = vpack.c.b16 %v1926, %v1925
          %v1948 = vpack.c.b16 %v1928, %v1927
          %v1949 = vpack.c.b16 %v1930, %v1929
          %v1950 = vpack.c.b16 %v1932, %v1931
          %v1951 = vpack.c.b16 %v1934, %v1933
          %v1952 = vpack.c.b16 %v1936, %v1935
          %1969 = vmatprep.subr.bf16.mxu0 0
          %1970 = vmatpush1.bf16.msra.mxu0 %v1937
          %1971 = vmatprep.subr.bf16.mxu0 0
          %1972 = vmatpush1.bf16.msra.mxu0 %v1938
          %1973 = vmatprep.subr.bf16.mxu0 0
          %1974 = vmatpush1.bf16.msra.mxu0 %v1939
          %1975 = vmatprep.subr.bf16.mxu0 0
          %1976 = vmatpush1.bf16.msra.mxu0 %v1940
          %1977 = vmatprep.subr.bf16.mxu0 0
          %1978 = vmatpush1.bf16.msra.mxu0 %v1941
          %1979 = vmatprep.subr.bf16.mxu0 0
          %1980 = vmatpush1.bf16.msra.mxu0 %v1942
          %1981 = vmatprep.subr.bf16.mxu0 0
          %1982 = vmatpush1.bf16.msra.mxu0 %v1943
          %1983 = vmatprep.subr.bf16.mxu0 0
          %1984 = vmatpush1.bf16.msra.mxu0 %v1944
          %1985 = vmatprep.subr.bf16.mxu0 0
          %1986 = vmatpush1.bf16.msra.mxu0 %v1945
          %1987 = vmatprep.subr.bf16.mxu0 0
          %1988 = vmatpush1.bf16.msra.mxu0 %v1946
          %1989 = vmatprep.subr.bf16.mxu0 0
          %1990 = vmatpush1.bf16.msra.mxu0 %v1947
          %1991 = vmatprep.subr.bf16.mxu0 0
          %1992 = vmatpush1.bf16.msra.mxu0 %v1948
          %1993 = vmatprep.subr.bf16.mxu0 0
          %1994 = vmatpush1.bf16.msra.mxu0 %v1949
          %1995 = vmatprep.subr.bf16.mxu0 0
          %1996 = vmatpush1.bf16.msra.mxu0 %v1950
          %1997 = vmatprep.subr.bf16.mxu0 0
          %1998 = vmatpush1.bf16.msra.mxu0 %v1951
          %1999 = vmatprep.subr.bf16.mxu0 0
          %2000 = vmatpush1.bf16.msra.mxu0 %v1952
          %2001 = vmatprep.mubr.bf16.mxu0 %v808
          %2002 = vmatmul.mubr.bf16.gmra.mrb[0].mxu0 %v807
          %v2003 = vpop.f32.mrb[0].mxu0
          %v2004 = vadd.f32 0.0, %v2003
          %v2005 = vpop.f32.mrb[0].mxu0
          %v2006 = vpop.f32.mrb[0].mxu0
          %v2007 = vadd.f32 0.0, %v2006
          %v2008 = vpop.f32.mrb[0].mxu0
          %2009 = vmatprep.mubr.bf16.mxu0 %v810
          %2010 = vmatmul.mubr.bf16.gmra.mrb[0].mxu0 %v809
          %v2011 = vpop.f32.mrb[0].mxu0
          %v2012 = vadd.f32 0.0, %v2011
          %v2013 = vpop.f32.mrb[0].mxu0
          %v2014 = vpop.f32.mrb[0].mxu0
          %v2015 = vadd.f32 0.0, %v2014
          %v2016 = vpop.f32.mrb[0].mxu0
          %2017 = vmatprep.mubr.bf16.mxu0 %v812
          %2018 = vmatmul.mubr.bf16.gmra.mrb[0].mxu0 %v811
          %v2019 = vpop.f32.mrb[0].mxu0
          %v2020 = vadd.f32 0.0, %v2019
          %v2021 = vpop.f32.mrb[0].mxu0
          %v2022 = vpop.f32.mrb[0].mxu0
          %v2023 = vadd.f32 0.0, %v2022
          %v2024 = vpop.f32.mrb[0].mxu0
          %2025 = vmatprep.mubr.bf16.mxu0 %v814
          %2026 = vmatmul.mubr.bf16.gmra.mrb[0].mxu0 %v813
          %v2027 = vpop.f32.mrb[0].mxu0
          %v2028 = vadd.f32 0.0, %v2027
          %v2029 = vpop.f32.mrb[0].mxu0
          %v2030 = vpop.f32.mrb[0].mxu0
          %v2031 = vadd.f32 0.0, %v2030
          %v2032 = vpop.f32.mrb[0].mxu0
          %2033 = vdwg.mxu0
          %v2034 = vpack.c.bf16 %v2007, %v2004
          %v2035 = vpack.c.bf16 %v2015, %v2012
          %v2036 = vpack.c.bf16 %v2023, %v2020
          %v2037 = vpack.c.bf16 %v2031, %v2028
          %s2038 = scalar_lea.vmem [#allocation4], 32
          %2039 = vst [vmem:[%s2038] sm:$0xff] %v2034
          %2040 = vst [vmem:[%s2038 + $0x8] sm:$0xff] %v2035
          %2041 = vst [vmem:[%s2038 + $0x10] sm:$0xff] %v2036
          %2042 = vst [vmem:[%s2038 + $0x18] sm:$0xff] %v2037
        $region112: #{tpu_custom_call.1} parent=75 // pred_fallthru
          _
        %s2043 = smul.u32 %s40, 64
        %s2044 = sshra.s32 %s2043, 3
        %s2045 = sand.u32 %s2043, 7
        %s2046 = smul.u32 %s2044, 2
        %s2047 = smul.addr %s2046, 8
        %s2048 = scalar_lea.vmem %s527, %s2047 [#allocation6]
        %v2049 = vld [vmem:[%s2048] sm:$0xff]
        %v2050 = vld [vmem:[%s2048 + $0x8] sm:$0xff]
        %v2051 = vld [vmem:[%s2048 + $0x10] sm:$0xff]
        %v2052 = vld [vmem:[%s2048 + $0x18] sm:$0xff]
        %v2053 = vld [vmem:[%s2048 + $0x20] sm:$0xff]
        %v2054 = vld [vmem:[%s2048 + $0x28] sm:$0xff]
        %v2055 = vld [vmem:[%s2048 + $0x30] sm:$0xff]
        %v2056 = vld [vmem:[%s2048 + $0x38] sm:$0xff]
        %v2057 = vld [vmem:[%s2048 + $0x40] sm:$0xff]
        %v2058 = vld [vmem:[%s2048 + $0x48] sm:$0xff]
        %v2059 = vld [vmem:[%s2048 + $0x50] sm:$0xff]
        %v2060 = vld [vmem:[%s2048 + $0x58] sm:$0xff]
        %v2061 = vld [vmem:[%s2048 + $0x60] sm:$0xff]
        %v2062 = vld [vmem:[%s2048 + $0x68] sm:$0xff]
        %v2063 = vld [vmem:[%s2048 + $0x70] sm:$0xff]
        %v2064 = vld [vmem:[%s2048 + $0x78] sm:$0xff]
        %s2065 = sshra.s32 %s2043, 4
        %s2066 = sand.u32 %s2043, 15
        %s2067 = smul.addr %s2065, 8
        %s2068 = scalar_lea.vmem [#allocation2], %s2067
        %v2069 = vld [vmem:[%s2068] sm:$0xff]
        %v2070 = vld [vmem:[%s2068 + $0x8] sm:$0xff]
        %v2071 = vld [vmem:[%s2068 + $0x10] sm:$0xff]
        %v2072 = vld [vmem:[%s2068 + $0x18] sm:$0xff]
        %v2073 = vld [vmem:[#allocation3] sm:$0xff]
        %v2074 = vld [vmem:[#allocation3 + $0x8] sm:$0xff]
        %v2075 = vld [vmem:[#allocation3 + $0x10] sm:$0xff]
        %v2076 = vld [vmem:[#allocation3 + $0x18] sm:$0xff]
        %v2077 = vld [vmem:[#allocation4] sm:$0xff]
        %v2078 = vld [vmem:[#allocation4 + $0x8] sm:$0xff]
        %v2079 = vld [vmem:[#allocation4 + $0x10] sm:$0xff]
        %v2080 = vld [vmem:[#allocation4 + $0x18] sm:$0xff]
        %2081 = vmatprep.subr.bf16.mxu0 0
        %2082 = vmatpush1.bf16.xpose.msra.mxu0 %v2073
        %2083 = vmatprep.subr.bf16.mxu0 0
        %2084 = vmatpush1.bf16.xpose.msra.mxu0 %v2074
        %2085 = vmatprep.subr.bf16.mxu0 0
        %2086 = vmatpush1.bf16.xpose.msra.mxu0 %v2075
        %2087 = vmatprep.subr.bf16.mxu0 0
        %2088 = vmatpush1.bf16.xpose.msra.mxu0 %v2076
        %2089 = vmatprep.subr.bf16.mxu0 0
        %2090 = vmatpush1.bf16.xpose.msra.mxu0 0
        %2091 = vmatprep.subr.bf16.mxu0 0
        %2092 = vmatpush1.bf16.xpose.msra.mxu0 0
        %2093 = vmatprep.subr.bf16.mxu0 0
        %2094 = vmatpush1.bf16.xpose.msra.mxu0 0
        %2095 = vmatprep.subr.bf16.mxu0 0
        %2096 = vmatpush1.bf16.xpose.msra.mxu0 0
        %2097 = vmatprep.subr.bf16.mxu0 0
        %2098 = vmatpush1.bf16.xpose.msra.mxu0 0
        %2099 = vmatprep.subr.bf16.mxu0 0
        %2100 = vmatpush1.bf16.xpose.msra.mxu0 0
        %2101 = vmatprep.subr.bf16.mxu0 0
        %2102 = vmatpush1.bf16.xpose.msra.mxu0 0
        %2103 = vmatprep.subr.bf16.mxu0 0
        %2104 = vmatpush1.bf16.xpose.msra.mxu0 0
        %2105 = vmatprep.subr.bf16.mxu0 0
        %2106 = vmatpush1.bf16.xpose.msra.mxu0 0
        %2107 = vmatprep.subr.bf16.mxu0 0
        %2108 = vmatpush1.bf16.xpose.msra.mxu0 0
        %2109 = vmatprep.subr.bf16.mxu0 0
        %2110 = vmatpush1.bf16.xpose.msra.mxu0 0
        %2111 = vmatprep.subr.bf16.mxu0 0
        %2112 = vmatpush1.bf16.xpose.msra.mxu0 0
        %2113 = vmatprep.mubr.bf16.mxu0 0
        %2114 = vmatmul.mubr.bf16.gmra.mrb[0].mxu0 %v2069
        %v2115 = vpop.f32.mrb[0].mxu0
        %v2116 = vadd.f32 0.0, %v2115
        %v2117 = vpop.f32.mrb[0].mxu0
        %v2118 = vpop.f32.mrb[0].mxu0
        %v2119 = vadd.f32 0.0, %v2118
        %v2120 = vpop.f32.mrb[0].mxu0
        %2121 = vmatprep.mubr.bf16.mxu0 0
        %2122 = vmatmul.mubr.bf16.gmra.mrb[0].mxu0 %v2070
        %v2123 = vpop.f32.mrb[0].mxu0
        %v2124 = vadd.f32 0.0, %v2123
        %v2125 = vpop.f32.mrb[0].mxu0
        %v2126 = vpop.f32.mrb[0].mxu0
        %v2127 = vadd.f32 0.0, %v2126
        %v2128 = vpop.f32.mrb[0].mxu0
        %2129 = vmatprep.mubr.bf16.mxu0 0
        %2130 = vmatmul.mubr.bf16.gmra.mrb[0].mxu0 %v2071
        %v2131 = vpop.f32.mrb[0].mxu0
        %v2132 = vadd.f32 0.0, %v2131
        %v2133 = vpop.f32.mrb[0].mxu0
        %v2134 = vpop.f32.mrb[0].mxu0
        %v2135 = vadd.f32 0.0, %v2134
        %v2136 = vpop.f32.mrb[0].mxu0
        %2137 = vmatprep.mubr.bf16.mxu0 0
        %2138 = vmatmul.mubr.bf16.gmra.mrb[0].mxu0 %v2072
        %v2139 = vpop.f32.mrb[0].mxu0
        %v2140 = vadd.f32 0.0, %v2139
        %v2141 = vpop.f32.mrb[0].mxu0
        %v2142 = vpop.f32.mrb[0].mxu0
        %v2143 = vadd.f32 0.0, %v2142
        %v2144 = vpop.f32.mrb[0].mxu0
        %2145 = vdwg.mxu0
        %vm2146 = vcmask 523264
        %v2147 = vsel %vm2146, %v2116, -inf
        %2148 = vmax.xlane.f32.xlu0 %v2147
        %v2149 = vpop.xlane.xlu0 %2148
        %v2150 = vsel %vm2146, %v2119, -inf
        %2151 = vmax.xlane.f32.xlu0 %v2150
        %v2152 = vpop.xlane.xlu0 %2151
        %v2153 = vsel %vm2146, %v2124, -inf
        %2154 = vmax.xlane.f32.xlu0 %v2153
        %v2155 = vpop.xlane.xlu0 %2154
        %v2156 = vsel %vm2146, %v2127, -inf
        %2157 = vmax.xlane.f32.xlu0 %v2156
        %v2158 = vpop.xlane.xlu0 %2157
        %v2159 = vsel %vm2146, %v2132, -inf
        %2160 = vmax.xlane.f32.xlu0 %v2159
        %v2161 = vpop.xlane.xlu0 %2160
        %v2162 = vsel %vm2146, %v2135, -inf
        %2163 = vmax.xlane.f32.xlu0 %v2162
        %v2164 = vpop.xlane.xlu0 %2163
        %v2165 = vsel %vm2146, %v2140, -inf
        %2166 = vmax.xlane.f32.xlu0 %v2165
        %v2167 = vpop.xlane.xlu0 %2166
        %v2168 = vsel %vm2146, %v2143, -inf
        %2169 = vmax.xlane.f32.xlu0 %v2168
        %v2170 = vpop.xlane.xlu0 %2169
        %v2171 = vsub.f32 %v2116, %v2149
        %v2172 = vsub.f32 %v2119, %v2152
        %v2173 = vsub.f32 %v2124, %v2155
        %v2174 = vsub.f32 %v2127, %v2158
        %v2175 = vsub.f32 %v2132, %v2161
        %v2176 = vsub.f32 %v2135, %v2164
        %v2177 = vsub.f32 %v2140, %v2167
        %v2178 = vsub.f32 %v2143, %v2170
        %v2179 = vmul.f32 %v2171, 1.442695
        %v2180 = vpow.pop %v2179
        %v2181 = vmul.f32 %v2172, 1.442695
        %v2182 = vpow.pop %v2181
        %v2183 = vmul.f32 %v2173, 1.442695
        %v2184 = vpow.pop %v2183
        %v2185 = vmul.f32 %v2174, 1.442695
        %v2186 = vpow.pop %v2185
        %v2187 = vmul.f32 %v2175, 1.442695
        %v2188 = vpow.pop %v2187
        %v2189 = vmul.f32 %v2176, 1.442695
        %v2190 = vpow.pop %v2189
        %v2191 = vmul.f32 %v2177, 1.442695
        %v2192 = vpow.pop %v2191
        %v2193 = vmul.f32 %v2178, 1.442695
        %v2194 = vpow.pop %v2193
        %v2195 = vsel %vm2146, %v2180, 0.0
        %2196 = vadd.xlane.f32.xlu0 %v2195
        %v2197 = vpop.xlane.xlu0 %2196
        %v2198 = vsel %vm2146, %v2182, 0.0
        %2199 = vadd.xlane.f32.xlu0 %v2198
        %v2200 = vpop.xlane.xlu0 %2199
        %v2201 = vsel %vm2146, %v2184, 0.0
        %2202 = vadd.xlane.f32.xlu0 %v2201
        %v2203 = vpop.xlane.xlu0 %2202
        %v2204 = vsel %vm2146, %v2186, 0.0
        %2205 = vadd.xlane.f32.xlu0 %v2204
        %v2206 = vpop.xlane.xlu0 %2205
        %v2207 = vsel %vm2146, %v2188, 0.0
        %2208 = vadd.xlane.f32.xlu0 %v2207
        %v2209 = vpop.xlane.xlu0 %2208
        %v2210 = vsel %vm2146, %v2190, 0.0
        %2211 = vadd.xlane.f32.xlu0 %v2210
        %v2212 = vpop.xlane.xlu0 %2211
        %v2213 = vsel %vm2146, %v2192, 0.0
        %2214 = vadd.xlane.f32.xlu0 %v2213
        %v2215 = vpop.xlane.xlu0 %2214
        %v2216 = vsel %vm2146, %v2194, 0.0
        %2217 = vadd.xlane.f32.xlu0 %v2216
        %v2218 = vpop.xlane.xlu0 %2217
        %v2219 = vrcp.pop %v2197
        %v2220 = vrcp.pop %v2200
        %v2221 = vrcp.pop %v2203
        %v2222 = vrcp.pop %v2206
        %v2223 = vrcp.pop %v2209
        %v2224 = vrcp.pop %v2212
        %v2225 = vrcp.pop %v2215
        %v2226 = vrcp.pop %v2218
        %v2227 = vmul.f32 %v2180, %v2219
        %v2228 = vmul.f32 %v2182, %v2220
        %v2229 = vmul.f32 %v2184, %v2221
        %v2230 = vmul.f32 %v2186, %v2222
        %v2231 = vmul.f32 %v2188, %v2223
        %v2232 = vmul.f32 %v2190, %v2224
        %v2233 = vmul.f32 %v2192, %v2225
        %v2234 = vmul.f32 %v2194, %v2226
        %v2235 = vpack.c.bf16 %v2228, %v2227
        %v2236 = vpack.c.bf16 %v2230, %v2229
        %v2237 = vpack.c.bf16 %v2232, %v2231
        %v2238 = vpack.c.bf16 %v2234, %v2233
        %v2240 = vsel %vm2146, %v2235, 0
        %v2243 = vsel %vm2146, %v2236, 0
        %v2246 = vsel %vm2146, %v2237, 0
        %v2249 = vsel %vm2146, %v2238, 0
        %2251 = vmatprep.subr.bf16.mxu0 0
        %2252 = vmatpush1.bf16.msra.mxu0 %v2077
        %2253 = vmatprep.subr.bf16.mxu0 0
        %2254 = vmatpush1.bf16.msra.mxu0 %v2078
        %2255 = vmatprep.subr.bf16.mxu0 0
        %2256 = vmatpush1.bf16.msra.mxu0 %v2079
        %2257 = vmatprep.subr.bf16.mxu0 0
        %2258 = vmatpush1.bf16.msra.mxu0 %v2080
        %2259 = vmatprep.subr.bf16.mxu0 0
        %2260 = vmatpush1.bf16.msra.mxu0 0
        %2261 = vmatprep.subr.bf16.mxu0 0
        %2262 = vmatpush1.bf16.msra.mxu0 0
        %2263 = vmatprep.subr.bf16.mxu0 0
        %2264 = vmatpush1.bf16.msra.mxu0 0
        %2265 = vmatprep.subr.bf16.mxu0 0
        %2266 = vmatpush1.bf16.msra.mxu0 0
        %2267 = vmatprep.subr.bf16.mxu0 0
        %2268 = vmatpush1.bf16.msra.mxu0 0
        %2269 = vmatprep.subr.bf16.mxu0 0
        %2270 = vmatpush1.bf16.msra.mxu0 0
        %2271 = vmatprep.subr.bf16.mxu0 0
        %2272 = vmatpush1.bf16.msra.mxu0 0
        %2273 = vmatprep.subr.bf16.mxu0 0
        %2274 = vmatpush1.bf16.msra.mxu0 0
        %2275 = vmatprep.subr.bf16.mxu0 0
        %2276 = vmatpush1.bf16.msra.mxu0 0
        %2277 = vmatprep.subr.bf16.mxu0 0
        %2278 = vmatpush1.bf16.msra.mxu0 0
        %2279 = vmatprep.subr.bf16.mxu0 0
        %2280 = vmatpush1.bf16.msra.mxu0 0
        %2281 = vmatprep.subr.bf16.mxu0 0
        %2282 = vmatpush1.bf16.msra.mxu0 0
        %2283 = vmatprep.mubr.bf16.mxu0 0
        %2284 = vmatmul.mubr.bf16.gmra.mrb[0].mxu0 %v2240
        %v2285 = vpop.f32.mrb[0].mxu0
        %v2286 = vadd.f32 0.0, %v2285
        %v2287 = vpop.f32.mrb[0].mxu0
        %v2288 = vpop.f32.mrb[0].mxu0
        %v2289 = vadd.f32 0.0, %v2288
        %v2290 = vpop.f32.mrb[0].mxu0
        %2291 = vmatprep.mubr.bf16.mxu0 0
        %2292 = vmatmul.mubr.bf16.gmra.mrb[0].mxu0 %v2243
        %v2293 = vpop.f32.mrb[0].mxu0
        %v2294 = vadd.f32 0.0, %v2293
        %v2295 = vpop.f32.mrb[0].mxu0
        %v2296 = vpop.f32.mrb[0].mxu0
        %v2297 = vadd.f32 0.0, %v2296
        %v2298 = vpop.f32.mrb[0].mxu0
        %2299 = vmatprep.mubr.bf16.mxu0 0
        %2300 = vmatmul.mubr.bf16.gmra.mrb[0].mxu0 %v2246
        %v2301 = vpop.f32.mrb[0].mxu0
        %v2302 = vadd.f32 0.0, %v2301
        %v2303 = vpop.f32.mrb[0].mxu0
        %v2304 = vpop.f32.mrb[0].mxu0
        %v2305 = vadd.f32 0.0, %v2304
        %v2306 = vpop.f32.mrb[0].mxu0
        %2307 = vmatprep.mubr.bf16.mxu0 0
        %2308 = vmatmul.mubr.bf16.gmra.mrb[0].mxu0 %v2249
        %v2309 = vpop.f32.mrb[0].mxu0
        %v2310 = vadd.f32 0.0, %v2309
        %v2311 = vpop.f32.mrb[0].mxu0
        %v2312 = vpop.f32.mrb[0].mxu0
        %v2313 = vadd.f32 0.0, %v2312
        %v2314 = vpop.f32.mrb[0].mxu0
        %2315 = vdwg.mxu0
        %v2316 = vpack.c.bf16 %v2289, %v2286
        %v2317 = vpack.c.bf16 %v2297, %v2294
        %v2318 = vpack.c.bf16 %v2305, %v2302
        %v2319 = vpack.c.bf16 %v2313, %v2310
        %2320 = vst [vmem:[#allocation5] sm:$0xff] %v2316
        %2321 = vst [vmem:[#allocation5 + $0x10] sm:$0xff] %v2317
        %2322 = vst [vmem:[#allocation5 + $0x20] sm:$0xff] %v2318
        %2323 = vst [vmem:[#allocation5 + $0x30] sm:$0xff] %v2319
        %s2324 = sadd.s32 %s2065, 4
        %s2325 = smul.addr %s2324, 8
        %s2326 = scalar_lea.vmem [#allocation2], %s2325
        %v2327 = vld [vmem:[%s2326] sm:$0xff]
        %v2328 = vld [vmem:[%s2326 + $0x8] sm:$0xff]
        %v2329 = vld [vmem:[%s2326 + $0x10] sm:$0xff]
        %v2330 = vld [vmem:[%s2326 + $0x18] sm:$0xff]
        %s2331 = scalar_lea.vmem [#allocation3], 32
        %v2332 = vld [vmem:[%s2331] sm:$0xff]
        %v2333 = vld [vmem:[%s2331 + $0x8] sm:$0xff]
        %v2334 = vld [vmem:[%s2331 + $0x10] sm:$0xff]
        %v2335 = vld [vmem:[%s2331 + $0x18] sm:$0xff]
        %s2336 = scalar_lea.vmem [#allocation4], 32
        %v2337 = vld [vmem:[%s2336] sm:$0xff]
        %v2338 = vld [vmem:[%s2336 + $0x8] sm:$0xff]
        %v2339 = vld [vmem:[%s2336 + $0x10] sm:$0xff]
        %v2340 = vld [vmem:[%s2336 + $0x18] sm:$0xff]
        %2341 = vmatprep.subr.bf16.mxu0 0
        %2342 = vmatpush1.bf16.xpose.msra.mxu0 %v2332
        %2343 = vmatprep.subr.bf16.mxu0 0
        %2344 = vmatpush1.bf16.xpose.msra.mxu0 %v2333
        %2345 = vmatprep.subr.bf16.mxu0 0
        %2346 = vmatpush1.bf16.xpose.msra.mxu0 %v2334
        %2347 = vmatprep.subr.bf16.mxu0 0
        %2348 = vmatpush1.bf16.xpose.msra.mxu0 %v2335
        %2349 = vmatprep.subr.bf16.mxu0 0
        %2350 = vmatpush1.bf16.xpose.msra.mxu0 0
        %2351 = vmatprep.subr.bf16.mxu0 0
        %2352 = vmatpush1.bf16.xpose.msra.mxu0 0
        %2353 = vmatprep.subr.bf16.mxu0 0
        %2354 = vmatpush1.bf16.xpose.msra.mxu0 0
        %2355 = vmatprep.subr.bf16.mxu0 0
        %2356 = vmatpush1.bf16.xpose.msra.mxu0 0
        %2357 = vmatprep.subr.bf16.mxu0 0
        %2358 = vmatpush1.bf16.xpose.msra.mxu0 0
        %2359 = vmatprep.subr.bf16.mxu0 0
        %2360 = vmatpush1.bf16.xpose.msra.mxu0 0
        %2361 = vmatprep.subr.bf16.mxu0 0
        %2362 = vmatpush1.bf16.xpose.msra.mxu0 0
        %2363 = vmatprep.subr.bf16.mxu0 0
        %2364 = vmatpush1.bf16.xpose.msra.mxu0 0
        %2365 = vmatprep.subr.bf16.mxu0 0
        %2366 = vmatpush1.bf16.xpose.msra.mxu0 0
        %2367 = vmatprep.subr.bf16.mxu0 0
        %2368 = vmatpush1.bf16.xpose.msra.mxu0 0
        %2369 = vmatprep.subr.bf16.mxu0 0
        %2370 = vmatpush1.bf16.xpose.msra.mxu0 0
        %2371 = vmatprep.subr.bf16.mxu0 0
        %2372 = vmatpush1.bf16.xpose.msra.mxu0 0
        %2373 = vmatprep.mubr.bf16.mxu0 0
        %2374 = vmatmul.mubr.bf16.gmra.mrb[0].mxu0 %v2327
        %v2375 = vpop.f32.mrb[0].mxu0
        %v2376 = vadd.f32 0.0, %v2375
        %v2377 = vpop.f32.mrb[0].mxu0
        %v2378 = vpop.f32.mrb[0].mxu0
        %v2379 = vadd.f32 0.0, %v2378
        %v2380 = vpop.f32.mrb[0].mxu0
        %2381 = vmatprep.mubr.bf16.mxu0 0
        %2382 = vmatmul.mubr.bf16.gmra.mrb[0].mxu0 %v2328
        %v2383 = vpop.f32.mrb[0].mxu0
        %v2384 = vadd.f32 0.0, %v2383
        %v2385 = vpop.f32.mrb[0].mxu0
        %v2386 = vpop.f32.mrb[0].mxu0
        %v2387 = vadd.f32 0.0, %v2386
        %v2388 = vpop.f32.mrb[0].mxu0
        %2389 = vmatprep.mubr.bf16.mxu0 0
        %2390 = vmatmul.mubr.bf16.gmra.mrb[0].mxu0 %v2329
        %v2391 = vpop.f32.mrb[0].mxu0
        %v2392 = vadd.f32 0.0, %v2391
        %v2393 = vpop.f32.mrb[0].mxu0
        %v2394 = vpop.f32.mrb[0].mxu0
        %v2395 = vadd.f32 0.0, %v2394
        %v2396 = vpop.f32.mrb[0].mxu0
        %2397 = vmatprep.mubr.bf16.mxu0 0
        %2398 = vmatmul.mubr.bf16.gmra.mrb[0].mxu0 %v2330
        %v2399 = vpop.f32.mrb[0].mxu0
        %v2400 = vadd.f32 0.0, %v2399
        %v2401 = vpop.f32.mrb[0].mxu0
        %v2402 = vpop.f32.mrb[0].mxu0
        %v2403 = vadd.f32 0.0, %v2402
        %v2404 = vpop.f32.mrb[0].mxu0
        %2405 = vdwg.mxu0
        %v2406 = vsel %vm2146, %v2376, -inf
        %2407 = vmax.xlane.f32.xlu0 %v2406
        %v2408 = vpop.xlane.xlu0 %2407
        %v2409 = vsel %vm2146, %v2379, -inf
        %2410 = vmax.xlane.f32.xlu0 %v2409
        %v2411 = vpop.xlane.xlu0 %2410
        %v2412 = vsel %vm2146, %v2384, -inf
        %2413 = vmax.xlane.f32.xlu0 %v2412
        %v2414 = vpop.xlane.xlu0 %2413
        %v2415 = vsel %vm2146, %v2387, -inf
        %2416 = vmax.xlane.f32.xlu0 %v2415
        %v2417 = vpop.xlane.xlu0 %2416
        %v2418 = vsel %vm2146, %v2392, -inf
        %2419 = vmax.xlane.f32.xlu0 %v2418
        %v2420 = vpop.xlane.xlu0 %2419
        %v2421 = vsel %vm2146, %v2395, -inf
        %2422 = vmax.xlane.f32.xlu0 %v2421
        %v2423 = vpop.xlane.xlu0 %2422
        %v2424 = vsel %vm2146, %v2400, -inf
        %2425 = vmax.xlane.f32.xlu0 %v2424
        %v2426 = vpop.xlane.xlu0 %2425
        %v2427 = vsel %vm2146, %v2403, -inf
        %2428 = vmax.xlane.f32.xlu0 %v2427
        %v2429 = vpop.xlane.xlu0 %2428
        %v2430 = vsub.f32 %v2376, %v2408
        %v2431 = vsub.f32 %v2379, %v2411
        %v2432 = vsub.f32 %v2384, %v2414
        %v2433 = vsub.f32 %v2387, %v2417
        %v2434 = vsub.f32 %v2392, %v2420
        %v2435 = vsub.f32 %v2395, %v2423
        %v2436 = vsub.f32 %v2400, %v2426
        %v2437 = vsub.f32 %v2403, %v2429
        %v2438 = vmul.f32 %v2430, 1.442695
        %v2439 = vpow.pop %v2438
        %v2440 = vmul.f32 %v2431, 1.442695
        %v2441 = vpow.pop %v2440
        %v2442 = vmul.f32 %v2432, 1.442695
        %v2443 = vpow.pop %v2442
        %v2444 = vmul.f32 %v2433, 1.442695
        %v2445 = vpow.pop %v2444
        %v2446 = vmul.f32 %v2434, 1.442695
        %v2447 = vpow.pop %v2446
        %v2448 = vmul.f32 %v2435, 1.442695
        %v2449 = vpow.pop %v2448
        %v2450 = vmul.f32 %v2436, 1.442695
        %v2451 = vpow.pop %v2450
        %v2452 = vmul.f32 %v2437, 1.442695
        %v2453 = vpow.pop %v2452
        %v2454 = vsel %vm2146, %v2439, 0.0
        %2455 = vadd.xlane.f32.xlu0 %v2454
        %v2456 = vpop.xlane.xlu0 %2455
        %v2457 = vsel %vm2146, %v2441, 0.0
        %2458 = vadd.xlane.f32.xlu0 %v2457
        %v2459 = vpop.xlane.xlu0 %2458
        %v2460 = vsel %vm2146, %v2443, 0.0
        %2461 = vadd.xlane.f32.xlu0 %v2460
        %v2462 = vpop.xlane.xlu0 %2461
        %v2463 = vsel %vm2146, %v2445, 0.0
        %2464 = vadd.xlane.f32.xlu0 %v2463
        %v2465 = vpop.xlane.xlu0 %2464
        %v2466 = vsel %vm2146, %v2447, 0.0
        %2467 = vadd.xlane.f32.xlu0 %v2466
        %v2468 = vpop.xlane.xlu0 %2467
        %v2469 = vsel %vm2146, %v2449, 0.0
        %2470 = vadd.xlane.f32.xlu0 %v2469
        %v2471 = vpop.xlane.xlu0 %2470
        %v2472 = vsel %vm2146, %v2451, 0.0
        %2473 = vadd.xlane.f32.xlu0 %v2472
        %v2474 = vpop.xlane.xlu0 %2473
        %v2475 = vsel %vm2146, %v2453, 0.0
        %2476 = vadd.xlane.f32.xlu0 %v2475
        %v2477 = vpop.xlane.xlu0 %2476
        %v2478 = vrcp.pop %v2456
        %v2479 = vrcp.pop %v2459
        %v2480 = vrcp.pop %v2462
        %v2481 = vrcp.pop %v2465
        %v2482 = vrcp.pop %v2468
        %v2483 = vrcp.pop %v2471
        %v2484 = vrcp.pop %v2474
        %v2485 = vrcp.pop %v2477
        %v2486 = vmul.f32 %v2439, %v2478
        %v2487 = vmul.f32 %v2441, %v2479
        %v2488 = vmul.f32 %v2443, %v2480
        %v2489 = vmul.f32 %v2445, %v2481
        %v2490 = vmul.f32 %v2447, %v2482
        %v2491 = vmul.f32 %v2449, %v2483
        %v2492 = vmul.f32 %v2451, %v2484
        %v2493 = vmul.f32 %v2453, %v2485
        %v2494 = vpack.c.bf16 %v2487, %v2486
        %v2495 = vpack.c.bf16 %v2489, %v2488
        %v2496 = vpack.c.bf16 %v2491, %v2490
        %v2497 = vpack.c.bf16 %v2493, %v2492
        %v2499 = vsel %vm2146, %v2494, 0
        %v2502 = vsel %vm2146, %v2495, 0
        %v2505 = vsel %vm2146, %v2496, 0
        %v2508 = vsel %vm2146, %v2497, 0
        %2510 = vmatprep.subr.bf16.mxu0 0
        %2511 = vmatpush1.bf16.msra.mxu0 %v2337
        %2512 = vmatprep.subr.bf16.mxu0 0
        %2513 = vmatpush1.bf16.msra.mxu0 %v2338
        %2514 = vmatprep.subr.bf16.mxu0 0
        %2515 = vmatpush1.bf16.msra.mxu0 %v2339
        %2516 = vmatprep.subr.bf16.mxu0 0
        %2517 = vmatpush1.bf16.msra.mxu0 %v2340
        %2518 = vmatprep.subr.bf16.mxu0 0
        %2519 = vmatpush1.bf16.msra.mxu0 0
        %2520 = vmatprep.subr.bf16.mxu0 0
        %2521 = vmatpush1.bf16.msra.mxu0 0
        %2522 = vmatprep.subr.bf16.mxu0 0
        %2523 = vmatpush1.bf16.msra.mxu0 0
        %2524 = vmatprep.subr.bf16.mxu0 0
        %2525 = vmatpush1.bf16.msra.mxu0 0
        %2526 = vmatprep.subr.bf16.mxu0 0
        %2527 = vmatpush1.bf16.msra.mxu0 0
        %2528 = vmatprep.subr.bf16.mxu0 0
        %2529 = vmatpush1.bf16.msra.mxu0 0
        %2530 = vmatprep.subr.bf16.mxu0 0
        %2531 = vmatpush1.bf16.msra.mxu0 0
        %2532 = vmatprep.subr.bf16.mxu0 0
        %2533 = vmatpush1.bf16.msra.mxu0 0
        %2534 = vmatprep.subr.bf16.mxu0 0
        %2535 = vmatpush1.bf16.msra.mxu0 0
        %2536 = vmatprep.subr.bf16.mxu0 0
        %2537 = vmatpush1.bf16.msra.mxu0 0
        %2538 = vmatprep.subr.bf16.mxu0 0
        %2539 = vmatpush1.bf16.msra.mxu0 0
        %2540 = vmatprep.subr.bf16.mxu0 0
        %2541 = vmatpush1.bf16.msra.mxu0 0
        %2542 = vmatprep.mubr.bf16.mxu0 0
        %2543 = vmatmul.mubr.bf16.gmra.mrb[0].mxu0 %v2499
        %v2544 = vpop.f32.mrb[0].mxu0
        %v2545 = vadd.f32 0.0, %v2544
        %v2546 = vpop.f32.mrb[0].mxu0
        %v2547 = vpop.f32.mrb[0].mxu0
        %v2548 = vadd.f32 0.0, %v2547
        %v2549 = vpop.f32.mrb[0].mxu0
        %2550 = vmatprep.mubr.bf16.mxu0 0
        %2551 = vmatmul.mubr.bf16.gmra.mrb[0].mxu0 %v2502
        %v2552 = vpop.f32.mrb[0].mxu0
        %v2553 = vadd.f32 0.0, %v2552
        %v2554 = vpop.f32.mrb[0].mxu0
        %v2555 = vpop.f32.mrb[0].mxu0
        %v2556 = vadd.f32 0.0, %v2555
        %v2557 = vpop.f32.mrb[0].mxu0
        %2558 = vmatprep.mubr.bf16.mxu0 0
        %2559 = vmatmul.mubr.bf16.gmra.mrb[0].mxu0 %v2505
        %v2560 = vpop.f32.mrb[0].mxu0
        %v2561 = vadd.f32 0.0, %v2560
        %v2562 = vpop.f32.mrb[0].mxu0
        %v2563 = vpop.f32.mrb[0].mxu0
        %v2564 = vadd.f32 0.0, %v2563
        %v2565 = vpop.f32.mrb[0].mxu0
        %2566 = vmatprep.mubr.bf16.mxu0 0
        %2567 = vmatmul.mubr.bf16.gmra.mrb[0].mxu0 %v2508
        %v2568 = vpop.f32.mrb[0].mxu0
        %v2569 = vadd.f32 0.0, %v2568
        %v2570 = vpop.f32.mrb[0].mxu0
        %v2571 = vpop.f32.mrb[0].mxu0
        %v2572 = vadd.f32 0.0, %v2571
        %v2573 = vpop.f32.mrb[0].mxu0
        %2574 = vdwg.mxu0
        %v2575 = vpack.c.bf16 %v2548, %v2545
        %v2576 = vpack.c.bf16 %v2556, %v2553
        %v2577 = vpack.c.bf16 %v2564, %v2561
        %v2578 = vpack.c.bf16 %v2572, %v2569
        %2579 = vst [vmem:[#allocation5 + $0x8] sm:$0xff] %v2575
        %2580 = vst [vmem:[#allocation5 + $0x18] sm:$0xff] %v2576
        %2581 = vst [vmem:[#allocation5 + $0x28] sm:$0xff] %v2577
        %2582 = vst [vmem:[#allocation5 + $0x38] sm:$0xff] %v2578
        %v2583 = vld [vmem:[#allocation5] sm:$0xff]
        %v2584 = vld [vmem:[#allocation5 + $0x8] sm:$0xff]
        %v2585 = vld [vmem:[#allocation5 + $0x10] sm:$0xff]
        %v2586 = vld [vmem:[#allocation5 + $0x18] sm:$0xff]
        %v2587 = vld [vmem:[#allocation5 + $0x20] sm:$0xff]
        %v2588 = vld [vmem:[#allocation5 + $0x28] sm:$0xff]
        %v2589 = vld [vmem:[#allocation5 + $0x30] sm:$0xff]
        %v2590 = vld [vmem:[#allocation5 + $0x38] sm:$0xff]
        %v2591 = vld [vmem:[#allocation15] sm:$0xff]
        %v2592 = vld [vmem:[#allocation15 + $0x8] sm:$0xff]
        %v2593 = vld [vmem:[#allocation15 + $0x10] sm:$0xff]
        %v2594 = vld [vmem:[#allocation15 + $0x18] sm:$0xff]
        %v2595 = vld [vmem:[#allocation15 + $0x20] sm:$0xff]
        %v2596 = vld [vmem:[#allocation15 + $0x28] sm:$0xff]
        %v2597 = vld [vmem:[#allocation15 + $0x30] sm:$0xff]
        %v2598 = vld [vmem:[#allocation15 + $0x38] sm:$0xff]
        %v2599 = vld [vmem:[#allocation15 + $0x40] sm:$0xff]
        %v2600 = vld [vmem:[#allocation15 + $0x48] sm:$0xff]
        %v2601 = vld [vmem:[#allocation15 + $0x50] sm:$0xff]
        %v2602 = vld [vmem:[#allocation15 + $0x58] sm:$0xff]
        %v2603 = vld [vmem:[#allocation15 + $0x60] sm:$0xff]
        %v2604 = vld [vmem:[#allocation15 + $0x68] sm:$0xff]
        %v2605 = vld [vmem:[#allocation15 + $0x70] sm:$0xff]
        %v2606 = vld [vmem:[#allocation15 + $0x78] sm:$0xff]
        %v2607 = vld [vmem:[#allocation15 + $0x80] sm:$0xff]
        %v2608 = vld [vmem:[#allocation15 + $0x88] sm:$0xff]
        %v2609 = vld [vmem:[#allocation15 + $0x90] sm:$0xff]
        %v2610 = vld [vmem:[#allocation15 + $0x98] sm:$0xff]
        %v2611 = vld [vmem:[#allocation15 + $0xa0] sm:$0xff]
        %v2612 = vld [vmem:[#allocation15 + $0xa8] sm:$0xff]
        %v2613 = vld [vmem:[#allocation15 + $0xb0] sm:$0xff]
        %v2614 = vld [vmem:[#allocation15 + $0xb8] sm:$0xff]
        %v2615 = vld [vmem:[#allocation15 + $0xc0] sm:$0xff]
        %v2616 = vld [vmem:[#allocation15 + $0xc8] sm:$0xff]
        %v2617 = vld [vmem:[#allocation15 + $0xd0] sm:$0xff]
        %v2618 = vld [vmem:[#allocation15 + $0xd8] sm:$0xff]
        %v2619 = vld [vmem:[#allocation15 + $0xe0] sm:$0xff]
        %v2620 = vld [vmem:[#allocation15 + $0xe8] sm:$0xff]
        %v2621 = vld [vmem:[#allocation15 + $0xf0] sm:$0xff]
        %v2622 = vld [vmem:[#allocation15 + $0xf8] sm:$0xff]
        %v2655 = vunpack.c.l.b16 %v2591
        %v2656 = vunpack.c.h.b16 %v2591
        %v2657 = vunpack.c.l.b16 %v2592
        %v2658 = vunpack.c.h.b16 %v2592
        %v2659 = vunpack.c.l.b16 %v2593
        %v2660 = vunpack.c.h.b16 %v2593
        %v2661 = vunpack.c.l.b16 %v2594
        %v2662 = vunpack.c.h.b16 %v2594
        %v2663 = vunpack.c.l.b16 %v2595
        %v2664 = vunpack.c.h.b16 %v2595
        %v2665 = vunpack.c.l.b16 %v2596
        %v2666 = vunpack.c.h.b16 %v2596
        %v2667 = vunpack.c.l.b16 %v2597
        %v2668 = vunpack.c.h.b16 %v2597
        %v2669 = vunpack.c.l.b16 %v2598
        %v2670 = vunpack.c.h.b16 %v2598
        %v2671 = vunpack.c.l.b16 %v2599
        %v2672 = vunpack.c.h.b16 %v2599
        %v2673 = vunpack.c.l.b16 %v2600
        %v2674 = vunpack.c.h.b16 %v2600
        %v2675 = vunpack.c.l.b16 %v2601
        %v2676 = vunpack.c.h.b16 %v2601
        %v2677 = vunpack.c.l.b16 %v2602
        %v2678 = vunpack.c.h.b16 %v2602
        %v2679 = vunpack.c.l.b16 %v2603
        %v2680 = vunpack.c.h.b16 %v2603
        %v2681 = vunpack.c.l.b16 %v2604
        %v2682 = vunpack.c.h.b16 %v2604
        %v2683 = vunpack.c.l.b16 %v2605
        %v2684 = vunpack.c.h.b16 %v2605
        %v2685 = vunpack.c.l.b16 %v2606
        %v2686 = vunpack.c.h.b16 %v2606
        %v2687 = vunpack.c.l.b16 %v2607
        %v2688 = vunpack.c.h.b16 %v2607
        %v2689 = vunpack.c.l.b16 %v2608
        %v2690 = vunpack.c.h.b16 %v2608
        %v2691 = vunpack.c.l.b16 %v2609
        %v2692 = vunpack.c.h.b16 %v2609
        %v2693 = vunpack.c.l.b16 %v2610
        %v2694 = vunpack.c.h.b16 %v2610
        %v2695 = vunpack.c.l.b16 %v2611
        %v2696 = vunpack.c.h.b16 %v2611
        %v2697 = vunpack.c.l.b16 %v2612
        %v2698 = vunpack.c.h.b16 %v2612
        %v2699 = vunpack.c.l.b16 %v2613
        %v2700 = vunpack.c.h.b16 %v2613
        %v2701 = vunpack.c.l.b16 %v2614
        %v2702 = vunpack.c.h.b16 %v2614
        %v2703 = vunpack.c.l.b16 %v2615
        %v2704 = vunpack.c.h.b16 %v2615
        %v2705 = vunpack.c.l.b16 %v2616
        %v2706 = vunpack.c.h.b16 %v2616
        %v2707 = vunpack.c.l.b16 %v2617
        %v2708 = vunpack.c.h.b16 %v2617
        %v2709 = vunpack.c.l.b16 %v2618
        %v2710 = vunpack.c.h.b16 %v2618
        %v2711 = vunpack.c.l.b16 %v2619
        %v2712 = vunpack.c.h.b16 %v2619
        %v2713 = vunpack.c.l.b16 %v2620
        %v2714 = vunpack.c.h.b16 %v2620
        %v2715 = vunpack.c.l.b16 %v2621
        %v2716 = vunpack.c.h.b16 %v2621
        %v2717 = vunpack.c.l.b16 %v2622
        %v2718 = vunpack.c.h.b16 %v2622
        %v2719 = vpack.c.b16 %v2657, %v2655
        %v2720 = vpack.c.b16 %v2658, %v2656
        %v2721 = vpack.c.b16 %v2661, %v2659
        %v2722 = vpack.c.b16 %v2662, %v2660
        %v2723 = vpack.c.b16 %v2665, %v2663
        %v2724 = vpack.c.b16 %v2666, %v2664
        %v2725 = vpack.c.b16 %v2669, %v2667
        %v2726 = vpack.c.b16 %v2670, %v2668
        %v2727 = vpack.c.b16 %v2673, %v2671
        %v2728 = vpack.c.b16 %v2674, %v2672
        %v2729 = vpack.c.b16 %v2677, %v2675
        %v2730 = vpack.c.b16 %v2678, %v2676
        %v2731 = vpack.c.b16 %v2681, %v2679
        %v2732 = vpack.c.b16 %v2682, %v2680
        %v2733 = vpack.c.b16 %v2685, %v2683
        %v2734 = vpack.c.b16 %v2686, %v2684
        %v2735 = vpack.c.b16 %v2689, %v2687
        %v2736 = vpack.c.b16 %v2690, %v2688
        %v2737 = vpack.c.b16 %v2693, %v2691
        %v2738 = vpack.c.b16 %v2694, %v2692
        %v2739 = vpack.c.b16 %v2697, %v2695
        %v2740 = vpack.c.b16 %v2698, %v2696
        %v2741 = vpack.c.b16 %v2701, %v2699
        %v2742 = vpack.c.b16 %v2702, %v2700
        %v2743 = vpack.c.b16 %v2705, %v2703
        %v2744 = vpack.c.b16 %v2706, %v2704
        %v2745 = vpack.c.b16 %v2709, %v2707
        %v2746 = vpack.c.b16 %v2710, %v2708
        %v2747 = vpack.c.b16 %v2713, %v2711
        %v2748 = vpack.c.b16 %v2714, %v2712
        %v2749 = vpack.c.b16 %v2717, %v2715
        %v2750 = vpack.c.b16 %v2718, %v2716
        %2783 = vmatprep.subr.bf16.mxu0 %v2720
        %2784 = vmatpush1.bf16.msra.mxu0 %v2719
        %2785 = vmatprep.subr.bf16.mxu0 %v2722
        %2786 = vmatpush1.bf16.msra.mxu0 %v2721
        %2787 = vmatprep.subr.bf16.mxu0 %v2724
        %2788 = vmatpush1.bf16.msra.mxu0 %v2723
        %2789 = vmatprep.subr.bf16.mxu0 %v2726
        %2790 = vmatpush1.bf16.msra.mxu0 %v2725
        %2791 = vmatprep.subr.bf16.mxu0 %v2728
        %2792 = vmatpush1.bf16.msra.mxu0 %v2727
        %2793 = vmatprep.subr.bf16.mxu0 %v2730
        %2794 = vmatpush1.bf16.msra.mxu0 %v2729
        %2795 = vmatprep.subr.bf16.mxu0 %v2732
        %2796 = vmatpush1.bf16.msra.mxu0 %v2731
        %2797 = vmatprep.subr.bf16.mxu0 %v2734
        %2798 = vmatpush1.bf16.msra.mxu0 %v2733
        %2799 = vmatprep.subr.bf16.mxu0 %v2736
        %2800 = vmatpush1.bf16.msra.mxu0 %v2735
        %2801 = vmatprep.subr.bf16.mxu0 %v2738
        %2802 = vmatpush1.bf16.msra.mxu0 %v2737
        %2803 = vmatprep.subr.bf16.mxu0 %v2740
        %2804 = vmatpush1.bf16.msra.mxu0 %v2739
        %2805 = vmatprep.subr.bf16.mxu0 %v2742
        %2806 = vmatpush1.bf16.msra.mxu0 %v2741
        %2807 = vmatprep.subr.bf16.mxu0 %v2744
        %2808 = vmatpush1.bf16.msra.mxu0 %v2743
        %2809 = vmatprep.subr.bf16.mxu0 %v2746
        %2810 = vmatpush1.bf16.msra.mxu0 %v2745
        %2811 = vmatprep.subr.bf16.mxu0 %v2748
        %2812 = vmatpush1.bf16.msra.mxu0 %v2747
        %2813 = vmatprep.subr.bf16.mxu0 %v2750
        %2814 = vmatpush1.bf16.msra.mxu0 %v2749
        %2815 = vmatprep.mubr.bf16.mxu0 %v2584
        %2816 = vmatmul.mubr.bf16.gmra.mrb[0].mxu0 %v2583
        %v2817 = vpop.f32.mrb[0].mxu0
        %v2818 = vadd.f32 0.0, %v2817
        %v2819 = vpop.f32.mrb[0].mxu0
        %v2820 = vadd.f32 0.0, %v2819
        %v2821 = vpop.f32.mrb[0].mxu0
        %v2822 = vadd.f32 0.0, %v2821
        %v2823 = vpop.f32.mrb[0].mxu0
        %v2824 = vadd.f32 0.0, %v2823
        %2825 = vmatprep.mubr.bf16.mxu0 %v2586
        %2826 = vmatmul.mubr.bf16.gmra.mrb[0].mxu0 %v2585
        %v2827 = vpop.f32.mrb[0].mxu0
        %v2828 = vadd.f32 0.0, %v2827
        %v2829 = vpop.f32.mrb[0].mxu0
        %v2830 = vadd.f32 0.0, %v2829
        %v2831 = vpop.f32.mrb[0].mxu0
        %v2832 = vadd.f32 0.0, %v2831
        %v2833 = vpop.f32.mrb[0].mxu0
        %v2834 = vadd.f32 0.0, %v2833
        %2835 = vmatprep.mubr.bf16.mxu0 %v2588
        %2836 = vmatmul.mubr.bf16.gmra.mrb[0].mxu0 %v2587
        %v2837 = vpop.f32.mrb[0].mxu0
        %v2838 = vadd.f32 0.0, %v2837
        %v2839 = vpop.f32.mrb[0].mxu0
        %v2840 = vadd.f32 0.0, %v2839
        %v2841 = vpop.f32.mrb[0].mxu0
        %v2842 = vadd.f32 0.0, %v2841
        %v2843 = vpop.f32.mrb[0].mxu0
        %v2844 = vadd.f32 0.0, %v2843
        %2845 = vmatprep.mubr.bf16.mxu0 %v2590
        %2846 = vmatmul.mubr.bf16.gmra.mrb[0].mxu0 %v2589
        %v2847 = vpop.f32.mrb[0].mxu0
        %v2848 = vadd.f32 0.0, %v2847
        %v2849 = vpop.f32.mrb[0].mxu0
        %v2850 = vadd.f32 0.0, %v2849
        %v2851 = vpop.f32.mrb[0].mxu0
        %v2852 = vadd.f32 0.0, %v2851
        %v2853 = vpop.f32.mrb[0].mxu0
        %v2854 = vadd.f32 0.0, %v2853
        %2855 = vdwg.mxu0
        %v2856 = vadd.f32 %v2049, %v2818
        %v2857 = vadd.f32 %v2050, %v2820
        %v2858 = vadd.f32 %v2051, %v2822
        %v2859 = vadd.f32 %v2052, %v2824
        %v2860 = vadd.f32 %v2053, %v2828
        %v2861 = vadd.f32 %v2054, %v2830
        %v2862 = vadd.f32 %v2055, %v2832
        %v2863 = vadd.f32 %v2056, %v2834
        %v2864 = vadd.f32 %v2057, %v2838
        %v2865 = vadd.f32 %v2058, %v2840
        %v2866 = vadd.f32 %v2059, %v2842
        %v2867 = vadd.f32 %v2060, %v2844
        %v2868 = vadd.f32 %v2061, %v2848
        %v2869 = vadd.f32 %v2062, %v2850
        %v2870 = vadd.f32 %v2063, %v2852
        %v2871 = vadd.f32 %v2064, %v2854
        %v2872 = vld [vmem:[%s7] sm:$0x3]
        %v2874 = vlaneseq
        %v2875 = vshrl.u32 %v2874, 7
        %v2876 = vsub.s32 0, %v2875
        %v2877 = vrot.slane %v2872, %v2876
        %v2878 = vlaneseq
        %v2879 = vshrl.u32 %v2878, 7
        %v2880 = vsub.s32 1, %v2879
        %v2881 = vrot.slane %v2872, %v2880
        %v2884 = vadd.f32 %v2856, %v2877
        %v2885 = vadd.f32 %v2857, %v2881
        %v2886 = vadd.f32 %v2858, %v2877
        %v2887 = vadd.f32 %v2859, %v2881
        %v2888 = vadd.f32 %v2860, %v2877
        %v2889 = vadd.f32 %v2861, %v2881
        %v2890 = vadd.f32 %v2862, %v2877
        %v2891 = vadd.f32 %v2863, %v2881
        %v2892 = vadd.f32 %v2864, %v2877
        %v2893 = vadd.f32 %v2865, %v2881
        %v2894 = vadd.f32 %v2866, %v2877
        %v2895 = vadd.f32 %v2867, %v2881
        %v2896 = vadd.f32 %v2868, %v2877
        %v2897 = vadd.f32 %v2869, %v2881
        %v2898 = vadd.f32 %v2870, %v2877
        %v2899 = vadd.f32 %v2871, %v2881
        %v2900 = vld [vmem:[%s8] sm:$0x3]
        %v2901 = vld [vmem:[%s9] sm:$0x3]
        %v2902 = vadd.f32 %v2884, %v2885
        %2903 = vadd.xlane.f32.xlu0 %v2902
        %v2904 = vpop.xlane.xlu0 %2903
        %v2905 = vadd.f32 %v2886, %v2887
        %2906 = vadd.xlane.f32.xlu0 %v2905
        %v2907 = vpop.xlane.xlu0 %2906
        %v2908 = vadd.f32 %v2888, %v2889
        %2909 = vadd.xlane.f32.xlu0 %v2908
        %v2910 = vpop.xlane.xlu0 %2909
        %v2911 = vadd.f32 %v2890, %v2891
        %2912 = vadd.xlane.f32.xlu0 %v2911
        %v2913 = vpop.xlane.xlu0 %2912
        %v2914 = vadd.f32 %v2892, %v2893
        %2915 = vadd.xlane.f32.xlu0 %v2914
        %v2916 = vpop.xlane.xlu0 %2915
        %v2917 = vadd.f32 %v2894, %v2895
        %2918 = vadd.xlane.f32.xlu0 %v2917
        %v2919 = vpop.xlane.xlu0 %2918
        %v2920 = vadd.f32 %v2896, %v2897
        %2921 = vadd.xlane.f32.xlu0 %v2920
        %v2922 = vpop.xlane.xlu0 %2921
        %v2923 = vadd.f32 %v2898, %v2899
        %2924 = vadd.xlane.f32.xlu0 %v2923
        %v2925 = vpop.xlane.xlu0 %2924
        %v2926 = vrcp.pop 256.0
        %v2927 = vmul.f32 %v2904, %v2926
        %v2928 = vmul.f32 %v2907, %v2926
        %v2929 = vmul.f32 %v2910, %v2926
        %v2930 = vmul.f32 %v2913, %v2926
        %v2931 = vmul.f32 %v2916, %v2926
        %v2932 = vmul.f32 %v2919, %v2926
        %v2933 = vmul.f32 %v2922, %v2926
        %v2934 = vmul.f32 %v2925, %v2926
        %v2935 = vsub.f32 %v2884, %v2927
        %v2936 = vsub.f32 %v2885, %v2927
        %v2937 = vsub.f32 %v2886, %v2928
        %v2938 = vsub.f32 %v2887, %v2928
        %v2939 = vsub.f32 %v2888, %v2929
        %v2940 = vsub.f32 %v2889, %v2929
        %v2941 = vsub.f32 %v2890, %v2930
        %v2942 = vsub.f32 %v2891, %v2930
        %v2943 = vsub.f32 %v2892, %v2931
        %v2944 = vsub.f32 %v2893, %v2931
        %v2945 = vsub.f32 %v2894, %v2932
        %v2946 = vsub.f32 %v2895, %v2932
        %v2947 = vsub.f32 %v2896, %v2933
        %v2948 = vsub.f32 %v2897, %v2933
        %v2949 = vsub.f32 %v2898, %v2934
        %v2950 = vsub.f32 %v2899, %v2934
        %v2951 = vmul.f32 %v2935, %v2935
        %v2952 = vmul.f32 %v2936, %v2936
        %v2953 = vmul.f32 %v2937, %v2937
        %v2954 = vmul.f32 %v2938, %v2938
        %v2955 = vmul.f32 %v2939, %v2939
        %v2956 = vmul.f32 %v2940, %v2940
        %v2957 = vmul.f32 %v2941, %v2941
        %v2958 = vmul.f32 %v2942, %v2942
        %v2959 = vmul.f32 %v2943, %v2943
        %v2960 = vmul.f32 %v2944, %v2944
        %v2961 = vmul.f32 %v2945, %v2945
        %v2962 = vmul.f32 %v2946, %v2946
        %v2963 = vmul.f32 %v2947, %v2947
        %v2964 = vmul.f32 %v2948, %v2948
        %v2965 = vmul.f32 %v2949, %v2949
        %v2966 = vmul.f32 %v2950, %v2950
        %v2967 = vadd.f32 %v2951, %v2952
        %2968 = vadd.xlane.f32.xlu0 %v2967
        %v2969 = vpop.xlane.xlu0 %2968
        %v2970 = vadd.f32 %v2953, %v2954
        %2971 = vadd.xlane.f32.xlu0 %v2970
        %v2972 = vpop.xlane.xlu0 %2971
        %v2973 = vadd.f32 %v2955, %v2956
        %2974 = vadd.xlane.f32.xlu0 %v2973
        %v2975 = vpop.xlane.xlu0 %2974
        %v2976 = vadd.f32 %v2957, %v2958
        %2977 = vadd.xlane.f32.xlu0 %v2976
        %v2978 = vpop.xlane.xlu0 %2977
        %v2979 = vadd.f32 %v2959, %v2960
        %2980 = vadd.xlane.f32.xlu0 %v2979
        %v2981 = vpop.xlane.xlu0 %2980
        %v2982 = vadd.f32 %v2961, %v2962
        %2983 = vadd.xlane.f32.xlu0 %v2982
        %v2984 = vpop.xlane.xlu0 %2983
        %v2985 = vadd.f32 %v2963, %v2964
        %2986 = vadd.xlane.f32.xlu0 %v2985
        %v2987 = vpop.xlane.xlu0 %2986
        %v2988 = vadd.f32 %v2965, %v2966
        %2989 = vadd.xlane.f32.xlu0 %v2988
        %v2990 = vpop.xlane.xlu0 %2989
        %v2991 = vmul.f32 %v2969, %v2926
        %v2992 = vmul.f32 %v2972, %v2926
        %v2993 = vmul.f32 %v2975, %v2926
        %v2994 = vmul.f32 %v2978, %v2926
        %v2995 = vmul.f32 %v2981, %v2926
        %v2996 = vmul.f32 %v2984, %v2926
        %v2997 = vmul.f32 %v2987, %v2926
        %v2998 = vmul.f32 %v2990, %v2926
        %v2999 = vadd.f32 %v2991, 1e-05
        %v3000 = vadd.f32 %v2992, 1e-05
        %v3001 = vadd.f32 %v2993, 1e-05
        %v3002 = vadd.f32 %v2994, 1e-05
        %v3003 = vadd.f32 %v2995, 1e-05
        %v3004 = vadd.f32 %v2996, 1e-05
        %v3005 = vadd.f32 %v2997, 1e-05
        %v3006 = vadd.f32 %v2998, 1e-05
        %v3007 = vrsqrt.pop %v2999
        %v3008 = vrsqrt.pop %v3000
        %v3009 = vrsqrt.pop %v3001
        %v3010 = vrsqrt.pop %v3002
        %v3011 = vrsqrt.pop %v3003
        %v3012 = vrsqrt.pop %v3004
        %v3013 = vrsqrt.pop %v3005
        %v3014 = vrsqrt.pop %v3006
        %v3015 = vmul.f32 %v2935, %v3007
        %v3016 = vmul.f32 %v2936, %v3007
        %v3017 = vmul.f32 %v2937, %v3008
        %v3018 = vmul.f32 %v2938, %v3008
        %v3019 = vmul.f32 %v2939, %v3009
        %v3020 = vmul.f32 %v2940, %v3009
        %v3021 = vmul.f32 %v2941, %v3010
        %v3022 = vmul.f32 %v2942, %v3010
        %v3023 = vmul.f32 %v2943, %v3011
        %v3024 = vmul.f32 %v2944, %v3011
        %v3025 = vmul.f32 %v2945, %v3012
        %v3026 = vmul.f32 %v2946, %v3012
        %v3027 = vmul.f32 %v2947, %v3013
        %v3028 = vmul.f32 %v2948, %v3013
        %v3029 = vmul.f32 %v2949, %v3014
        %v3030 = vmul.f32 %v2950, %v3014
        %v3032 = vlaneseq
        %v3033 = vshrl.u32 %v3032, 7
        %v3034 = vsub.s32 0, %v3033
        %v3035 = vrot.slane %v2900, %v3034
        %v3036 = vlaneseq
        %v3037 = vshrl.u32 %v3036, 7
        %v3038 = vsub.s32 1, %v3037
        %v3039 = vrot.slane %v2900, %v3038
        %v3042 = vmul.f32 %v3015, %v3035
        %v3043 = vmul.f32 %v3016, %v3039
        %v3044 = vmul.f32 %v3017, %v3035
        %v3045 = vmul.f32 %v3018, %v3039
        %v3046 = vmul.f32 %v3019, %v3035
        %v3047 = vmul.f32 %v3020, %v3039
        %v3048 = vmul.f32 %v3021, %v3035
        %v3049 = vmul.f32 %v3022, %v3039
        %v3050 = vmul.f32 %v3023, %v3035
        %v3051 = vmul.f32 %v3024, %v3039
        %v3052 = vmul.f32 %v3025, %v3035
        %v3053 = vmul.f32 %v3026, %v3039
        %v3054 = vmul.f32 %v3027, %v3035
        %v3055 = vmul.f32 %v3028, %v3039
        %v3056 = vmul.f32 %v3029, %v3035
        %v3057 = vmul.f32 %v3030, %v3039
        %v3059 = vlaneseq
        %v3060 = vshrl.u32 %v3059, 7
        %v3061 = vsub.s32 0, %v3060
        %v3062 = vrot.slane %v2901, %v3061
        %v3063 = vlaneseq
        %v3064 = vshrl.u32 %v3063, 7
        %v3065 = vsub.s32 1, %v3064
        %v3066 = vrot.slane %v2901, %v3065
        %v3069 = vadd.f32 %v3042, %v3062
        %v3070 = vadd.f32 %v3043, %v3066
        %v3071 = vadd.f32 %v3044, %v3062
        %v3072 = vadd.f32 %v3045, %v3066
        %v3073 = vadd.f32 %v3046, %v3062
        %v3074 = vadd.f32 %v3047, %v3066
        %v3075 = vadd.f32 %v3048, %v3062
        %v3076 = vadd.f32 %v3049, %v3066
        %v3077 = vadd.f32 %v3050, %v3062
        %v3078 = vadd.f32 %v3051, %v3066
        %v3079 = vadd.f32 %v3052, %v3062
        %v3080 = vadd.f32 %v3053, %v3066
        %v3081 = vadd.f32 %v3054, %v3062
        %v3082 = vadd.f32 %v3055, %v3066
        %v3083 = vadd.f32 %v3056, %v3062
        %v3084 = vadd.f32 %v3057, %v3066
        %v3085 = vpack.c.bf16 %v3071, %v3069
        %v3086 = vpack.c.bf16 %v3072, %v3070
        %v3087 = vpack.c.bf16 %v3075, %v3073
        %v3088 = vpack.c.bf16 %v3076, %v3074
        %v3089 = vpack.c.bf16 %v3079, %v3077
        %v3090 = vpack.c.bf16 %v3080, %v3078
        %v3091 = vpack.c.bf16 %v3083, %v3081
        %v3092 = vpack.c.bf16 %v3084, %v3082
        %v3093 = vld [vmem:[#allocation17] sm:$0xff]
        %v3094 = vld [vmem:[#allocation17 + $0x8] sm:$0xff]
        %v3095 = vld [vmem:[#allocation17 + $0x10] sm:$0xff]
        %v3096 = vld [vmem:[#allocation17 + $0x18] sm:$0xff]
        %v3097 = vld [vmem:[#allocation17 + $0x20] sm:$0xff]
        %v3098 = vld [vmem:[#allocation17 + $0x28] sm:$0xff]
        %v3099 = vld [vmem:[#allocation17 + $0x30] sm:$0xff]
        %v3100 = vld [vmem:[#allocation17 + $0x38] sm:$0xff]
        %v3101 = vld [vmem:[#allocation17 + $0x40] sm:$0xff]
        %v3102 = vld [vmem:[#allocation17 + $0x48] sm:$0xff]
        %v3103 = vld [vmem:[#allocation17 + $0x50] sm:$0xff]
        %v3104 = vld [vmem:[#allocation17 + $0x58] sm:$0xff]
        %v3105 = vld [vmem:[#allocation17 + $0x60] sm:$0xff]
        %v3106 = vld [vmem:[#allocation17 + $0x68] sm:$0xff]
        %v3107 = vld [vmem:[#allocation17 + $0x70] sm:$0xff]
        %v3108 = vld [vmem:[#allocation17 + $0x78] sm:$0xff]
        %v3109 = vld [vmem:[#allocation17 + $0x80] sm:$0xff]
        %v3110 = vld [vmem:[#allocation17 + $0x88] sm:$0xff]
        %v3111 = vld [vmem:[#allocation17 + $0x90] sm:$0xff]
        %v3112 = vld [vmem:[#allocation17 + $0x98] sm:$0xff]
        %v3113 = vld [vmem:[#allocation17 + $0xa0] sm:$0xff]
        %v3114 = vld [vmem:[#allocation17 + $0xa8] sm:$0xff]
        %v3115 = vld [vmem:[#allocation17 + $0xb0] sm:$0xff]
        %v3116 = vld [vmem:[#allocation17 + $0xb8] sm:$0xff]
        %v3117 = vld [vmem:[#allocation17 + $0xc0] sm:$0xff]
        %v3118 = vld [vmem:[#allocation17 + $0xc8] sm:$0xff]
        %v3119 = vld [vmem:[#allocation17 + $0xd0] sm:$0xff]
        %v3120 = vld [vmem:[#allocation17 + $0xd8] sm:$0xff]
        %v3121 = vld [vmem:[#allocation17 + $0xe0] sm:$0xff]
        %v3122 = vld [vmem:[#allocation17 + $0xe8] sm:$0xff]
        %v3123 = vld [vmem:[#allocation17 + $0xf0] sm:$0xff]
        %v3124 = vld [vmem:[#allocation17 + $0xf8] sm:$0xff]
        %v3125 = vld [vmem:[#allocation17 + $0x100] sm:$0xff]
        %v3126 = vld [vmem:[#allocation17 + $0x108] sm:$0xff]
        %v3127 = vld [vmem:[#allocation17 + $0x110] sm:$0xff]
        %v3128 = vld [vmem:[#allocation17 + $0x118] sm:$0xff]
        %v3129 = vld [vmem:[#allocation17 + $0x120] sm:$0xff]
        %v3130 = vld [vmem:[#allocation17 + $0x128] sm:$0xff]
        %v3131 = vld [vmem:[#allocation17 + $0x130] sm:$0xff]
        %v3132 = vld [vmem:[#allocation17 + $0x138] sm:$0xff]
        %v3133 = vld [vmem:[#allocation17 + $0x140] sm:$0xff]
        %v3134 = vld [vmem:[#allocation17 + $0x148] sm:$0xff]
        %v3135 = vld [vmem:[#allocation17 + $0x150] sm:$0xff]
        %v3136 = vld [vmem:[#allocation17 + $0x158] sm:$0xff]
        %v3137 = vld [vmem:[#allocation17 + $0x160] sm:$0xff]
        %v3138 = vld [vmem:[#allocation17 + $0x168] sm:$0xff]
        %v3139 = vld [vmem:[#allocation17 + $0x170] sm:$0xff]
        %v3140 = vld [vmem:[#allocation17 + $0x178] sm:$0xff]
        %v3141 = vld [vmem:[#allocation17 + $0x180] sm:$0xff]
        %v3142 = vld [vmem:[#allocation17 + $0x188] sm:$0xff]
        %v3143 = vld [vmem:[#allocation17 + $0x190] sm:$0xff]
        %v3144 = vld [vmem:[#allocation17 + $0x198] sm:$0xff]
        %v3145 = vld [vmem:[#allocation17 + $0x1a0] sm:$0xff]
        %v3146 = vld [vmem:[#allocation17 + $0x1a8] sm:$0xff]
        %v3147 = vld [vmem:[#allocation17 + $0x1b0] sm:$0xff]
        %v3148 = vld [vmem:[#allocation17 + $0x1b8] sm:$0xff]
        %v3149 = vld [vmem:[#allocation17 + $0x1c0] sm:$0xff]
        %v3150 = vld [vmem:[#allocation17 + $0x1c8] sm:$0xff]
        %v3151 = vld [vmem:[#allocation17 + $0x1d0] sm:$0xff]
        %v3152 = vld [vmem:[#allocation17 + $0x1d8] sm:$0xff]
        %v3153 = vld [vmem:[#allocation17 + $0x1e0] sm:$0xff]
        %v3154 = vld [vmem:[#allocation17 + $0x1e8] sm:$0xff]
        %v3155 = vld [vmem:[#allocation17 + $0x1f0] sm:$0xff]
        %v3156 = vld [vmem:[#allocation17 + $0x1f8] sm:$0xff]
        %v3157 = vld [vmem:[%s11] sm:$0xf]
        %v3159 = vlaneseq
        %v3160 = vshrl.u32 %v3159, 7
        %v3161 = vsub.s32 0, %v3160
        %v3162 = vrot.slane %v3157, %v3161
        %v3163 = vlaneseq
        %v3164 = vshrl.u32 %v3163, 7
        %v3165 = vsub.s32 1, %v3164
        %v3166 = vrot.slane %v3157, %v3165
        %v3167 = vlaneseq
        %v3168 = vshrl.u32 %v3167, 7
        %v3169 = vsub.s32 2, %v3168
        %v3170 = vrot.slane %v3157, %v3169
        %v3171 = vlaneseq
        %v3172 = vshrl.u32 %v3171, 7
        %v3173 = vsub.s32 3, %v3172
        %v3174 = vrot.slane %v3157, %v3173
        %v3243 = vunpack.c.l.b16 %v3093
        %v3244 = vunpack.c.h.b16 %v3093
        %v3245 = vunpack.c.l.b16 %v3094
        %v3246 = vunpack.c.h.b16 %v3094
        %v3247 = vunpack.c.l.b16 %v3095
        %v3248 = vunpack.c.h.b16 %v3095
        %v3249 = vunpack.c.l.b16 %v3096
        %v3250 = vunpack.c.h.b16 %v3096
        %v3251 = vunpack.c.l.b16 %v3097
        %v3252 = vunpack.c.h.b16 %v3097
        %v3253 = vunpack.c.l.b16 %v3098
        %v3254 = vunpack.c.h.b16 %v3098
        %v3255 = vunpack.c.l.b16 %v3099
        %v3256 = vunpack.c.h.b16 %v3099
        %v3257 = vunpack.c.l.b16 %v3100
        %v3258 = vunpack.c.h.b16 %v3100
        %v3259 = vunpack.c.l.b16 %v3101
        %v3260 = vunpack.c.h.b16 %v3101
        %v3261 = vunpack.c.l.b16 %v3102
        %v3262 = vunpack.c.h.b16 %v3102
        %v3263 = vunpack.c.l.b16 %v3103
        %v3264 = vunpack.c.h.b16 %v3103
        %v3265 = vunpack.c.l.b16 %v3104
        %v3266 = vunpack.c.h.b16 %v3104
        %v3267 = vunpack.c.l.b16 %v3105
        %v3268 = vunpack.c.h.b16 %v3105
        %v3269 = vunpack.c.l.b16 %v3106
        %v3270 = vunpack.c.h.b16 %v3106
        %v3271 = vunpack.c.l.b16 %v3107
        %v3272 = vunpack.c.h.b16 %v3107
        %v3273 = vunpack.c.l.b16 %v3108
        %v3274 = vunpack.c.h.b16 %v3108
        %v3275 = vunpack.c.l.b16 %v3109
        %v3276 = vunpack.c.h.b16 %v3109
        %v3277 = vunpack.c.l.b16 %v3110
        %v3278 = vunpack.c.h.b16 %v3110
        %v3279 = vunpack.c.l.b16 %v3111
        %v3280 = vunpack.c.h.b16 %v3111
        %v3281 = vunpack.c.l.b16 %v3112
        %v3282 = vunpack.c.h.b16 %v3112
        %v3283 = vunpack.c.l.b16 %v3113
        %v3284 = vunpack.c.h.b16 %v3113
        %v3285 = vunpack.c.l.b16 %v3114
        %v3286 = vunpack.c.h.b16 %v3114
        %v3287 = vunpack.c.l.b16 %v3115
        %v3288 = vunpack.c.h.b16 %v3115
        %v3289 = vunpack.c.l.b16 %v3116
        %v3290 = vunpack.c.h.b16 %v3116
        %v3291 = vunpack.c.l.b16 %v3117
        %v3292 = vunpack.c.h.b16 %v3117
        %v3293 = vunpack.c.l.b16 %v3118
        %v3294 = vunpack.c.h.b16 %v3118
        %v3295 = vunpack.c.l.b16 %v3119
        %v3296 = vunpack.c.h.b16 %v3119
        %v3297 = vunpack.c.l.b16 %v3120
        %v3298 = vunpack.c.h.b16 %v3120
        %v3299 = vunpack.c.l.b16 %v3121
        %v3300 = vunpack.c.h.b16 %v3121
        %v3301 = vunpack.c.l.b16 %v3122
        %v3302 = vunpack.c.h.b16 %v3122
        %v3303 = vunpack.c.l.b16 %v3123
        %v3304 = vunpack.c.h.b16 %v3123
        %v3305 = vunpack.c.l.b16 %v3124
        %v3306 = vunpack.c.h.b16 %v3124
        %v3307 = vunpack.c.l.b16 %v3125
        %v3308 = vunpack.c.h.b16 %v3125
        %v3309 = vunpack.c.l.b16 %v3126
        %v3310 = vunpack.c.h.b16 %v3126
        %v3311 = vunpack.c.l.b16 %v3127
        %v3312 = vunpack.c.h.b16 %v3127
        %v3313 = vunpack.c.l.b16 %v3128
        %v3314 = vunpack.c.h.b16 %v3128
        %v3315 = vunpack.c.l.b16 %v3129
        %v3316 = vunpack.c.h.b16 %v3129
        %v3317 = vunpack.c.l.b16 %v3130
        %v3318 = vunpack.c.h.b16 %v3130
        %v3319 = vunpack.c.l.b16 %v3131
        %v3320 = vunpack.c.h.b16 %v3131
        %v3321 = vunpack.c.l.b16 %v3132
        %v3322 = vunpack.c.h.b16 %v3132
        %v3323 = vunpack.c.l.b16 %v3133
        %v3324 = vunpack.c.h.b16 %v3133
        %v3325 = vunpack.c.l.b16 %v3134
        %v3326 = vunpack.c.h.b16 %v3134
        %v3327 = vunpack.c.l.b16 %v3135
        %v3328 = vunpack.c.h.b16 %v3135
        %v3329 = vunpack.c.l.b16 %v3136
        %v3330 = vunpack.c.h.b16 %v3136
        %v3331 = vunpack.c.l.b16 %v3137
        %v3332 = vunpack.c.h.b16 %v3137
        %v3333 = vunpack.c.l.b16 %v3138
        %v3334 = vunpack.c.h.b16 %v3138
        %v3335 = vunpack.c.l.b16 %v3139
        %v3336 = vunpack.c.h.b16 %v3139
        %v3337 = vunpack.c.l.b16 %v3140
        %v3338 = vunpack.c.h.b16 %v3140
        %v3339 = vunpack.c.l.b16 %v3141
        %v3340 = vunpack.c.h.b16 %v3141
        %v3341 = vunpack.c.l.b16 %v3142
        %v3342 = vunpack.c.h.b16 %v3142
        %v3343 = vunpack.c.l.b16 %v3143
        %v3344 = vunpack.c.h.b16 %v3143
        %v3345 = vunpack.c.l.b16 %v3144
        %v3346 = vunpack.c.h.b16 %v3144
        %v3347 = vunpack.c.l.b16 %v3145
        %v3348 = vunpack.c.h.b16 %v3145
        %v3349 = vunpack.c.l.b16 %v3146
        %v3350 = vunpack.c.h.b16 %v3146
        %v3351 = vunpack.c.l.b16 %v3147
        %v3352 = vunpack.c.h.b16 %v3147
        %v3353 = vunpack.c.l.b16 %v3148
        %v3354 = vunpack.c.h.b16 %v3148
        %v3355 = vunpack.c.l.b16 %v3149
        %v3356 = vunpack.c.h.b16 %v3149
        %v3357 = vunpack.c.l.b16 %v3150
        %v3358 = vunpack.c.h.b16 %v3150
        %v3359 = vunpack.c.l.b16 %v3151
        %v3360 = vunpack.c.h.b16 %v3151
        %v3361 = vunpack.c.l.b16 %v3152
        %v3362 = vunpack.c.h.b16 %v3152
        %v3363 = vunpack.c.l.b16 %v3153
        %v3364 = vunpack.c.h.b16 %v3153
        %v3365 = vunpack.c.l.b16 %v3154
        %v3366 = vunpack.c.h.b16 %v3154
        %v3367 = vunpack.c.l.b16 %v3155
        %v3368 = vunpack.c.h.b16 %v3155
        %v3369 = vunpack.c.l.b16 %v3156
        %v3370 = vunpack.c.h.b16 %v3156
        %v3371 = vpack.c.b16 %v3247, %v3243
        %v3372 = vpack.c.b16 %v3248, %v3244
        %v3373 = vpack.c.b16 %v3249, %v3245
        %v3374 = vpack.c.b16 %v3250, %v3246
        %v3375 = vpack.c.b16 %v3255, %v3251
        %v3376 = vpack.c.b16 %v3256, %v3252
        %v3377 = vpack.c.b16 %v3257, %v3253
        %v3378 = vpack.c.b16 %v3258, %v3254
        %v3379 = vpack.c.b16 %v3263, %v3259
        %v3380 = vpack.c.b16 %v3264, %v3260
        %v3381 = vpack.c.b16 %v3265, %v3261
        %v3382 = vpack.c.b16 %v3266, %v3262
        %v3383 = vpack.c.b16 %v3271, %v3267
        %v3384 = vpack.c.b16 %v3272, %v3268
        %v3385 = vpack.c.b16 %v3273, %v3269
        %v3386 = vpack.c.b16 %v3274, %v3270
        %v3387 = vpack.c.b16 %v3279, %v3275
        %v3388 = vpack.c.b16 %v3280, %v3276
        %v3389 = vpack.c.b16 %v3281, %v3277
        %v3390 = vpack.c.b16 %v3282, %v3278
        %v3391 = vpack.c.b16 %v3287, %v3283
        %v3392 = vpack.c.b16 %v3288, %v3284
        %v3393 = vpack.c.b16 %v3289, %v3285
        %v3394 = vpack.c.b16 %v3290, %v3286
        %v3395 = vpack.c.b16 %v3295, %v3291
        %v3396 = vpack.c.b16 %v3296, %v3292
        %v3397 = vpack.c.b16 %v3297, %v3293
        %v3398 = vpack.c.b16 %v3298, %v3294
        %v3399 = vpack.c.b16 %v3303, %v3299
        %v3400 = vpack.c.b16 %v3304, %v3300
        %v3401 = vpack.c.b16 %v3305, %v3301
        %v3402 = vpack.c.b16 %v3306, %v3302
        %v3403 = vpack.c.b16 %v3311, %v3307
        %v3404 = vpack.c.b16 %v3312, %v3308
        %v3405 = vpack.c.b16 %v3313, %v3309
        %v3406 = vpack.c.b16 %v3314, %v3310
        %v3407 = vpack.c.b16 %v3319, %v3315
        %v3408 = vpack.c.b16 %v3320, %v3316
        %v3409 = vpack.c.b16 %v3321, %v3317
        %v3410 = vpack.c.b16 %v3322, %v3318
        %v3411 = vpack.c.b16 %v3327, %v3323
        %v3412 = vpack.c.b16 %v3328, %v3324
        %v3413 = vpack.c.b16 %v3329, %v3325
        %v3414 = vpack.c.b16 %v3330, %v3326
        %v3415 = vpack.c.b16 %v3335, %v3331
        %v3416 = vpack.c.b16 %v3336, %v3332
        %v3417 = vpack.c.b16 %v3337, %v3333
        %v3418 = vpack.c.b16 %v3338, %v3334
        %v3419 = vpack.c.b16 %v3343, %v3339
        %v3420 = vpack.c.b16 %v3344, %v3340
        %v3421 = vpack.c.b16 %v3345, %v3341
        %v3422 = vpack.c.b16 %v3346, %v3342
        %v3423 = vpack.c.b16 %v3351, %v3347
        %v3424 = vpack.c.b16 %v3352, %v3348
        %v3425 = vpack.c.b16 %v3353, %v3349
        %v3426 = vpack.c.b16 %v3354, %v3350
        %v3427 = vpack.c.b16 %v3359, %v3355
        %v3428 = vpack.c.b16 %v3360, %v3356
        %v3429 = vpack.c.b16 %v3361, %v3357
        %v3430 = vpack.c.b16 %v3362, %v3358
        %v3431 = vpack.c.b16 %v3367, %v3363
        %v3432 = vpack.c.b16 %v3368, %v3364
        %v3433 = vpack.c.b16 %v3369, %v3365
        %v3434 = vpack.c.b16 %v3370, %v3366
        %3499 = vmatprep.subr.bf16.mxu0 %v3372
        %3500 = vmatpush1.bf16.msra.mxu0 %v3371
        %3501 = vmatprep.subr.bf16.mxu0 %v3376
        %3502 = vmatpush1.bf16.msra.mxu0 %v3375
        %3503 = vmatprep.subr.bf16.mxu0 %v3380
        %3504 = vmatpush1.bf16.msra.mxu0 %v3379
        %3505 = vmatprep.subr.bf16.mxu0 %v3384
        %3506 = vmatpush1.bf16.msra.mxu0 %v3383
        %3507 = vmatprep.subr.bf16.mxu0 %v3388
        %3508 = vmatpush1.bf16.msra.mxu0 %v3387
        %3509 = vmatprep.subr.bf16.mxu0 %v3392
        %3510 = vmatpush1.bf16.msra.mxu0 %v3391
        %3511 = vmatprep.subr.bf16.mxu0 %v3396
        %3512 = vmatpush1.bf16.msra.mxu0 %v3395
        %3513 = vmatprep.subr.bf16.mxu0 %v3400
        %3514 = vmatpush1.bf16.msra.mxu0 %v3399
        %3515 = vmatprep.subr.bf16.mxu0 %v3404
        %3516 = vmatpush1.bf16.msra.mxu0 %v3403
        %3517 = vmatprep.subr.bf16.mxu0 %v3408
        %3518 = vmatpush1.bf16.msra.mxu0 %v3407
        %3519 = vmatprep.subr.bf16.mxu0 %v3412
        %3520 = vmatpush1.bf16.msra.mxu0 %v3411
        %3521 = vmatprep.subr.bf16.mxu0 %v3416
        %3522 = vmatpush1.bf16.msra.mxu0 %v3415
        %3523 = vmatprep.subr.bf16.mxu0 %v3420
        %3524 = vmatpush1.bf16.msra.mxu0 %v3419
        %3525 = vmatprep.subr.bf16.mxu0 %v3424
        %3526 = vmatpush1.bf16.msra.mxu0 %v3423
        %3527 = vmatprep.subr.bf16.mxu0 %v3428
        %3528 = vmatpush1.bf16.msra.mxu0 %v3427
        %3529 = vmatprep.subr.bf16.mxu0 %v3432
        %3530 = vmatpush1.bf16.msra.mxu0 %v3431
        %3531 = vmatprep.mubr.bf16.mxu0 %v3086
        %3532 = vmatmul.mubr.bf16.gmra.mrb[0].mxu0 %v3085
        %v3533 = vpop.f32.mrb[0].mxu0
        %v3534 = vadd.f32 %v3162, %v3533
        %v3535 = vpop.f32.mrb[0].mxu0
        %v3536 = vadd.f32 %v3166, %v3535
        %v3537 = vpop.f32.mrb[0].mxu0
        %v3538 = vadd.f32 %v3162, %v3537
        %v3539 = vpop.f32.mrb[0].mxu0
        %v3540 = vadd.f32 %v3166, %v3539
        %3541 = vmatprep.mubr.bf16.mxu0 %v3088
        %3542 = vmatmul.mubr.bf16.gmra.mrb[0].mxu0 %v3087
        %v3543 = vpop.f32.mrb[0].mxu0
        %v3544 = vadd.f32 %v3162, %v3543
        %v3545 = vpop.f32.mrb[0].mxu0
        %v3546 = vadd.f32 %v3166, %v3545
        %v3547 = vpop.f32.mrb[0].mxu0
        %v3548 = vadd.f32 %v3162, %v3547
        %v3549 = vpop.f32.mrb[0].mxu0
        %v3550 = vadd.f32 %v3166, %v3549
        %3551 = vmatprep.mubr.bf16.mxu0 %v3090
        %3552 = vmatmul.mubr.bf16.gmra.mrb[0].mxu0 %v3089
        %v3553 = vpop.f32.mrb[0].mxu0
        %v3554 = vadd.f32 %v3162, %v3553
        %v3555 = vpop.f32.mrb[0].mxu0
        %v3556 = vadd.f32 %v3166, %v3555
        %v3557 = vpop.f32.mrb[0].mxu0
        %v3558 = vadd.f32 %v3162, %v3557
        %v3559 = vpop.f32.mrb[0].mxu0
        %v3560 = vadd.f32 %v3166, %v3559
        %3561 = vmatprep.mubr.bf16.mxu0 %v3092
        %3562 = vmatmul.mubr.bf16.gmra.mrb[0].mxu0 %v3091
        %v3563 = vpop.f32.mrb[0].mxu0
        %v3564 = vadd.f32 %v3162, %v3563
        %v3565 = vpop.f32.mrb[0].mxu0
        %v3566 = vadd.f32 %v3166, %v3565
        %v3567 = vpop.f32.mrb[0].mxu0
        %v3568 = vadd.f32 %v3162, %v3567
        %v3569 = vpop.f32.mrb[0].mxu0
        %v3570 = vadd.f32 %v3166, %v3569
        %3571 = vdwg.mxu0
        %3572 = vmatprep.subr.bf16.mxu0 %v3374
        %3573 = vmatpush1.bf16.msra.mxu0 %v3373
        %3574 = vmatprep.subr.bf16.mxu0 %v3378
        %3575 = vmatpush1.bf16.msra.mxu0 %v3377
        %3576 = vmatprep.subr.bf16.mxu0 %v3382
        %3577 = vmatpush1.bf16.msra.mxu0 %v3381
        %3578 = vmatprep.subr.bf16.mxu0 %v3386
        %3579 = vmatpush1.bf16.msra.mxu0 %v3385
        %3580 = vmatprep.subr.bf16.mxu0 %v3390
        %3581 = vmatpush1.bf16.msra.mxu0 %v3389
        %3582 = vmatprep.subr.bf16.mxu0 %v3394
        %3583 = vmatpush1.bf16.msra.mxu0 %v3393
        %3584 = vmatprep.subr.bf16.mxu0 %v3398
        %3585 = vmatpush1.bf16.msra.mxu0 %v3397
        %3586 = vmatprep.subr.bf16.mxu0 %v3402
        %3587 = vmatpush1.bf16.msra.mxu0 %v3401
        %3588 = vmatprep.subr.bf16.mxu0 %v3406
        %3589 = vmatpush1.bf16.msra.mxu0 %v3405
        %3590 = vmatprep.subr.bf16.mxu0 %v3410
        %3591 = vmatpush1.bf16.msra.mxu0 %v3409
        %3592 = vmatprep.subr.bf16.mxu0 %v3414
        %3593 = vmatpush1.bf16.msra.mxu0 %v3413
        %3594 = vmatprep.subr.bf16.mxu0 %v3418
        %3595 = vmatpush1.bf16.msra.mxu0 %v3417
        %3596 = vmatprep.subr.bf16.mxu0 %v3422
        %3597 = vmatpush1.bf16.msra.mxu0 %v3421
        %3598 = vmatprep.subr.bf16.mxu0 %v3426
        %3599 = vmatpush1.bf16.msra.mxu0 %v3425
        %3600 = vmatprep.subr.bf16.mxu0 %v3430
        %3601 = vmatpush1.bf16.msra.mxu0 %v3429
        %3602 = vmatprep.subr.bf16.mxu0 %v3434
        %3603 = vmatpush1.bf16.msra.mxu0 %v3433
        %3604 = vmatprep.mubr.bf16.mxu0 %v3086
        %3605 = vmatmul.mubr.bf16.gmra.mrb[0].mxu0 %v3085
        %v3606 = vpop.f32.mrb[0].mxu0
        %v3607 = vadd.f32 %v3170, %v3606
        %v3608 = vpop.f32.mrb[0].mxu0
        %v3609 = vadd.f32 %v3174, %v3608
        %v3610 = vpop.f32.mrb[0].mxu0
        %v3611 = vadd.f32 %v3170, %v3610
        %v3612 = vpop.f32.mrb[0].mxu0
        %v3613 = vadd.f32 %v3174, %v3612
        %3614 = vmatprep.mubr.bf16.mxu0 %v3088
        %3615 = vmatmul.mubr.bf16.gmra.mrb[0].mxu0 %v3087
        %v3616 = vpop.f32.mrb[0].mxu0
        %v3617 = vadd.f32 %v3170, %v3616
        %v3618 = vpop.f32.mrb[0].mxu0
        %v3619 = vadd.f32 %v3174, %v3618
        %v3620 = vpop.f32.mrb[0].mxu0
        %v3621 = vadd.f32 %v3170, %v3620
        %v3622 = vpop.f32.mrb[0].mxu0
        %v3623 = vadd.f32 %v3174, %v3622
        %3624 = vmatprep.mubr.bf16.mxu0 %v3090
        %3625 = vmatmul.mubr.bf16.gmra.mrb[0].mxu0 %v3089
        %v3626 = vpop.f32.mrb[0].mxu0
        %v3627 = vadd.f32 %v3170, %v3626
        %v3628 = vpop.f32.mrb[0].mxu0
        %v3629 = vadd.f32 %v3174, %v3628
        %v3630 = vpop.f32.mrb[0].mxu0
        %v3631 = vadd.f32 %v3170, %v3630
        %v3632 = vpop.f32.mrb[0].mxu0
        %v3633 = vadd.f32 %v3174, %v3632
        %3634 = vmatprep.mubr.bf16.mxu0 %v3092
        %3635 = vmatmul.mubr.bf16.gmra.mrb[0].mxu0 %v3091
        %v3636 = vpop.f32.mrb[0].mxu0
        %v3637 = vadd.f32 %v3170, %v3636
        %v3638 = vpop.f32.mrb[0].mxu0
        %v3639 = vadd.f32 %v3174, %v3638
        %v3640 = vpop.f32.mrb[0].mxu0
        %v3641 = vadd.f32 %v3170, %v3640
        %v3642 = vpop.f32.mrb[0].mxu0
        %v3643 = vadd.f32 %v3174, %v3642
        %3644 = vdwg.mxu0
        %v3645 = vmax.f32 %v3534, 0.0
        %v3646 = vmax.f32 %v3536, 0.0
        %v3647 = vmax.f32 %v3607, 0.0
        %v3648 = vmax.f32 %v3609, 0.0
        %v3649 = vmax.f32 %v3538, 0.0
        %v3650 = vmax.f32 %v3540, 0.0
        %v3651 = vmax.f32 %v3611, 0.0
        %v3652 = vmax.f32 %v3613, 0.0
        %v3653 = vmax.f32 %v3544, 0.0
        %v3654 = vmax.f32 %v3546, 0.0
        %v3655 = vmax.f32 %v3617, 0.0
        %v3656 = vmax.f32 %v3619, 0.0
        %v3657 = vmax.f32 %v3548, 0.0
        %v3658 = vmax.f32 %v3550, 0.0
        %v3659 = vmax.f32 %v3621, 0.0
        %v3660 = vmax.f32 %v3623, 0.0
        %v3661 = vmax.f32 %v3554, 0.0
        %v3662 = vmax.f32 %v3556, 0.0
        %v3663 = vmax.f32 %v3627, 0.0
        %v3664 = vmax.f32 %v3629, 0.0
        %v3665 = vmax.f32 %v3558, 0.0
        %v3666 = vmax.f32 %v3560, 0.0
        %v3667 = vmax.f32 %v3631, 0.0
        %v3668 = vmax.f32 %v3633, 0.0
        %v3669 = vmax.f32 %v3564, 0.0
        %v3670 = vmax.f32 %v3566, 0.0
        %v3671 = vmax.f32 %v3637, 0.0
        %v3672 = vmax.f32 %v3639, 0.0
        %v3673 = vmax.f32 %v3568, 0.0
        %v3674 = vmax.f32 %v3570, 0.0
        %v3675 = vmax.f32 %v3641, 0.0
        %v3676 = vmax.f32 %v3643, 0.0
        %v3677 = vpack.c.bf16 %v3649, %v3645
        %v3678 = vpack.c.bf16 %v3650, %v3646
        %v3679 = vpack.c.bf16 %v3651, %v3647
        %v3680 = vpack.c.bf16 %v3652, %v3648
        %v3681 = vpack.c.bf16 %v3657, %v3653
        %v3682 = vpack.c.bf16 %v3658, %v3654
        %v3683 = vpack.c.bf16 %v3659, %v3655
        %v3684 = vpack.c.bf16 %v3660, %v3656
        %v3685 = vpack.c.bf16 %v3665, %v3661
        %v3686 = vpack.c.bf16 %v3666, %v3662
        %v3687 = vpack.c.bf16 %v3667, %v3663
        %v3688 = vpack.c.bf16 %v3668, %v3664
        %v3689 = vpack.c.bf16 %v3673, %v3669
        %v3690 = vpack.c.bf16 %v3674, %v3670
        %v3691 = vpack.c.bf16 %v3675, %v3671
        %v3692 = vpack.c.bf16 %v3676, %v3672
        %v3693 = vld [vmem:[#allocation18] sm:$0xff]
        %v3694 = vld [vmem:[#allocation18 + $0x8] sm:$0xff]
        %v3695 = vld [vmem:[#allocation18 + $0x10] sm:$0xff]
        %v3696 = vld [vmem:[#allocation18 + $0x18] sm:$0xff]
        %v3697 = vld [vmem:[#allocation18 + $0x20] sm:$0xff]
        %v3698 = vld [vmem:[#allocation18 + $0x28] sm:$0xff]
        %v3699 = vld [vmem:[#allocation18 + $0x30] sm:$0xff]
        %v3700 = vld [vmem:[#allocation18 + $0x38] sm:$0xff]
        %v3701 = vld [vmem:[#allocation18 + $0x40] sm:$0xff]
        %v3702 = vld [vmem:[#allocation18 + $0x48] sm:$0xff]
        %v3703 = vld [vmem:[#allocation18 + $0x50] sm:$0xff]
        %v3704 = vld [vmem:[#allocation18 + $0x58] sm:$0xff]
        %v3705 = vld [vmem:[#allocation18 + $0x60] sm:$0xff]
        %v3706 = vld [vmem:[#allocation18 + $0x68] sm:$0xff]
        %v3707 = vld [vmem:[#allocation18 + $0x70] sm:$0xff]
        %v3708 = vld [vmem:[#allocation18 + $0x78] sm:$0xff]
        %v3709 = vld [vmem:[#allocation18 + $0x80] sm:$0xff]
        %v3710 = vld [vmem:[#allocation18 + $0x88] sm:$0xff]
        %v3711 = vld [vmem:[#allocation18 + $0x90] sm:$0xff]
        %v3712 = vld [vmem:[#allocation18 + $0x98] sm:$0xff]
        %v3713 = vld [vmem:[#allocation18 + $0xa0] sm:$0xff]
        %v3714 = vld [vmem:[#allocation18 + $0xa8] sm:$0xff]
        %v3715 = vld [vmem:[#allocation18 + $0xb0] sm:$0xff]
        %v3716 = vld [vmem:[#allocation18 + $0xb8] sm:$0xff]
        %v3717 = vld [vmem:[#allocation18 + $0xc0] sm:$0xff]
        %v3718 = vld [vmem:[#allocation18 + $0xc8] sm:$0xff]
        %v3719 = vld [vmem:[#allocation18 + $0xd0] sm:$0xff]
        %v3720 = vld [vmem:[#allocation18 + $0xd8] sm:$0xff]
        %v3721 = vld [vmem:[#allocation18 + $0xe0] sm:$0xff]
        %v3722 = vld [vmem:[#allocation18 + $0xe8] sm:$0xff]
        %v3723 = vld [vmem:[#allocation18 + $0xf0] sm:$0xff]
        %v3724 = vld [vmem:[#allocation18 + $0xf8] sm:$0xff]
        %v3725 = vld [vmem:[#allocation18 + $0x100] sm:$0xff]
        %v3726 = vld [vmem:[#allocation18 + $0x108] sm:$0xff]
        %v3727 = vld [vmem:[#allocation18 + $0x110] sm:$0xff]
        %v3728 = vld [vmem:[#allocation18 + $0x118] sm:$0xff]
        %v3729 = vld [vmem:[#allocation18 + $0x120] sm:$0xff]
        %v3730 = vld [vmem:[#allocation18 + $0x128] sm:$0xff]
        %v3731 = vld [vmem:[#allocation18 + $0x130] sm:$0xff]
        %v3732 = vld [vmem:[#allocation18 + $0x138] sm:$0xff]
        %v3733 = vld [vmem:[#allocation18 + $0x140] sm:$0xff]
        %v3734 = vld [vmem:[#allocation18 + $0x148] sm:$0xff]
        %v3735 = vld [vmem:[#allocation18 + $0x150] sm:$0xff]
        %v3736 = vld [vmem:[#allocation18 + $0x158] sm:$0xff]
        %v3737 = vld [vmem:[#allocation18 + $0x160] sm:$0xff]
        %v3738 = vld [vmem:[#allocation18 + $0x168] sm:$0xff]
        %v3739 = vld [vmem:[#allocation18 + $0x170] sm:$0xff]
        %v3740 = vld [vmem:[#allocation18 + $0x178] sm:$0xff]
        %v3741 = vld [vmem:[#allocation18 + $0x180] sm:$0xff]
        %v3742 = vld [vmem:[#allocation18 + $0x188] sm:$0xff]
        %v3743 = vld [vmem:[#allocation18 + $0x190] sm:$0xff]
        %v3744 = vld [vmem:[#allocation18 + $0x198] sm:$0xff]
        %v3745 = vld [vmem:[#allocation18 + $0x1a0] sm:$0xff]
        %v3746 = vld [vmem:[#allocation18 + $0x1a8] sm:$0xff]
        %v3747 = vld [vmem:[#allocation18 + $0x1b0] sm:$0xff]
        %v3748 = vld [vmem:[#allocation18 + $0x1b8] sm:$0xff]
        %v3749 = vld [vmem:[#allocation18 + $0x1c0] sm:$0xff]
        %v3750 = vld [vmem:[#allocation18 + $0x1c8] sm:$0xff]
        %v3751 = vld [vmem:[#allocation18 + $0x1d0] sm:$0xff]
        %v3752 = vld [vmem:[#allocation18 + $0x1d8] sm:$0xff]
        %v3753 = vld [vmem:[#allocation18 + $0x1e0] sm:$0xff]
        %v3754 = vld [vmem:[#allocation18 + $0x1e8] sm:$0xff]
        %v3755 = vld [vmem:[#allocation18 + $0x1f0] sm:$0xff]
        %v3756 = vld [vmem:[#allocation18 + $0x1f8] sm:$0xff]
        %v3757 = vld [vmem:[%s13] sm:$0x3]
        %v3759 = vlaneseq
        %v3760 = vshrl.u32 %v3759, 7
        %v3761 = vsub.s32 0, %v3760
        %v3762 = vrot.slane %v3757, %v3761
        %v3763 = vlaneseq
        %v3764 = vshrl.u32 %v3763, 7
        %v3765 = vsub.s32 1, %v3764
        %v3766 = vrot.slane %v3757, %v3765
        %v3833 = vunpack.c.l.b16 %v3693
        %v3834 = vunpack.c.h.b16 %v3693
        %v3835 = vunpack.c.l.b16 %v3694
        %v3836 = vunpack.c.h.b16 %v3694
        %v3837 = vunpack.c.l.b16 %v3695
        %v3838 = vunpack.c.h.b16 %v3695
        %v3839 = vunpack.c.l.b16 %v3696
        %v3840 = vunpack.c.h.b16 %v3696
        %v3841 = vunpack.c.l.b16 %v3697
        %v3842 = vunpack.c.h.b16 %v3697
        %v3843 = vunpack.c.l.b16 %v3698
        %v3844 = vunpack.c.h.b16 %v3698
        %v3845 = vunpack.c.l.b16 %v3699
        %v3846 = vunpack.c.h.b16 %v3699
        %v3847 = vunpack.c.l.b16 %v3700
        %v3848 = vunpack.c.h.b16 %v3700
        %v3849 = vunpack.c.l.b16 %v3701
        %v3850 = vunpack.c.h.b16 %v3701
        %v3851 = vunpack.c.l.b16 %v3702
        %v3852 = vunpack.c.h.b16 %v3702
        %v3853 = vunpack.c.l.b16 %v3703
        %v3854 = vunpack.c.h.b16 %v3703
        %v3855 = vunpack.c.l.b16 %v3704
        %v3856 = vunpack.c.h.b16 %v3704
        %v3857 = vunpack.c.l.b16 %v3705
        %v3858 = vunpack.c.h.b16 %v3705
        %v3859 = vunpack.c.l.b16 %v3706
        %v3860 = vunpack.c.h.b16 %v3706
        %v3861 = vunpack.c.l.b16 %v3707
        %v3862 = vunpack.c.h.b16 %v3707
        %v3863 = vunpack.c.l.b16 %v3708
        %v3864 = vunpack.c.h.b16 %v3708
        %v3865 = vunpack.c.l.b16 %v3709
        %v3866 = vunpack.c.h.b16 %v3709
        %v3867 = vunpack.c.l.b16 %v3710
        %v3868 = vunpack.c.h.b16 %v3710
        %v3869 = vunpack.c.l.b16 %v3711
        %v3870 = vunpack.c.h.b16 %v3711
        %v3871 = vunpack.c.l.b16 %v3712
        %v3872 = vunpack.c.h.b16 %v3712
        %v3873 = vunpack.c.l.b16 %v3713
        %v3874 = vunpack.c.h.b16 %v3713
        %v3875 = vunpack.c.l.b16 %v3714
        %v3876 = vunpack.c.h.b16 %v3714
        %v3877 = vunpack.c.l.b16 %v3715
        %v3878 = vunpack.c.h.b16 %v3715
        %v3879 = vunpack.c.l.b16 %v3716
        %v3880 = vunpack.c.h.b16 %v3716
        %v3881 = vunpack.c.l.b16 %v3717
        %v3882 = vunpack.c.h.b16 %v3717
        %v3883 = vunpack.c.l.b16 %v3718
        %v3884 = vunpack.c.h.b16 %v3718
        %v3885 = vunpack.c.l.b16 %v3719
        %v3886 = vunpack.c.h.b16 %v3719
        %v3887 = vunpack.c.l.b16 %v3720
        %v3888 = vunpack.c.h.b16 %v3720
        %v3889 = vunpack.c.l.b16 %v3721
        %v3890 = vunpack.c.h.b16 %v3721
        %v3891 = vunpack.c.l.b16 %v3722
        %v3892 = vunpack.c.h.b16 %v3722
        %v3893 = vunpack.c.l.b16 %v3723
        %v3894 = vunpack.c.h.b16 %v3723
        %v3895 = vunpack.c.l.b16 %v3724
        %v3896 = vunpack.c.h.b16 %v3724
        %v3897 = vunpack.c.l.b16 %v3725
        %v3898 = vunpack.c.h.b16 %v3725
        %v3899 = vunpack.c.l.b16 %v3726
        %v3900 = vunpack.c.h.b16 %v3726
        %v3901 = vunpack.c.l.b16 %v3727
        %v3902 = vunpack.c.h.b16 %v3727
        %v3903 = vunpack.c.l.b16 %v3728
        %v3904 = vunpack.c.h.b16 %v3728
        %v3905 = vunpack.c.l.b16 %v3729
        %v3906 = vunpack.c.h.b16 %v3729
        %v3907 = vunpack.c.l.b16 %v3730
        %v3908 = vunpack.c.h.b16 %v3730
        %v3909 = vunpack.c.l.b16 %v3731
        %v3910 = vunpack.c.h.b16 %v3731
        %v3911 = vunpack.c.l.b16 %v3732
        %v3912 = vunpack.c.h.b16 %v3732
        %v3913 = vunpack.c.l.b16 %v3733
        %v3914 = vunpack.c.h.b16 %v3733
        %v3915 = vunpack.c.l.b16 %v3734
        %v3916 = vunpack.c.h.b16 %v3734
        %v3917 = vunpack.c.l.b16 %v3735
        %v3918 = vunpack.c.h.b16 %v3735
        %v3919 = vunpack.c.l.b16 %v3736
        %v3920 = vunpack.c.h.b16 %v3736
        %v3921 = vunpack.c.l.b16 %v3737
        %v3922 = vunpack.c.h.b16 %v3737
        %v3923 = vunpack.c.l.b16 %v3738
        %v3924 = vunpack.c.h.b16 %v3738
        %v3925 = vunpack.c.l.b16 %v3739
        %v3926 = vunpack.c.h.b16 %v3739
        %v3927 = vunpack.c.l.b16 %v3740
        %v3928 = vunpack.c.h.b16 %v3740
        %v3929 = vunpack.c.l.b16 %v3741
        %v3930 = vunpack.c.h.b16 %v3741
        %v3931 = vunpack.c.l.b16 %v3742
        %v3932 = vunpack.c.h.b16 %v3742
        %v3933 = vunpack.c.l.b16 %v3743
        %v3934 = vunpack.c.h.b16 %v3743
        %v3935 = vunpack.c.l.b16 %v3744
        %v3936 = vunpack.c.h.b16 %v3744
        %v3937 = vunpack.c.l.b16 %v3745
        %v3938 = vunpack.c.h.b16 %v3745
        %v3939 = vunpack.c.l.b16 %v3746
        %v3940 = vunpack.c.h.b16 %v3746
        %v3941 = vunpack.c.l.b16 %v3747
        %v3942 = vunpack.c.h.b16 %v3747
        %v3943 = vunpack.c.l.b16 %v3748
        %v3944 = vunpack.c.h.b16 %v3748
        %v3945 = vunpack.c.l.b16 %v3749
        %v3946 = vunpack.c.h.b16 %v3749
        %v3947 = vunpack.c.l.b16 %v3750
        %v3948 = vunpack.c.h.b16 %v3750
        %v3949 = vunpack.c.l.b16 %v3751
        %v3950 = vunpack.c.h.b16 %v3751
        %v3951 = vunpack.c.l.b16 %v3752
        %v3952 = vunpack.c.h.b16 %v3752
        %v3953 = vunpack.c.l.b16 %v3753
        %v3954 = vunpack.c.h.b16 %v3753
        %v3955 = vunpack.c.l.b16 %v3754
        %v3956 = vunpack.c.h.b16 %v3754
        %v3957 = vunpack.c.l.b16 %v3755
        %v3958 = vunpack.c.h.b16 %v3755
        %v3959 = vunpack.c.l.b16 %v3756
        %v3960 = vunpack.c.h.b16 %v3756
        %v3961 = vpack.c.b16 %v3835, %v3833
        %v3962 = vpack.c.b16 %v3836, %v3834
        %v3963 = vpack.c.b16 %v3839, %v3837
        %v3964 = vpack.c.b16 %v3840, %v3838
        %v3965 = vpack.c.b16 %v3843, %v3841
        %v3966 = vpack.c.b16 %v3844, %v3842
        %v3967 = vpack.c.b16 %v3847, %v3845
        %v3968 = vpack.c.b16 %v3848, %v3846
        %v3969 = vpack.c.b16 %v3851, %v3849
        %v3970 = vpack.c.b16 %v3852, %v3850
        %v3971 = vpack.c.b16 %v3855, %v3853
        %v3972 = vpack.c.b16 %v3856, %v3854
        %v3973 = vpack.c.b16 %v3859, %v3857
        %v3974 = vpack.c.b16 %v3860, %v3858
        %v3975 = vpack.c.b16 %v3863, %v3861
        %v3976 = vpack.c.b16 %v3864, %v3862
        %v3977 = vpack.c.b16 %v3867, %v3865
        %v3978 = vpack.c.b16 %v3868, %v3866
        %v3979 = vpack.c.b16 %v3871, %v3869
        %v3980 = vpack.c.b16 %v3872, %v3870
        %v3981 = vpack.c.b16 %v3875, %v3873
        %v3982 = vpack.c.b16 %v3876, %v3874
        %v3983 = vpack.c.b16 %v3879, %v3877
        %v3984 = vpack.c.b16 %v3880, %v3878
        %v3985 = vpack.c.b16 %v3883, %v3881
        %v3986 = vpack.c.b16 %v3884, %v3882
        %v3987 = vpack.c.b16 %v3887, %v3885
        %v3988 = vpack.c.b16 %v3888, %v3886
        %v3989 = vpack.c.b16 %v3891, %v3889
        %v3990 = vpack.c.b16 %v3892, %v3890
        %v3991 = vpack.c.b16 %v3895, %v3893
        %v3992 = vpack.c.b16 %v3896, %v3894
        %v3993 = vpack.c.b16 %v3899, %v3897
        %v3994 = vpack.c.b16 %v3900, %v3898
        %v3995 = vpack.c.b16 %v3903, %v3901
        %v3996 = vpack.c.b16 %v3904, %v3902
        %v3997 = vpack.c.b16 %v3907, %v3905
        %v3998 = vpack.c.b16 %v3908, %v3906
        %v3999 = vpack.c.b16 %v3911, %v3909
        %v4000 = vpack.c.b16 %v3912, %v3910
        %v4001 = vpack.c.b16 %v3915, %v3913
        %v4002 = vpack.c.b16 %v3916, %v3914
        %v4003 = vpack.c.b16 %v3919, %v3917
        %v4004 = vpack.c.b16 %v3920, %v3918
        %v4005 = vpack.c.b16 %v3923, %v3921
        %v4006 = vpack.c.b16 %v3924, %v3922
        %v4007 = vpack.c.b16 %v3927, %v3925
        %v4008 = vpack.c.b16 %v3928, %v3926
        %v4009 = vpack.c.b16 %v3931, %v3929
        %v4010 = vpack.c.b16 %v3932, %v3930
        %v4011 = vpack.c.b16 %v3935, %v3933
        %v4012 = vpack.c.b16 %v3936, %v3934
        %v4013 = vpack.c.b16 %v3939, %v3937
        %v4014 = vpack.c.b16 %v3940, %v3938
        %v4015 = vpack.c.b16 %v3943, %v3941
        %v4016 = vpack.c.b16 %v3944, %v3942
        %v4017 = vpack.c.b16 %v3947, %v3945
        %v4018 = vpack.c.b16 %v3948, %v3946
        %v4019 = vpack.c.b16 %v3951, %v3949
        %v4020 = vpack.c.b16 %v3952, %v3950
        %v4021 = vpack.c.b16 %v3955, %v3953
        %v4022 = vpack.c.b16 %v3956, %v3954
        %v4023 = vpack.c.b16 %v3959, %v3957
        %v4024 = vpack.c.b16 %v3960, %v3958
        %4089 = vmatprep.subr.bf16.mxu0 %v3962
        %4090 = vmatpush1.bf16.msra.mxu0 %v3961
        %4091 = vmatprep.subr.bf16.mxu0 %v3964
        %4092 = vmatpush1.bf16.msra.mxu0 %v3963
        %4093 = vmatprep.subr.bf16.mxu0 %v3966
        %4094 = vmatpush1.bf16.msra.mxu0 %v3965
        %4095 = vmatprep.subr.bf16.mxu0 %v3968
        %4096 = vmatpush1.bf16.msra.mxu0 %v3967
        %4097 = vmatprep.subr.bf16.mxu0 %v3970
        %4098 = vmatpush1.bf16.msra.mxu0 %v3969
        %4099 = vmatprep.subr.bf16.mxu0 %v3972
        %4100 = vmatpush1.bf16.msra.mxu0 %v3971
        %4101 = vmatprep.subr.bf16.mxu0 %v3974
        %4102 = vmatpush1.bf16.msra.mxu0 %v3973
        %4103 = vmatprep.subr.bf16.mxu0 %v3976
        %4104 = vmatpush1.bf16.msra.mxu0 %v3975
        %4105 = vmatprep.subr.bf16.mxu0 %v3978
        %4106 = vmatpush1.bf16.msra.mxu0 %v3977
        %4107 = vmatprep.subr.bf16.mxu0 %v3980
        %4108 = vmatpush1.bf16.msra.mxu0 %v3979
        %4109 = vmatprep.subr.bf16.mxu0 %v3982
        %4110 = vmatpush1.bf16.msra.mxu0 %v3981
        %4111 = vmatprep.subr.bf16.mxu0 %v3984
        %4112 = vmatpush1.bf16.msra.mxu0 %v3983
        %4113 = vmatprep.subr.bf16.mxu0 %v3986
        %4114 = vmatpush1.bf16.msra.mxu0 %v3985
        %4115 = vmatprep.subr.bf16.mxu0 %v3988
        %4116 = vmatpush1.bf16.msra.mxu0 %v3987
        %4117 = vmatprep.subr.bf16.mxu0 %v3990
        %4118 = vmatpush1.bf16.msra.mxu0 %v3989
        %4119 = vmatprep.subr.bf16.mxu0 %v3992
        %4120 = vmatpush1.bf16.msra.mxu0 %v3991
        %4121 = vmatprep.mubr.bf16.mxu0 %v3678
        %4122 = vmatmul.mubr.bf16.gmra.mrb[0].mxu0 %v3677
        %v4123 = vpop.f32.mrb[0].mxu0
        %v4124 = vadd.f32 %v3762, %v4123
        %v4125 = vpop.f32.mrb[0].mxu0
        %v4126 = vadd.f32 %v3766, %v4125
        %v4127 = vpop.f32.mrb[0].mxu0
        %v4128 = vadd.f32 %v3762, %v4127
        %v4129 = vpop.f32.mrb[0].mxu0
        %v4130 = vadd.f32 %v3766, %v4129
        %4131 = vmatprep.mubr.bf16.mxu0 %v3682
        %4132 = vmatmul.mubr.bf16.gmra.mrb[0].mxu0 %v3681
        %v4133 = vpop.f32.mrb[0].mxu0
        %v4134 = vadd.f32 %v3762, %v4133
        %v4135 = vpop.f32.mrb[0].mxu0
        %v4136 = vadd.f32 %v3766, %v4135
        %v4137 = vpop.f32.mrb[0].mxu0
        %v4138 = vadd.f32 %v3762, %v4137
        %v4139 = vpop.f32.mrb[0].mxu0
        %v4140 = vadd.f32 %v3766, %v4139
        %4141 = vmatprep.mubr.bf16.mxu0 %v3686
        %4142 = vmatmul.mubr.bf16.gmra.mrb[0].mxu0 %v3685
        %v4143 = vpop.f32.mrb[0].mxu0
        %v4144 = vadd.f32 %v3762, %v4143
        %v4145 = vpop.f32.mrb[0].mxu0
        %v4146 = vadd.f32 %v3766, %v4145
        %v4147 = vpop.f32.mrb[0].mxu0
        %v4148 = vadd.f32 %v3762, %v4147
        %v4149 = vpop.f32.mrb[0].mxu0
        %v4150 = vadd.f32 %v3766, %v4149
        %4151 = vmatprep.mubr.bf16.mxu0 %v3690
        %4152 = vmatmul.mubr.bf16.gmra.mrb[0].mxu0 %v3689
        %v4153 = vpop.f32.mrb[0].mxu0
        %v4154 = vadd.f32 %v3762, %v4153
        %v4155 = vpop.f32.mrb[0].mxu0
        %v4156 = vadd.f32 %v3766, %v4155
        %v4157 = vpop.f32.mrb[0].mxu0
        %v4158 = vadd.f32 %v3762, %v4157
        %v4159 = vpop.f32.mrb[0].mxu0
        %v4160 = vadd.f32 %v3766, %v4159
        %4161 = vdwg.mxu0
        %4162 = vmatprep.subr.bf16.mxu0 %v3994
        %4163 = vmatpush1.bf16.msra.mxu0 %v3993
        %4164 = vmatprep.subr.bf16.mxu0 %v3996
        %4165 = vmatpush1.bf16.msra.mxu0 %v3995
        %4166 = vmatprep.subr.bf16.mxu0 %v3998
        %4167 = vmatpush1.bf16.msra.mxu0 %v3997
        %4168 = vmatprep.subr.bf16.mxu0 %v4000
        %4169 = vmatpush1.bf16.msra.mxu0 %v3999
        %4170 = vmatprep.subr.bf16.mxu0 %v4002
        %4171 = vmatpush1.bf16.msra.mxu0 %v4001
        %4172 = vmatprep.subr.bf16.mxu0 %v4004
        %4173 = vmatpush1.bf16.msra.mxu0 %v4003
        %4174 = vmatprep.subr.bf16.mxu0 %v4006
        %4175 = vmatpush1.bf16.msra.mxu0 %v4005
        %4176 = vmatprep.subr.bf16.mxu0 %v4008
        %4177 = vmatpush1.bf16.msra.mxu0 %v4007
        %4178 = vmatprep.subr.bf16.mxu0 %v4010
        %4179 = vmatpush1.bf16.msra.mxu0 %v4009
        %4180 = vmatprep.subr.bf16.mxu0 %v4012
        %4181 = vmatpush1.bf16.msra.mxu0 %v4011
        %4182 = vmatprep.subr.bf16.mxu0 %v4014
        %4183 = vmatpush1.bf16.msra.mxu0 %v4013
        %4184 = vmatprep.subr.bf16.mxu0 %v4016
        %4185 = vmatpush1.bf16.msra.mxu0 %v4015
        %4186 = vmatprep.subr.bf16.mxu0 %v4018
        %4187 = vmatpush1.bf16.msra.mxu0 %v4017
        %4188 = vmatprep.subr.bf16.mxu0 %v4020
        %4189 = vmatpush1.bf16.msra.mxu0 %v4019
        %4190 = vmatprep.subr.bf16.mxu0 %v4022
        %4191 = vmatpush1.bf16.msra.mxu0 %v4021
        %4192 = vmatprep.subr.bf16.mxu0 %v4024
        %4193 = vmatpush1.bf16.msra.mxu0 %v4023
        %4194 = vmatprep.mubr.bf16.mxu0 %v3680
        %4195 = vmatmul.mubr.bf16.gmra.mrb[0].mxu0 %v3679
        %v4196 = vpop.f32.mrb[0].mxu0
        %v4197 = vadd.f32 %v4124, %v4196
        %v4198 = vpop.f32.mrb[0].mxu0
        %v4199 = vadd.f32 %v4126, %v4198
        %v4200 = vpop.f32.mrb[0].mxu0
        %v4201 = vadd.f32 %v4128, %v4200
        %v4202 = vpop.f32.mrb[0].mxu0
        %v4203 = vadd.f32 %v4130, %v4202
        %4204 = vmatprep.mubr.bf16.mxu0 %v3684
        %4205 = vmatmul.mubr.bf16.gmra.mrb[0].mxu0 %v3683
        %v4206 = vpop.f32.mrb[0].mxu0
        %v4207 = vadd.f32 %v4134, %v4206
        %v4208 = vpop.f32.mrb[0].mxu0
        %v4209 = vadd.f32 %v4136, %v4208
        %v4210 = vpop.f32.mrb[0].mxu0
        %v4211 = vadd.f32 %v4138, %v4210
        %v4212 = vpop.f32.mrb[0].mxu0
        %v4213 = vadd.f32 %v4140, %v4212
        %4214 = vmatprep.mubr.bf16.mxu0 %v3688
        %4215 = vmatmul.mubr.bf16.gmra.mrb[0].mxu0 %v3687
        %v4216 = vpop.f32.mrb[0].mxu0
        %v4217 = vadd.f32 %v4144, %v4216
        %v4218 = vpop.f32.mrb[0].mxu0
        %v4219 = vadd.f32 %v4146, %v4218
        %v4220 = vpop.f32.mrb[0].mxu0
        %v4221 = vadd.f32 %v4148, %v4220
        %v4222 = vpop.f32.mrb[0].mxu0
        %v4223 = vadd.f32 %v4150, %v4222
        %4224 = vmatprep.mubr.bf16.mxu0 %v3692
        %4225 = vmatmul.mubr.bf16.gmra.mrb[0].mxu0 %v3691
        %v4226 = vpop.f32.mrb[0].mxu0
        %v4227 = vadd.f32 %v4154, %v4226
        %v4228 = vpop.f32.mrb[0].mxu0
        %v4229 = vadd.f32 %v4156, %v4228
        %v4230 = vpop.f32.mrb[0].mxu0
        %v4231 = vadd.f32 %v4158, %v4230
        %v4232 = vpop.f32.mrb[0].mxu0
        %v4233 = vadd.f32 %v4160, %v4232
        %4234 = vdwg.mxu0
        %v4235 = vadd.f32 %v2884, %v4197
        %v4236 = vadd.f32 %v2885, %v4199
        %v4237 = vadd.f32 %v2886, %v4201
        %v4238 = vadd.f32 %v2887, %v4203
        %v4239 = vadd.f32 %v2888, %v4207
        %v4240 = vadd.f32 %v2889, %v4209
        %v4241 = vadd.f32 %v2890, %v4211
        %v4242 = vadd.f32 %v2891, %v4213
        %v4243 = vadd.f32 %v2892, %v4217
        %v4244 = vadd.f32 %v2893, %v4219
        %v4245 = vadd.f32 %v2894, %v4221
        %v4246 = vadd.f32 %v2895, %v4223
        %v4247 = vadd.f32 %v2896, %v4227
        %v4248 = vadd.f32 %v2897, %v4229
        %v4249 = vadd.f32 %v2898, %v4231
        %v4250 = vadd.f32 %v2899, %v4233
        %4251 = vst [vmem:[%s599] sm:$0xff] %v4235
        %4252 = vst [vmem:[%s599 + $0x8] sm:$0xff] %v4236
        %4253 = vst [vmem:[%s599 + $0x10] sm:$0xff] %v4237
        %4254 = vst [vmem:[%s599 + $0x18] sm:$0xff] %v4238
        %4255 = vst [vmem:[%s599 + $0x20] sm:$0xff] %v4239
        %4256 = vst [vmem:[%s599 + $0x28] sm:$0xff] %v4240
        %4257 = vst [vmem:[%s599 + $0x30] sm:$0xff] %v4241
        %4258 = vst [vmem:[%s599 + $0x38] sm:$0xff] %v4242
        %4259 = vst [vmem:[%s599 + $0x40] sm:$0xff] %v4243
        %4260 = vst [vmem:[%s599 + $0x48] sm:$0xff] %v4244
        %4261 = vst [vmem:[%s599 + $0x50] sm:$0xff] %v4245
        %4262 = vst [vmem:[%s599 + $0x58] sm:$0xff] %v4246
        %4263 = vst [vmem:[%s599 + $0x60] sm:$0xff] %v4247
        %4264 = vst [vmem:[%s599 + $0x68] sm:$0xff] %v4248
        %4265 = vst [vmem:[%s599 + $0x70] sm:$0xff] %v4249
        %4266 = vst [vmem:[%s599 + $0x78] sm:$0xff] %v4250
        %s4267 = sand.u32 %s356, 1
        %s4268 = scalar_lea.sflag [#allocation8], %s4267
        %s4269 = sand.u32 %s356, 1
        %s4270 = smul.addr %s4269, 128
        %s4271 = scalar_lea.vmem [#allocation20], %s4270
        // Predicated region
        $region113: #{tpu_custom_call.1} parent=75 // pred_check
          %p4272 = pneg %p366
        $region114: #{tpu_custom_call.1} parent=75 // pred_check_branch
          %4274 = sbr.rel (%p4272) target = $region116
        $region115: #{tpu_custom_call.1} parent=75 // pred_region
          %s4275 = smul.u32 8, %s40
          %s4277 = ssub.s32 2048, 2048
          %4278 = vsyncadd %s4268, %s4277
          %s4279 = smul.addr %s4275, 2
          %s4280 = smul.addr %s39, 16
          %s4281 = sadd.s32 %s4279, %s4280
          %s4282 = smul.addr %s4281, 128
          %s4283 = scalar_lea.hbm %s14, %s4282
          %s4284 = sshll.u32 %s4271, 4
          %s4285 = int_to_ptr.vmem [resolvable:$true] %s4284
          %4290 = dma.vmem_to_hbm [thread:$0]  %s4285, 2048, %s4283, %s4268, 256, 256, 16
        $region116: #{tpu_custom_call.1} parent=75 // pred_fallthru
          _
      $region76: #{tpu_custom_call.1} parent=5 // pred_fallthru
        _
      %p4291 = scmp.le.s32.totalorder 2, %s30
      // Predicated region
      $region117: #{tpu_custom_call.1} parent=5 // pred_check
        %p4292 = pneg %p4291
      $region118: #{tpu_custom_call.1} parent=5 // pred_check_branch
        %4294 = sbr.rel (%p4292) target = $region120
      $region119: #{tpu_custom_call.1} parent=5 // pred_region
        %s4295 = ssub.s32 %s30, 2
        // Predicated region
        $region121: #{tpu_custom_call.1} parent=119 // pred_check
          %p4296 = pneg %p372
        $region122: #{tpu_custom_call.1} parent=119 // pred_check_branch
          %4298 = sbr.rel (%p4296) target = $region124
        $region123: #{tpu_custom_call.1} parent=119 // pred_region
          %s4299 = sand.u32 %s357, 1
          %s4300 = scalar_lea.sflag [#allocation8], %s4299
          %s4301 = sand.u32 %s357, 1
          %s4302 = smul.addr %s4301, 128
          %s4303 = scalar_lea.vmem [#allocation20], %s4302
          %4304 = dma.done %s4300, 2048
        $region124: #{tpu_custom_call.1} parent=119 // pred_fallthru
          _
      $region120: #{tpu_custom_call.1} parent=5 // pred_fallthru
        _
    $region6: #{tpu_custom_call.1} parent=1 // loop_footer
      %s34 = sadd.s32 1, %s30
    $region7: #{tpu_custom_call.1} parent=1 // loop_footer_branch
      %29 = sbr.rel target = $region3
    $region8: #{tpu_custom_call.1} parent=1 // loop_exit
      _
    %4305 = vsyncpa [#allocation7], 1
    %s4306 = scalar_lea.sflag [#allocation7], 1
    %4307 = vsyncpa %s4306, 1
    %4308 = vsyncpa [#allocation10], 1
    %4309 = vsyncpa [#allocation13], 1
    %4310 = vsyncpa [#allocation16], 1
    %4311 = vsyncpa [#allocation19], 1
    %4312 = vsyncpa [#allocation8], 1
    %s4313 = scalar_lea.sflag [#allocation8], 1
    %4314 = vsyncpa %s4313, 1

// kernel: tpu_custom_call.1
$region0: #{tpu_custom_call.1}
  #allocation0 [shape = 'u32[]', space=smem, size = 0x4, offset = 0x4, fixed_abs, tag = 'smem constant byte address 0x4 - core index']
  #allocation1 [shape = 'u32[144,128]{1,0:T(1,128)}', space=vmem, size = 0x12000, scoped, tag = 'internal scratch']
  #allocation2 [shape = 'bf16[2,64,128]{2,1,0:T(16,128)(2,1)}', space=vmem, size = 0x8000, scoped, tag = 'scratch operand']
  #allocation3 [shape = 'bf16[2,64,128]{2,1,0:T(16,128)(2,1)}', space=vmem, size = 0x8000, scoped, tag = 'scratch operand']
  #allocation4 [shape = 'bf16[2,64,128]{2,1,0:T(16,128)(2,1)}', space=vmem, size = 0x8000, scoped, tag = 'scratch operand']
  #allocation5 [shape = 'bf16[64,256]{1,0:T(16,128)(2,1)}', space=vmem, size = 0x8000, scoped, tag = 'scratch operand']
  %s0 = inlined_call_operand.hbm [shape: f32[2,64,256], index: 0, kind: input, shape index: {}]
  %s1 = inlined_call_operand.vmem [shape: f32[1,256], index: 1, kind: input, shape index: {}]
  %s2 = inlined_call_operand.hbm [shape: f32[1,256], index: 2, kind: input, shape index: {}]
  %s3 = inlined_call_operand.hbm [shape: bf16[2,256,128], index: 3, kind: input, shape index: {}]
  %s4 = inlined_call_operand.hbm [shape: bf16[2,256,128], index: 4, kind: input, shape index: {}]
  %s5 = inlined_call_operand.hbm [shape: bf16[2,256,128], index: 5, kind: input, shape index: {}]
  %s6 = inlined_call_operand.hbm [shape: bf16[256,256], index: 6, kind: input, shape index: {}]
  %s7 = inlined_call_operand.vmem [shape: f32[1,256], index: 7, kind: input, shape index: {}]
  %s8 = inlined_call_operand.vmem [shape: f32[1,256], index: 8, kind: input, shape index: {}]
  %s9 = inlined_call_operand.vmem [shape: f32[1,256], index: 9, kind: input, shape index: {}]
  %s10 = inlined_call_operand.hbm [shape: bf16[256,512], index: 10, kind: input, shape index: {}]
  %s11 = inlined_call_operand.vmem [shape: f32[1,512], index: 11, kind: input, shape index: {}]
  %s12 = inlined_call_operand.hbm [shape: bf16[512,256], index: 12, kind: input, shape index: {}]
  %s13 = inlined_call_operand.vmem [shape: f32[1,256], index: 13, kind: input, shape index: {}]
  %s14 = inlined_call_operand.hbm [shape: f32[2,64,256], index: 14, kind: output, shape index: {}]
  %s15 = sld [smem:[#allocation0]]
  $region125: #{tpu_custom_call.1} parent=0
    _
  %s17 = ssub.s32 1, %s15
  %s18 = scalar_select 0, %s17, %s15
  $region1: #{tpu_custom_call.1} parent=0
    #allocation6 [shape = 'u8[131072]{0}', space=vmem, size = 0x20000, scoped, tag = 'input window, operand 0']
    #allocation7 [shape = 's32[2]{0}', space=sflag, size = 0x8, scoped, tag = 'scoped memory for tpu_custom_call.1']
    #allocation8 [shape = 's32[2]{0}', space=sflag, size = 0x8, scoped, tag = 'scoped memory for tpu_custom_call.1']
    #allocation9 [shape = 'u8[1024]{0}', space=vmem, size = 0x400, scoped, tag = 'input window, operand 2, single buffered']
    #allocation10 [shape = 's32[1]{0}', space=sflag, size = 0x4, scoped, tag = 'scoped memory for tpu_custom_call.1']
    #allocation11 [shape = 'u8[131072]{0}', space=vmem, size = 0x20000, scoped, tag = 'input window, operand 3, single buffered']
    #allocation12 [shape = 'u8[131072]{0}', space=vmem, size = 0x20000, scoped, tag = 'input window, operand 4, single buffered']
    #allocation13 [shape = 's32[1]{0}', space=sflag, size = 0x4, scoped, tag = 'scoped memory for tpu_custom_call.1']
    #allocation14 [shape = 'u8[131072]{0}', space=vmem, size = 0x20000, scoped, tag = 'input window, operand 5, single buffered']
    #allocation15 [shape = 'u8[131072]{0}', space=vmem, size = 0x20000, scoped, tag = 'input window, operand 6, single buffered']
    #allocation16 [shape = 's32[1]{0}', space=sflag, size = 0x4, scoped, tag = 'scoped memory for tpu_custom_call.1']
    #allocation17 [shape = 'u8[262144]{0}', space=vmem, size = 0x40000, scoped, tag = 'input window, operand 10, single buffered']
    #allocation18 [shape = 'u8[262144]{0}', space=vmem, size = 0x40000, scoped, tag = 'input window, operand 12, single buffered']
    #allocation19 [shape = 's32[1]{0}', space=sflag, size = 0x4, scoped, tag = 'scoped memory for tpu_custom_call.1']
    #allocation20 [shape = 'u8[131072]{0}', space=vmem, size = 0x20000, scoped, tag = 'output window, operand 0']
    %19 = vsyncpa [#allocation7], 0
    %s20 = scalar_lea.sflag [#allocation7], 1
    %21 = vsyncpa %s20, 0
    %22 = vsyncpa [#allocation10], 0
    %23 = vsyncpa [#allocation13], 0
    %24 = vsyncpa [#allocation16], 0
    %25 = vsyncpa [#allocation19], 0
    %26 = vsyncpa [#allocation8], 0
    %s27 = scalar_lea.sflag [#allocation8], 1
    %28 = vsyncpa %s27, 0
    loop: start=0, step=1, limit=4
    $region2: #{tpu_custom_call.1} parent=1 // loop_pre_header
      _
    $region3: #{tpu_custom_call.1} parent=1 // loop_header
      %s30 = sphi 0, %s34
      %p31 = scmp.ge.s32.totalorder %s30, 4
      %s37 = sphi 0, %s49
      %s38 = sphi 0, %s45
      %s39 = sphi 0, %s37
      %s40 = sphi 0, %s38
      %s41 = sphi 0, %s39
      %s42 = sphi 0, %s40
      %s52 = sphi 0, %s54
      %s55 = sphi 0, %s52
      %s56 = sphi 0, %s55
      %s72 = sphi 0, %s56
      %s76 = sphi 0, %s76
      %s78 = sphi 0, %s76
      %s79 = sphi 0, %s78
      %s93 = sphi 0, %s79
      %s97 = sphi 0, %s97
      %s99 = sphi 0, %s97
      %s100 = sphi 0, %s99
      %s114 = sphi 0, %s100
      %s118 = sphi 0, %s118
      %s120 = sphi 0, %s118
      %s121 = sphi 0, %s120
      %s135 = sphi 0, %s121
      %s139 = sphi 0, %s139
      %s141 = sphi 0, %s139
      %s142 = sphi 0, %s141
      %s156 = sphi 0, %s142
      %s160 = sphi 0, %s160
      %s162 = sphi 0, %s160
      %s163 = sphi 0, %s162
      %s177 = sphi 0, %s163
      %s181 = sphi 0, %s181
      %s183 = sphi 0, %s181
      %s184 = sphi 0, %s183
      %s198 = sphi 0, %s184
      %s202 = sphi 0, %s202
      %s204 = sphi 0, %s202
      %s205 = sphi 0, %s204
      %s219 = sphi 0, %s205
      %s223 = sphi 0, %s223
      %s225 = sphi 0, %s223
      %s226 = sphi 0, %s225
      %s240 = sphi 0, %s226
      %s244 = sphi 0, %s244
      %s246 = sphi 0, %s244
      %s247 = sphi 0, %s246
      %s261 = sphi 0, %s247
      %s265 = sphi 0, %s265
      %s267 = sphi 0, %s265
      %s268 = sphi 0, %s267
      %s282 = sphi 0, %s268
      %s286 = sphi 0, %s286
      %s288 = sphi 0, %s286
      %s289 = sphi 0, %s288
      %s303 = sphi 0, %s289
      %s307 = sphi 0, %s307
      %s309 = sphi 0, %s307
      %s310 = sphi 0, %s309
      %s324 = sphi 0, %s310
      %s328 = sphi 0, %s328
      %s330 = sphi 0, %s328
      %s331 = sphi 0, %s330
      %s345 = sphi 0, %s331
      %s353 = sphi 0, %s355
      %s356 = sphi 0, %s353
      %s357 = sphi 0, %s356
      %s373 = sphi 0, %s357
    $region4: #{tpu_custom_call.1} parent=1 // loop_header_branch
      %33 = sbr.rel (%p31) target = $region8
    $region5: #{tpu_custom_call.1} parent=1 // loop_body
      %s35 = ssub.s32 %s30, 1
      %s36 = ssub.s32 %s30, 2
      %s43 = sadd.s32 1, %s38
      %p44 = scmp.ge.s32.totalorder %s43, 1
      %s45 = scalar_select %p44, 0, %s43
      %s46 = sadd.s32 1, %s37
      %s47 = scalar_select %p44, %s46, %s37
      %p48 = scmp.ge.s32.totalorder %s47, 2
      %s49 = scalar_select %p48, 0, %s47
      %s50 = ssub.s32 %s37, %s49
      %p51 = scmp.eq.s32.totalorder %s50, 0
      %s53 = sadd.s32 %s52, 1
      %s54 = scalar_select %p51, %s52, %s53
      %p57 = pneg %p51
      %p58 = scmp.eq.s32.totalorder %s30, 1
      %p59 = por %p57, %p58
      %p60 = scmp.ne.s32.totalorder %s52, %s55
      %p61 = scmp.eq.s32.totalorder %s30, 0
      %p62 = por %p60, %p61
      %p63 = scmp.ne.s32.totalorder %s52, %s55
      %p64 = scmp.eq.s32.totalorder %s35, 1
      %p65 = por %p63, %p64
      %p66 = scmp.ne.s32.totalorder %s55, %s56
      %p67 = scmp.eq.s32.totalorder %s35, 0
      %p68 = por %p66, %p67
      %p69 = scmp.ne.s32.totalorder %s55, %s56
      %p70 = scmp.eq.s32.totalorder %s36, 1
      %p71 = por %p69, %p70
      %p73 = scmp.ne.s32.totalorder %s56, %s72
      %p74 = scmp.eq.s32.totalorder %s36, 0
      %p75 = por %p73, %p74
      %s77 = sadd.s32 %s76, 1
      %p80 = scmp.eq.s32.totalorder %s30, 1
      %p81 = scmp.ne.s32.totalorder %s76, %s78
      %p82 = scmp.eq.s32.totalorder %s30, 0
      %p83 = por %p81, %p82
      %p84 = scmp.ne.s32.totalorder %s76, %s78
      %p85 = scmp.eq.s32.totalorder %s35, 1
      %p86 = por %p84, %p85
      %p87 = scmp.ne.s32.totalorder %s78, %s79
      %p88 = scmp.eq.s32.totalorder %s35, 0
      %p89 = por %p87, %p88
      %p90 = scmp.ne.s32.totalorder %s78, %s79
      %p91 = scmp.eq.s32.totalorder %s36, 1
      %p92 = por %p90, %p91
      %p94 = scmp.ne.s32.totalorder %s79, %s93
      %p95 = scmp.eq.s32.totalorder %s36, 0
      %p96 = por %p94, %p95
      %s98 = sadd.s32 %s97, 1
      %p101 = scmp.eq.s32.totalorder %s30, 1
      %p102 = scmp.ne.s32.totalorder %s97, %s99
      %p103 = scmp.eq.s32.totalorder %s30, 0
      %p104 = por %p102, %p103
      %p105 = scmp.ne.s32.totalorder %s97, %s99
      %p106 = scmp.eq.s32.totalorder %s35, 1
      %p107 = por %p105, %p106
      %p108 = scmp.ne.s32.totalorder %s99, %s100
      %p109 = scmp.eq.s32.totalorder %s35, 0
      %p110 = por %p108, %p109
      %p111 = scmp.ne.s32.totalorder %s99, %s100
      %p112 = scmp.eq.s32.totalorder %s36, 1
      %p113 = por %p111, %p112
      %p115 = scmp.ne.s32.totalorder %s100, %s114
      %p116 = scmp.eq.s32.totalorder %s36, 0
      %p117 = por %p115, %p116
      %s119 = sadd.s32 %s118, 1
      %p122 = scmp.eq.s32.totalorder %s30, 1
      %p123 = scmp.ne.s32.totalorder %s118, %s120
      %p124 = scmp.eq.s32.totalorder %s30, 0
      %p125 = por %p123, %p124
      %p126 = scmp.ne.s32.totalorder %s118, %s120
      %p127 = scmp.eq.s32.totalorder %s35, 1
      %p128 = por %p126, %p127
      %p129 = scmp.ne.s32.totalorder %s120, %s121
      %p130 = scmp.eq.s32.totalorder %s35, 0
      %p131 = por %p129, %p130
      %p132 = scmp.ne.s32.totalorder %s120, %s121
      %p133 = scmp.eq.s32.totalorder %s36, 1
      %p134 = por %p132, %p133
      %p136 = scmp.ne.s32.totalorder %s121, %s135
      %p137 = scmp.eq.s32.totalorder %s36, 0
      %p138 = por %p136, %p137
      %s140 = sadd.s32 %s139, 1
      %p143 = scmp.eq.s32.totalorder %s30, 1
      %p144 = scmp.ne.s32.totalorder %s139, %s141
      %p145 = scmp.eq.s32.totalorder %s30, 0
      %p146 = por %p144, %p145
      %p147 = scmp.ne.s32.totalorder %s139, %s141
      %p148 = scmp.eq.s32.totalorder %s35, 1
      %p149 = por %p147, %p148
      %p150 = scmp.ne.s32.totalorder %s141, %s142
      %p151 = scmp.eq.s32.totalorder %s35, 0
      %p152 = por %p150, %p151
      %p153 = scmp.ne.s32.totalorder %s141, %s142
      %p154 = scmp.eq.s32.totalorder %s36, 1
      %p155 = por %p153, %p154
      %p157 = scmp.ne.s32.totalorder %s142, %s156
      %p158 = scmp.eq.s32.totalorder %s36, 0
      %p159 = por %p157, %p158
      %s161 = sadd.s32 %s160, 1
      %p164 = scmp.eq.s32.totalorder %s30, 1
      %p165 = scmp.ne.s32.totalorder %s160, %s162
      %p166 = scmp.eq.s32.totalorder %s30, 0
      %p167 = por %p165, %p166
      %p168 = scmp.ne.s32.totalorder %s160, %s162
      %p169 = scmp.eq.s32.totalorder %s35, 1
      %p170 = por %p168, %p169
      %p171 = scmp.ne.s32.totalorder %s162, %s163
      %p172 = scmp.eq.s32.totalorder %s35, 0
      %p173 = por %p171, %p172
      %p174 = scmp.ne.s32.totalorder %s162, %s163
      %p175 = scmp.eq.s32.totalorder %s36, 1
      %p176 = por %p174, %p175
      %p178 = scmp.ne.s32.totalorder %s163, %s177
      %p179 = scmp.eq.s32.totalorder %s36, 0
      %p180 = por %p178, %p179
      %s182 = sadd.s32 %s181, 1
      %p185 = scmp.eq.s32.totalorder %s30, 1
      %p186 = scmp.ne.s32.totalorder %s181, %s183
      %p187 = scmp.eq.s32.totalorder %s30, 0
      %p188 = por %p186, %p187
      %p189 = scmp.ne.s32.totalorder %s181, %s183
      %p190 = scmp.eq.s32.totalorder %s35, 1
      %p191 = por %p189, %p190
      %p192 = scmp.ne.s32.totalorder %s183, %s184
      %p193 = scmp.eq.s32.totalorder %s35, 0
      %p194 = por %p192, %p193
      %p195 = scmp.ne.s32.totalorder %s183, %s184
      %p196 = scmp.eq.s32.totalorder %s36, 1
      %p197 = por %p195, %p196
      %p199 = scmp.ne.s32.totalorder %s184, %s198
      %p200 = scmp.eq.s32.totalorder %s36, 0
      %p201 = por %p199, %p200
      %s203 = sadd.s32 %s202, 1
      %p206 = scmp.eq.s32.totalorder %s30, 1
      %p207 = scmp.ne.s32.totalorder %s202, %s204
      %p208 = scmp.eq.s32.totalorder %s30, 0
      %p209 = por %p207, %p208
      %p210 = scmp.ne.s32.totalorder %s202, %s204
      %p211 = scmp.eq.s32.totalorder %s35, 1
      %p212 = por %p210, %p211
      %p213 = scmp.ne.s32.totalorder %s204, %s205
      %p214 = scmp.eq.s32.totalorder %s35, 0
      %p215 = por %p213, %p214
      %p216 = scmp.ne.s32.totalorder %s204, %s205
      %p217 = scmp.eq.s32.totalorder %s36, 1
      %p218 = por %p216, %p217
      %p220 = scmp.ne.s32.totalorder %s205, %s219
      %p221 = scmp.eq.s32.totalorder %s36, 0
      %p222 = por %p220, %p221
      %s224 = sadd.s32 %s223, 1
      %p227 = scmp.eq.s32.totalorder %s30, 1
      %p228 = scmp.ne.s32.totalorder %s223, %s225
      %p229 = scmp.eq.s32.totalorder %s30, 0
      %p230 = por %p228, %p229
      %p231 = scmp.ne.s32.totalorder %s223, %s225
      %p232 = scmp.eq.s32.totalorder %s35, 1
      %p233 = por %p231, %p232
      %p234 = scmp.ne.s32.totalorder %s225, %s226
      %p235 = scmp.eq.s32.totalorder %s35, 0
      %p236 = por %p234, %p235
      %p237 = scmp.ne.s32.totalorder %s225, %s226
      %p238 = scmp.eq.s32.totalorder %s36, 1
      %p239 = por %p237, %p238
      %p241 = scmp.ne.s32.totalorder %s226, %s240
      %p242 = scmp.eq.s32.totalorder %s36, 0
      %p243 = por %p241, %p242
      %s245 = sadd.s32 %s244, 1
      %p248 = scmp.eq.s32.totalorder %s30, 1
      %p249 = scmp.ne.s32.totalorder %s244, %s246
      %p250 = scmp.eq.s32.totalorder %s30, 0
      %p251 = por %p249, %p250
      %p252 = scmp.ne.s32.totalorder %s244, %s246
      %p253 = scmp.eq.s32.totalorder %s35, 1
      %p254 = por %p252, %p253
      %p255 = scmp.ne.s32.totalorder %s246, %s247
      %p256 = scmp.eq.s32.totalorder %s35, 0
      %p257 = por %p255, %p256
      %p258 = scmp.ne.s32.totalorder %s246, %s247
      %p259 = scmp.eq.s32.totalorder %s36, 1
      %p260 = por %p258, %p259
      %p262 = scmp.ne.s32.totalorder %s247, %s261
      %p263 = scmp.eq.s32.totalorder %s36, 0
      %p264 = por %p262, %p263
      %s266 = sadd.s32 %s265, 1
      %p269 = scmp.eq.s32.totalorder %s30, 1
      %p270 = scmp.ne.s32.totalorder %s265, %s267
      %p271 = scmp.eq.s32.totalorder %s30, 0
      %p272 = por %p270, %p271
      %p273 = scmp.ne.s32.totalorder %s265, %s267
      %p274 = scmp.eq.s32.totalorder %s35, 1
      %p275 = por %p273, %p274
      %p276 = scmp.ne.s32.totalorder %s267, %s268
      %p277 = scmp.eq.s32.totalorder %s35, 0
      %p278 = por %p276, %p277
      %p279 = scmp.ne.s32.totalorder %s267, %s268
      %p280 = scmp.eq.s32.totalorder %s36, 1
      %p281 = por %p279, %p280
      %p283 = scmp.ne.s32.totalorder %s268, %s282
      %p284 = scmp.eq.s32.totalorder %s36, 0
      %p285 = por %p283, %p284
      %s287 = sadd.s32 %s286, 1
      %p290 = scmp.eq.s32.totalorder %s30, 1
      %p291 = scmp.ne.s32.totalorder %s286, %s288
      %p292 = scmp.eq.s32.totalorder %s30, 0
      %p293 = por %p291, %p292
      %p294 = scmp.ne.s32.totalorder %s286, %s288
      %p295 = scmp.eq.s32.totalorder %s35, 1
      %p296 = por %p294, %p295
      %p297 = scmp.ne.s32.totalorder %s288, %s289
      %p298 = scmp.eq.s32.totalorder %s35, 0
      %p299 = por %p297, %p298
      %p300 = scmp.ne.s32.totalorder %s288, %s289
      %p301 = scmp.eq.s32.totalorder %s36, 1
      %p302 = por %p300, %p301
      %p304 = scmp.ne.s32.totalorder %s289, %s303
      %p305 = scmp.eq.s32.totalorder %s36, 0
      %p306 = por %p304, %p305
      %s308 = sadd.s32 %s307, 1
      %p311 = scmp.eq.s32.totalorder %s30, 1
      %p312 = scmp.ne.s32.totalorder %s307, %s309
      %p313 = scmp.eq.s32.totalorder %s30, 0
      %p314 = por %p312, %p313
      %p315 = scmp.ne.s32.totalorder %s307, %s309
      %p316 = scmp.eq.s32.totalorder %s35, 1
      %p317 = por %p315, %p316
      %p318 = scmp.ne.s32.totalorder %s309, %s310
      %p319 = scmp.eq.s32.totalorder %s35, 0
      %p320 = por %p318, %p319
      %p321 = scmp.ne.s32.totalorder %s309, %s310
      %p322 = scmp.eq.s32.totalorder %s36, 1
      %p323 = por %p321, %p322
      %p325 = scmp.ne.s32.totalorder %s310, %s324
      %p326 = scmp.eq.s32.totalorder %s36, 0
      %p327 = por %p325, %p326
      %s329 = sadd.s32 %s328, 1
      %p332 = scmp.eq.s32.totalorder %s30, 1
      %p333 = scmp.ne.s32.totalorder %s328, %s330
      %p334 = scmp.eq.s32.totalorder %s30, 0
      %p335 = por %p333, %p334
      %p336 = scmp.ne.s32.totalorder %s328, %s330
      %p337 = scmp.eq.s32.totalorder %s35, 1
      %p338 = por %p336, %p337
      %p339 = scmp.ne.s32.totalorder %s330, %s331
      %p340 = scmp.eq.s32.totalorder %s35, 0
      %p341 = por %p339, %p340
      %p342 = scmp.ne.s32.totalorder %s330, %s331
      %p343 = scmp.eq.s32.totalorder %s36, 1
      %p344 = por %p342, %p343
      %p346 = scmp.ne.s32.totalorder %s331, %s345
      %p347 = scmp.eq.s32.totalorder %s36, 0
      %p348 = por %p346, %p347
      %s349 = ssub.s32 %s37, %s49
      %s350 = ssub.s32 %s38, %s45
      %s351 = sor.u32 %s349, %s350
      %p352 = scmp.eq.s32.totalorder %s351, 0
      %s354 = sadd.s32 %s353, 1
      %s355 = scalar_select %p352, %s353, %s354
      %p358 = pneg %p352
      %p359 = scmp.eq.s32.totalorder %s30, 1
      %p360 = por %p358, %p359
      %p361 = scmp.ne.s32.totalorder %s353, %s356
      %p362 = scmp.eq.s32.totalorder %s30, 0
      %p363 = por %p361, %p362
      %p364 = scmp.ne.s32.totalorder %s353, %s356
      %p365 = scmp.eq.s32.totalorder %s35, 1
      %p366 = por %p364, %p365
      %p367 = scmp.ne.s32.totalorder %s356, %s357
      %p368 = scmp.eq.s32.totalorder %s35, 0
      %p369 = por %p367, %p368
      %p370 = scmp.ne.s32.totalorder %s356, %s357
      %p371 = scmp.eq.s32.totalorder %s36, 1
      %p372 = por %p370, %p371
      %p374 = scmp.ne.s32.totalorder %s357, %s373
      %p375 = scmp.eq.s32.totalorder %s36, 0
      %p376 = por %p374, %p375
      %p377 = scmp.le.s32.totalorder 1, %s30
      %p378 = scmp.lt.s32.totalorder %s30, 3
      %p379 = pnand %p377, %p378
      %p380 = pneg %p379
      // Predicated region
      $region9: #{tpu_custom_call.1} parent=5 // pred_check
        _
      $region10: #{tpu_custom_call.1} parent=5 // pred_check_branch
        %382 = sbr.rel (%p379) target = $region12
      $region11: #{tpu_custom_call.1} parent=5 // pred_region
        %s383 = ssub.s32 %s30, 1
        // Predicated region
        $region13: #{tpu_custom_call.1} parent=11 // pred_check
          %p384 = pneg %p89
        $region14: #{tpu_custom_call.1} parent=11 // pred_check_branch
          %386 = sbr.rel (%p384) target = $region16
        $region15: #{tpu_custom_call.1} parent=11 // pred_region
          _
        $region16: #{tpu_custom_call.1} parent=11 // pred_fallthru
          _
        // Predicated region
        $region17: #{tpu_custom_call.1} parent=11 // pred_check
          %p387 = pneg %p110
        $region18: #{tpu_custom_call.1} parent=11 // pred_check_branch
          %389 = sbr.rel (%p387) target = $region20
        $region19: #{tpu_custom_call.1} parent=11 // pred_region
          %s391 = ssub.s32 32, 32
          %392 = vsyncadd [#allocation10], %s391
          %s394 = sshll.u32 [#allocation9], 4
          %s395 = int_to_ptr.vmem [resolvable:$true] %s394
          %397 = dma.hbm_to_vmem [thread:$0]  %s2, 32, %s395, [#allocation10]
        $region20: #{tpu_custom_call.1} parent=11 // pred_fallthru
          _
        // Predicated region
        $region21: #{tpu_custom_call.1} parent=11 // pred_check
          %p398 = pneg %p131
        $region22: #{tpu_custom_call.1} parent=11 // pred_check_branch
          %400 = sbr.rel (%p398) target = $region24
        $region23: #{tpu_custom_call.1} parent=11 // pred_region
          %s402 = ssub.s32 4096, 4096
          %403 = vsyncadd [#allocation10], %s402
          %s404 = sshll.u32 [#allocation11], 4
          %s405 = int_to_ptr.vmem [resolvable:$true] %s404
          %410 = dma.hbm_to_vmem [thread:$0]  %s3, 4096, %s405, [#allocation10], 64, 64, 4
        $region24: #{tpu_custom_call.1} parent=11 // pred_fallthru
          _
        // Predicated region
        $region25: #{tpu_custom_call.1} parent=11 // pred_check
          %p411 = pneg %p152
        $region26: #{tpu_custom_call.1} parent=11 // pred_check_branch
          %413 = sbr.rel (%p411) target = $region28
        $region27: #{tpu_custom_call.1} parent=11 // pred_region
          %s415 = ssub.s32 4096, 4096
          %416 = vsyncadd [#allocation13], %s415
          %s417 = sshll.u32 [#allocation12], 4
          %s418 = int_to_ptr.vmem [resolvable:$true] %s417
          %423 = dma.hbm_to_vmem [thread:$0]  %s4, 4096, %s418, [#allocation13], 64, 64, 4
        $region28: #{tpu_custom_call.1} parent=11 // pred_fallthru
          _
        // Predicated region
        $region29: #{tpu_custom_call.1} parent=11 // pred_check
          %p424 = pneg %p173
        $region30: #{tpu_custom_call.1} parent=11 // pred_check_branch
          %426 = sbr.rel (%p424) target = $region32
        $region31: #{tpu_custom_call.1} parent=11 // pred_region
          %s428 = ssub.s32 4096, 4096
          %429 = vsyncadd [#allocation13], %s428
          %s430 = sshll.u32 [#allocation14], 4
          %s431 = int_to_ptr.vmem [resolvable:$true] %s430
          %436 = dma.hbm_to_vmem [thread:$0]  %s5, 4096, %s431, [#allocation13], 64, 64, 4
        $region32: #{tpu_custom_call.1} parent=11 // pred_fallthru
          _
        // Predicated region
        $region33: #{tpu_custom_call.1} parent=11 // pred_check
          %p437 = pneg %p194
        $region34: #{tpu_custom_call.1} parent=11 // pred_check_branch
          %439 = sbr.rel (%p437) target = $region36
        $region35: #{tpu_custom_call.1} parent=11 // pred_region
          %s441 = ssub.s32 4096, 4096
          %442 = vsyncadd [#allocation16], %s441
          %s443 = sshll.u32 [#allocation15], 4
          %s444 = int_to_ptr.vmem [resolvable:$true] %s443
          %449 = dma.hbm_to_vmem [thread:$0]  %s6, 4096, %s444, [#allocation16], 128, 128, 8
        $region36: #{tpu_custom_call.1} parent=11 // pred_fallthru
          _
        // Predicated region
        $region37: #{tpu_custom_call.1} parent=11 // pred_check
          %p450 = pneg %p215
        $region38: #{tpu_custom_call.1} parent=11 // pred_check_branch
          %452 = sbr.rel (%p450) target = $region40
        $region39: #{tpu_custom_call.1} parent=11 // pred_region
          _
        $region40: #{tpu_custom_call.1} parent=11 // pred_fallthru
          _
        // Predicated region
        $region41: #{tpu_custom_call.1} parent=11 // pred_check
          %p453 = pneg %p236
        $region42: #{tpu_custom_call.1} parent=11 // pred_check_branch
          %455 = sbr.rel (%p453) target = $region44
        $region43: #{tpu_custom_call.1} parent=11 // pred_region
          _
        $region44: #{tpu_custom_call.1} parent=11 // pred_fallthru
          _
        // Predicated region
        $region45: #{tpu_custom_call.1} parent=11 // pred_check
          %p456 = pneg %p257
        $region46: #{tpu_custom_call.1} parent=11 // pred_check_branch
          %458 = sbr.rel (%p456) target = $region48
        $region47: #{tpu_custom_call.1} parent=11 // pred_region
          _
        $region48: #{tpu_custom_call.1} parent=11 // pred_fallthru
          _
        // Predicated region
        $region49: #{tpu_custom_call.1} parent=11 // pred_check
          %p459 = pneg %p278
        $region50: #{tpu_custom_call.1} parent=11 // pred_check_branch
          %461 = sbr.rel (%p459) target = $region52
        $region51: #{tpu_custom_call.1} parent=11 // pred_region
          %s463 = ssub.s32 8192, 8192
          %464 = vsyncadd [#allocation16], %s463
          %s465 = sshll.u32 [#allocation17], 4
          %s466 = int_to_ptr.vmem [resolvable:$true] %s465
          %471 = dma.hbm_to_vmem [thread:$0]  %s10, 8192, %s466, [#allocation16], 256, 256, 16
        $region52: #{tpu_custom_call.1} parent=11 // pred_fallthru
          _
        // Predicated region
        $region53: #{tpu_custom_call.1} parent=11 // pred_check
          %p472 = pneg %p299
        $region54: #{tpu_custom_call.1} parent=11 // pred_check_branch
          %474 = sbr.rel (%p472) target = $region56
        $region55: #{tpu_custom_call.1} parent=11 // pred_region
          _
        $region56: #{tpu_custom_call.1} parent=11 // pred_fallthru
          _
        // Predicated region
        $region57: #{tpu_custom_call.1} parent=11 // pred_check
          %p475 = pneg %p320
        $region58: #{tpu_custom_call.1} parent=11 // pred_check_branch
          %477 = sbr.rel (%p475) target = $region60
        $region59: #{tpu_custom_call.1} parent=11 // pred_region
          %s479 = ssub.s32 8192, 8192
          %480 = vsyncadd [#allocation19], %s479
          %s481 = sshll.u32 [#allocation18], 4
          %s482 = int_to_ptr.vmem [resolvable:$true] %s481
          %487 = dma.hbm_to_vmem [thread:$0]  %s12, 8192, %s482, [#allocation19], 128, 128, 8
        $region60: #{tpu_custom_call.1} parent=11 // pred_fallthru
          _
        // Predicated region
        $region61: #{tpu_custom_call.1} parent=11 // pred_check
          %p488 = pneg %p341
        $region62: #{tpu_custom_call.1} parent=11 // pred_check_branch
          %490 = sbr.rel (%p488) target = $region64
        $region63: #{tpu_custom_call.1} parent=11 // pred_region
          _
        $region64: #{tpu_custom_call.1} parent=11 // pred_fallthru
          _
      $region12: #{tpu_custom_call.1} parent=5 // pred_fallthru
        _
      %p491 = scmp.lt.s32.totalorder %s30, 2
      // Predicated region
      $region65: #{tpu_custom_call.1} parent=5 // pred_check
        %p492 = pneg %p491
      $region66: #{tpu_custom_call.1} parent=5 // pred_check_branch
        %494 = sbr.rel (%p492) target = $region68
      $region67: #{tpu_custom_call.1} parent=5 // pred_region
        // Predicated region
        $region69: #{tpu_custom_call.1} parent=67 // pred_check
          %p495 = pneg %p62
        $region70: #{tpu_custom_call.1} parent=67 // pred_check_branch
          %497 = sbr.rel (%p495) target = $region72
        $region71: #{tpu_custom_call.1} parent=67 // pred_region
          %s498 = sand.u32 %s52, 1
          %s499 = scalar_lea.sflag [#allocation7], %s498
          %s500 = sand.u32 %s52, 1
          %s501 = smul.addr %s500, 128
          %s502 = scalar_lea.vmem [#allocation6], %s501
          %s504 = ssub.s32 2048, 2048
          %505 = vsyncadd %s499, %s504
          %s506 = smul.addr %s37, 16
          %s507 = smul.addr %s506, 128
          %s508 = scalar_lea.hbm %s0, %s507
          %s509 = sshll.u32 %s502, 4
          %s510 = int_to_ptr.vmem [resolvable:$true] %s509
          %515 = dma.hbm_to_vmem [thread:$0]  %s508, 2048, %s510, %s499, 256, 256, 16
        $region72: #{tpu_custom_call.1} parent=67 // pred_fallthru
          _
      $region68: #{tpu_custom_call.1} parent=5 // pred_fallthru
        _
      %p516 = scmp.le.s32.totalorder 1, %s30
      %p517 = scmp.lt.s32.totalorder %s30, 3
      %p518 = pnand %p516, %p517
      %p519 = pneg %p518
      // Predicated region
      $region73: #{tpu_custom_call.1} parent=5 // pred_check
        _
      $region74: #{tpu_custom_call.1} parent=5 // pred_check_branch
        %521 = sbr.rel (%p518) target = $region76
      $region75: #{tpu_custom_call.1} parent=5 // pred_region
        %s522 = ssub.s32 %s30, 1
        %s523 = sand.u32 %s55, 1
        %s524 = scalar_lea.sflag [#allocation7], %s523
        %s525 = sand.u32 %s55, 1
        %s526 = smul.addr %s525, 128
        %s527 = scalar_lea.vmem [#allocation6], %s526
        // Predicated region
        $region77: #{tpu_custom_call.1} parent=75 // pred_check
          %p528 = pneg %p68
        $region78: #{tpu_custom_call.1} parent=75 // pred_check_branch
          %530 = sbr.rel (%p528) target = $region80
        $region79: #{tpu_custom_call.1} parent=75 // pred_region
          %531 = dma.done %s524, 2048
        $region80: #{tpu_custom_call.1} parent=75 // pred_fallthru
          _
        // Predicated region
        $region81: #{tpu_custom_call.1} parent=75 // pred_check
          %p532 = pneg %p110
        $region82: #{tpu_custom_call.1} parent=75 // pred_check_branch
          %534 = sbr.rel (%p532) target = $region84
        $region83: #{tpu_custom_call.1} parent=75 // pred_region
          %535 = dma.done [#allocation10], 32
        $region84: #{tpu_custom_call.1} parent=75 // pred_fallthru
          _
        // Predicated region
        $region85: #{tpu_custom_call.1} parent=75 // pred_check
          %p536 = pneg %p131
        $region86: #{tpu_custom_call.1} parent=75 // pred_check_branch
          %538 = sbr.rel (%p536) target = $region88
        $region87: #{tpu_custom_call.1} parent=75 // pred_region
          %539 = dma.done [#allocation10], 4096
        $region88: #{tpu_custom_call.1} parent=75 // pred_fallthru
          _
        // Predicated region
        $region89: #{tpu_custom_call.1} parent=75 // pred_check
          %p540 = pneg %p152
        $region90: #{tpu_custom_call.1} parent=75 // pred_check_branch
          %542 = sbr.rel (%p540) target = $region92
        $region91: #{tpu_custom_call.1} parent=75 // pred_region
          %543 = dma.done [#allocation13], 4096
        $region92: #{tpu_custom_call.1} parent=75 // pred_fallthru
          _
        // Predicated region
        $region93: #{tpu_custom_call.1} parent=75 // pred_check
          %p544 = pneg %p173
        $region94: #{tpu_custom_call.1} parent=75 // pred_check_branch
          %546 = sbr.rel (%p544) target = $region96
        $region95: #{tpu_custom_call.1} parent=75 // pred_region
          %547 = dma.done [#allocation13], 4096
        $region96: #{tpu_custom_call.1} parent=75 // pred_fallthru
          _
        // Predicated region
        $region97: #{tpu_custom_call.1} parent=75 // pred_check
          %p548 = pneg %p194
        $region98: #{tpu_custom_call.1} parent=75 // pred_check_branch
          %550 = sbr.rel (%p548) target = $region100
        $region99: #{tpu_custom_call.1} parent=75 // pred_region
          %551 = dma.done [#allocation16], 4096
        $region100: #{tpu_custom_call.1} parent=75 // pred_fallthru
          _
        // Predicated region
        $region101: #{tpu_custom_call.1} parent=75 // pred_check
          %p552 = pneg %p278
        $region102: #{tpu_custom_call.1} parent=75 // pred_check_branch
          %554 = sbr.rel (%p552) target = $region104
        $region103: #{tpu_custom_call.1} parent=75 // pred_region
          %555 = dma.done [#allocation16], 8192
        $region104: #{tpu_custom_call.1} parent=75 // pred_fallthru
          _
        // Predicated region
        $region105: #{tpu_custom_call.1} parent=75 // pred_check
          %p556 = pneg %p320
        $region106: #{tpu_custom_call.1} parent=75 // pred_check_branch
          %558 = sbr.rel (%p556) target = $region108
        $region107: #{tpu_custom_call.1} parent=75 // pred_region
          %559 = dma.done [#allocation19], 8192
        $region108: #{tpu_custom_call.1} parent=75 // pred_fallthru
          _
        %s560 = sand.u32 %s55, 1
        %s561 = scalar_lea.sflag [#allocation7], %s560
        %s562 = sand.u32 %s55, 1
        %s563 = smul.addr %s562, 128
        %s564 = scalar_lea.vmem [#allocation6], %s563
        %p565 = pneg %p68
        %p566 = pneg %p65
        %p567 = pneg %p89
        %p568 = pneg %p86
        %p569 = pneg %p110
        %p570 = pneg %p107
        %p571 = pneg %p131
        %p572 = pneg %p128
        %p573 = pneg %p152
        %p574 = pneg %p149
        %p575 = pneg %p173
        %p576 = pneg %p170
        %p577 = pneg %p194
        %p578 = pneg %p191
        %p579 = pneg %p215
        %p580 = pneg %p212
        %p581 = pneg %p236
        %p582 = pneg %p233
        %p583 = pneg %p257
        %p584 = pneg %p254
        %p585 = pneg %p278
        %p586 = pneg %p275
        %p587 = pneg %p299
        %p588 = pneg %p296
        %p589 = pneg %p320
        %p590 = pneg %p317
        %p591 = pneg %p341
        %p592 = pneg %p338
        %p593 = pneg %p369
        %p594 = pneg %p366
        %s595 = sand.u32 %s356, 1
        %s596 = scalar_lea.sflag [#allocation8], %s595
        %s597 = sand.u32 %s356, 1
        %s598 = smul.addr %s597, 128
        %s599 = scalar_lea.vmem [#allocation20], %s598
        %s600 = smul.u32 8, %s40
        %p602 = scmp.eq.s32.totalorder %s40, 0
        // Predicated region
        $region109: #{tpu_custom_call.1} parent=75 // pred_check
          %p603 = pneg %p602
        $region110: #{tpu_custom_call.1} parent=75 // pred_check_branch
          %605 = sbr.rel (%p603) target = $region112
        $region111: #{tpu_custom_call.1} parent=75 // pred_region
          %v606 = vld [vmem:[%s527] sm:$0xff]
          %v607 = vld [vmem:[%s527 + $0x8] sm:$0xff]
          %v608 = vld [vmem:[%s527 + $0x10] sm:$0xff]
          %v609 = vld [vmem:[%s527 + $0x18] sm:$0xff]
          %v610 = vld [vmem:[%s527 + $0x20] sm:$0xff]
          %v611 = vld [vmem:[%s527 + $0x28] sm:$0xff]
          %v612 = vld [vmem:[%s527 + $0x30] sm:$0xff]
          %v613 = vld [vmem:[%s527 + $0x38] sm:$0xff]
          %v614 = vld [vmem:[%s527 + $0x40] sm:$0xff]
          %v615 = vld [vmem:[%s527 + $0x48] sm:$0xff]
          %v616 = vld [vmem:[%s527 + $0x50] sm:$0xff]
          %v617 = vld [vmem:[%s527 + $0x58] sm:$0xff]
          %v618 = vld [vmem:[%s527 + $0x60] sm:$0xff]
          %v619 = vld [vmem:[%s527 + $0x68] sm:$0xff]
          %v620 = vld [vmem:[%s527 + $0x70] sm:$0xff]
          %v621 = vld [vmem:[%s527 + $0x78] sm:$0xff]
          %v622 = vld [vmem:[%s1] sm:$0x3]
          %v623 = vld [vmem:[#allocation9] sm:$0x3]
          %v624 = vadd.f32 %v606, %v607
          %625 = vadd.xlane.f32.xlu0 %v624
          %v626 = vpop.xlane.xlu0 %625
          %v627 = vadd.f32 %v608, %v609
          %628 = vadd.xlane.f32.xlu0 %v627
          %v629 = vpop.xlane.xlu0 %628
          %v630 = vadd.f32 %v610, %v611
          %631 = vadd.xlane.f32.xlu0 %v630
          %v632 = vpop.xlane.xlu0 %631
          %v633 = vadd.f32 %v612, %v613
          %634 = vadd.xlane.f32.xlu0 %v633
          %v635 = vpop.xlane.xlu0 %634
          %v636 = vadd.f32 %v614, %v615
          %637 = vadd.xlane.f32.xlu0 %v636
          %v638 = vpop.xlane.xlu0 %637
          %v639 = vadd.f32 %v616, %v617
          %640 = vadd.xlane.f32.xlu0 %v639
          %v641 = vpop.xlane.xlu0 %640
          %v642 = vadd.f32 %v618, %v619
          %643 = vadd.xlane.f32.xlu0 %v642
          %v644 = vpop.xlane.xlu0 %643
          %v645 = vadd.f32 %v620, %v621
          %646 = vadd.xlane.f32.xlu0 %v645
          %v647 = vpop.xlane.xlu0 %646
          %v648 = vrcp.pop 256.0
          %v649 = vmul.f32 %v626, %v648
          %v650 = vmul.f32 %v629, %v648
          %v651 = vmul.f32 %v632, %v648
          %v652 = vmul.f32 %v635, %v648
          %v653 = vmul.f32 %v638, %v648
          %v654 = vmul.f32 %v641, %v648
          %v655 = vmul.f32 %v644, %v648
          %v656 = vmul.f32 %v647, %v648
          %v657 = vsub.f32 %v606, %v649
          %v658 = vsub.f32 %v607, %v649
          %v659 = vsub.f32 %v608, %v650
          %v660 = vsub.f32 %v609, %v650
          %v661 = vsub.f32 %v610, %v651
          %v662 = vsub.f32 %v611, %v651
          %v663 = vsub.f32 %v612, %v652
          %v664 = vsub.f32 %v613, %v652
          %v665 = vsub.f32 %v614, %v653
          %v666 = vsub.f32 %v615, %v653
          %v667 = vsub.f32 %v616, %v654
          %v668 = vsub.f32 %v617, %v654
          %v669 = vsub.f32 %v618, %v655
          %v670 = vsub.f32 %v619, %v655
          %v671 = vsub.f32 %v620, %v656
          %v672 = vsub.f32 %v621, %v656
          %v673 = vmul.f32 %v657, %v657
          %v674 = vmul.f32 %v658, %v658
          %v675 = vmul.f32 %v659, %v659
          %v676 = vmul.f32 %v660, %v660
          %v677 = vmul.f32 %v661, %v661
          %v678 = vmul.f32 %v662, %v662
          %v679 = vmul.f32 %v663, %v663
          %v680 = vmul.f32 %v664, %v664
          %v681 = vmul.f32 %v665, %v665
          %v682 = vmul.f32 %v666, %v666
          %v683 = vmul.f32 %v667, %v667
          %v684 = vmul.f32 %v668, %v668
          %v685 = vmul.f32 %v669, %v669
          %v686 = vmul.f32 %v670, %v670
          %v687 = vmul.f32 %v671, %v671
          %v688 = vmul.f32 %v672, %v672
          %v689 = vadd.f32 %v673, %v674
          %690 = vadd.xlane.f32.xlu0 %v689
          %v691 = vpop.xlane.xlu0 %690
          %v692 = vadd.f32 %v675, %v676
          %693 = vadd.xlane.f32.xlu0 %v692
          %v694 = vpop.xlane.xlu0 %693
          %v695 = vadd.f32 %v677, %v678
          %696 = vadd.xlane.f32.xlu0 %v695
          %v697 = vpop.xlane.xlu0 %696
          %v698 = vadd.f32 %v679, %v680
          %699 = vadd.xlane.f32.xlu0 %v698
          %v700 = vpop.xlane.xlu0 %699
          %v701 = vadd.f32 %v681, %v682
          %702 = vadd.xlane.f32.xlu0 %v701
          %v703 = vpop.xlane.xlu0 %702
          %v704 = vadd.f32 %v683, %v684
          %705 = vadd.xlane.f32.xlu0 %v704
          %v706 = vpop.xlane.xlu0 %705
          %v707 = vadd.f32 %v685, %v686
          %708 = vadd.xlane.f32.xlu0 %v707
          %v709 = vpop.xlane.xlu0 %708
          %v710 = vadd.f32 %v687, %v688
          %711 = vadd.xlane.f32.xlu0 %v710
          %v712 = vpop.xlane.xlu0 %711
          %v713 = vmul.f32 %v691, %v648
          %v714 = vmul.f32 %v694, %v648
          %v715 = vmul.f32 %v697, %v648
          %v716 = vmul.f32 %v700, %v648
          %v717 = vmul.f32 %v703, %v648
          %v718 = vmul.f32 %v706, %v648
          %v719 = vmul.f32 %v709, %v648
          %v720 = vmul.f32 %v712, %v648
          %v721 = vadd.f32 %v713, 1e-05
          %v722 = vadd.f32 %v714, 1e-05
          %v723 = vadd.f32 %v715, 1e-05
          %v724 = vadd.f32 %v716, 1e-05
          %v725 = vadd.f32 %v717, 1e-05
          %v726 = vadd.f32 %v718, 1e-05
          %v727 = vadd.f32 %v719, 1e-05
          %v728 = vadd.f32 %v720, 1e-05
          %v729 = vrsqrt.pop %v721
          %v730 = vrsqrt.pop %v722
          %v731 = vrsqrt.pop %v723
          %v732 = vrsqrt.pop %v724
          %v733 = vrsqrt.pop %v725
          %v734 = vrsqrt.pop %v726
          %v735 = vrsqrt.pop %v727
          %v736 = vrsqrt.pop %v728
          %v737 = vmul.f32 %v657, %v729
          %v738 = vmul.f32 %v658, %v729
          %v739 = vmul.f32 %v659, %v730
          %v740 = vmul.f32 %v660, %v730
          %v741 = vmul.f32 %v661, %v731
          %v742 = vmul.f32 %v662, %v731
          %v743 = vmul.f32 %v663, %v732
          %v744 = vmul.f32 %v664, %v732
          %v745 = vmul.f32 %v665, %v733
          %v746 = vmul.f32 %v666, %v733
          %v747 = vmul.f32 %v667, %v734
          %v748 = vmul.f32 %v668, %v734
          %v749 = vmul.f32 %v669, %v735
          %v750 = vmul.f32 %v670, %v735
          %v751 = vmul.f32 %v671, %v736
          %v752 = vmul.f32 %v672, %v736
          %v754 = vlaneseq
          %v755 = vshrl.u32 %v754, 7
          %v756 = vsub.s32 0, %v755
          %v757 = vrot.slane %v622, %v756
          %v758 = vlaneseq
          %v759 = vshrl.u32 %v758, 7
          %v760 = vsub.s32 1, %v759
          %v761 = vrot.slane %v622, %v760
          %v764 = vmul.f32 %v737, %v757
          %v765 = vmul.f32 %v738, %v761
          %v766 = vmul.f32 %v739, %v757
          %v767 = vmul.f32 %v740, %v761
          %v768 = vmul.f32 %v741, %v757
          %v769 = vmul.f32 %v742, %v761
          %v770 = vmul.f32 %v743, %v757
          %v771 = vmul.f32 %v744, %v761
          %v772 = vmul.f32 %v745, %v757
          %v773 = vmul.f32 %v746, %v761
          %v774 = vmul.f32 %v747, %v757
          %v775 = vmul.f32 %v748, %v761
          %v776 = vmul.f32 %v749, %v757
          %v777 = vmul.f32 %v750, %v761
          %v778 = vmul.f32 %v751, %v757
          %v779 = vmul.f32 %v752, %v761
          %v781 = vlaneseq
          %v782 = vshrl.u32 %v781, 7
          %v783 = vsub.s32 0, %v782
          %v784 = vrot.slane %v623, %v783
          %v785 = vlaneseq
          %v786 = vshrl.u32 %v785, 7
          %v787 = vsub.s32 1, %v786
          %v788 = vrot.slane %v623, %v787
          %v791 = vadd.f32 %v764, %v784
          %v792 = vadd.f32 %v765, %v788
          %v793 = vadd.f32 %v766, %v784
          %v794 = vadd.f32 %v767, %v788
          %v795 = vadd.f32 %v768, %v784
          %v796 = vadd.f32 %v769, %v788
          %v797 = vadd.f32 %v770, %v784
          %v798 = vadd.f32 %v771, %v788
          %v799 = vadd.f32 %v772, %v784
          %v800 = vadd.f32 %v773, %v788
          %v801 = vadd.f32 %v774, %v784
          %v802 = vadd.f32 %v775, %v788
          %v803 = vadd.f32 %v776, %v784
          %v804 = vadd.f32 %v777, %v788
          %v805 = vadd.f32 %v778, %v784
          %v806 = vadd.f32 %v779, %v788
          %v807 = vpack.c.bf16 %v793, %v791
          %v808 = vpack.c.bf16 %v794, %v792
          %v809 = vpack.c.bf16 %v797, %v795
          %v810 = vpack.c.bf16 %v798, %v796
          %v811 = vpack.c.bf16 %v801, %v799
          %v812 = vpack.c.bf16 %v802, %v800
          %v813 = vpack.c.bf16 %v805, %v803
          %v814 = vpack.c.bf16 %v806, %v804
          %v815 = vld [vmem:[#allocation11] sm:$0xf]
          %v816 = vld [vmem:[#allocation11 + $0x4] sm:$0xf]
          %v817 = vld [vmem:[#allocation11 + $0x8] sm:$0xf]
          %v818 = vld [vmem:[#allocation11 + $0xc] sm:$0xf]
          %v819 = vld [vmem:[#allocation11 + $0x10] sm:$0xf]
          %v820 = vld [vmem:[#allocation11 + $0x14] sm:$0xf]
          %v821 = vld [vmem:[#allocation11 + $0x18] sm:$0xf]
          %v822 = vld [vmem:[#allocation11 + $0x1c] sm:$0xf]
          %v823 = vld [vmem:[#allocation11 + $0x20] sm:$0xf]
          %v824 = vld [vmem:[#allocation11 + $0x24] sm:$0xf]
          %v825 = vld [vmem:[#allocation11 + $0x28] sm:$0xf]
          %v826 = vld [vmem:[#allocation11 + $0x2c] sm:$0xf]
          %v827 = vld [vmem:[#allocation11 + $0x30] sm:$0xf]
          %v828 = vld [vmem:[#allocation11 + $0x34] sm:$0xf]
          %v829 = vld [vmem:[#allocation11 + $0x38] sm:$0xf]
          %v830 = vld [vmem:[#allocation11 + $0x3c] sm:$0xf]
          %v831 = vld [vmem:[#allocation11 + $0x40] sm:$0xf]
          %v832 = vld [vmem:[#allocation11 + $0x44] sm:$0xf]
          %v833 = vld [vmem:[#allocation11 + $0x48] sm:$0xf]
          %v834 = vld [vmem:[#allocation11 + $0x4c] sm:$0xf]
          %v835 = vld [vmem:[#allocation11 + $0x50] sm:$0xf]
          %v836 = vld [vmem:[#allocation11 + $0x54] sm:$0xf]
          %v837 = vld [vmem:[#allocation11 + $0x58] sm:$0xf]
          %v838 = vld [vmem:[#allocation11 + $0x5c] sm:$0xf]
          %v839 = vld [vmem:[#allocation11 + $0x60] sm:$0xf]
          %v840 = vld [vmem:[#allocation11 + $0x64] sm:$0xf]
          %v841 = vld [vmem:[#allocation11 + $0x68] sm:$0xf]
          %v842 = vld [vmem:[#allocation11 + $0x6c] sm:$0xf]
          %v843 = vld [vmem:[#allocation11 + $0x70] sm:$0xf]
          %v844 = vld [vmem:[#allocation11 + $0x74] sm:$0xf]
          %v845 = vld [vmem:[#allocation11 + $0x78] sm:$0xf]
          %v846 = vld [vmem:[#allocation11 + $0x7c] sm:$0xf]
          %v879 = vunpack.c.l.b16 %v815
          %v880 = vunpack.c.l.b16 %v816
          %v881 = vunpack.c.l.b16 %v817
          %v882 = vunpack.c.l.b16 %v818
          %v883 = vunpack.c.l.b16 %v819
          %v884 = vunpack.c.l.b16 %v820
          %v885 = vunpack.c.l.b16 %v821
          %v886 = vunpack.c.l.b16 %v822
          %v887 = vunpack.c.l.b16 %v823
          %v888 = vunpack.c.l.b16 %v824
          %v889 = vunpack.c.l.b16 %v825
          %v890 = vunpack.c.l.b16 %v826
          %v891 = vunpack.c.l.b16 %v827
          %v892 = vunpack.c.l.b16 %v828
          %v893 = vunpack.c.l.b16 %v829
          %v894 = vunpack.c.l.b16 %v830
          %v895 = vunpack.c.l.b16 %v831
          %v896 = vunpack.c.l.b16 %v832
          %v897 = vunpack.c.l.b16 %v833
          %v898 = vunpack.c.l.b16 %v834
          %v899 = vunpack.c.l.b16 %v835
          %v900 = vunpack.c.l.b16 %v836
          %v901 = vunpack.c.l.b16 %v837
          %v902 = vunpack.c.l.b16 %v838
          %v903 = vunpack.c.l.b16 %v839
          %v904 = vunpack.c.l.b16 %v840
          %v905 = vunpack.c.l.b16 %v841
          %v906 = vunpack.c.l.b16 %v842
          %v907 = vunpack.c.l.b16 %v843
          %v908 = vunpack.c.l.b16 %v844
          %v909 = vunpack.c.l.b16 %v845
          %v910 = vunpack.c.l.b16 %v846
          %v911 = vpack.c.b16 %v880, %v879
          %v912 = vpack.c.b16 %v882, %v881
          %v913 = vpack.c.b16 %v884, %v883
          %v914 = vpack.c.b16 %v886, %v885
          %v915 = vpack.c.b16 %v888, %v887
          %v916 = vpack.c.b16 %v890, %v889
          %v917 = vpack.c.b16 %v892, %v891
          %v918 = vpack.c.b16 %v894, %v893
          %v919 = vpack.c.b16 %v896, %v895
          %v920 = vpack.c.b16 %v898, %v897
          %v921 = vpack.c.b16 %v900, %v899
          %v922 = vpack.c.b16 %v902, %v901
          %v923 = vpack.c.b16 %v904, %v903
          %v924 = vpack.c.b16 %v906, %v905
          %v925 = vpack.c.b16 %v908, %v907
          %v926 = vpack.c.b16 %v910, %v909
          %943 = vmatprep.subr.bf16.mxu0 0
          %944 = vmatpush1.bf16.msra.mxu0 %v911
          %945 = vmatprep.subr.bf16.mxu0 0
          %946 = vmatpush1.bf16.msra.mxu0 %v912
          %947 = vmatprep.subr.bf16.mxu0 0
          %948 = vmatpush1.bf16.msra.mxu0 %v913
          %949 = vmatprep.subr.bf16.mxu0 0
          %950 = vmatpush1.bf16.msra.mxu0 %v914
          %951 = vmatprep.subr.bf16.mxu0 0
          %952 = vmatpush1.bf16.msra.mxu0 %v915
          %953 = vmatprep.subr.bf16.mxu0 0
          %954 = vmatpush1.bf16.msra.mxu0 %v916
          %955 = vmatprep.subr.bf16.mxu0 0
          %956 = vmatpush1.bf16.msra.mxu0 %v917
          %957 = vmatprep.subr.bf16.mxu0 0
          %958 = vmatpush1.bf16.msra.mxu0 %v918
          %959 = vmatprep.subr.bf16.mxu0 0
          %960 = vmatpush1.bf16.msra.mxu0 %v919
          %961 = vmatprep.subr.bf16.mxu0 0
          %962 = vmatpush1.bf16.msra.mxu0 %v920
          %963 = vmatprep.subr.bf16.mxu0 0
          %964 = vmatpush1.bf16.msra.mxu0 %v921
          %965 = vmatprep.subr.bf16.mxu0 0
          %966 = vmatpush1.bf16.msra.mxu0 %v922
          %967 = vmatprep.subr.bf16.mxu0 0
          %968 = vmatpush1.bf16.msra.mxu0 %v923
          %969 = vmatprep.subr.bf16.mxu0 0
          %970 = vmatpush1.bf16.msra.mxu0 %v924
          %971 = vmatprep.subr.bf16.mxu0 0
          %972 = vmatpush1.bf16.msra.mxu0 %v925
          %973 = vmatprep.subr.bf16.mxu0 0
          %974 = vmatpush1.bf16.msra.mxu0 %v926
          %975 = vmatprep.mubr.bf16.mxu0 %v808
          %976 = vmatmul.mubr.bf16.gmra.mrb[0].mxu0 %v807
          %v977 = vpop.f32.mrb[0].mxu0
          %v978 = vadd.f32 0.0, %v977
          %v979 = vpop.f32.mrb[0].mxu0
          %v980 = vpop.f32.mrb[0].mxu0
          %v981 = vadd.f32 0.0, %v980
          %v982 = vpop.f32.mrb[0].mxu0
          %983 = vmatprep.mubr.bf16.mxu0 %v810
          %984 = vmatmul.mubr.bf16.gmra.mrb[0].mxu0 %v809
          %v985 = vpop.f32.mrb[0].mxu0
          %v986 = vadd.f32 0.0, %v985
          %v987 = vpop.f32.mrb[0].mxu0
          %v988 = vpop.f32.mrb[0].mxu0
          %v989 = vadd.f32 0.0, %v988
          %v990 = vpop.f32.mrb[0].mxu0
          %991 = vmatprep.mubr.bf16.mxu0 %v812
          %992 = vmatmul.mubr.bf16.gmra.mrb[0].mxu0 %v811
          %v993 = vpop.f32.mrb[0].mxu0
          %v994 = vadd.f32 0.0, %v993
          %v995 = vpop.f32.mrb[0].mxu0
          %v996 = vpop.f32.mrb[0].mxu0
          %v997 = vadd.f32 0.0, %v996
          %v998 = vpop.f32.mrb[0].mxu0
          %999 = vmatprep.mubr.bf16.mxu0 %v814
          %1000 = vmatmul.mubr.bf16.gmra.mrb[0].mxu0 %v813
          %v1001 = vpop.f32.mrb[0].mxu0
          %v1002 = vadd.f32 0.0, %v1001
          %v1003 = vpop.f32.mrb[0].mxu0
          %v1004 = vpop.f32.mrb[0].mxu0
          %v1005 = vadd.f32 0.0, %v1004
          %v1006 = vpop.f32.mrb[0].mxu0
          %1007 = vdwg.mxu0
          %v1008 = vmul.f32 %v978, 0.088388346
          %v1009 = vmul.f32 %v981, 0.088388346
          %v1010 = vmul.f32 %v986, 0.088388346
          %v1011 = vmul.f32 %v989, 0.088388346
          %v1012 = vmul.f32 %v994, 0.088388346
          %v1013 = vmul.f32 %v997, 0.088388346
          %v1014 = vmul.f32 %v1002, 0.088388346
          %v1015 = vmul.f32 %v1005, 0.088388346
          %v1016 = vpack.c.bf16 %v1009, %v1008
          %v1017 = vpack.c.bf16 %v1011, %v1010
          %v1018 = vpack.c.bf16 %v1013, %v1012
          %v1019 = vpack.c.bf16 %v1015, %v1014
          %1020 = vst [vmem:[#allocation2] sm:$0xff] %v1016
          %1021 = vst [vmem:[#allocation2 + $0x8] sm:$0xff] %v1017
          %1022 = vst [vmem:[#allocation2 + $0x10] sm:$0xff] %v1018
          %1023 = vst [vmem:[#allocation2 + $0x18] sm:$0xff] %v1019
          %v1024 = vld [vmem:[#allocation12] sm:$0xf]
          %v1025 = vld [vmem:[#allocation12 + $0x4] sm:$0xf]
          %v1026 = vld [vmem:[#allocation12 + $0x8] sm:$0xf]
          %v1027 = vld [vmem:[#allocation12 + $0xc] sm:$0xf]
          %v1028 = vld [vmem:[#allocation12 + $0x10] sm:$0xf]
          %v1029 = vld [vmem:[#allocation12 + $0x14] sm:$0xf]
          %v1030 = vld [vmem:[#allocation12 + $0x18] sm:$0xf]
          %v1031 = vld [vmem:[#allocation12 + $0x1c] sm:$0xf]
          %v1032 = vld [vmem:[#allocation12 + $0x20] sm:$0xf]
          %v1033 = vld [vmem:[#allocation12 + $0x24] sm:$0xf]
          %v1034 = vld [vmem:[#allocation12 + $0x28] sm:$0xf]
          %v1035 = vld [vmem:[#allocation12 + $0x2c] sm:$0xf]
          %v1036 = vld [vmem:[#allocation12 + $0x30] sm:$0xf]
          %v1037 = vld [vmem:[#allocation12 + $0x34] sm:$0xf]
          %v1038 = vld [vmem:[#allocation12 + $0x38] sm:$0xf]
          %v1039 = vld [vmem:[#allocation12 + $0x3c] sm:$0xf]
          %v1040 = vld [vmem:[#allocation12 + $0x40] sm:$0xf]
          %v1041 = vld [vmem:[#allocation12 + $0x44] sm:$0xf]
          %v1042 = vld [vmem:[#allocation12 + $0x48] sm:$0xf]
          %v1043 = vld [vmem:[#allocation12 + $0x4c] sm:$0xf]
          %v1044 = vld [vmem:[#allocation12 + $0x50] sm:$0xf]
          %v1045 = vld [vmem:[#allocation12 + $0x54] sm:$0xf]
          %v1046 = vld [vmem:[#allocation12 + $0x58] sm:$0xf]
          %v1047 = vld [vmem:[#allocation12 + $0x5c] sm:$0xf]
          %v1048 = vld [vmem:[#allocation12 + $0x60] sm:$0xf]
          %v1049 = vld [vmem:[#allocation12 + $0x64] sm:$0xf]
          %v1050 = vld [vmem:[#allocation12 + $0x68] sm:$0xf]
          %v1051 = vld [vmem:[#allocation12 + $0x6c] sm:$0xf]
          %v1052 = vld [vmem:[#allocation12 + $0x70] sm:$0xf]
          %v1053 = vld [vmem:[#allocation12 + $0x74] sm:$0xf]
          %v1054 = vld [vmem:[#allocation12 + $0x78] sm:$0xf]
          %v1055 = vld [vmem:[#allocation12 + $0x7c] sm:$0xf]
          %v1088 = vunpack.c.l.b16 %v1024
          %v1089 = vunpack.c.l.b16 %v1025
          %v1090 = vunpack.c.l.b16 %v1026
          %v1091 = vunpack.c.l.b16 %v1027
          %v1092 = vunpack.c.l.b16 %v1028
          %v1093 = vunpack.c.l.b16 %v1029
          %v1094 = vunpack.c.l.b16 %v1030
          %v1095 = vunpack.c.l.b16 %v1031
          %v1096 = vunpack.c.l.b16 %v1032
          %v1097 = vunpack.c.l.b16 %v1033
          %v1098 = vunpack.c.l.b16 %v1034
          %v1099 = vunpack.c.l.b16 %v1035
          %v1100 = vunpack.c.l.b16 %v1036
          %v1101 = vunpack.c.l.b16 %v1037
          %v1102 = vunpack.c.l.b16 %v1038
          %v1103 = vunpack.c.l.b16 %v1039
          %v1104 = vunpack.c.l.b16 %v1040
          %v1105 = vunpack.c.l.b16 %v1041
          %v1106 = vunpack.c.l.b16 %v1042
          %v1107 = vunpack.c.l.b16 %v1043
          %v1108 = vunpack.c.l.b16 %v1044
          %v1109 = vunpack.c.l.b16 %v1045
          %v1110 = vunpack.c.l.b16 %v1046
          %v1111 = vunpack.c.l.b16 %v1047
          %v1112 = vunpack.c.l.b16 %v1048
          %v1113 = vunpack.c.l.b16 %v1049
          %v1114 = vunpack.c.l.b16 %v1050
          %v1115 = vunpack.c.l.b16 %v1051
          %v1116 = vunpack.c.l.b16 %v1052
          %v1117 = vunpack.c.l.b16 %v1053
          %v1118 = vunpack.c.l.b16 %v1054
          %v1119 = vunpack.c.l.b16 %v1055
          %v1120 = vpack.c.b16 %v1089, %v1088
          %v1121 = vpack.c.b16 %v1091, %v1090
          %v1122 = vpack.c.b16 %v1093, %v1092
          %v1123 = vpack.c.b16 %v1095, %v1094
          %v1124 = vpack.c.b16 %v1097, %v1096
          %v1125 = vpack.c.b16 %v1099, %v1098
          %v1126 = vpack.c.b16 %v1101, %v1100
          %v1127 = vpack.c.b16 %v1103, %v1102
          %v1128 = vpack.c.b16 %v1105, %v1104
          %v1129 = vpack.c.b16 %v1107, %v1106
          %v1130 = vpack.c.b16 %v1109, %v1108
          %v1131 = vpack.c.b16 %v1111, %v1110
          %v1132 = vpack.c.b16 %v1113, %v1112
          %v1133 = vpack.c.b16 %v1115, %v1114
          %v1134 = vpack.c.b16 %v1117, %v1116
          %v1135 = vpack.c.b16 %v1119, %v1118
          %1152 = vmatprep.subr.bf16.mxu0 0
          %1153 = vmatpush1.bf16.msra.mxu0 %v1120
          %1154 = vmatprep.subr.bf16.mxu0 0
          %1155 = vmatpush1.bf16.msra.mxu0 %v1121
          %1156 = vmatprep.subr.bf16.mxu0 0
          %1157 = vmatpush1.bf16.msra.mxu0 %v1122
          %1158 = vmatprep.subr.bf16.mxu0 0
          %1159 = vmatpush1.bf16.msra.mxu0 %v1123
          %1160 = vmatprep.subr.bf16.mxu0 0
          %1161 = vmatpush1.bf16.msra.mxu0 %v1124
          %1162 = vmatprep.subr.bf16.mxu0 0
          %1163 = vmatpush1.bf16.msra.mxu0 %v1125
          %1164 = vmatprep.subr.bf16.mxu0 0
          %1165 = vmatpush1.bf16.msra.mxu0 %v1126
          %1166 = vmatprep.subr.bf16.mxu0 0
          %1167 = vmatpush1.bf16.msra.mxu0 %v1127
          %1168 = vmatprep.subr.bf16.mxu0 0
          %1169 = vmatpush1.bf16.msra.mxu0 %v1128
          %1170 = vmatprep.subr.bf16.mxu0 0
          %1171 = vmatpush1.bf16.msra.mxu0 %v1129
          %1172 = vmatprep.subr.bf16.mxu0 0
          %1173 = vmatpush1.bf16.msra.mxu0 %v1130
          %1174 = vmatprep.subr.bf16.mxu0 0
          %1175 = vmatpush1.bf16.msra.mxu0 %v1131
          %1176 = vmatprep.subr.bf16.mxu0 0
          %1177 = vmatpush1.bf16.msra.mxu0 %v1132
          %1178 = vmatprep.subr.bf16.mxu0 0
          %1179 = vmatpush1.bf16.msra.mxu0 %v1133
          %1180 = vmatprep.subr.bf16.mxu0 0
          %1181 = vmatpush1.bf16.msra.mxu0 %v1134
          %1182 = vmatprep.subr.bf16.mxu0 0
          %1183 = vmatpush1.bf16.msra.mxu0 %v1135
          %1184 = vmatprep.mubr.bf16.mxu0 %v808
          %1185 = vmatmul.mubr.bf16.gmra.mrb[0].mxu0 %v807
          %v1186 = vpop.f32.mrb[0].mxu0
          %v1187 = vadd.f32 0.0, %v1186
          %v1188 = vpop.f32.mrb[0].mxu0
          %v1189 = vpop.f32.mrb[0].mxu0
          %v1190 = vadd.f32 0.0, %v1189
          %v1191 = vpop.f32.mrb[0].mxu0
          %1192 = vmatprep.mubr.bf16.mxu0 %v810
          %1193 = vmatmul.mubr.bf16.gmra.mrb[0].mxu0 %v809
          %v1194 = vpop.f32.mrb[0].mxu0
          %v1195 = vadd.f32 0.0, %v1194
          %v1196 = vpop.f32.mrb[0].mxu0
          %v1197 = vpop.f32.mrb[0].mxu0
          %v1198 = vadd.f32 0.0, %v1197
          %v1199 = vpop.f32.mrb[0].mxu0
          %1200 = vmatprep.mubr.bf16.mxu0 %v812
          %1201 = vmatmul.mubr.bf16.gmra.mrb[0].mxu0 %v811
          %v1202 = vpop.f32.mrb[0].mxu0
          %v1203 = vadd.f32 0.0, %v1202
          %v1204 = vpop.f32.mrb[0].mxu0
          %v1205 = vpop.f32.mrb[0].mxu0
          %v1206 = vadd.f32 0.0, %v1205
          %v1207 = vpop.f32.mrb[0].mxu0
          %1208 = vmatprep.mubr.bf16.mxu0 %v814
          %1209 = vmatmul.mubr.bf16.gmra.mrb[0].mxu0 %v813
          %v1210 = vpop.f32.mrb[0].mxu0
          %v1211 = vadd.f32 0.0, %v1210
          %v1212 = vpop.f32.mrb[0].mxu0
          %v1213 = vpop.f32.mrb[0].mxu0
          %v1214 = vadd.f32 0.0, %v1213
          %v1215 = vpop.f32.mrb[0].mxu0
          %1216 = vdwg.mxu0
          %v1217 = vpack.c.bf16 %v1190, %v1187
          %v1218 = vpack.c.bf16 %v1198, %v1195
          %v1219 = vpack.c.bf16 %v1206, %v1203
          %v1220 = vpack.c.bf16 %v1214, %v1211
          %1221 = vst [vmem:[#allocation3] sm:$0xff] %v1217
          %1222 = vst [vmem:[#allocation3 + $0x8] sm:$0xff] %v1218
          %1223 = vst [vmem:[#allocation3 + $0x10] sm:$0xff] %v1219
          %1224 = vst [vmem:[#allocation3 + $0x18] sm:$0xff] %v1220
          %v1225 = vld [vmem:[#allocation14] sm:$0xf]
          %v1226 = vld [vmem:[#allocation14 + $0x4] sm:$0xf]
          %v1227 = vld [vmem:[#allocation14 + $0x8] sm:$0xf]
          %v1228 = vld [vmem:[#allocation14 + $0xc] sm:$0xf]
          %v1229 = vld [vmem:[#allocation14 + $0x10] sm:$0xf]
          %v1230 = vld [vmem:[#allocation14 + $0x14] sm:$0xf]
          %v1231 = vld [vmem:[#allocation14 + $0x18] sm:$0xf]
          %v1232 = vld [vmem:[#allocation14 + $0x1c] sm:$0xf]
          %v1233 = vld [vmem:[#allocation14 + $0x20] sm:$0xf]
          %v1234 = vld [vmem:[#allocation14 + $0x24] sm:$0xf]
          %v1235 = vld [vmem:[#allocation14 + $0x28] sm:$0xf]
          %v1236 = vld [vmem:[#allocation14 + $0x2c] sm:$0xf]
          %v1237 = vld [vmem:[#allocation14 + $0x30] sm:$0xf]
          %v1238 = vld [vmem:[#allocation14 + $0x34] sm:$0xf]
          %v1239 = vld [vmem:[#allocation14 + $0x38] sm:$0xf]
          %v1240 = vld [vmem:[#allocation14 + $0x3c] sm:$0xf]
          %v1241 = vld [vmem:[#allocation14 + $0x40] sm:$0xf]
          %v1242 = vld [vmem:[#allocation14 + $0x44] sm:$0xf]
          %v1243 = vld [vmem:[#allocation14 + $0x48] sm:$0xf]
          %v1244 = vld [vmem:[#allocation14 + $0x4c] sm:$0xf]
          %v1245 = vld [vmem:[#allocation14 + $0x50] sm:$0xf]
          %v1246 = vld [vmem:[#allocation14 + $0x54] sm:$0xf]
          %v1247 = vld [vmem:[#allocation14 + $0x58] sm:$0xf]
          %v1248 = vld [vmem:[#allocation14 + $0x5c] sm:$0xf]
          %v1249 = vld [vmem:[#allocation14 + $0x60] sm:$0xf]
          %v1250 = vld [vmem:[#allocation14 + $0x64] sm:$0xf]
          %v1251 = vld [vmem:[#allocation14 + $0x68] sm:$0xf]
          %v1252 = vld [vmem:[#allocation14 + $0x6c] sm:$0xf]
          %v1253 = vld [vmem:[#allocation14 + $0x70] sm:$0xf]
          %v1254 = vld [vmem:[#allocation14 + $0x74] sm:$0xf]
          %v1255 = vld [vmem:[#allocation14 + $0x78] sm:$0xf]
          %v1256 = vld [vmem:[#allocation14 + $0x7c] sm:$0xf]
          %v1289 = vunpack.c.l.b16 %v1225
          %v1290 = vunpack.c.l.b16 %v1226
          %v1291 = vunpack.c.l.b16 %v1227
          %v1292 = vunpack.c.l.b16 %v1228
          %v1293 = vunpack.c.l.b16 %v1229
          %v1294 = vunpack.c.l.b16 %v1230
          %v1295 = vunpack.c.l.b16 %v1231
          %v1296 = vunpack.c.l.b16 %v1232
          %v1297 = vunpack.c.l.b16 %v1233
          %v1298 = vunpack.c.l.b16 %v1234
          %v1299 = vunpack.c.l.b16 %v1235
          %v1300 = vunpack.c.l.b16 %v1236
          %v1301 = vunpack.c.l.b16 %v1237
          %v1302 = vunpack.c.l.b16 %v1238
          %v1303 = vunpack.c.l.b16 %v1239
          %v1304 = vunpack.c.l.b16 %v1240
          %v1305 = vunpack.c.l.b16 %v1241
          %v1306 = vunpack.c.l.b16 %v1242
          %v1307 = vunpack.c.l.b16 %v1243
          %v1308 = vunpack.c.l.b16 %v1244
          %v1309 = vunpack.c.l.b16 %v1245
          %v1310 = vunpack.c.l.b16 %v1246
          %v1311 = vunpack.c.l.b16 %v1247
          %v1312 = vunpack.c.l.b16 %v1248
          %v1313 = vunpack.c.l.b16 %v1249
          %v1314 = vunpack.c.l.b16 %v1250
          %v1315 = vunpack.c.l.b16 %v1251
          %v1316 = vunpack.c.l.b16 %v1252
          %v1317 = vunpack.c.l.b16 %v1253
          %v1318 = vunpack.c.l.b16 %v1254
          %v1319 = vunpack.c.l.b16 %v1255
          %v1320 = vunpack.c.l.b16 %v1256
          %v1321 = vpack.c.b16 %v1290, %v1289
          %v1322 = vpack.c.b16 %v1292, %v1291
          %v1323 = vpack.c.b16 %v1294, %v1293
          %v1324 = vpack.c.b16 %v1296, %v1295
          %v1325 = vpack.c.b16 %v1298, %v1297
          %v1326 = vpack.c.b16 %v1300, %v1299
          %v1327 = vpack.c.b16 %v1302, %v1301
          %v1328 = vpack.c.b16 %v1304, %v1303
          %v1329 = vpack.c.b16 %v1306, %v1305
          %v1330 = vpack.c.b16 %v1308, %v1307
          %v1331 = vpack.c.b16 %v1310, %v1309
          %v1332 = vpack.c.b16 %v1312, %v1311
          %v1333 = vpack.c.b16 %v1314, %v1313
          %v1334 = vpack.c.b16 %v1316, %v1315
          %v1335 = vpack.c.b16 %v1318, %v1317
          %v1336 = vpack.c.b16 %v1320, %v1319
          %1353 = vmatprep.subr.bf16.mxu0 0
          %1354 = vmatpush1.bf16.msra.mxu0 %v1321
          %1355 = vmatprep.subr.bf16.mxu0 0
          %1356 = vmatpush1.bf16.msra.mxu0 %v1322
          %1357 = vmatprep.subr.bf16.mxu0 0
          %1358 = vmatpush1.bf16.msra.mxu0 %v1323
          %1359 = vmatprep.subr.bf16.mxu0 0
          %1360 = vmatpush1.bf16.msra.mxu0 %v1324
          %1361 = vmatprep.subr.bf16.mxu0 0
          %1362 = vmatpush1.bf16.msra.mxu0 %v1325
          %1363 = vmatprep.subr.bf16.mxu0 0
          %1364 = vmatpush1.bf16.msra.mxu0 %v1326
          %1365 = vmatprep.subr.bf16.mxu0 0
          %1366 = vmatpush1.bf16.msra.mxu0 %v1327
          %1367 = vmatprep.subr.bf16.mxu0 0
          %1368 = vmatpush1.bf16.msra.mxu0 %v1328
          %1369 = vmatprep.subr.bf16.mxu0 0
          %1370 = vmatpush1.bf16.msra.mxu0 %v1329
          %1371 = vmatprep.subr.bf16.mxu0 0
          %1372 = vmatpush1.bf16.msra.mxu0 %v1330
          %1373 = vmatprep.subr.bf16.mxu0 0
          %1374 = vmatpush1.bf16.msra.mxu0 %v1331
          %1375 = vmatprep.subr.bf16.mxu0 0
          %1376 = vmatpush1.bf16.msra.mxu0 %v1332
          %1377 = vmatprep.subr.bf16.mxu0 0
          %1378 = vmatpush1.bf16.msra.mxu0 %v1333
          %1379 = vmatprep.subr.bf16.mxu0 0
          %1380 = vmatpush1.bf16.msra.mxu0 %v1334
          %1381 = vmatprep.subr.bf16.mxu0 0
          %1382 = vmatpush1.bf16.msra.mxu0 %v1335
          %1383 = vmatprep.subr.bf16.mxu0 0
          %1384 = vmatpush1.bf16.msra.mxu0 %v1336
          %1385 = vmatprep.mubr.bf16.mxu0 %v808
          %1386 = vmatmul.mubr.bf16.gmra.mrb[0].mxu0 %v807
          %v1387 = vpop.f32.mrb[0].mxu0
          %v1388 = vadd.f32 0.0, %v1387
          %v1389 = vpop.f32.mrb[0].mxu0
          %v1390 = vpop.f32.mrb[0].mxu0
          %v1391 = vadd.f32 0.0, %v1390
          %v1392 = vpop.f32.mrb[0].mxu0
          %1393 = vmatprep.mubr.bf16.mxu0 %v810
          %1394 = vmatmul.mubr.bf16.gmra.mrb[0].mxu0 %v809
          %v1395 = vpop.f32.mrb[0].mxu0
          %v1396 = vadd.f32 0.0, %v1395
          %v1397 = vpop.f32.mrb[0].mxu0
          %v1398 = vpop.f32.mrb[0].mxu0
          %v1399 = vadd.f32 0.0, %v1398
          %v1400 = vpop.f32.mrb[0].mxu0
          %1401 = vmatprep.mubr.bf16.mxu0 %v812
          %1402 = vmatmul.mubr.bf16.gmra.mrb[0].mxu0 %v811
          %v1403 = vpop.f32.mrb[0].mxu0
          %v1404 = vadd.f32 0.0, %v1403
          %v1405 = vpop.f32.mrb[0].mxu0
          %v1406 = vpop.f32.mrb[0].mxu0
          %v1407 = vadd.f32 0.0, %v1406
          %v1408 = vpop.f32.mrb[0].mxu0
          %1409 = vmatprep.mubr.bf16.mxu0 %v814
          %1410 = vmatmul.mubr.bf16.gmra.mrb[0].mxu0 %v813
          %v1411 = vpop.f32.mrb[0].mxu0
          %v1412 = vadd.f32 0.0, %v1411
          %v1413 = vpop.f32.mrb[0].mxu0
          %v1414 = vpop.f32.mrb[0].mxu0
          %v1415 = vadd.f32 0.0, %v1414
          %v1416 = vpop.f32.mrb[0].mxu0
          %1417 = vdwg.mxu0
          %v1418 = vpack.c.bf16 %v1391, %v1388
          %v1419 = vpack.c.bf16 %v1399, %v1396
          %v1420 = vpack.c.bf16 %v1407, %v1404
          %v1421 = vpack.c.bf16 %v1415, %v1412
          %1422 = vst [vmem:[#allocation4] sm:$0xff] %v1418
          %1423 = vst [vmem:[#allocation4 + $0x8] sm:$0xff] %v1419
          %1424 = vst [vmem:[#allocation4 + $0x10] sm:$0xff] %v1420
          %1425 = vst [vmem:[#allocation4 + $0x18] sm:$0xff] %v1421
          %s1426 = scalar_lea.vmem [#allocation11], 128
          %v1427 = vld [vmem:[%s1426] sm:$0xf]
          %v1428 = vld [vmem:[%s1426 + $0x4] sm:$0xf]
          %v1429 = vld [vmem:[%s1426 + $0x8] sm:$0xf]
          %v1430 = vld [vmem:[%s1426 + $0xc] sm:$0xf]
          %v1431 = vld [vmem:[%s1426 + $0x10] sm:$0xf]
          %v1432 = vld [vmem:[%s1426 + $0x14] sm:$0xf]
          %v1433 = vld [vmem:[%s1426 + $0x18] sm:$0xf]
          %v1434 = vld [vmem:[%s1426 + $0x1c] sm:$0xf]
          %v1435 = vld [vmem:[%s1426 + $0x20] sm:$0xf]
          %v1436 = vld [vmem:[%s1426 + $0x24] sm:$0xf]
          %v1437 = vld [vmem:[%s1426 + $0x28] sm:$0xf]
          %v1438 = vld [vmem:[%s1426 + $0x2c] sm:$0xf]
          %v1439 = vld [vmem:[%s1426 + $0x30] sm:$0xf]
          %v1440 = vld [vmem:[%s1426 + $0x34] sm:$0xf]
          %v1441 = vld [vmem:[%s1426 + $0x38] sm:$0xf]
          %v1442 = vld [vmem:[%s1426 + $0x3c] sm:$0xf]
          %v1443 = vld [vmem:[%s1426 + $0x40] sm:$0xf]
          %v1444 = vld [vmem:[%s1426 + $0x44] sm:$0xf]
          %v1445 = vld [vmem:[%s1426 + $0x48] sm:$0xf]
          %v1446 = vld [vmem:[%s1426 + $0x4c] sm:$0xf]
          %v1447 = vld [vmem:[%s1426 + $0x50] sm:$0xf]
          %v1448 = vld [vmem:[%s1426 + $0x54] sm:$0xf]
          %v1449 = vld [vmem:[%s1426 + $0x58] sm:$0xf]
          %v1450 = vld [vmem:[%s1426 + $0x5c] sm:$0xf]
          %v1451 = vld [vmem:[%s1426 + $0x60] sm:$0xf]
          %v1452 = vld [vmem:[%s1426 + $0x64] sm:$0xf]
          %v1453 = vld [vmem:[%s1426 + $0x68] sm:$0xf]
          %v1454 = vld [vmem:[%s1426 + $0x6c] sm:$0xf]
          %v1455 = vld [vmem:[%s1426 + $0x70] sm:$0xf]
          %v1456 = vld [vmem:[%s1426 + $0x74] sm:$0xf]
          %v1457 = vld [vmem:[%s1426 + $0x78] sm:$0xf]
          %v1458 = vld [vmem:[%s1426 + $0x7c] sm:$0xf]
          %v1491 = vunpack.c.l.b16 %v1427
          %v1492 = vunpack.c.l.b16 %v1428
          %v1493 = vunpack.c.l.b16 %v1429
          %v1494 = vunpack.c.l.b16 %v1430
          %v1495 = vunpack.c.l.b16 %v1431
          %v1496 = vunpack.c.l.b16 %v1432
          %v1497 = vunpack.c.l.b16 %v1433
          %v1498 = vunpack.c.l.b16 %v1434
          %v1499 = vunpack.c.l.b16 %v1435
          %v1500 = vunpack.c.l.b16 %v1436
          %v1501 = vunpack.c.l.b16 %v1437
          %v1502 = vunpack.c.l.b16 %v1438
          %v1503 = vunpack.c.l.b16 %v1439
          %v1504 = vunpack.c.l.b16 %v1440
          %v1505 = vunpack.c.l.b16 %v1441
          %v1506 = vunpack.c.l.b16 %v1442
          %v1507 = vunpack.c.l.b16 %v1443
          %v1508 = vunpack.c.l.b16 %v1444
          %v1509 = vunpack.c.l.b16 %v1445
          %v1510 = vunpack.c.l.b16 %v1446
          %v1511 = vunpack.c.l.b16 %v1447
          %v1512 = vunpack.c.l.b16 %v1448
          %v1513 = vunpack.c.l.b16 %v1449
          %v1514 = vunpack.c.l.b16 %v1450
          %v1515 = vunpack.c.l.b16 %v1451
          %v1516 = vunpack.c.l.b16 %v1452
          %v1517 = vunpack.c.l.b16 %v1453
          %v1518 = vunpack.c.l.b16 %v1454
          %v1519 = vunpack.c.l.b16 %v1455
          %v1520 = vunpack.c.l.b16 %v1456
          %v1521 = vunpack.c.l.b16 %v1457
          %v1522 = vunpack.c.l.b16 %v1458
          %v1523 = vpack.c.b16 %v1492, %v1491
          %v1524 = vpack.c.b16 %v1494, %v1493
          %v1525 = vpack.c.b16 %v1496, %v1495
          %v1526 = vpack.c.b16 %v1498, %v1497
          %v1527 = vpack.c.b16 %v1500, %v1499
          %v1528 = vpack.c.b16 %v1502, %v1501
          %v1529 = vpack.c.b16 %v1504, %v1503
          %v1530 = vpack.c.b16 %v1506, %v1505
          %v1531 = vpack.c.b16 %v1508, %v1507
          %v1532 = vpack.c.b16 %v1510, %v1509
          %v1533 = vpack.c.b16 %v1512, %v1511
          %v1534 = vpack.c.b16 %v1514, %v1513
          %v1535 = vpack.c.b16 %v1516, %v1515
          %v1536 = vpack.c.b16 %v1518, %v1517
          %v1537 = vpack.c.b16 %v1520, %v1519
          %v1538 = vpack.c.b16 %v1522, %v1521
          %1555 = vmatprep.subr.bf16.mxu0 0
          %1556 = vmatpush1.bf16.msra.mxu0 %v1523
          %1557 = vmatprep.subr.bf16.mxu0 0
          %1558 = vmatpush1.bf16.msra.mxu0 %v1524
          %1559 = vmatprep.subr.bf16.mxu0 0
          %1560 = vmatpush1.bf16.msra.mxu0 %v1525
          %1561 = vmatprep.subr.bf16.mxu0 0
          %1562 = vmatpush1.bf16.msra.mxu0 %v1526
          %1563 = vmatprep.subr.bf16.mxu0 0
          %1564 = vmatpush1.bf16.msra.mxu0 %v1527
          %1565 = vmatprep.subr.bf16.mxu0 0
          %1566 = vmatpush1.bf16.msra.mxu0 %v1528
          %1567 = vmatprep.subr.bf16.mxu0 0
          %1568 = vmatpush1.bf16.msra.mxu0 %v1529
          %1569 = vmatprep.subr.bf16.mxu0 0
          %1570 = vmatpush1.bf16.msra.mxu0 %v1530
          %1571 = vmatprep.subr.bf16.mxu0 0
          %1572 = vmatpush1.bf16.msra.mxu0 %v1531
          %1573 = vmatprep.subr.bf16.mxu0 0
          %1574 = vmatpush1.bf16.msra.mxu0 %v1532
          %1575 = vmatprep.subr.bf16.mxu0 0
          %1576 = vmatpush1.bf16.msra.mxu0 %v1533
          %1577 = vmatprep.subr.bf16.mxu0 0
          %1578 = vmatpush1.bf16.msra.mxu0 %v1534
          %1579 = vmatprep.subr.bf16.mxu0 0
          %1580 = vmatpush1.bf16.msra.mxu0 %v1535
          %1581 = vmatprep.subr.bf16.mxu0 0
          %1582 = vmatpush1.bf16.msra.mxu0 %v1536
          %1583 = vmatprep.subr.bf16.mxu0 0
          %1584 = vmatpush1.bf16.msra.mxu0 %v1537
          %1585 = vmatprep.subr.bf16.mxu0 0
          %1586 = vmatpush1.bf16.msra.mxu0 %v1538
          %1587 = vmatprep.mubr.bf16.mxu0 %v808
          %1588 = vmatmul.mubr.bf16.gmra.mrb[0].mxu0 %v807
          %v1589 = vpop.f32.mrb[0].mxu0
          %v1590 = vadd.f32 0.0, %v1589
          %v1591 = vpop.f32.mrb[0].mxu0
          %v1592 = vpop.f32.mrb[0].mxu0
          %v1593 = vadd.f32 0.0, %v1592
          %v1594 = vpop.f32.mrb[0].mxu0
          %1595 = vmatprep.mubr.bf16.mxu0 %v810
          %1596 = vmatmul.mubr.bf16.gmra.mrb[0].mxu0 %v809
          %v1597 = vpop.f32.mrb[0].mxu0
          %v1598 = vadd.f32 0.0, %v1597
          %v1599 = vpop.f32.mrb[0].mxu0
          %v1600 = vpop.f32.mrb[0].mxu0
          %v1601 = vadd.f32 0.0, %v1600
          %v1602 = vpop.f32.mrb[0].mxu0
          %1603 = vmatprep.mubr.bf16.mxu0 %v812
          %1604 = vmatmul.mubr.bf16.gmra.mrb[0].mxu0 %v811
          %v1605 = vpop.f32.mrb[0].mxu0
          %v1606 = vadd.f32 0.0, %v1605
          %v1607 = vpop.f32.mrb[0].mxu0
          %v1608 = vpop.f32.mrb[0].mxu0
          %v1609 = vadd.f32 0.0, %v1608
          %v1610 = vpop.f32.mrb[0].mxu0
          %1611 = vmatprep.mubr.bf16.mxu0 %v814
          %1612 = vmatmul.mubr.bf16.gmra.mrb[0].mxu0 %v813
          %v1613 = vpop.f32.mrb[0].mxu0
          %v1614 = vadd.f32 0.0, %v1613
          %v1615 = vpop.f32.mrb[0].mxu0
          %v1616 = vpop.f32.mrb[0].mxu0
          %v1617 = vadd.f32 0.0, %v1616
          %v1618 = vpop.f32.mrb[0].mxu0
          %1619 = vdwg.mxu0
          %v1620 = vmul.f32 %v1590, 0.088388346
          %v1621 = vmul.f32 %v1593, 0.088388346
          %v1622 = vmul.f32 %v1598, 0.088388346
          %v1623 = vmul.f32 %v1601, 0.088388346
          %v1624 = vmul.f32 %v1606, 0.088388346
          %v1625 = vmul.f32 %v1609, 0.088388346
          %v1626 = vmul.f32 %v1614, 0.088388346
          %v1627 = vmul.f32 %v1617, 0.088388346
          %v1628 = vpack.c.bf16 %v1621, %v1620
          %v1629 = vpack.c.bf16 %v1623, %v1622
          %v1630 = vpack.c.bf16 %v1625, %v1624
          %v1631 = vpack.c.bf16 %v1627, %v1626
          %s1632 = scalar_lea.vmem [#allocation2], 32
          %1633 = vst [vmem:[%s1632] sm:$0xff] %v1628
          %1634 = vst [vmem:[%s1632 + $0x8] sm:$0xff] %v1629
          %1635 = vst [vmem:[%s1632 + $0x10] sm:$0xff] %v1630
          %1636 = vst [vmem:[%s1632 + $0x18] sm:$0xff] %v1631
          %s1637 = scalar_lea.vmem [#allocation12], 128
          %v1638 = vld [vmem:[%s1637] sm:$0xf]
          %v1639 = vld [vmem:[%s1637 + $0x4] sm:$0xf]
          %v1640 = vld [vmem:[%s1637 + $0x8] sm:$0xf]
          %v1641 = vld [vmem:[%s1637 + $0xc] sm:$0xf]
          %v1642 = vld [vmem:[%s1637 + $0x10] sm:$0xf]
          %v1643 = vld [vmem:[%s1637 + $0x14] sm:$0xf]
          %v1644 = vld [vmem:[%s1637 + $0x18] sm:$0xf]
          %v1645 = vld [vmem:[%s1637 + $0x1c] sm:$0xf]
          %v1646 = vld [vmem:[%s1637 + $0x20] sm:$0xf]
          %v1647 = vld [vmem:[%s1637 + $0x24] sm:$0xf]
          %v1648 = vld [vmem:[%s1637 + $0x28] sm:$0xf]
          %v1649 = vld [vmem:[%s1637 + $0x2c] sm:$0xf]
          %v1650 = vld [vmem:[%s1637 + $0x30] sm:$0xf]
          %v1651 = vld [vmem:[%s1637 + $0x34] sm:$0xf]
          %v1652 = vld [vmem:[%s1637 + $0x38] sm:$0xf]
          %v1653 = vld [vmem:[%s1637 + $0x3c] sm:$0xf]
          %v1654 = vld [vmem:[%s1637 + $0x40] sm:$0xf]
          %v1655 = vld [vmem:[%s1637 + $0x44] sm:$0xf]
          %v1656 = vld [vmem:[%s1637 + $0x48] sm:$0xf]
          %v1657 = vld [vmem:[%s1637 + $0x4c] sm:$0xf]
          %v1658 = vld [vmem:[%s1637 + $0x50] sm:$0xf]
          %v1659 = vld [vmem:[%s1637 + $0x54] sm:$0xf]
          %v1660 = vld [vmem:[%s1637 + $0x58] sm:$0xf]
          %v1661 = vld [vmem:[%s1637 + $0x5c] sm:$0xf]
          %v1662 = vld [vmem:[%s1637 + $0x60] sm:$0xf]
          %v1663 = vld [vmem:[%s1637 + $0x64] sm:$0xf]
          %v1664 = vld [vmem:[%s1637 + $0x68] sm:$0xf]
          %v1665 = vld [vmem:[%s1637 + $0x6c] sm:$0xf]
          %v1666 = vld [vmem:[%s1637 + $0x70] sm:$0xf]
          %v1667 = vld [vmem:[%s1637 + $0x74] sm:$0xf]
          %v1668 = vld [vmem:[%s1637 + $0x78] sm:$0xf]
          %v1669 = vld [vmem:[%s1637 + $0x7c] sm:$0xf]
          %v1702 = vunpack.c.l.b16 %v1638
          %v1703 = vunpack.c.l.b16 %v1639
          %v1704 = vunpack.c.l.b16 %v1640
          %v1705 = vunpack.c.l.b16 %v1641
          %v1706 = vunpack.c.l.b16 %v1642
          %v1707 = vunpack.c.l.b16 %v1643
          %v1708 = vunpack.c.l.b16 %v1644
          %v1709 = vunpack.c.l.b16 %v1645
          %v1710 = vunpack.c.l.b16 %v1646
          %v1711 = vunpack.c.l.b16 %v1647
          %v1712 = vunpack.c.l.b16 %v1648
          %v1713 = vunpack.c.l.b16 %v1649
          %v1714 = vunpack.c.l.b16 %v1650
          %v1715 = vunpack.c.l.b16 %v1651
          %v1716 = vunpack.c.l.b16 %v1652
          %v1717 = vunpack.c.l.b16 %v1653
          %v1718 = vunpack.c.l.b16 %v1654
          %v1719 = vunpack.c.l.b16 %v1655
          %v1720 = vunpack.c.l.b16 %v1656
          %v1721 = vunpack.c.l.b16 %v1657
          %v1722 = vunpack.c.l.b16 %v1658
          %v1723 = vunpack.c.l.b16 %v1659
          %v1724 = vunpack.c.l.b16 %v1660
          %v1725 = vunpack.c.l.b16 %v1661
          %v1726 = vunpack.c.l.b16 %v1662
          %v1727 = vunpack.c.l.b16 %v1663
          %v1728 = vunpack.c.l.b16 %v1664
          %v1729 = vunpack.c.l.b16 %v1665
          %v1730 = vunpack.c.l.b16 %v1666
          %v1731 = vunpack.c.l.b16 %v1667
          %v1732 = vunpack.c.l.b16 %v1668
          %v1733 = vunpack.c.l.b16 %v1669
          %v1734 = vpack.c.b16 %v1703, %v1702
          %v1735 = vpack.c.b16 %v1705, %v1704
          %v1736 = vpack.c.b16 %v1707, %v1706
          %v1737 = vpack.c.b16 %v1709, %v1708
          %v1738 = vpack.c.b16 %v1711, %v1710
          %v1739 = vpack.c.b16 %v1713, %v1712
          %v1740 = vpack.c.b16 %v1715, %v1714
          %v1741 = vpack.c.b16 %v1717, %v1716
          %v1742 = vpack.c.b16 %v1719, %v1718
          %v1743 = vpack.c.b16 %v1721, %v1720
          %v1744 = vpack.c.b16 %v1723, %v1722
          %v1745 = vpack.c.b16 %v1725, %v1724
          %v1746 = vpack.c.b16 %v1727, %v1726
          %v1747 = vpack.c.b16 %v1729, %v1728
          %v1748 = vpack.c.b16 %v1731, %v1730
          %v1749 = vpack.c.b16 %v1733, %v1732
          %1766 = vmatprep.subr.bf16.mxu0 0
          %1767 = vmatpush1.bf16.msra.mxu0 %v1734
          %1768 = vmatprep.subr.bf16.mxu0 0
          %1769 = vmatpush1.bf16.msra.mxu0 %v1735
          %1770 = vmatprep.subr.bf16.mxu0 0
          %1771 = vmatpush1.bf16.msra.mxu0 %v1736
          %1772 = vmatprep.subr.bf16.mxu0 0
          %1773 = vmatpush1.bf16.msra.mxu0 %v1737
          %1774 = vmatprep.subr.bf16.mxu0 0
          %1775 = vmatpush1.bf16.msra.mxu0 %v1738
          %1776 = vmatprep.subr.bf16.mxu0 0
          %1777 = vmatpush1.bf16.msra.mxu0 %v1739
          %1778 = vmatprep.subr.bf16.mxu0 0
          %1779 = vmatpush1.bf16.msra.mxu0 %v1740
          %1780 = vmatprep.subr.bf16.mxu0 0
          %1781 = vmatpush1.bf16.msra.mxu0 %v1741
          %1782 = vmatprep.subr.bf16.mxu0 0
          %1783 = vmatpush1.bf16.msra.mxu0 %v1742
          %1784 = vmatprep.subr.bf16.mxu0 0
          %1785 = vmatpush1.bf16.msra.mxu0 %v1743
          %1786 = vmatprep.subr.bf16.mxu0 0
          %1787 = vmatpush1.bf16.msra.mxu0 %v1744
          %1788 = vmatprep.subr.bf16.mxu0 0
          %1789 = vmatpush1.bf16.msra.mxu0 %v1745
          %1790 = vmatprep.subr.bf16.mxu0 0
          %1791 = vmatpush1.bf16.msra.mxu0 %v1746
          %1792 = vmatprep.subr.bf16.mxu0 0
          %1793 = vmatpush1.bf16.msra.mxu0 %v1747
          %1794 = vmatprep.subr.bf16.mxu0 0
          %1795 = vmatpush1.bf16.msra.mxu0 %v1748
          %1796 = vmatprep.subr.bf16.mxu0 0
          %1797 = vmatpush1.bf16.msra.mxu0 %v1749
          %1798 = vmatprep.mubr.bf16.mxu0 %v808
          %1799 = vmatmul.mubr.bf16.gmra.mrb[0].mxu0 %v807
          %v1800 = vpop.f32.mrb[0].mxu0
          %v1801 = vadd.f32 0.0, %v1800
          %v1802 = vpop.f32.mrb[0].mxu0
          %v1803 = vpop.f32.mrb[0].mxu0
          %v1804 = vadd.f32 0.0, %v1803
          %v1805 = vpop.f32.mrb[0].mxu0
          %1806 = vmatprep.mubr.bf16.mxu0 %v810
          %1807 = vmatmul.mubr.bf16.gmra.mrb[0].mxu0 %v809
          %v1808 = vpop.f32.mrb[0].mxu0
          %v1809 = vadd.f32 0.0, %v1808
          %v1810 = vpop.f32.mrb[0].mxu0
          %v1811 = vpop.f32.mrb[0].mxu0
          %v1812 = vadd.f32 0.0, %v1811
          %v1813 = vpop.f32.mrb[0].mxu0
          %1814 = vmatprep.mubr.bf16.mxu0 %v812
          %1815 = vmatmul.mubr.bf16.gmra.mrb[0].mxu0 %v811
          %v1816 = vpop.f32.mrb[0].mxu0
          %v1817 = vadd.f32 0.0, %v1816
          %v1818 = vpop.f32.mrb[0].mxu0
          %v1819 = vpop.f32.mrb[0].mxu0
          %v1820 = vadd.f32 0.0, %v1819
          %v1821 = vpop.f32.mrb[0].mxu0
          %1822 = vmatprep.mubr.bf16.mxu0 %v814
          %1823 = vmatmul.mubr.bf16.gmra.mrb[0].mxu0 %v813
          %v1824 = vpop.f32.mrb[0].mxu0
          %v1825 = vadd.f32 0.0, %v1824
          %v1826 = vpop.f32.mrb[0].mxu0
          %v1827 = vpop.f32.mrb[0].mxu0
          %v1828 = vadd.f32 0.0, %v1827
          %v1829 = vpop.f32.mrb[0].mxu0
          %1830 = vdwg.mxu0
          %v1831 = vpack.c.bf16 %v1804, %v1801
          %v1832 = vpack.c.bf16 %v1812, %v1809
          %v1833 = vpack.c.bf16 %v1820, %v1817
          %v1834 = vpack.c.bf16 %v1828, %v1825
          %s1835 = scalar_lea.vmem [#allocation3], 32
          %1836 = vst [vmem:[%s1835] sm:$0xff] %v1831
          %1837 = vst [vmem:[%s1835 + $0x8] sm:$0xff] %v1832
          %1838 = vst [vmem:[%s1835 + $0x10] sm:$0xff] %v1833
          %1839 = vst [vmem:[%s1835 + $0x18] sm:$0xff] %v1834
          %s1840 = scalar_lea.vmem [#allocation14], 128
          %v1841 = vld [vmem:[%s1840] sm:$0xf]
          %v1842 = vld [vmem:[%s1840 + $0x4] sm:$0xf]
          %v1843 = vld [vmem:[%s1840 + $0x8] sm:$0xf]
          %v1844 = vld [vmem:[%s1840 + $0xc] sm:$0xf]
          %v1845 = vld [vmem:[%s1840 + $0x10] sm:$0xf]
          %v1846 = vld [vmem:[%s1840 + $0x14] sm:$0xf]
          %v1847 = vld [vmem:[%s1840 + $0x18] sm:$0xf]
          %v1848 = vld [vmem:[%s1840 + $0x1c] sm:$0xf]
          %v1849 = vld [vmem:[%s1840 + $0x20] sm:$0xf]
          %v1850 = vld [vmem:[%s1840 + $0x24] sm:$0xf]
          %v1851 = vld [vmem:[%s1840 + $0x28] sm:$0xf]
          %v1852 = vld [vmem:[%s1840 + $0x2c] sm:$0xf]
          %v1853 = vld [vmem:[%s1840 + $0x30] sm:$0xf]
          %v1854 = vld [vmem:[%s1840 + $0x34] sm:$0xf]
          %v1855 = vld [vmem:[%s1840 + $0x38] sm:$0xf]
          %v1856 = vld [vmem:[%s1840 + $0x3c] sm:$0xf]
          %v1857 = vld [vmem:[%s1840 + $0x40] sm:$0xf]
          %v1858 = vld [vmem:[%s1840 + $0x44] sm:$0xf]
          %v1859 = vld [vmem:[%s1840 + $0x48] sm:$0xf]
          %v1860 = vld [vmem:[%s1840 + $0x4c] sm:$0xf]
          %v1861 = vld [vmem:[%s1840 + $0x50] sm:$0xf]
          %v1862 = vld [vmem:[%s1840 + $0x54] sm:$0xf]
          %v1863 = vld [vmem:[%s1840 + $0x58] sm:$0xf]
          %v1864 = vld [vmem:[%s1840 + $0x5c] sm:$0xf]
          %v1865 = vld [vmem:[%s1840 + $0x60] sm:$0xf]
          %v1866 = vld [vmem:[%s1840 + $0x64] sm:$0xf]
          %v1867 = vld [vmem:[%s1840 + $0x68] sm:$0xf]
          %v1868 = vld [vmem:[%s1840 + $0x6c] sm:$0xf]
          %v1869 = vld [vmem:[%s1840 + $0x70] sm:$0xf]
          %v1870 = vld [vmem:[%s1840 + $0x74] sm:$0xf]
          %v1871 = vld [vmem:[%s1840 + $0x78] sm:$0xf]
          %v1872 = vld [vmem:[%s1840 + $0x7c] sm:$0xf]
          %v1905 = vunpack.c.l.b16 %v1841
          %v1906 = vunpack.c.l.b16 %v1842
          %v1907 = vunpack.c.l.b16 %v1843
          %v1908 = vunpack.c.l.b16 %v1844
          %v1909 = vunpack.c.l.b16 %v1845
          %v1910 = vunpack.c.l.b16 %v1846
          %v1911 = vunpack.c.l.b16 %v1847
          %v1912 = vunpack.c.l.b16 %v1848
          %v1913 = vunpack.c.l.b16 %v1849
          %v1914 = vunpack.c.l.b16 %v1850
          %v1915 = vunpack.c.l.b16 %v1851
          %v1916 = vunpack.c.l.b16 %v1852
          %v1917 = vunpack.c.l.b16 %v1853
          %v1918 = vunpack.c.l.b16 %v1854
          %v1919 = vunpack.c.l.b16 %v1855
          %v1920 = vunpack.c.l.b16 %v1856
          %v1921 = vunpack.c.l.b16 %v1857
          %v1922 = vunpack.c.l.b16 %v1858
          %v1923 = vunpack.c.l.b16 %v1859
          %v1924 = vunpack.c.l.b16 %v1860
          %v1925 = vunpack.c.l.b16 %v1861
          %v1926 = vunpack.c.l.b16 %v1862
          %v1927 = vunpack.c.l.b16 %v1863
          %v1928 = vunpack.c.l.b16 %v1864
          %v1929 = vunpack.c.l.b16 %v1865
          %v1930 = vunpack.c.l.b16 %v1866
          %v1931 = vunpack.c.l.b16 %v1867
          %v1932 = vunpack.c.l.b16 %v1868
          %v1933 = vunpack.c.l.b16 %v1869
          %v1934 = vunpack.c.l.b16 %v1870
          %v1935 = vunpack.c.l.b16 %v1871
          %v1936 = vunpack.c.l.b16 %v1872
          %v1937 = vpack.c.b16 %v1906, %v1905
          %v1938 = vpack.c.b16 %v1908, %v1907
          %v1939 = vpack.c.b16 %v1910, %v1909
          %v1940 = vpack.c.b16 %v1912, %v1911
          %v1941 = vpack.c.b16 %v1914, %v1913
          %v1942 = vpack.c.b16 %v1916, %v1915
          %v1943 = vpack.c.b16 %v1918, %v1917
          %v1944 = vpack.c.b16 %v1920, %v1919
          %v1945 = vpack.c.b16 %v1922, %v1921
          %v1946 = vpack.c.b16 %v1924, %v1923
          %v1947 = vpack.c.b16 %v1926, %v1925
          %v1948 = vpack.c.b16 %v1928, %v1927
          %v1949 = vpack.c.b16 %v1930, %v1929
          %v1950 = vpack.c.b16 %v1932, %v1931
          %v1951 = vpack.c.b16 %v1934, %v1933
          %v1952 = vpack.c.b16 %v1936, %v1935
          %1969 = vmatprep.subr.bf16.mxu0 0
          %1970 = vmatpush1.bf16.msra.mxu0 %v1937
          %1971 = vmatprep.subr.bf16.mxu0 0
          %1972 = vmatpush1.bf16.msra.mxu0 %v1938
          %1973 = vmatprep.subr.bf16.mxu0 0
          %1974 = vmatpush1.bf16.msra.mxu0 %v1939
          %1975 = vmatprep.subr.bf16.mxu0 0
          %1976 = vmatpush1.bf16.msra.mxu0 %v1940
          %1977 = vmatprep.subr.bf16.mxu0 0
          %1978 = vmatpush1.bf16.msra.mxu0 %v1941
          %1979 = vmatprep.subr.bf16.mxu0 0
          %1980 = vmatpush1.bf16.msra.mxu0 %v1942
          %1981 = vmatprep.subr.bf16.mxu0 0
          %1982 = vmatpush1.bf16.msra.mxu0 %v1943
          %1983 = vmatprep.subr.bf16.mxu0 0
          %1984 = vmatpush1.bf16.msra.mxu0 %v1944
          %1985 = vmatprep.subr.bf16.mxu0 0
          %1986 = vmatpush1.bf16.msra.mxu0 %v1945
          %1987 = vmatprep.subr.bf16.mxu0 0
          %1988 = vmatpush1.bf16.msra.mxu0 %v1946
          %1989 = vmatprep.subr.bf16.mxu0 0
          %1990 = vmatpush1.bf16.msra.mxu0 %v1947
          %1991 = vmatprep.subr.bf16.mxu0 0
          %1992 = vmatpush1.bf16.msra.mxu0 %v1948
          %1993 = vmatprep.subr.bf16.mxu0 0
          %1994 = vmatpush1.bf16.msra.mxu0 %v1949
          %1995 = vmatprep.subr.bf16.mxu0 0
          %1996 = vmatpush1.bf16.msra.mxu0 %v1950
          %1997 = vmatprep.subr.bf16.mxu0 0
          %1998 = vmatpush1.bf16.msra.mxu0 %v1951
          %1999 = vmatprep.subr.bf16.mxu0 0
          %2000 = vmatpush1.bf16.msra.mxu0 %v1952
          %2001 = vmatprep.mubr.bf16.mxu0 %v808
          %2002 = vmatmul.mubr.bf16.gmra.mrb[0].mxu0 %v807
          %v2003 = vpop.f32.mrb[0].mxu0
          %v2004 = vadd.f32 0.0, %v2003
          %v2005 = vpop.f32.mrb[0].mxu0
          %v2006 = vpop.f32.mrb[0].mxu0
          %v2007 = vadd.f32 0.0, %v2006
          %v2008 = vpop.f32.mrb[0].mxu0
          %2009 = vmatprep.mubr.bf16.mxu0 %v810
          %2010 = vmatmul.mubr.bf16.gmra.mrb[0].mxu0 %v809
          %v2011 = vpop.f32.mrb[0].mxu0
          %v2012 = vadd.f32 0.0, %v2011
          %v2013 = vpop.f32.mrb[0].mxu0
          %v2014 = vpop.f32.mrb[0].mxu0
          %v2015 = vadd.f32 0.0, %v2014
          %v2016 = vpop.f32.mrb[0].mxu0
          %2017 = vmatprep.mubr.bf16.mxu0 %v812
          %2018 = vmatmul.mubr.bf16.gmra.mrb[0].mxu0 %v811
          %v2019 = vpop.f32.mrb[0].mxu0
          %v2020 = vadd.f32 0.0, %v2019
          %v2021 = vpop.f32.mrb[0].mxu0
          %v2022 = vpop.f32.mrb[0].mxu0
          %v2023 = vadd.f32 0.0, %v2022
          %v2024 = vpop.f32.mrb[0].mxu0
          %2025 = vmatprep.mubr.bf16.mxu0 %v814
          %2026 = vmatmul.mubr.bf16.gmra.mrb[0].mxu0 %v813
          %v2027 = vpop.f32.mrb[0].mxu0
          %v2028 = vadd.f32 0.0, %v2027
          %v2029 = vpop.f32.mrb[0].mxu0
          %v2030 = vpop.f32.mrb[0].mxu0
          %v2031 = vadd.f32 0.0, %v2030
          %v2032 = vpop.f32.mrb[0].mxu0
          %2033 = vdwg.mxu0
          %v2034 = vpack.c.bf16 %v2007, %v2004
          %v2035 = vpack.c.bf16 %v2015, %v2012
          %v2036 = vpack.c.bf16 %v2023, %v2020
          %v2037 = vpack.c.bf16 %v2031, %v2028
          %s2038 = scalar_lea.vmem [#allocation4], 32
          %2039 = vst [vmem:[%s2038] sm:$0xff] %v2034
          %2040 = vst [vmem:[%s2038 + $0x8] sm:$0xff] %v2035
          %2041 = vst [vmem:[%s2038 + $0x10] sm:$0xff] %v2036
          %2042 = vst [vmem:[%s2038 + $0x18] sm:$0xff] %v2037
        $region112: #{tpu_custom_call.1} parent=75 // pred_fallthru
          _
        %s2043 = smul.u32 %s40, 64
        %s2044 = sshra.s32 %s2043, 3
        %s2045 = sand.u32 %s2043, 7
        %s2046 = smul.u32 %s2044, 2
        %s2047 = smul.addr %s2046, 8
        %s2048 = scalar_lea.vmem %s527, %s2047 [#allocation6]
        %v2049 = vld [vmem:[%s2048] sm:$0xff]
        %v2050 = vld [vmem:[%s2048 + $0x8] sm:$0xff]
        %v2051 = vld [vmem:[%s2048 + $0x10] sm:$0xff]
        %v2052 = vld [vmem:[%s2048 + $0x18] sm:$0xff]
        %v2053 = vld [vmem:[%s2048 + $0x20] sm:$0xff]
        %v2054 = vld [vmem:[%s2048 + $0x28] sm:$0xff]
        %v2055 = vld [vmem:[%s2048 + $0x30] sm:$0xff]
        %v2056 = vld [vmem:[%s2048 + $0x38] sm:$0xff]
        %v2057 = vld [vmem:[%s2048 + $0x40] sm:$0xff]
        %v2058 = vld [vmem:[%s2048 + $0x48] sm:$0xff]
        %v2059 = vld [vmem:[%s2048 + $0x50] sm:$0xff]
        %v2060 = vld [vmem:[%s2048 + $0x58] sm:$0xff]
        %v2061 = vld [vmem:[%s2048 + $0x60] sm:$0xff]
        %v2062 = vld [vmem:[%s2048 + $0x68] sm:$0xff]
        %v2063 = vld [vmem:[%s2048 + $0x70] sm:$0xff]
        %v2064 = vld [vmem:[%s2048 + $0x78] sm:$0xff]
        %s2065 = sshra.s32 %s2043, 4
        %s2066 = sand.u32 %s2043, 15
        %s2067 = smul.addr %s2065, 8
        %s2068 = scalar_lea.vmem [#allocation2], %s2067
        %v2069 = vld [vmem:[%s2068] sm:$0xff]
        %v2070 = vld [vmem:[%s2068 + $0x8] sm:$0xff]
        %v2071 = vld [vmem:[%s2068 + $0x10] sm:$0xff]
        %v2072 = vld [vmem:[%s2068 + $0x18] sm:$0xff]
        %v2073 = vld [vmem:[#allocation3] sm:$0xff]
        %v2074 = vld [vmem:[#allocation3 + $0x8] sm:$0xff]
        %v2075 = vld [vmem:[#allocation3 + $0x10] sm:$0xff]
        %v2076 = vld [vmem:[#allocation3 + $0x18] sm:$0xff]
        %v2077 = vld [vmem:[#allocation4] sm:$0xff]
        %v2078 = vld [vmem:[#allocation4 + $0x8] sm:$0xff]
        %v2079 = vld [vmem:[#allocation4 + $0x10] sm:$0xff]
        %v2080 = vld [vmem:[#allocation4 + $0x18] sm:$0xff]
        %2081 = vmatprep.subr.bf16.mxu0 0
        %2082 = vmatpush1.bf16.xpose.msra.mxu0 %v2073
        %2083 = vmatprep.subr.bf16.mxu0 0
        %2084 = vmatpush1.bf16.xpose.msra.mxu0 %v2074
        %2085 = vmatprep.subr.bf16.mxu0 0
        %2086 = vmatpush1.bf16.xpose.msra.mxu0 %v2075
        %2087 = vmatprep.subr.bf16.mxu0 0
        %2088 = vmatpush1.bf16.xpose.msra.mxu0 %v2076
        %2089 = vmatprep.subr.bf16.mxu0 0
        %2090 = vmatpush1.bf16.xpose.msra.mxu0 0
        %2091 = vmatprep.subr.bf16.mxu0 0
        %2092 = vmatpush1.bf16.xpose.msra.mxu0 0
        %2093 = vmatprep.subr.bf16.mxu0 0
        %2094 = vmatpush1.bf16.xpose.msra.mxu0 0
        %2095 = vmatprep.subr.bf16.mxu0 0
        %2096 = vmatpush1.bf16.xpose.msra.mxu0 0
        %2097 = vmatprep.subr.bf16.mxu0 0
        %2098 = vmatpush1.bf16.xpose.msra.mxu0 0
        %2099 = vmatprep.subr.bf16.mxu0 0
        %2100 = vmatpush1.bf16.xpose.msra.mxu0 0
        %2101 = vmatprep.subr.bf16.mxu0 0
        %2102 = vmatpush1.bf16.xpose.msra.mxu0 0
        %2103 = vmatprep.subr.bf16.mxu0 0
        %2104 = vmatpush1.bf16.xpose.msra.mxu0 0
        %2105 = vmatprep.subr.bf16.mxu0 0
        %2106 = vmatpush1.bf16.xpose.msra.mxu0 0
        %2107 = vmatprep.subr.bf16.mxu0 0
        %2108 = vmatpush1.bf16.xpose.msra.mxu0 0
        %2109 = vmatprep.subr.bf16.mxu0 0
        %2110 = vmatpush1.bf16.xpose.msra.mxu0 0
        %2111 = vmatprep.subr.bf16.mxu0 0
        %2112 = vmatpush1.bf16.xpose.msra.mxu0 0
        %2113 = vmatprep.mubr.bf16.mxu0 0
        %2114 = vmatmul.mubr.bf16.gmra.mrb[0].mxu0 %v2069
        %v2115 = vpop.f32.mrb[0].mxu0
        %v2116 = vadd.f32 0.0, %v2115
        %v2117 = vpop.f32.mrb[0].mxu0
        %v2118 = vpop.f32.mrb[0].mxu0
        %v2119 = vadd.f32 0.0, %v2118
        %v2120 = vpop.f32.mrb[0].mxu0
        %2121 = vmatprep.mubr.bf16.mxu0 0
        %2122 = vmatmul.mubr.bf16.gmra.mrb[0].mxu0 %v2070
        %v2123 = vpop.f32.mrb[0].mxu0
        %v2124 = vadd.f32 0.0, %v2123
        %v2125 = vpop.f32.mrb[0].mxu0
        %v2126 = vpop.f32.mrb[0].mxu0
        %v2127 = vadd.f32 0.0, %v2126
        %v2128 = vpop.f32.mrb[0].mxu0
        %2129 = vmatprep.mubr.bf16.mxu0 0
        %2130 = vmatmul.mubr.bf16.gmra.mrb[0].mxu0 %v2071
        %v2131 = vpop.f32.mrb[0].mxu0
        %v2132 = vadd.f32 0.0, %v2131
        %v2133 = vpop.f32.mrb[0].mxu0
        %v2134 = vpop.f32.mrb[0].mxu0
        %v2135 = vadd.f32 0.0, %v2134
        %v2136 = vpop.f32.mrb[0].mxu0
        %2137 = vmatprep.mubr.bf16.mxu0 0
        %2138 = vmatmul.mubr.bf16.gmra.mrb[0].mxu0 %v2072
        %v2139 = vpop.f32.mrb[0].mxu0
        %v2140 = vadd.f32 0.0, %v2139
        %v2141 = vpop.f32.mrb[0].mxu0
        %v2142 = vpop.f32.mrb[0].mxu0
        %v2143 = vadd.f32 0.0, %v2142
        %v2144 = vpop.f32.mrb[0].mxu0
        %2145 = vdwg.mxu0
        %vm2146 = vcmask 523264
        %v2147 = vsel %vm2146, %v2116, -inf
        %2148 = vmax.xlane.f32.xlu0 %v2147
        %v2149 = vpop.xlane.xlu0 %2148
        %v2150 = vsel %vm2146, %v2119, -inf
        %2151 = vmax.xlane.f32.xlu0 %v2150
        %v2152 = vpop.xlane.xlu0 %2151
        %v2153 = vsel %vm2146, %v2124, -inf
        %2154 = vmax.xlane.f32.xlu0 %v2153
        %v2155 = vpop.xlane.xlu0 %2154
        %v2156 = vsel %vm2146, %v2127, -inf
        %2157 = vmax.xlane.f32.xlu0 %v2156
        %v2158 = vpop.xlane.xlu0 %2157
        %v2159 = vsel %vm2146, %v2132, -inf
        %2160 = vmax.xlane.f32.xlu0 %v2159
        %v2161 = vpop.xlane.xlu0 %2160
        %v2162 = vsel %vm2146, %v2135, -inf
        %2163 = vmax.xlane.f32.xlu0 %v2162
        %v2164 = vpop.xlane.xlu0 %2163
        %v2165 = vsel %vm2146, %v2140, -inf
        %2166 = vmax.xlane.f32.xlu0 %v2165
        %v2167 = vpop.xlane.xlu0 %2166
        %v2168 = vsel %vm2146, %v2143, -inf
        %2169 = vmax.xlane.f32.xlu0 %v2168
        %v2170 = vpop.xlane.xlu0 %2169
        %v2171 = vsub.f32 %v2116, %v2149
        %v2172 = vsub.f32 %v2119, %v2152
        %v2173 = vsub.f32 %v2124, %v2155
        %v2174 = vsub.f32 %v2127, %v2158
        %v2175 = vsub.f32 %v2132, %v2161
        %v2176 = vsub.f32 %v2135, %v2164
        %v2177 = vsub.f32 %v2140, %v2167
        %v2178 = vsub.f32 %v2143, %v2170
        %v2179 = vmul.f32 %v2171, 1.442695
        %v2180 = vpow.pop %v2179
        %v2181 = vmul.f32 %v2172, 1.442695
        %v2182 = vpow.pop %v2181
        %v2183 = vmul.f32 %v2173, 1.442695
        %v2184 = vpow.pop %v2183
        %v2185 = vmul.f32 %v2174, 1.442695
        %v2186 = vpow.pop %v2185
        %v2187 = vmul.f32 %v2175, 1.442695
        %v2188 = vpow.pop %v2187
        %v2189 = vmul.f32 %v2176, 1.442695
        %v2190 = vpow.pop %v2189
        %v2191 = vmul.f32 %v2177, 1.442695
        %v2192 = vpow.pop %v2191
        %v2193 = vmul.f32 %v2178, 1.442695
        %v2194 = vpow.pop %v2193
        %v2195 = vsel %vm2146, %v2180, 0.0
        %2196 = vadd.xlane.f32.xlu0 %v2195
        %v2197 = vpop.xlane.xlu0 %2196
        %v2198 = vsel %vm2146, %v2182, 0.0
        %2199 = vadd.xlane.f32.xlu0 %v2198
        %v2200 = vpop.xlane.xlu0 %2199
        %v2201 = vsel %vm2146, %v2184, 0.0
        %2202 = vadd.xlane.f32.xlu0 %v2201
        %v2203 = vpop.xlane.xlu0 %2202
        %v2204 = vsel %vm2146, %v2186, 0.0
        %2205 = vadd.xlane.f32.xlu0 %v2204
        %v2206 = vpop.xlane.xlu0 %2205
        %v2207 = vsel %vm2146, %v2188, 0.0
        %2208 = vadd.xlane.f32.xlu0 %v2207
        %v2209 = vpop.xlane.xlu0 %2208
        %v2210 = vsel %vm2146, %v2190, 0.0
        %2211 = vadd.xlane.f32.xlu0 %v2210
        %v2212 = vpop.xlane.xlu0 %2211
        %v2213 = vsel %vm2146, %v2192, 0.0
        %2214 = vadd.xlane.f32.xlu0 %v2213
        %v2215 = vpop.xlane.xlu0 %2214
        %v2216 = vsel %vm2146, %v2194, 0.0
        %2217 = vadd.xlane.f32.xlu0 %v2216
        %v2218 = vpop.xlane.xlu0 %2217
        %v2219 = vrcp.pop %v2197
        %v2220 = vrcp.pop %v2200
        %v2221 = vrcp.pop %v2203
        %v2222 = vrcp.pop %v2206
        %v2223 = vrcp.pop %v2209
        %v2224 = vrcp.pop %v2212
        %v2225 = vrcp.pop %v2215
        %v2226 = vrcp.pop %v2218
        %v2227 = vmul.f32 %v2180, %v2219
        %v2228 = vmul.f32 %v2182, %v2220
        %v2229 = vmul.f32 %v2184, %v2221
        %v2230 = vmul.f32 %v2186, %v2222
        %v2231 = vmul.f32 %v2188, %v2223
        %v2232 = vmul.f32 %v2190, %v2224
        %v2233 = vmul.f32 %v2192, %v2225
        %v2234 = vmul.f32 %v2194, %v2226
        %v2235 = vpack.c.bf16 %v2228, %v2227
        %v2236 = vpack.c.bf16 %v2230, %v2229
        %v2237 = vpack.c.bf16 %v2232, %v2231
        %v2238 = vpack.c.bf16 %v2234, %v2233
        %v2240 = vsel %vm2146, %v2235, 0
        %v2243 = vsel %vm2146, %v2236, 0
        %v2246 = vsel %vm2146, %v2237, 0
        %v2249 = vsel %vm2146, %v2238, 0
        %2251 = vmatprep.subr.bf16.mxu0 0
        %2252 = vmatpush1.bf16.msra.mxu0 %v2077
        %2253 = vmatprep.subr.bf16.mxu0 0
        %2254 = vmatpush1.bf16.msra.mxu0 %v2078
        %2255 = vmatprep.subr.bf16.mxu0 0
        %2256 = vmatpush1.bf16.msra.mxu0 %v2079
        %2257 = vmatprep.subr.bf16.mxu0 0
        %2258 = vmatpush1.bf16.msra.mxu0 %v2080
        %2259 = vmatprep.subr.bf16.mxu0 0
        %2260 = vmatpush1.bf16.msra.mxu0 0
        %2261 = vmatprep.subr.bf16.mxu0 0
        %2262 = vmatpush1.bf16.msra.mxu0 0
        %2263 = vmatprep.subr.bf16.mxu0 0
        %2264 = vmatpush1.bf16.msra.mxu0 0
        %2265 = vmatprep.subr.bf16.mxu0 0
        %2266 = vmatpush1.bf16.msra.mxu0 0
        %2267 = vmatprep.subr.bf16.mxu0 0
        %2268 = vmatpush1.bf16.msra.mxu0 0
        %2269 = vmatprep.subr.bf16.mxu0 0
        %2270 = vmatpush1.bf16.msra.mxu0 0
        %2271 = vmatprep.subr.bf16.mxu0 0
        %2272 = vmatpush1.bf16.msra.mxu0 0
        %2273 = vmatprep.subr.bf16.mxu0 0
        %2274 = vmatpush1.bf16.msra.mxu0 0
        %2275 = vmatprep.subr.bf16.mxu0 0
        %2276 = vmatpush1.bf16.msra.mxu0 0
        %2277 = vmatprep.subr.bf16.mxu0 0
        %2278 = vmatpush1.bf16.msra.mxu0 0
        %2279 = vmatprep.subr.bf16.mxu0 0
        %2280 = vmatpush1.bf16.msra.mxu0 0
        %2281 = vmatprep.subr.bf16.mxu0 0
        %2282 = vmatpush1.bf16.msra.mxu0 0
        %2283 = vmatprep.mubr.bf16.mxu0 0
        %2284 = vmatmul.mubr.bf16.gmra.mrb[0].mxu0 %v2240
        %v2285 = vpop.f32.mrb[0].mxu0
        %v2286 = vadd.f32 0.0, %v2285
        %v2287 = vpop.f32.mrb[0].mxu0
        %v2288 = vpop.f32.mrb[0].mxu0
        %v2289 = vadd.f32 0.0, %v2288
        %v2290 = vpop.f32.mrb[0].mxu0
        %2291 = vmatprep.mubr.bf16.mxu0 0
        %2292 = vmatmul.mubr.bf16.gmra.mrb[0].mxu0 %v2243
        %v2293 = vpop.f32.mrb[0].mxu0
        %v2294 = vadd.f32 0.0, %v2293
        %v2295 = vpop.f32.mrb[0].mxu0
        %v2296 = vpop.f32.mrb[0].mxu0
        %v2297 = vadd.f32 0.0, %v2296
        %v2298 = vpop.f32.mrb[0].mxu0
        %2299 = vmatprep.mubr.bf16.mxu0 0
        %2300 = vmatmul.mubr.bf16.gmra.mrb[0].mxu0 %v2246
        %v2301 = vpop.f32.mrb[0].mxu0
        %v2302 = vadd.f32 0.0, %v2301
        %v2303 = vpop.f32.mrb[0].mxu0
        %v2304 = vpop.f32.mrb[0].mxu0
        %v2305 = vadd.f32 0.0, %v2304
        %v2306 = vpop.f32.mrb[0].mxu0
        %2307 = vmatprep.mubr.bf16.mxu0 0
        %2308 = vmatmul.mubr.bf16.gmra.mrb[0].mxu0 %v2249
        %v2309 = vpop.f32.mrb[0].mxu0
        %v2310 = vadd.f32 0.0, %v2309
        %v2311 = vpop.f32.mrb[0].mxu0
        %v2312 = vpop.f32.mrb[0].mxu0
        %v2313 = vadd.f32 0.0, %v2312
        %v2314 = vpop.f32.mrb[0].mxu0
        %2315 = vdwg.mxu0
        %v2316 = vpack.c.bf16 %v2289, %v2286
        %v2317 = vpack.c.bf16 %v2297, %v2294
        %v2318 = vpack.c.bf16 %v2305, %v2302
        %v2319 = vpack.c.bf16 %v2313, %v2310
        %2320 = vst [vmem:[#allocation5] sm:$0xff] %v2316
        %2321 = vst [vmem:[#allocation5 + $0x10] sm:$0xff] %v2317
        %2322 = vst [vmem:[#allocation5 + $0x20] sm:$0xff] %v2318
        %2323 = vst [vmem:[#allocation5 + $0x30] sm:$0xff] %v2319
        %s2324 = sadd.s32 %s2065, 4
        %s2325 = smul.addr %s2324, 8
        %s2326 = scalar_lea.vmem [#allocation2], %s2325
        %v2327 = vld [vmem:[%s2326] sm:$0xff]
        %v2328 = vld [vmem:[%s2326 + $0x8] sm:$0xff]
        %v2329 = vld [vmem:[%s2326 + $0x10] sm:$0xff]
        %v2330 = vld [vmem:[%s2326 + $0x18] sm:$0xff]
        %s2331 = scalar_lea.vmem [#allocation3], 32
        %v2332 = vld [vmem:[%s2331] sm:$0xff]
        %v2333 = vld [vmem:[%s2331 + $0x8] sm:$0xff]
        %v2334 = vld [vmem:[%s2331 + $0x10] sm:$0xff]
        %v2335 = vld [vmem:[%s2331 + $0x18] sm:$0xff]
        %s2336 = scalar_lea.vmem [#allocation4], 32
        %v2337 = vld [vmem:[%s2336] sm:$0xff]
        %v2338 = vld [vmem:[%s2336 + $0x8] sm:$0xff]
        %v2339 = vld [vmem:[%s2336 + $0x10] sm:$0xff]
        %v2340 = vld [vmem:[%s2336 + $0x18] sm:$0xff]
        %2341 = vmatprep.subr.bf16.mxu0 0
        %2342 = vmatpush1.bf16.xpose.msra.mxu0 %v2332
        %2343 = vmatprep.subr.bf16.mxu0 0
        %2344 = vmatpush1.bf16.xpose.msra.mxu0 %v2333
        %2345 = vmatprep.subr.bf16.mxu0 0
        %2346 = vmatpush1.bf16.xpose.msra.mxu0 %v2334
        %2347 = vmatprep.subr.bf16.mxu0 0
        %2348 = vmatpush1.bf16.xpose.msra.mxu0 %v2335
        %2349 = vmatprep.subr.bf16.mxu0 0
        %2350 = vmatpush1.bf16.xpose.msra.mxu0 0
        %2351 = vmatprep.subr.bf16.mxu0 0
        %2352 = vmatpush1.bf16.xpose.msra.mxu0 0
        %2353 = vmatprep.subr.bf16.mxu0 0
        %2354 = vmatpush1.bf16.xpose.msra.mxu0 0
        %2355 = vmatprep.subr.bf16.mxu0 0
        %2356 = vmatpush1.bf16.xpose.msra.mxu0 0
        %2357 = vmatprep.subr.bf16.mxu0 0
        %2358 = vmatpush1.bf16.xpose.msra.mxu0 0
        %2359 = vmatprep.subr.bf16.mxu0 0
        %2360 = vmatpush1.bf16.xpose.msra.mxu0 0
        %2361 = vmatprep.subr.bf16.mxu0 0
        %2362 = vmatpush1.bf16.xpose.msra.mxu0 0
        %2363 = vmatprep.subr.bf16.mxu0 0
        %2364 = vmatpush1.bf16.xpose.msra.mxu0 0
        %2365 = vmatprep.subr.bf16.mxu0 0
        %2366 = vmatpush1.bf16.xpose.msra.mxu0 0
        %2367 = vmatprep.subr.bf16.mxu0 0
        %2368 = vmatpush1.bf16.xpose.msra.mxu0 0
        %2369 = vmatprep.subr.bf16.mxu0 0
        %2370 = vmatpush1.bf16.xpose.msra.mxu0 0
        %2371 = vmatprep.subr.bf16.mxu0 0
        %2372 = vmatpush1.bf16.xpose.msra.mxu0 0
        %2373 = vmatprep.mubr.bf16.mxu0 0
        %2374 = vmatmul.mubr.bf16.gmra.mrb[0].mxu0 %v2327
        %v2375 = vpop.f32.mrb[0].mxu0
        %v2376 = vadd.f32 0.0, %v2375
        %v2377 = vpop.f32.mrb[0].mxu0
        %v2378 = vpop.f32.mrb[0].mxu0
        %v2379 = vadd.f32 0.0, %v2378
        %v2380 = vpop.f32.mrb[0].mxu0
        %2381 = vmatprep.mubr.bf16.mxu0 0
        %2382 = vmatmul.mubr.bf16.gmra.mrb[0].mxu0 %v2328
        %v2383 = vpop.f32.mrb[0].mxu0
        %v2384 = vadd.f32 0.0, %v2383
        %v2385 = vpop.f32.mrb[0].mxu0
        %v2386 = vpop.f32.mrb[0].mxu0
        %v2387 = vadd.f32 0.0, %v2386
        %v2388 = vpop.f32.mrb[0].mxu0
        %2389 = vmatprep.mubr.bf16.mxu0 0
        %2390 = vmatmul.mubr.bf16.gmra.mrb[0].mxu0 %v2329
        %v2391 = vpop.f32.mrb[0].mxu0
        %v2392 = vadd.f32 0.0, %v2391
        %v2393 = vpop.f32.mrb[0].mxu0
        %v2394 = vpop.f32.mrb[0].mxu0
        %v2395 = vadd.f32 0.0, %v2394
        %v2396 = vpop.f32.mrb[0].mxu0
        %2397 = vmatprep.mubr.bf16.mxu0 0
        %2398 = vmatmul.mubr.bf16.gmra.mrb[0].mxu0 %v2330
        %v2399 = vpop.f32.mrb[0].mxu0
        %v2400 = vadd.f32 0.0, %v2399
        %v2401 = vpop.f32.mrb[0].mxu0
        %v2402 = vpop.f32.mrb[0].mxu0
        %v2403 = vadd.f32 0.0, %v2402
        %v2404 = vpop.f32.mrb[0].mxu0
        %2405 = vdwg.mxu0
        %v2406 = vsel %vm2146, %v2376, -inf
        %2407 = vmax.xlane.f32.xlu0 %v2406
        %v2408 = vpop.xlane.xlu0 %2407
        %v2409 = vsel %vm2146, %v2379, -inf
        %2410 = vmax.xlane.f32.xlu0 %v2409
        %v2411 = vpop.xlane.xlu0 %2410
        %v2412 = vsel %vm2146, %v2384, -inf
        %2413 = vmax.xlane.f32.xlu0 %v2412
        %v2414 = vpop.xlane.xlu0 %2413
        %v2415 = vsel %vm2146, %v2387, -inf
        %2416 = vmax.xlane.f32.xlu0 %v2415
        %v2417 = vpop.xlane.xlu0 %2416
        %v2418 = vsel %vm2146, %v2392, -inf
        %2419 = vmax.xlane.f32.xlu0 %v2418
        %v2420 = vpop.xlane.xlu0 %2419
        %v2421 = vsel %vm2146, %v2395, -inf
        %2422 = vmax.xlane.f32.xlu0 %v2421
        %v2423 = vpop.xlane.xlu0 %2422
        %v2424 = vsel %vm2146, %v2400, -inf
        %2425 = vmax.xlane.f32.xlu0 %v2424
        %v2426 = vpop.xlane.xlu0 %2425
        %v2427 = vsel %vm2146, %v2403, -inf
        %2428 = vmax.xlane.f32.xlu0 %v2427
        %v2429 = vpop.xlane.xlu0 %2428
        %v2430 = vsub.f32 %v2376, %v2408
        %v2431 = vsub.f32 %v2379, %v2411
        %v2432 = vsub.f32 %v2384, %v2414
        %v2433 = vsub.f32 %v2387, %v2417
        %v2434 = vsub.f32 %v2392, %v2420
        %v2435 = vsub.f32 %v2395, %v2423
        %v2436 = vsub.f32 %v2400, %v2426
        %v2437 = vsub.f32 %v2403, %v2429
        %v2438 = vmul.f32 %v2430, 1.442695
        %v2439 = vpow.pop %v2438
        %v2440 = vmul.f32 %v2431, 1.442695
        %v2441 = vpow.pop %v2440
        %v2442 = vmul.f32 %v2432, 1.442695
        %v2443 = vpow.pop %v2442
        %v2444 = vmul.f32 %v2433, 1.442695
        %v2445 = vpow.pop %v2444
        %v2446 = vmul.f32 %v2434, 1.442695
        %v2447 = vpow.pop %v2446
        %v2448 = vmul.f32 %v2435, 1.442695
        %v2449 = vpow.pop %v2448
        %v2450 = vmul.f32 %v2436, 1.442695
        %v2451 = vpow.pop %v2450
        %v2452 = vmul.f32 %v2437, 1.442695
        %v2453 = vpow.pop %v2452
        %v2454 = vsel %vm2146, %v2439, 0.0
        %2455 = vadd.xlane.f32.xlu0 %v2454
        %v2456 = vpop.xlane.xlu0 %2455
        %v2457 = vsel %vm2146, %v2441, 0.0
        %2458 = vadd.xlane.f32.xlu0 %v2457
        %v2459 = vpop.xlane.xlu0 %2458
        %v2460 = vsel %vm2146, %v2443, 0.0
        %2461 = vadd.xlane.f32.xlu0 %v2460
        %v2462 = vpop.xlane.xlu0 %2461
        %v2463 = vsel %vm2146, %v2445, 0.0
        %2464 = vadd.xlane.f32.xlu0 %v2463
        %v2465 = vpop.xlane.xlu0 %2464
        %v2466 = vsel %vm2146, %v2447, 0.0
        %2467 = vadd.xlane.f32.xlu0 %v2466
        %v2468 = vpop.xlane.xlu0 %2467
        %v2469 = vsel %vm2146, %v2449, 0.0
        %2470 = vadd.xlane.f32.xlu0 %v2469
        %v2471 = vpop.xlane.xlu0 %2470
        %v2472 = vsel %vm2146, %v2451, 0.0
        %2473 = vadd.xlane.f32.xlu0 %v2472
        %v2474 = vpop.xlane.xlu0 %2473
        %v2475 = vsel %vm2146, %v2453, 0.0
        %2476 = vadd.xlane.f32.xlu0 %v2475
        %v2477 = vpop.xlane.xlu0 %2476
        %v2478 = vrcp.pop %v2456
        %v2479 = vrcp.pop %v2459
        %v2480 = vrcp.pop %v2462
        %v2481 = vrcp.pop %v2465
        %v2482 = vrcp.pop %v2468
        %v2483 = vrcp.pop %v2471
        %v2484 = vrcp.pop %v2474
        %v2485 = vrcp.pop %v2477
        %v2486 = vmul.f32 %v2439, %v2478
        %v2487 = vmul.f32 %v2441, %v2479
        %v2488 = vmul.f32 %v2443, %v2480
        %v2489 = vmul.f32 %v2445, %v2481
        %v2490 = vmul.f32 %v2447, %v2482
        %v2491 = vmul.f32 %v2449, %v2483
        %v2492 = vmul.f32 %v2451, %v2484
        %v2493 = vmul.f32 %v2453, %v2485
        %v2494 = vpack.c.bf16 %v2487, %v2486
        %v2495 = vpack.c.bf16 %v2489, %v2488
        %v2496 = vpack.c.bf16 %v2491, %v2490
        %v2497 = vpack.c.bf16 %v2493, %v2492
        %v2499 = vsel %vm2146, %v2494, 0
        %v2502 = vsel %vm2146, %v2495, 0
        %v2505 = vsel %vm2146, %v2496, 0
        %v2508 = vsel %vm2146, %v2497, 0
        %2510 = vmatprep.subr.bf16.mxu0 0
        %2511 = vmatpush1.bf16.msra.mxu0 %v2337
        %2512 = vmatprep.subr.bf16.mxu0 0
        %2513 = vmatpush1.bf16.msra.mxu0 %v2338
        %2514 = vmatprep.subr.bf16.mxu0 0
        %2515 = vmatpush1.bf16.msra.mxu0 %v2339
        %2516 = vmatprep.subr.bf16.mxu0 0
        %2517 = vmatpush1.bf16.msra.mxu0 %v2340
        %2518 = vmatprep.subr.bf16.mxu0 0
        %2519 = vmatpush1.bf16.msra.mxu0 0
        %2520 = vmatprep.subr.bf16.mxu0 0
        %2521 = vmatpush1.bf16.msra.mxu0 0
        %2522 = vmatprep.subr.bf16.mxu0 0
        %2523 = vmatpush1.bf16.msra.mxu0 0
        %2524 = vmatprep.subr.bf16.mxu0 0
        %2525 = vmatpush1.bf16.msra.mxu0 0
        %2526 = vmatprep.subr.bf16.mxu0 0
        %2527 = vmatpush1.bf16.msra.mxu0 0
        %2528 = vmatprep.subr.bf16.mxu0 0
        %2529 = vmatpush1.bf16.msra.mxu0 0
        %2530 = vmatprep.subr.bf16.mxu0 0
        %2531 = vmatpush1.bf16.msra.mxu0 0
        %2532 = vmatprep.subr.bf16.mxu0 0
        %2533 = vmatpush1.bf16.msra.mxu0 0
        %2534 = vmatprep.subr.bf16.mxu0 0
        %2535 = vmatpush1.bf16.msra.mxu0 0
        %2536 = vmatprep.subr.bf16.mxu0 0
        %2537 = vmatpush1.bf16.msra.mxu0 0
        %2538 = vmatprep.subr.bf16.mxu0 0
        %2539 = vmatpush1.bf16.msra.mxu0 0
        %2540 = vmatprep.subr.bf16.mxu0 0
        %2541 = vmatpush1.bf16.msra.mxu0 0
        %2542 = vmatprep.mubr.bf16.mxu0 0
        %2543 = vmatmul.mubr.bf16.gmra.mrb[0].mxu0 %v2499
        %v2544 = vpop.f32.mrb[0].mxu0
        %v2545 = vadd.f32 0.0, %v2544
        %v2546 = vpop.f32.mrb[0].mxu0
        %v2547 = vpop.f32.mrb[0].mxu0
        %v2548 = vadd.f32 0.0, %v2547
        %v2549 = vpop.f32.mrb[0].mxu0
        %2550 = vmatprep.mubr.bf16.mxu0 0
        %2551 = vmatmul.mubr.bf16.gmra.mrb[0].mxu0 %v2502
        %v2552 = vpop.f32.mrb[0].mxu0
        %v2553 = vadd.f32 0.0, %v2552
        %v2554 = vpop.f32.mrb[0].mxu0
        %v2555 = vpop.f32.mrb[0].mxu0
        %v2556 = vadd.f32 0.0, %v2555
        %v2557 = vpop.f32.mrb[0].mxu0
        %2558 = vmatprep.mubr.bf16.mxu0 0
        %2559 = vmatmul.mubr.bf16.gmra.mrb[0].mxu0 %v2505
        %v2560 = vpop.f32.mrb[0].mxu0
        %v2561 = vadd.f32 0.0, %v2560
        %v2562 = vpop.f32.mrb[0].mxu0
        %v2563 = vpop.f32.mrb[0].mxu0
        %v2564 = vadd.f32 0.0, %v2563
        %v2565 = vpop.f32.mrb[0].mxu0
        %2566 = vmatprep.mubr.bf16.mxu0 0
        %2567 = vmatmul.mubr.bf16.gmra.mrb[0].mxu0 %v2508
        %v2568 = vpop.f32.mrb[0].mxu0
        %v2569 = vadd.f32 0.0, %v2568
        %v2570 = vpop.f32.mrb[0].mxu0
        %v2571 = vpop.f32.mrb[0].mxu0
        %v2572 = vadd.f32 0.0, %v2571
        %v2573 = vpop.f32.mrb[0].mxu0
        %2574 = vdwg.mxu0
        %v2575 = vpack.c.bf16 %v2548, %v2545
        %v2576 = vpack.c.bf16 %v2556, %v2553
        %v2577 = vpack.c.bf16 %v2564, %v2561
        %v2578 = vpack.c.bf16 %v2572, %v2569
        %2579 = vst [vmem:[#allocation5 + $0x8] sm:$0xff] %v2575
        %2580 = vst [vmem:[#allocation5 + $0x18] sm:$0xff] %v2576
        %2581 = vst [vmem:[#allocation5 + $0x28] sm:$0xff] %v2577
        %2582 = vst [vmem:[#allocation5 + $0x38] sm:$0xff] %v2578
        %v2583 = vld [vmem:[#allocation5] sm:$0xff]
        %v2584 = vld [vmem:[#allocation5 + $0x8] sm:$0xff]
        %v2585 = vld [vmem:[#allocation5 + $0x10] sm:$0xff]
        %v2586 = vld [vmem:[#allocation5 + $0x18] sm:$0xff]
        %v2587 = vld [vmem:[#allocation5 + $0x20] sm:$0xff]
        %v2588 = vld [vmem:[#allocation5 + $0x28] sm:$0xff]
        %v2589 = vld [vmem:[#allocation5 + $0x30] sm:$0xff]
        %v2590 = vld [vmem:[#allocation5 + $0x38] sm:$0xff]
        %v2591 = vld [vmem:[#allocation15] sm:$0xff]
        %v2592 = vld [vmem:[#allocation15 + $0x8] sm:$0xff]
        %v2593 = vld [vmem:[#allocation15 + $0x10] sm:$0xff]
        %v2594 = vld [vmem:[#allocation15 + $0x18] sm:$0xff]
        %v2595 = vld [vmem:[#allocation15 + $0x20] sm:$0xff]
        %v2596 = vld [vmem:[#allocation15 + $0x28] sm:$0xff]
        %v2597 = vld [vmem:[#allocation15 + $0x30] sm:$0xff]
        %v2598 = vld [vmem:[#allocation15 + $0x38] sm:$0xff]
        %v2599 = vld [vmem:[#allocation15 + $0x40] sm:$0xff]
        %v2600 = vld [vmem:[#allocation15 + $0x48] sm:$0xff]
        %v2601 = vld [vmem:[#allocation15 + $0x50] sm:$0xff]
        %v2602 = vld [vmem:[#allocation15 + $0x58] sm:$0xff]
        %v2603 = vld [vmem:[#allocation15 + $0x60] sm:$0xff]
        %v2604 = vld [vmem:[#allocation15 + $0x68] sm:$0xff]
        %v2605 = vld [vmem:[#allocation15 + $0x70] sm:$0xff]
        %v2606 = vld [vmem:[#allocation15 + $0x78] sm:$0xff]
        %v2607 = vld [vmem:[#allocation15 + $0x80] sm:$0xff]
        %v2608 = vld [vmem:[#allocation15 + $0x88] sm:$0xff]
        %v2609 = vld [vmem:[#allocation15 + $0x90] sm:$0xff]
        %v2610 = vld [vmem:[#allocation15 + $0x98] sm:$0xff]
        %v2611 = vld [vmem:[#allocation15 + $0xa0] sm:$0xff]
        %v2612 = vld [vmem:[#allocation15 + $0xa8] sm:$0xff]
        %v2613 = vld [vmem:[#allocation15 + $0xb0] sm:$0xff]
        %v2614 = vld [vmem:[#allocation15 + $0xb8] sm:$0xff]
        %v2615 = vld [vmem:[#allocation15 + $0xc0] sm:$0xff]
        %v2616 = vld [vmem:[#allocation15 + $0xc8] sm:$0xff]
        %v2617 = vld [vmem:[#allocation15 + $0xd0] sm:$0xff]
        %v2618 = vld [vmem:[#allocation15 + $0xd8] sm:$0xff]
        %v2619 = vld [vmem:[#allocation15 + $0xe0] sm:$0xff]
        %v2620 = vld [vmem:[#allocation15 + $0xe8] sm:$0xff]
        %v2621 = vld [vmem:[#allocation15 + $0xf0] sm:$0xff]
        %v2622 = vld [vmem:[#allocation15 + $0xf8] sm:$0xff]
        %v2655 = vunpack.c.l.b16 %v2591
        %v2656 = vunpack.c.h.b16 %v2591
        %v2657 = vunpack.c.l.b16 %v2592
        %v2658 = vunpack.c.h.b16 %v2592
        %v2659 = vunpack.c.l.b16 %v2593
        %v2660 = vunpack.c.h.b16 %v2593
        %v2661 = vunpack.c.l.b16 %v2594
        %v2662 = vunpack.c.h.b16 %v2594
        %v2663 = vunpack.c.l.b16 %v2595
        %v2664 = vunpack.c.h.b16 %v2595
        %v2665 = vunpack.c.l.b16 %v2596
        %v2666 = vunpack.c.h.b16 %v2596
        %v2667 = vunpack.c.l.b16 %v2597
        %v2668 = vunpack.c.h.b16 %v2597
        %v2669 = vunpack.c.l.b16 %v2598
        %v2670 = vunpack.c.h.b16 %v2598
        %v2671 = vunpack.c.l.b16 %v2599
        %v2672 = vunpack.c.h.b16 %v2599
        %v2673 = vunpack.c.l.b16 %v2600
        %v2674 = vunpack.c.h.b16 %v2600
        %v2675 = vunpack.c.l.b16 %v2601
        %v2676 = vunpack.c.h.b16 %v2601
        %v2677 = vunpack.c.l.b16 %v2602
        %v2678 = vunpack.c.h.b16 %v2602
        %v2679 = vunpack.c.l.b16 %v2603
        %v2680 = vunpack.c.h.b16 %v2603
        %v2681 = vunpack.c.l.b16 %v2604
        %v2682 = vunpack.c.h.b16 %v2604
        %v2683 = vunpack.c.l.b16 %v2605
        %v2684 = vunpack.c.h.b16 %v2605
        %v2685 = vunpack.c.l.b16 %v2606
        %v2686 = vunpack.c.h.b16 %v2606
        %v2687 = vunpack.c.l.b16 %v2607
        %v2688 = vunpack.c.h.b16 %v2607
        %v2689 = vunpack.c.l.b16 %v2608
        %v2690 = vunpack.c.h.b16 %v2608
        %v2691 = vunpack.c.l.b16 %v2609
        %v2692 = vunpack.c.h.b16 %v2609
        %v2693 = vunpack.c.l.b16 %v2610
        %v2694 = vunpack.c.h.b16 %v2610
        %v2695 = vunpack.c.l.b16 %v2611
        %v2696 = vunpack.c.h.b16 %v2611
        %v2697 = vunpack.c.l.b16 %v2612
        %v2698 = vunpack.c.h.b16 %v2612
        %v2699 = vunpack.c.l.b16 %v2613
        %v2700 = vunpack.c.h.b16 %v2613
        %v2701 = vunpack.c.l.b16 %v2614
        %v2702 = vunpack.c.h.b16 %v2614
        %v2703 = vunpack.c.l.b16 %v2615
        %v2704 = vunpack.c.h.b16 %v2615
        %v2705 = vunpack.c.l.b16 %v2616
        %v2706 = vunpack.c.h.b16 %v2616
        %v2707 = vunpack.c.l.b16 %v2617
        %v2708 = vunpack.c.h.b16 %v2617
        %v2709 = vunpack.c.l.b16 %v2618
        %v2710 = vunpack.c.h.b16 %v2618
        %v2711 = vunpack.c.l.b16 %v2619
        %v2712 = vunpack.c.h.b16 %v2619
        %v2713 = vunpack.c.l.b16 %v2620
        %v2714 = vunpack.c.h.b16 %v2620
        %v2715 = vunpack.c.l.b16 %v2621
        %v2716 = vunpack.c.h.b16 %v2621
        %v2717 = vunpack.c.l.b16 %v2622
        %v2718 = vunpack.c.h.b16 %v2622
        %v2719 = vpack.c.b16 %v2657, %v2655
        %v2720 = vpack.c.b16 %v2658, %v2656
        %v2721 = vpack.c.b16 %v2661, %v2659
        %v2722 = vpack.c.b16 %v2662, %v2660
        %v2723 = vpack.c.b16 %v2665, %v2663
        %v2724 = vpack.c.b16 %v2666, %v2664
        %v2725 = vpack.c.b16 %v2669, %v2667
        %v2726 = vpack.c.b16 %v2670, %v2668
        %v2727 = vpack.c.b16 %v2673, %v2671
        %v2728 = vpack.c.b16 %v2674, %v2672
        %v2729 = vpack.c.b16 %v2677, %v2675
        %v2730 = vpack.c.b16 %v2678, %v2676
        %v2731 = vpack.c.b16 %v2681, %v2679
        %v2732 = vpack.c.b16 %v2682, %v2680
        %v2733 = vpack.c.b16 %v2685, %v2683
        %v2734 = vpack.c.b16 %v2686, %v2684
        %v2735 = vpack.c.b16 %v2689, %v2687
        %v2736 = vpack.c.b16 %v2690, %v2688
        %v2737 = vpack.c.b16 %v2693, %v2691
        %v2738 = vpack.c.b16 %v2694, %v2692
        %v2739 = vpack.c.b16 %v2697, %v2695
        %v2740 = vpack.c.b16 %v2698, %v2696
        %v2741 = vpack.c.b16 %v2701, %v2699
        %v2742 = vpack.c.b16 %v2702, %v2700
        %v2743 = vpack.c.b16 %v2705, %v2703
        %v2744 = vpack.c.b16 %v2706, %v2704
        %v2745 = vpack.c.b16 %v2709, %v2707
        %v2746 = vpack.c.b16 %v2710, %v2708
        %v2747 = vpack.c.b16 %v2713, %v2711
        %v2748 = vpack.c.b16 %v2714, %v2712
        %v2749 = vpack.c.b16 %v2717, %v2715
        %v2750 = vpack.c.b16 %v2718, %v2716
        %2783 = vmatprep.subr.bf16.mxu0 %v2720
        %2784 = vmatpush1.bf16.msra.mxu0 %v2719
        %2785 = vmatprep.subr.bf16.mxu0 %v2722
        %2786 = vmatpush1.bf16.msra.mxu0 %v2721
        %2787 = vmatprep.subr.bf16.mxu0 %v2724
        %2788 = vmatpush1.bf16.msra.mxu0 %v2723
        %2789 = vmatprep.subr.bf16.mxu0 %v2726
        %2790 = vmatpush1.bf16.msra.mxu0 %v2725
        %2791 = vmatprep.subr.bf16.mxu0 %v2728
        %2792 = vmatpush1.bf16.msra.mxu0 %v2727
        %2793 = vmatprep.subr.bf16.mxu0 %v2730
        %2794 = vmatpush1.bf16.msra.mxu0 %v2729
        %2795 = vmatprep.subr.bf16.mxu0 %v2732
        %2796 = vmatpush1.bf16.msra.mxu0 %v2731
        %2797 = vmatprep.subr.bf16.mxu0 %v2734
        %2798 = vmatpush1.bf16.msra.mxu0 %v2733
        %2799 = vmatprep.subr.bf16.mxu0 %v2736
        %2800 = vmatpush1.bf16.msra.mxu0 %v2735
        %2801 = vmatprep.subr.bf16.mxu0 %v2738
        %2802 = vmatpush1.bf16.msra.mxu0 %v2737
        %2803 = vmatprep.subr.bf16.mxu0 %v2740
        %2804 = vmatpush1.bf16.msra.mxu0 %v2739
        %2805 = vmatprep.subr.bf16.mxu0 %v2742
        %2806 = vmatpush1.bf16.msra.mxu0 %v2741
        %2807 = vmatprep.subr.bf16.mxu0 %v2744
        %2808 = vmatpush1.bf16.msra.mxu0 %v2743
        %2809 = vmatprep.subr.bf16.mxu0 %v2746
        %2810 = vmatpush1.bf16.msra.mxu0 %v2745
        %2811 = vmatprep.subr.bf16.mxu0 %v2748
        %2812 = vmatpush1.bf16.msra.mxu0 %v2747
        %2813 = vmatprep.subr.bf16.mxu0 %v2750
        %2814 = vmatpush1.bf16.msra.mxu0 %v2749
        %2815 = vmatprep.mubr.bf16.mxu0 %v2584
        %2816 = vmatmul.mubr.bf16.gmra.mrb[0].mxu0 %v2583
        %v2817 = vpop.f32.mrb[0].mxu0
        %v2818 = vadd.f32 0.0, %v2817
        %v2819 = vpop.f32.mrb[0].mxu0
        %v2820 = vadd.f32 0.0, %v2819
        %v2821 = vpop.f32.mrb[0].mxu0
        %v2822 = vadd.f32 0.0, %v2821
        %v2823 = vpop.f32.mrb[0].mxu0
        %v2824 = vadd.f32 0.0, %v2823
        %2825 = vmatprep.mubr.bf16.mxu0 %v2586
        %2826 = vmatmul.mubr.bf16.gmra.mrb[0].mxu0 %v2585
        %v2827 = vpop.f32.mrb[0].mxu0
        %v2828 = vadd.f32 0.0, %v2827
        %v2829 = vpop.f32.mrb[0].mxu0
        %v2830 = vadd.f32 0.0, %v2829
        %v2831 = vpop.f32.mrb[0].mxu0
        %v2832 = vadd.f32 0.0, %v2831
        %v2833 = vpop.f32.mrb[0].mxu0
        %v2834 = vadd.f32 0.0, %v2833
        %2835 = vmatprep.mubr.bf16.mxu0 %v2588
        %2836 = vmatmul.mubr.bf16.gmra.mrb[0].mxu0 %v2587
        %v2837 = vpop.f32.mrb[0].mxu0
        %v2838 = vadd.f32 0.0, %v2837
        %v2839 = vpop.f32.mrb[0].mxu0
        %v2840 = vadd.f32 0.0, %v2839
        %v2841 = vpop.f32.mrb[0].mxu0
        %v2842 = vadd.f32 0.0, %v2841
        %v2843 = vpop.f32.mrb[0].mxu0
        %v2844 = vadd.f32 0.0, %v2843
        %2845 = vmatprep.mubr.bf16.mxu0 %v2590
        %2846 = vmatmul.mubr.bf16.gmra.mrb[0].mxu0 %v2589
        %v2847 = vpop.f32.mrb[0].mxu0
        %v2848 = vadd.f32 0.0, %v2847
        %v2849 = vpop.f32.mrb[0].mxu0
        %v2850 = vadd.f32 0.0, %v2849
        %v2851 = vpop.f32.mrb[0].mxu0
        %v2852 = vadd.f32 0.0, %v2851
        %v2853 = vpop.f32.mrb[0].mxu0
        %v2854 = vadd.f32 0.0, %v2853
        %2855 = vdwg.mxu0
        %v2856 = vadd.f32 %v2049, %v2818
        %v2857 = vadd.f32 %v2050, %v2820
        %v2858 = vadd.f32 %v2051, %v2822
        %v2859 = vadd.f32 %v2052, %v2824
        %v2860 = vadd.f32 %v2053, %v2828
        %v2861 = vadd.f32 %v2054, %v2830
        %v2862 = vadd.f32 %v2055, %v2832
        %v2863 = vadd.f32 %v2056, %v2834
        %v2864 = vadd.f32 %v2057, %v2838
        %v2865 = vadd.f32 %v2058, %v2840
        %v2866 = vadd.f32 %v2059, %v2842
        %v2867 = vadd.f32 %v2060, %v2844
        %v2868 = vadd.f32 %v2061, %v2848
        %v2869 = vadd.f32 %v2062, %v2850
        %v2870 = vadd.f32 %v2063, %v2852
        %v2871 = vadd.f32 %v2064, %v2854
        %v2872 = vld [vmem:[%s7] sm:$0x3]
        %v2874 = vlaneseq
        %v2875 = vshrl.u32 %v2874, 7
        %v2876 = vsub.s32 0, %v2875
        %v2877 = vrot.slane %v2872, %v2876
        %v2878 = vlaneseq
        %v2879 = vshrl.u32 %v2878, 7
        %v2880 = vsub.s32 1, %v2879
        %v2881 = vrot.slane %v2872, %v2880
        %v2884 = vadd.f32 %v2856, %v2877
        %v2885 = vadd.f32 %v2857, %v2881
        %v2886 = vadd.f32 %v2858, %v2877
        %v2887 = vadd.f32 %v2859, %v2881
        %v2888 = vadd.f32 %v2860, %v2877
        %v2889 = vadd.f32 %v2861, %v2881
        %v2890 = vadd.f32 %v2862, %v2877
        %v2891 = vadd.f32 %v2863, %v2881
        %v2892 = vadd.f32 %v2864, %v2877
        %v2893 = vadd.f32 %v2865, %v2881
        %v2894 = vadd.f32 %v2866, %v2877
        %v2895 = vadd.f32 %v2867, %v2881
        %v2896 = vadd.f32 %v2868, %v2877
        %v2897 = vadd.f32 %v2869, %v2881
        %v2898 = vadd.f32 %v2870, %v2877
        %v2899 = vadd.f32 %v2871, %v2881
        %v2900 = vld [vmem:[%s8] sm:$0x3]
        %v2901 = vld [vmem:[%s9] sm:$0x3]
        %v2902 = vadd.f32 %v2884, %v2885
        %2903 = vadd.xlane.f32.xlu0 %v2902
        %v2904 = vpop.xlane.xlu0 %2903
        %v2905 = vadd.f32 %v2886, %v2887
        %2906 = vadd.xlane.f32.xlu0 %v2905
        %v2907 = vpop.xlane.xlu0 %2906
        %v2908 = vadd.f32 %v2888, %v2889
        %2909 = vadd.xlane.f32.xlu0 %v2908
        %v2910 = vpop.xlane.xlu0 %2909
        %v2911 = vadd.f32 %v2890, %v2891
        %2912 = vadd.xlane.f32.xlu0 %v2911
        %v2913 = vpop.xlane.xlu0 %2912
        %v2914 = vadd.f32 %v2892, %v2893
        %2915 = vadd.xlane.f32.xlu0 %v2914
        %v2916 = vpop.xlane.xlu0 %2915
        %v2917 = vadd.f32 %v2894, %v2895
        %2918 = vadd.xlane.f32.xlu0 %v2917
        %v2919 = vpop.xlane.xlu0 %2918
        %v2920 = vadd.f32 %v2896, %v2897
        %2921 = vadd.xlane.f32.xlu0 %v2920
        %v2922 = vpop.xlane.xlu0 %2921
        %v2923 = vadd.f32 %v2898, %v2899
        %2924 = vadd.xlane.f32.xlu0 %v2923
        %v2925 = vpop.xlane.xlu0 %2924
        %v2926 = vrcp.pop 256.0
        %v2927 = vmul.f32 %v2904, %v2926
        %v2928 = vmul.f32 %v2907, %v2926
        %v2929 = vmul.f32 %v2910, %v2926
        %v2930 = vmul.f32 %v2913, %v2926
        %v2931 = vmul.f32 %v2916, %v2926
        %v2932 = vmul.f32 %v2919, %v2926
        %v2933 = vmul.f32 %v2922, %v2926
        %v2934 = vmul.f32 %v2925, %v2926
        %v2935 = vsub.f32 %v2884, %v2927
        %v2936 = vsub.f32 %v2885, %v2927
        %v2937 = vsub.f32 %v2886, %v2928
        %v2938 = vsub.f32 %v2887, %v2928
        %v2939 = vsub.f32 %v2888, %v2929
        %v2940 = vsub.f32 %v2889, %v2929
        %v2941 = vsub.f32 %v2890, %v2930
        %v2942 = vsub.f32 %v2891, %v2930
        %v2943 = vsub.f32 %v2892, %v2931
        %v2944 = vsub.f32 %v2893, %v2931
        %v2945 = vsub.f32 %v2894, %v2932
        %v2946 = vsub.f32 %v2895, %v2932
        %v2947 = vsub.f32 %v2896, %v2933
        %v2948 = vsub.f32 %v2897, %v2933
        %v2949 = vsub.f32 %v2898, %v2934
        %v2950 = vsub.f32 %v2899, %v2934
        %v2951 = vmul.f32 %v2935, %v2935
        %v2952 = vmul.f32 %v2936, %v2936
        %v2953 = vmul.f32 %v2937, %v2937
        %v2954 = vmul.f32 %v2938, %v2938
        %v2955 = vmul.f32 %v2939, %v2939
        %v2956 = vmul.f32 %v2940, %v2940
        %v2957 = vmul.f32 %v2941, %v2941
        %v2958 = vmul.f32 %v2942, %v2942
        %v2959 = vmul.f32 %v2943, %v2943
        %v2960 = vmul.f32 %v2944, %v2944
        %v2961 = vmul.f32 %v2945, %v2945
        %v2962 = vmul.f32 %v2946, %v2946
        %v2963 = vmul.f32 %v2947, %v2947
        %v2964 = vmul.f32 %v2948, %v2948
        %v2965 = vmul.f32 %v2949, %v2949
        %v2966 = vmul.f32 %v2950, %v2950
        %v2967 = vadd.f32 %v2951, %v2952
        %2968 = vadd.xlane.f32.xlu0 %v2967
        %v2969 = vpop.xlane.xlu0 %2968
        %v2970 = vadd.f32 %v2953, %v2954
        %2971 = vadd.xlane.f32.xlu0 %v2970
        %v2972 = vpop.xlane.xlu0 %2971
        %v2973 = vadd.f32 %v2955, %v2956
        %2974 = vadd.xlane.f32.xlu0 %v2973
        %v2975 = vpop.xlane.xlu0 %2974
        %v2976 = vadd.f32 %v2957, %v2958
        %2977 = vadd.xlane.f32.xlu0 %v2976
        %v2978 = vpop.xlane.xlu0 %2977
        %v2979 = vadd.f32 %v2959, %v2960
        %2980 = vadd.xlane.f32.xlu0 %v2979
        %v2981 = vpop.xlane.xlu0 %2980
        %v2982 = vadd.f32 %v2961, %v2962
        %2983 = vadd.xlane.f32.xlu0 %v2982
        %v2984 = vpop.xlane.xlu0 %2983
        %v2985 = vadd.f32 %v2963, %v2964
        %2986 = vadd.xlane.f32.xlu0 %v2985
        %v2987 = vpop.xlane.xlu0 %2986
        %v2988 = vadd.f32 %v2965, %v2966
        %2989 = vadd.xlane.f32.xlu0 %v2988
        %v2990 = vpop.xlane.xlu0 %2989
        %v2991 = vmul.f32 %v2969, %v2926
        %v2992 = vmul.f32 %v2972, %v2926
        %v2993 = vmul.f32 %v2975, %v2926
        %v2994 = vmul.f32 %v2978, %v2926
        %v2995 = vmul.f32 %v2981, %v2926
        %v2996 = vmul.f32 %v2984, %v2926
        %v2997 = vmul.f32 %v2987, %v2926
        %v2998 = vmul.f32 %v2990, %v2926
        %v2999 = vadd.f32 %v2991, 1e-05
        %v3000 = vadd.f32 %v2992, 1e-05
        %v3001 = vadd.f32 %v2993, 1e-05
        %v3002 = vadd.f32 %v2994, 1e-05
        %v3003 = vadd.f32 %v2995, 1e-05
        %v3004 = vadd.f32 %v2996, 1e-05
        %v3005 = vadd.f32 %v2997, 1e-05
        %v3006 = vadd.f32 %v2998, 1e-05
        %v3007 = vrsqrt.pop %v2999
        %v3008 = vrsqrt.pop %v3000
        %v3009 = vrsqrt.pop %v3001
        %v3010 = vrsqrt.pop %v3002
        %v3011 = vrsqrt.pop %v3003
        %v3012 = vrsqrt.pop %v3004
        %v3013 = vrsqrt.pop %v3005
        %v3014 = vrsqrt.pop %v3006
        %v3015 = vmul.f32 %v2935, %v3007
        %v3016 = vmul.f32 %v2936, %v3007
        %v3017 = vmul.f32 %v2937, %v3008
        %v3018 = vmul.f32 %v2938, %v3008
        %v3019 = vmul.f32 %v2939, %v3009
        %v3020 = vmul.f32 %v2940, %v3009
        %v3021 = vmul.f32 %v2941, %v3010
        %v3022 = vmul.f32 %v2942, %v3010
        %v3023 = vmul.f32 %v2943, %v3011
        %v3024 = vmul.f32 %v2944, %v3011
        %v3025 = vmul.f32 %v2945, %v3012
        %v3026 = vmul.f32 %v2946, %v3012
        %v3027 = vmul.f32 %v2947, %v3013
        %v3028 = vmul.f32 %v2948, %v3013
        %v3029 = vmul.f32 %v2949, %v3014
        %v3030 = vmul.f32 %v2950, %v3014
        %v3032 = vlaneseq
        %v3033 = vshrl.u32 %v3032, 7
        %v3034 = vsub.s32 0, %v3033
        %v3035 = vrot.slane %v2900, %v3034
        %v3036 = vlaneseq
        %v3037 = vshrl.u32 %v3036, 7
        %v3038 = vsub.s32 1, %v3037
        %v3039 = vrot.slane %v2900, %v3038
        %v3042 = vmul.f32 %v3015, %v3035
        %v3043 = vmul.f32 %v3016, %v3039
        %v3044 = vmul.f32 %v3017, %v3035
        %v3045 = vmul.f32 %v3018, %v3039
        %v3046 = vmul.f32 %v3019, %v3035
        %v3047 = vmul.f32 %v3020, %v3039
        %v3048 = vmul.f32 %v3021, %v3035
        %v3049 = vmul.f32 %v3022, %v3039
        %v3050 = vmul.f32 %v3023, %v3035
        %v3051 = vmul.f32 %v3024, %v3039
        %v3052 = vmul.f32 %v3025, %v3035
        %v3053 = vmul.f32 %v3026, %v3039
        %v3054 = vmul.f32 %v3027, %v3035
        %v3055 = vmul.f32 %v3028, %v3039
        %v3056 = vmul.f32 %v3029, %v3035
        %v3057 = vmul.f32 %v3030, %v3039
        %v3059 = vlaneseq
        %v3060 = vshrl.u32 %v3059, 7
        %v3061 = vsub.s32 0, %v3060
        %v3062 = vrot.slane %v2901, %v3061
        %v3063 = vlaneseq
        %v3064 = vshrl.u32 %v3063, 7
        %v3065 = vsub.s32 1, %v3064
        %v3066 = vrot.slane %v2901, %v3065
        %v3069 = vadd.f32 %v3042, %v3062
        %v3070 = vadd.f32 %v3043, %v3066
        %v3071 = vadd.f32 %v3044, %v3062
        %v3072 = vadd.f32 %v3045, %v3066
        %v3073 = vadd.f32 %v3046, %v3062
        %v3074 = vadd.f32 %v3047, %v3066
        %v3075 = vadd.f32 %v3048, %v3062
        %v3076 = vadd.f32 %v3049, %v3066
        %v3077 = vadd.f32 %v3050, %v3062
        %v3078 = vadd.f32 %v3051, %v3066
        %v3079 = vadd.f32 %v3052, %v3062
        %v3080 = vadd.f32 %v3053, %v3066
        %v3081 = vadd.f32 %v3054, %v3062
        %v3082 = vadd.f32 %v3055, %v3066
        %v3083 = vadd.f32 %v3056, %v3062
        %v3084 = vadd.f32 %v3057, %v3066
        %v3085 = vpack.c.bf16 %v3071, %v3069
        %v3086 = vpack.c.bf16 %v3072, %v3070
        %v3087 = vpack.c.bf16 %v3075, %v3073
        %v3088 = vpack.c.bf16 %v3076, %v3074
        %v3089 = vpack.c.bf16 %v3079, %v3077
        %v3090 = vpack.c.bf16 %v3080, %v3078
        %v3091 = vpack.c.bf16 %v3083, %v3081
        %v3092 = vpack.c.bf16 %v3084, %v3082
        %v3093 = vld [vmem:[#allocation17] sm:$0xff]
        %v3094 = vld [vmem:[#allocation17 + $0x8] sm:$0xff]
        %v3095 = vld [vmem:[#allocation17 + $0x10] sm:$0xff]
        %v3096 = vld [vmem:[#allocation17 + $0x18] sm:$0xff]
        %v3097 = vld [vmem:[#allocation17 + $0x20] sm:$0xff]
        %v3098 = vld [vmem:[#allocation17 + $0x28] sm:$0xff]
        %v3099 = vld [vmem:[#allocation17 + $0x30] sm:$0xff]
        %v3100 = vld [vmem:[#allocation17 + $0x38] sm:$0xff]
        %v3101 = vld [vmem:[#allocation17 + $0x40] sm:$0xff]
        %v3102 = vld [vmem:[#allocation17 + $0x48] sm:$0xff]
        %v3103 = vld [vmem:[#allocation17 + $0x50] sm:$0xff]
        %v3104 = vld [vmem:[#allocation17 + $0x58] sm:$0xff]
        %v3105 = vld [vmem:[#allocation17 + $0x60] sm:$0xff]
        %v3106 = vld [vmem:[#allocation17 + $0x68] sm:$0xff]
        %v3107 = vld [vmem:[#allocation17 + $0x70] sm:$0xff]
        %v3108 = vld [vmem:[#allocation17 + $0x78] sm:$0xff]
        %v3109 = vld [vmem:[#allocation17 + $0x80] sm:$0xff]
        %v3110 = vld [vmem:[#allocation17 + $0x88] sm:$0xff]
        %v3111 = vld [vmem:[#allocation17 + $0x90] sm:$0xff]
        %v3112 = vld [vmem:[#allocation17 + $0x98] sm:$0xff]
        %v3113 = vld [vmem:[#allocation17 + $0xa0] sm:$0xff]
        %v3114 = vld [vmem:[#allocation17 + $0xa8] sm:$0xff]
        %v3115 = vld [vmem:[#allocation17 + $0xb0] sm:$0xff]
        %v3116 = vld [vmem:[#allocation17 + $0xb8] sm:$0xff]
        %v3117 = vld [vmem:[#allocation17 + $0xc0] sm:$0xff]
        %v3118 = vld [vmem:[#allocation17 + $0xc8] sm:$0xff]
        %v3119 = vld [vmem:[#allocation17 + $0xd0] sm:$0xff]
        %v3120 = vld [vmem:[#allocation17 + $0xd8] sm:$0xff]
        %v3121 = vld [vmem:[#allocation17 + $0xe0] sm:$0xff]
        %v3122 = vld [vmem:[#allocation17 + $0xe8] sm:$0xff]
        %v3123 = vld [vmem:[#allocation17 + $0xf0] sm:$0xff]
        %v3124 = vld [vmem:[#allocation17 + $0xf8] sm:$0xff]
        %v3125 = vld [vmem:[#allocation17 + $0x100] sm:$0xff]
        %v3126 = vld [vmem:[#allocation17 + $0x108] sm:$0xff]
        %v3127 = vld [vmem:[#allocation17 + $0x110] sm:$0xff]
        %v3128 = vld [vmem:[#allocation17 + $0x118] sm:$0xff]
        %v3129 = vld [vmem:[#allocation17 + $0x120] sm:$0xff]
        %v3130 = vld [vmem:[#allocation17 + $0x128] sm:$0xff]
        %v3131 = vld [vmem:[#allocation17 + $0x130] sm:$0xff]
        %v3132 = vld [vmem:[#allocation17 + $0x138] sm:$0xff]
        %v3133 = vld [vmem:[#allocation17 + $0x140] sm:$0xff]
        %v3134 = vld [vmem:[#allocation17 + $0x148] sm:$0xff]
        %v3135 = vld [vmem:[#allocation17 + $0x150] sm:$0xff]
        %v3136 = vld [vmem:[#allocation17 + $0x158] sm:$0xff]
        %v3137 = vld [vmem:[#allocation17 + $0x160] sm:$0xff]
        %v3138 = vld [vmem:[#allocation17 + $0x168] sm:$0xff]
        %v3139 = vld [vmem:[#allocation17 + $0x170] sm:$0xff]
        %v3140 = vld [vmem:[#allocation17 + $0x178] sm:$0xff]
        %v3141 = vld [vmem:[#allocation17 + $0x180] sm:$0xff]
        %v3142 = vld [vmem:[#allocation17 + $0x188] sm:$0xff]
        %v3143 = vld [vmem:[#allocation17 + $0x190] sm:$0xff]
        %v3144 = vld [vmem:[#allocation17 + $0x198] sm:$0xff]
        %v3145 = vld [vmem:[#allocation17 + $0x1a0] sm:$0xff]
        %v3146 = vld [vmem:[#allocation17 + $0x1a8] sm:$0xff]
        %v3147 = vld [vmem:[#allocation17 + $0x1b0] sm:$0xff]
        %v3148 = vld [vmem:[#allocation17 + $0x1b8] sm:$0xff]
        %v3149 = vld [vmem:[#allocation17 + $0x1c0] sm:$0xff]
        %v3150 = vld [vmem:[#allocation17 + $0x1c8] sm:$0xff]
        %v3151 = vld [vmem:[#allocation17 + $0x1d0] sm:$0xff]
        %v3152 = vld [vmem:[#allocation17 + $0x1d8] sm:$0xff]
        %v3153 = vld [vmem:[#allocation17 + $0x1e0] sm:$0xff]
        %v3154 = vld [vmem:[#allocation17 + $0x1e8] sm:$0xff]
        %v3155 = vld [vmem:[#allocation17 + $0x1f0] sm:$0xff]
        %v3156 = vld [vmem:[#allocation17 + $0x1f8] sm:$0xff]
        %v3157 = vld [vmem:[%s11] sm:$0xf]
        %v3159 = vlaneseq
        %v3160 = vshrl.u32 %v3159, 7
        %v3161 = vsub.s32 0, %v3160
        %v3162 = vrot.slane %v3157, %v3161
        %v3163 = vlaneseq
        %v3164 = vshrl.u32 %v3163, 7
        %v3165 = vsub.s32 1, %v3164
        %v3166 = vrot.slane %v3157, %v3165
        %v3167 = vlaneseq
        %v3168 = vshrl.u32 %v3167, 7
        %v3169 = vsub.s32 2, %v3168
        %v3170 = vrot.slane %v3157, %v3169
        %v3171 = vlaneseq
        %v3172 = vshrl.u32 %v3171, 7
        %v3173 = vsub.s32 3, %v3172
        %v3174 = vrot.slane %v3157, %v3173
        %v3243 = vunpack.c.l.b16 %v3093
        %v3244 = vunpack.c.h.b16 %v3093
        %v3245 = vunpack.c.l.b16 %v3094
        %v3246 = vunpack.c.h.b16 %v3094
        %v3247 = vunpack.c.l.b16 %v3095
        %v3248 = vunpack.c.h.b16 %v3095
        %v3249 = vunpack.c.l.b16 %v3096
        %v3250 = vunpack.c.h.b16 %v3096
        %v3251 = vunpack.c.l.b16 %v3097
        %v3252 = vunpack.c.h.b16 %v3097
        %v3253 = vunpack.c.l.b16 %v3098
        %v3254 = vunpack.c.h.b16 %v3098
        %v3255 = vunpack.c.l.b16 %v3099
        %v3256 = vunpack.c.h.b16 %v3099
        %v3257 = vunpack.c.l.b16 %v3100
        %v3258 = vunpack.c.h.b16 %v3100
        %v3259 = vunpack.c.l.b16 %v3101
        %v3260 = vunpack.c.h.b16 %v3101
        %v3261 = vunpack.c.l.b16 %v3102
        %v3262 = vunpack.c.h.b16 %v3102
        %v3263 = vunpack.c.l.b16 %v3103
        %v3264 = vunpack.c.h.b16 %v3103
        %v3265 = vunpack.c.l.b16 %v3104
        %v3266 = vunpack.c.h.b16 %v3104
        %v3267 = vunpack.c.l.b16 %v3105
        %v3268 = vunpack.c.h.b16 %v3105
        %v3269 = vunpack.c.l.b16 %v3106
        %v3270 = vunpack.c.h.b16 %v3106
        %v3271 = vunpack.c.l.b16 %v3107
        %v3272 = vunpack.c.h.b16 %v3107
        %v3273 = vunpack.c.l.b16 %v3108
        %v3274 = vunpack.c.h.b16 %v3108
        %v3275 = vunpack.c.l.b16 %v3109
        %v3276 = vunpack.c.h.b16 %v3109
        %v3277 = vunpack.c.l.b16 %v3110
        %v3278 = vunpack.c.h.b16 %v3110
        %v3279 = vunpack.c.l.b16 %v3111
        %v3280 = vunpack.c.h.b16 %v3111
        %v3281 = vunpack.c.l.b16 %v3112
        %v3282 = vunpack.c.h.b16 %v3112
        %v3283 = vunpack.c.l.b16 %v3113
        %v3284 = vunpack.c.h.b16 %v3113
        %v3285 = vunpack.c.l.b16 %v3114
        %v3286 = vunpack.c.h.b16 %v3114
        %v3287 = vunpack.c.l.b16 %v3115
        %v3288 = vunpack.c.h.b16 %v3115
        %v3289 = vunpack.c.l.b16 %v3116
        %v3290 = vunpack.c.h.b16 %v3116
        %v3291 = vunpack.c.l.b16 %v3117
        %v3292 = vunpack.c.h.b16 %v3117
        %v3293 = vunpack.c.l.b16 %v3118
        %v3294 = vunpack.c.h.b16 %v3118
        %v3295 = vunpack.c.l.b16 %v3119
        %v3296 = vunpack.c.h.b16 %v3119
        %v3297 = vunpack.c.l.b16 %v3120
        %v3298 = vunpack.c.h.b16 %v3120
        %v3299 = vunpack.c.l.b16 %v3121
        %v3300 = vunpack.c.h.b16 %v3121
        %v3301 = vunpack.c.l.b16 %v3122
        %v3302 = vunpack.c.h.b16 %v3122
        %v3303 = vunpack.c.l.b16 %v3123
        %v3304 = vunpack.c.h.b16 %v3123
        %v3305 = vunpack.c.l.b16 %v3124
        %v3306 = vunpack.c.h.b16 %v3124
        %v3307 = vunpack.c.l.b16 %v3125
        %v3308 = vunpack.c.h.b16 %v3125
        %v3309 = vunpack.c.l.b16 %v3126
        %v3310 = vunpack.c.h.b16 %v3126
        %v3311 = vunpack.c.l.b16 %v3127
        %v3312 = vunpack.c.h.b16 %v3127
        %v3313 = vunpack.c.l.b16 %v3128
        %v3314 = vunpack.c.h.b16 %v3128
        %v3315 = vunpack.c.l.b16 %v3129
        %v3316 = vunpack.c.h.b16 %v3129
        %v3317 = vunpack.c.l.b16 %v3130
        %v3318 = vunpack.c.h.b16 %v3130
        %v3319 = vunpack.c.l.b16 %v3131
        %v3320 = vunpack.c.h.b16 %v3131
        %v3321 = vunpack.c.l.b16 %v3132
        %v3322 = vunpack.c.h.b16 %v3132
        %v3323 = vunpack.c.l.b16 %v3133
        %v3324 = vunpack.c.h.b16 %v3133
        %v3325 = vunpack.c.l.b16 %v3134
        %v3326 = vunpack.c.h.b16 %v3134
        %v3327 = vunpack.c.l.b16 %v3135
        %v3328 = vunpack.c.h.b16 %v3135
        %v3329 = vunpack.c.l.b16 %v3136
        %v3330 = vunpack.c.h.b16 %v3136
        %v3331 = vunpack.c.l.b16 %v3137
        %v3332 = vunpack.c.h.b16 %v3137
        %v3333 = vunpack.c.l.b16 %v3138
        %v3334 = vunpack.c.h.b16 %v3138
        %v3335 = vunpack.c.l.b16 %v3139
        %v3336 = vunpack.c.h.b16 %v3139
        %v3337 = vunpack.c.l.b16 %v3140
        %v3338 = vunpack.c.h.b16 %v3140
        %v3339 = vunpack.c.l.b16 %v3141
        %v3340 = vunpack.c.h.b16 %v3141
        %v3341 = vunpack.c.l.b16 %v3142
        %v3342 = vunpack.c.h.b16 %v3142
        %v3343 = vunpack.c.l.b16 %v3143
        %v3344 = vunpack.c.h.b16 %v3143
        %v3345 = vunpack.c.l.b16 %v3144
        %v3346 = vunpack.c.h.b16 %v3144
        %v3347 = vunpack.c.l.b16 %v3145
        %v3348 = vunpack.c.h.b16 %v3145
        %v3349 = vunpack.c.l.b16 %v3146
        %v3350 = vunpack.c.h.b16 %v3146
        %v3351 = vunpack.c.l.b16 %v3147
        %v3352 = vunpack.c.h.b16 %v3147
        %v3353 = vunpack.c.l.b16 %v3148
        %v3354 = vunpack.c.h.b16 %v3148
        %v3355 = vunpack.c.l.b16 %v3149
        %v3356 = vunpack.c.h.b16 %v3149
        %v3357 = vunpack.c.l.b16 %v3150
        %v3358 = vunpack.c.h.b16 %v3150
        %v3359 = vunpack.c.l.b16 %v3151
        %v3360 = vunpack.c.h.b16 %v3151
        %v3361 = vunpack.c.l.b16 %v3152
        %v3362 = vunpack.c.h.b16 %v3152
        %v3363 = vunpack.c.l.b16 %v3153
        %v3364 = vunpack.c.h.b16 %v3153
        %v3365 = vunpack.c.l.b16 %v3154
        %v3366 = vunpack.c.h.b16 %v3154
        %v3367 = vunpack.c.l.b16 %v3155
        %v3368 = vunpack.c.h.b16 %v3155
        %v3369 = vunpack.c.l.b16 %v3156
        %v3370 = vunpack.c.h.b16 %v3156
        %v3371 = vpack.c.b16 %v3247, %v3243
        %v3372 = vpack.c.b16 %v3248, %v3244
        %v3373 = vpack.c.b16 %v3249, %v3245
        %v3374 = vpack.c.b16 %v3250, %v3246
        %v3375 = vpack.c.b16 %v3255, %v3251
        %v3376 = vpack.c.b16 %v3256, %v3252
        %v3377 = vpack.c.b16 %v3257, %v3253
        %v3378 = vpack.c.b16 %v3258, %v3254
        %v3379 = vpack.c.b16 %v3263, %v3259
        %v3380 = vpack.c.b16 %v3264, %v3260
        %v3381 = vpack.c.b16 %v3265, %v3261
        %v3382 = vpack.c.b16 %v3266, %v3262
        %v3383 = vpack.c.b16 %v3271, %v3267
        %v3384 = vpack.c.b16 %v3272, %v3268
        %v3385 = vpack.c.b16 %v3273, %v3269
        %v3386 = vpack.c.b16 %v3274, %v3270
        %v3387 = vpack.c.b16 %v3279, %v3275
        %v3388 = vpack.c.b16 %v3280, %v3276
        %v3389 = vpack.c.b16 %v3281, %v3277
        %v3390 = vpack.c.b16 %v3282, %v3278
        %v3391 = vpack.c.b16 %v3287, %v3283
        %v3392 = vpack.c.b16 %v3288, %v3284
        %v3393 = vpack.c.b16 %v3289, %v3285
        %v3394 = vpack.c.b16 %v3290, %v3286
        %v3395 = vpack.c.b16 %v3295, %v3291
        %v3396 = vpack.c.b16 %v3296, %v3292
        %v3397 = vpack.c.b16 %v3297, %v3293
        %v3398 = vpack.c.b16 %v3298, %v3294
        %v3399 = vpack.c.b16 %v3303, %v3299
        %v3400 = vpack.c.b16 %v3304, %v3300
        %v3401 = vpack.c.b16 %v3305, %v3301
        %v3402 = vpack.c.b16 %v3306, %v3302
        %v3403 = vpack.c.b16 %v3311, %v3307
        %v3404 = vpack.c.b16 %v3312, %v3308
        %v3405 = vpack.c.b16 %v3313, %v3309
        %v3406 = vpack.c.b16 %v3314, %v3310
        %v3407 = vpack.c.b16 %v3319, %v3315
        %v3408 = vpack.c.b16 %v3320, %v3316
        %v3409 = vpack.c.b16 %v3321, %v3317
        %v3410 = vpack.c.b16 %v3322, %v3318
        %v3411 = vpack.c.b16 %v3327, %v3323
        %v3412 = vpack.c.b16 %v3328, %v3324
        %v3413 = vpack.c.b16 %v3329, %v3325
        %v3414 = vpack.c.b16 %v3330, %v3326
        %v3415 = vpack.c.b16 %v3335, %v3331
        %v3416 = vpack.c.b16 %v3336, %v3332
        %v3417 = vpack.c.b16 %v3337, %v3333
        %v3418 = vpack.c.b16 %v3338, %v3334
        %v3419 = vpack.c.b16 %v3343, %v3339
        %v3420 = vpack.c.b16 %v3344, %v3340
        %v3421 = vpack.c.b16 %v3345, %v3341
        %v3422 = vpack.c.b16 %v3346, %v3342
        %v3423 = vpack.c.b16 %v3351, %v3347
        %v3424 = vpack.c.b16 %v3352, %v3348
        %v3425 = vpack.c.b16 %v3353, %v3349
        %v3426 = vpack.c.b16 %v3354, %v3350
        %v3427 = vpack.c.b16 %v3359, %v3355
        %v3428 = vpack.c.b16 %v3360, %v3356
        %v3429 = vpack.c.b16 %v3361, %v3357
        %v3430 = vpack.c.b16 %v3362, %v3358
        %v3431 = vpack.c.b16 %v3367, %v3363
        %v3432 = vpack.c.b16 %v3368, %v3364
        %v3433 = vpack.c.b16 %v3369, %v3365
        %v3434 = vpack.c.b16 %v3370, %v3366
        %3499 = vmatprep.subr.bf16.mxu0 %v3372
        %3500 = vmatpush1.bf16.msra.mxu0 %v3371
        %3501 = vmatprep.subr.bf16.mxu0 %v3376
        %3502 = vmatpush1.bf16.msra.mxu0 %v3375
        %3503 = vmatprep.subr.bf16.mxu0 %v3380
        %3504 = vmatpush1.bf16.msra.mxu0 %v3379
        %3505 = vmatprep.subr.bf16.mxu0 %v3384
        %3506 = vmatpush1.bf16.msra.mxu0 %v3383
        %3507 = vmatprep.subr.bf16.mxu0 %v3388
        %3508 = vmatpush1.bf16.msra.mxu0 %v3387
        %3509 = vmatprep.subr.bf16.mxu0 %v3392
        %3510 = vmatpush1.bf16.msra.mxu0 %v3391
        %3511 = vmatprep.subr.bf16.mxu0 %v3396
        %3512 = vmatpush1.bf16.msra.mxu0 %v3395
        %3513 = vmatprep.subr.bf16.mxu0 %v3400
        %3514 = vmatpush1.bf16.msra.mxu0 %v3399
        %3515 = vmatprep.subr.bf16.mxu0 %v3404
        %3516 = vmatpush1.bf16.msra.mxu0 %v3403
        %3517 = vmatprep.subr.bf16.mxu0 %v3408
        %3518 = vmatpush1.bf16.msra.mxu0 %v3407
        %3519 = vmatprep.subr.bf16.mxu0 %v3412
        %3520 = vmatpush1.bf16.msra.mxu0 %v3411
        %3521 = vmatprep.subr.bf16.mxu0 %v3416
        %3522 = vmatpush1.bf16.msra.mxu0 %v3415
        %3523 = vmatprep.subr.bf16.mxu0 %v3420
        %3524 = vmatpush1.bf16.msra.mxu0 %v3419
        %3525 = vmatprep.subr.bf16.mxu0 %v3424
        %3526 = vmatpush1.bf16.msra.mxu0 %v3423
        %3527 = vmatprep.subr.bf16.mxu0 %v3428
        %3528 = vmatpush1.bf16.msra.mxu0 %v3427
        %3529 = vmatprep.subr.bf16.mxu0 %v3432
        %3530 = vmatpush1.bf16.msra.mxu0 %v3431
        %3531 = vmatprep.mubr.bf16.mxu0 %v3086
        %3532 = vmatmul.mubr.bf16.gmra.mrb[0].mxu0 %v3085
        %v3533 = vpop.f32.mrb[0].mxu0
        %v3534 = vadd.f32 %v3162, %v3533
        %v3535 = vpop.f32.mrb[0].mxu0
        %v3536 = vadd.f32 %v3166, %v3535
        %v3537 = vpop.f32.mrb[0].mxu0
        %v3538 = vadd.f32 %v3162, %v3537
        %v3539 = vpop.f32.mrb[0].mxu0
        %v3540 = vadd.f32 %v3166, %v3539
        %3541 = vmatprep.mubr.bf16.mxu0 %v3088
        %3542 = vmatmul.mubr.bf16.gmra.mrb[0].mxu0 %v3087
        %v3543 = vpop.f32.mrb[0].mxu0
        %v3544 = vadd.f32 %v3162, %v3543
        %v3545 = vpop.f32.mrb[0].mxu0
        %v3546 = vadd.f32 %v3166, %v3545
        %v3547 = vpop.f32.mrb[0].mxu0
        %v3548 = vadd.f32 %v3162, %v3547
        %v3549 = vpop.f32.mrb[0].mxu0
        %v3550 = vadd.f32 %v3166, %v3549
        %3551 = vmatprep.mubr.bf16.mxu0 %v3090
        %3552 = vmatmul.mubr.bf16.gmra.mrb[0].mxu0 %v3089
        %v3553 = vpop.f32.mrb[0].mxu0
        %v3554 = vadd.f32 %v3162, %v3553
        %v3555 = vpop.f32.mrb[0].mxu0
        %v3556 = vadd.f32 %v3166, %v3555
        %v3557 = vpop.f32.mrb[0].mxu0
        %v3558 = vadd.f32 %v3162, %v3557
        %v3559 = vpop.f32.mrb[0].mxu0
        %v3560 = vadd.f32 %v3166, %v3559
        %3561 = vmatprep.mubr.bf16.mxu0 %v3092
        %3562 = vmatmul.mubr.bf16.gmra.mrb[0].mxu0 %v3091
        %v3563 = vpop.f32.mrb[0].mxu0
        %v3564 = vadd.f32 %v3162, %v3563
        %v3565 = vpop.f32.mrb[0].mxu0
        %v3566 = vadd.f32 %v3166, %v3565
        %v3567 = vpop.f32.mrb[0].mxu0
        %v3568 = vadd.f32 %v3162, %v3567
        %v3569 = vpop.f32.mrb[0].mxu0
        %v3570 = vadd.f32 %v3166, %v3569
        %3571 = vdwg.mxu0
        %3572 = vmatprep.subr.bf16.mxu0 %v3374
        %3573 = vmatpush1.bf16.msra.mxu0 %v3373
        %3574 = vmatprep.subr.bf16.mxu0 %v3378
        %3575 = vmatpush1.bf16.msra.mxu0 %v3377
        %3576 = vmatprep.subr.bf16.mxu0 %v3382
        %3577 = vmatpush1.bf16.msra.mxu0 %v3381
        %3578 = vmatprep.subr.bf16.mxu0 %v3386
        %3579 = vmatpush1.bf16.msra.mxu0 %v3385
        %3580 = vmatprep.subr.bf16.mxu0 %v3390
        %3581 = vmatpush1.bf16.msra.mxu0 %v3389
        %3582 = vmatprep.subr.bf16.mxu0 %v3394
        %3583 = vmatpush1.bf16.msra.mxu0 %v3393
        %3584 = vmatprep.subr.bf16.mxu0 %v3398
        %3585 = vmatpush1.bf16.msra.mxu0 %v3397
        %3586 = vmatprep.subr.bf16.mxu0 %v3402
        %3587 = vmatpush1.bf16.msra.mxu0 %v3401
        %3588 = vmatprep.subr.bf16.mxu0 %v3406
        %3589 = vmatpush1.bf16.msra.mxu0 %v3405
        %3590 = vmatprep.subr.bf16.mxu0 %v3410
        %3591 = vmatpush1.bf16.msra.mxu0 %v3409
        %3592 = vmatprep.subr.bf16.mxu0 %v3414
        %3593 = vmatpush1.bf16.msra.mxu0 %v3413
        %3594 = vmatprep.subr.bf16.mxu0 %v3418
        %3595 = vmatpush1.bf16.msra.mxu0 %v3417
        %3596 = vmatprep.subr.bf16.mxu0 %v3422
        %3597 = vmatpush1.bf16.msra.mxu0 %v3421
        %3598 = vmatprep.subr.bf16.mxu0 %v3426
        %3599 = vmatpush1.bf16.msra.mxu0 %v3425
        %3600 = vmatprep.subr.bf16.mxu0 %v3430
        %3601 = vmatpush1.bf16.msra.mxu0 %v3429
        %3602 = vmatprep.subr.bf16.mxu0 %v3434
        %3603 = vmatpush1.bf16.msra.mxu0 %v3433
        %3604 = vmatprep.mubr.bf16.mxu0 %v3086
        %3605 = vmatmul.mubr.bf16.gmra.mrb[0].mxu0 %v3085
        %v3606 = vpop.f32.mrb[0].mxu0
        %v3607 = vadd.f32 %v3170, %v3606
        %v3608 = vpop.f32.mrb[0].mxu0
        %v3609 = vadd.f32 %v3174, %v3608
        %v3610 = vpop.f32.mrb[0].mxu0
        %v3611 = vadd.f32 %v3170, %v3610
        %v3612 = vpop.f32.mrb[0].mxu0
        %v3613 = vadd.f32 %v3174, %v3612
        %3614 = vmatprep.mubr.bf16.mxu0 %v3088
        %3615 = vmatmul.mubr.bf16.gmra.mrb[0].mxu0 %v3087
        %v3616 = vpop.f32.mrb[0].mxu0
        %v3617 = vadd.f32 %v3170, %v3616
        %v3618 = vpop.f32.mrb[0].mxu0
        %v3619 = vadd.f32 %v3174, %v3618
        %v3620 = vpop.f32.mrb[0].mxu0
        %v3621 = vadd.f32 %v3170, %v3620
        %v3622 = vpop.f32.mrb[0].mxu0
        %v3623 = vadd.f32 %v3174, %v3622
        %3624 = vmatprep.mubr.bf16.mxu0 %v3090
        %3625 = vmatmul.mubr.bf16.gmra.mrb[0].mxu0 %v3089
        %v3626 = vpop.f32.mrb[0].mxu0
        %v3627 = vadd.f32 %v3170, %v3626
        %v3628 = vpop.f32.mrb[0].mxu0
        %v3629 = vadd.f32 %v3174, %v3628
        %v3630 = vpop.f32.mrb[0].mxu0
        %v3631 = vadd.f32 %v3170, %v3630
        %v3632 = vpop.f32.mrb[0].mxu0
        %v3633 = vadd.f32 %v3174, %v3632
        %3634 = vmatprep.mubr.bf16.mxu0 %v3092
        %3635 = vmatmul.mubr.bf16.gmra.mrb[0].mxu0 %v3091
        %v3636 = vpop.f32.mrb[0].mxu0
        %v3637 = vadd.f32 %v3170, %v3636
        %v3638 = vpop.f32.mrb[0].mxu0
        %v3639 = vadd.f32 %v3174, %v3638
        %v3640 = vpop.f32.mrb[0].mxu0
        %v3641 = vadd.f32 %v3170, %v3640
        %v3642 = vpop.f32.mrb[0].mxu0
        %v3643 = vadd.f32 %v3174, %v3642
        %3644 = vdwg.mxu0
        %v3645 = vmax.f32 %v3534, 0.0
        %v3646 = vmax.f32 %v3536, 0.0
        %v3647 = vmax.f32 %v3607, 0.0
        %v3648 = vmax.f32 %v3609, 0.0
        %v3649 = vmax.f32 %v3538, 0.0
        %v3650 = vmax.f32 %v3540, 0.0
        %v3651 = vmax.f32 %v3611, 0.0
        %v3652 = vmax.f32 %v3613, 0.0
        %v3653 = vmax.f32 %v3544, 0.0
        %v3654 = vmax.f32 %v3546, 0.0
        %v3655 = vmax.f32 %v3617, 0.0
        %v3656 = vmax.f32 %v3619, 0.0
        %v3657 = vmax.f32 %v3548, 0.0
        %v3658 = vmax.f32 %v3550, 0.0
        %v3659 = vmax.f32 %v3621, 0.0
        %v3660 = vmax.f32 %v3623, 0.0
        %v3661 = vmax.f32 %v3554, 0.0
        %v3662 = vmax.f32 %v3556, 0.0
        %v3663 = vmax.f32 %v3627, 0.0
        %v3664 = vmax.f32 %v3629, 0.0
        %v3665 = vmax.f32 %v3558, 0.0
        %v3666 = vmax.f32 %v3560, 0.0
        %v3667 = vmax.f32 %v3631, 0.0
        %v3668 = vmax.f32 %v3633, 0.0
        %v3669 = vmax.f32 %v3564, 0.0
        %v3670 = vmax.f32 %v3566, 0.0
        %v3671 = vmax.f32 %v3637, 0.0
        %v3672 = vmax.f32 %v3639, 0.0
        %v3673 = vmax.f32 %v3568, 0.0
        %v3674 = vmax.f32 %v3570, 0.0
        %v3675 = vmax.f32 %v3641, 0.0
        %v3676 = vmax.f32 %v3643, 0.0
        %v3677 = vpack.c.bf16 %v3649, %v3645
        %v3678 = vpack.c.bf16 %v3650, %v3646
        %v3679 = vpack.c.bf16 %v3651, %v3647
        %v3680 = vpack.c.bf16 %v3652, %v3648
        %v3681 = vpack.c.bf16 %v3657, %v3653
        %v3682 = vpack.c.bf16 %v3658, %v3654
        %v3683 = vpack.c.bf16 %v3659, %v3655
        %v3684 = vpack.c.bf16 %v3660, %v3656
        %v3685 = vpack.c.bf16 %v3665, %v3661
        %v3686 = vpack.c.bf16 %v3666, %v3662
        %v3687 = vpack.c.bf16 %v3667, %v3663
        %v3688 = vpack.c.bf16 %v3668, %v3664
        %v3689 = vpack.c.bf16 %v3673, %v3669
        %v3690 = vpack.c.bf16 %v3674, %v3670
        %v3691 = vpack.c.bf16 %v3675, %v3671
        %v3692 = vpack.c.bf16 %v3676, %v3672
        %v3693 = vld [vmem:[#allocation18] sm:$0xff]
        %v3694 = vld [vmem:[#allocation18 + $0x8] sm:$0xff]
        %v3695 = vld [vmem:[#allocation18 + $0x10] sm:$0xff]
        %v3696 = vld [vmem:[#allocation18 + $0x18] sm:$0xff]
        %v3697 = vld [vmem:[#allocation18 + $0x20] sm:$0xff]
        %v3698 = vld [vmem:[#allocation18 + $0x28] sm:$0xff]
        %v3699 = vld [vmem:[#allocation18 + $0x30] sm:$0xff]
        %v3700 = vld [vmem:[#allocation18 + $0x38] sm:$0xff]
        %v3701 = vld [vmem:[#allocation18 + $0x40] sm:$0xff]
        %v3702 = vld [vmem:[#allocation18 + $0x48] sm:$0xff]
        %v3703 = vld [vmem:[#allocation18 + $0x50] sm:$0xff]
        %v3704 = vld [vmem:[#allocation18 + $0x58] sm:$0xff]
        %v3705 = vld [vmem:[#allocation18 + $0x60] sm:$0xff]
        %v3706 = vld [vmem:[#allocation18 + $0x68] sm:$0xff]
        %v3707 = vld [vmem:[#allocation18 + $0x70] sm:$0xff]
        %v3708 = vld [vmem:[#allocation18 + $0x78] sm:$0xff]
        %v3709 = vld [vmem:[#allocation18 + $0x80] sm:$0xff]
        %v3710 = vld [vmem:[#allocation18 + $0x88] sm:$0xff]
        %v3711 = vld [vmem:[#allocation18 + $0x90] sm:$0xff]
        %v3712 = vld [vmem:[#allocation18 + $0x98] sm:$0xff]
        %v3713 = vld [vmem:[#allocation18 + $0xa0] sm:$0xff]
        %v3714 = vld [vmem:[#allocation18 + $0xa8] sm:$0xff]
        %v3715 = vld [vmem:[#allocation18 + $0xb0] sm:$0xff]
        %v3716 = vld [vmem:[#allocation18 + $0xb8] sm:$0xff]
        %v3717 = vld [vmem:[#allocation18 + $0xc0] sm:$0xff]
        %v3718 = vld [vmem:[#allocation18 + $0xc8] sm:$0xff]
        %v3719 = vld [vmem:[#allocation18 + $0xd0] sm:$0xff]
        %v3720 = vld [vmem:[#allocation18 + $0xd8] sm:$0xff]
        %v3721 = vld [vmem:[#allocation18 + $0xe0] sm:$0xff]
        %v3722 = vld [vmem:[#allocation18 + $0xe8] sm:$0xff]
        %v3723 = vld [vmem:[#allocation18 + $0xf0] sm:$0xff]
        %v3724 = vld [vmem:[#allocation18 + $0xf8] sm:$0xff]
        %v3725 = vld [vmem:[#allocation18 + $0x100] sm:$0xff]
        %v3726 = vld [vmem:[#allocation18 + $0x108] sm:$0xff]
        %v3727 = vld [vmem:[#allocation18 + $0x110] sm:$0xff]
        %v3728 = vld [vmem:[#allocation18 + $0x118] sm:$0xff]
        %v3729 = vld [vmem:[#allocation18 + $0x120] sm:$0xff]
        %v3730 = vld [vmem:[#allocation18 + $0x128] sm:$0xff]
        %v3731 = vld [vmem:[#allocation18 + $0x130] sm:$0xff]
        %v3732 = vld [vmem:[#allocation18 + $0x138] sm:$0xff]
        %v3733 = vld [vmem:[#allocation18 + $0x140] sm:$0xff]
        %v3734 = vld [vmem:[#allocation18 + $0x148] sm:$0xff]
        %v3735 = vld [vmem:[#allocation18 + $0x150] sm:$0xff]
        %v3736 = vld [vmem:[#allocation18 + $0x158] sm:$0xff]
        %v3737 = vld [vmem:[#allocation18 + $0x160] sm:$0xff]
        %v3738 = vld [vmem:[#allocation18 + $0x168] sm:$0xff]
        %v3739 = vld [vmem:[#allocation18 + $0x170] sm:$0xff]
        %v3740 = vld [vmem:[#allocation18 + $0x178] sm:$0xff]
        %v3741 = vld [vmem:[#allocation18 + $0x180] sm:$0xff]
        %v3742 = vld [vmem:[#allocation18 + $0x188] sm:$0xff]
        %v3743 = vld [vmem:[#allocation18 + $0x190] sm:$0xff]
        %v3744 = vld [vmem:[#allocation18 + $0x198] sm:$0xff]
        %v3745 = vld [vmem:[#allocation18 + $0x1a0] sm:$0xff]
        %v3746 = vld [vmem:[#allocation18 + $0x1a8] sm:$0xff]
        %v3747 = vld [vmem:[#allocation18 + $0x1b0] sm:$0xff]
        %v3748 = vld [vmem:[#allocation18 + $0x1b8] sm:$0xff]
        %v3749 = vld [vmem:[#allocation18 + $0x1c0] sm:$0xff]
        %v3750 = vld [vmem:[#allocation18 + $0x1c8] sm:$0xff]
        %v3751 = vld [vmem:[#allocation18 + $0x1d0] sm:$0xff]
        %v3752 = vld [vmem:[#allocation18 + $0x1d8] sm:$0xff]
        %v3753 = vld [vmem:[#allocation18 + $0x1e0] sm:$0xff]
        %v3754 = vld [vmem:[#allocation18 + $0x1e8] sm:$0xff]
        %v3755 = vld [vmem:[#allocation18 + $0x1f0] sm:$0xff]
        %v3756 = vld [vmem:[#allocation18 + $0x1f8] sm:$0xff]
        %v3757 = vld [vmem:[%s13] sm:$0x3]
        %v3759 = vlaneseq
        %v3760 = vshrl.u32 %v3759, 7
        %v3761 = vsub.s32 0, %v3760
        %v3762 = vrot.slane %v3757, %v3761
        %v3763 = vlaneseq
        %v3764 = vshrl.u32 %v3763, 7
        %v3765 = vsub.s32 1, %v3764
        %v3766 = vrot.slane %v3757, %v3765
        %v3833 = vunpack.c.l.b16 %v3693
        %v3834 = vunpack.c.h.b16 %v3693
        %v3835 = vunpack.c.l.b16 %v3694
        %v3836 = vunpack.c.h.b16 %v3694
        %v3837 = vunpack.c.l.b16 %v3695
        %v3838 = vunpack.c.h.b16 %v3695
        %v3839 = vunpack.c.l.b16 %v3696
        %v3840 = vunpack.c.h.b16 %v3696
        %v3841 = vunpack.c.l.b16 %v3697
        %v3842 = vunpack.c.h.b16 %v3697
        %v3843 = vunpack.c.l.b16 %v3698
        %v3844 = vunpack.c.h.b16 %v3698
        %v3845 = vunpack.c.l.b16 %v3699
        %v3846 = vunpack.c.h.b16 %v3699
        %v3847 = vunpack.c.l.b16 %v3700
        %v3848 = vunpack.c.h.b16 %v3700
        %v3849 = vunpack.c.l.b16 %v3701
        %v3850 = vunpack.c.h.b16 %v3701
        %v3851 = vunpack.c.l.b16 %v3702
        %v3852 = vunpack.c.h.b16 %v3702
        %v3853 = vunpack.c.l.b16 %v3703
        %v3854 = vunpack.c.h.b16 %v3703
        %v3855 = vunpack.c.l.b16 %v3704
        %v3856 = vunpack.c.h.b16 %v3704
        %v3857 = vunpack.c.l.b16 %v3705
        %v3858 = vunpack.c.h.b16 %v3705
        %v3859 = vunpack.c.l.b16 %v3706
        %v3860 = vunpack.c.h.b16 %v3706
        %v3861 = vunpack.c.l.b16 %v3707
        %v3862 = vunpack.c.h.b16 %v3707
        %v3863 = vunpack.c.l.b16 %v3708
        %v3864 = vunpack.c.h.b16 %v3708
        %v3865 = vunpack.c.l.b16 %v3709
        %v3866 = vunpack.c.h.b16 %v3709
        %v3867 = vunpack.c.l.b16 %v3710
        %v3868 = vunpack.c.h.b16 %v3710
        %v3869 = vunpack.c.l.b16 %v3711
        %v3870 = vunpack.c.h.b16 %v3711
        %v3871 = vunpack.c.l.b16 %v3712
        %v3872 = vunpack.c.h.b16 %v3712
        %v3873 = vunpack.c.l.b16 %v3713
        %v3874 = vunpack.c.h.b16 %v3713
        %v3875 = vunpack.c.l.b16 %v3714
        %v3876 = vunpack.c.h.b16 %v3714
        %v3877 = vunpack.c.l.b16 %v3715
        %v3878 = vunpack.c.h.b16 %v3715
        %v3879 = vunpack.c.l.b16 %v3716
        %v3880 = vunpack.c.h.b16 %v3716
        %v3881 = vunpack.c.l.b16 %v3717
        %v3882 = vunpack.c.h.b16 %v3717
        %v3883 = vunpack.c.l.b16 %v3718
        %v3884 = vunpack.c.h.b16 %v3718
        %v3885 = vunpack.c.l.b16 %v3719
        %v3886 = vunpack.c.h.b16 %v3719
        %v3887 = vunpack.c.l.b16 %v3720
        %v3888 = vunpack.c.h.b16 %v3720
        %v3889 = vunpack.c.l.b16 %v3721
        %v3890 = vunpack.c.h.b16 %v3721
        %v3891 = vunpack.c.l.b16 %v3722
        %v3892 = vunpack.c.h.b16 %v3722
        %v3893 = vunpack.c.l.b16 %v3723
        %v3894 = vunpack.c.h.b16 %v3723
        %v3895 = vunpack.c.l.b16 %v3724
        %v3896 = vunpack.c.h.b16 %v3724
        %v3897 = vunpack.c.l.b16 %v3725
        %v3898 = vunpack.c.h.b16 %v3725
        %v3899 = vunpack.c.l.b16 %v3726
        %v3900 = vunpack.c.h.b16 %v3726
        %v3901 = vunpack.c.l.b16 %v3727
        %v3902 = vunpack.c.h.b16 %v3727
        %v3903 = vunpack.c.l.b16 %v3728
        %v3904 = vunpack.c.h.b16 %v3728
        %v3905 = vunpack.c.l.b16 %v3729
        %v3906 = vunpack.c.h.b16 %v3729
        %v3907 = vunpack.c.l.b16 %v3730
        %v3908 = vunpack.c.h.b16 %v3730
        %v3909 = vunpack.c.l.b16 %v3731
        %v3910 = vunpack.c.h.b16 %v3731
        %v3911 = vunpack.c.l.b16 %v3732
        %v3912 = vunpack.c.h.b16 %v3732
        %v3913 = vunpack.c.l.b16 %v3733
        %v3914 = vunpack.c.h.b16 %v3733
        %v3915 = vunpack.c.l.b16 %v3734
        %v3916 = vunpack.c.h.b16 %v3734
        %v3917 = vunpack.c.l.b16 %v3735
        %v3918 = vunpack.c.h.b16 %v3735
        %v3919 = vunpack.c.l.b16 %v3736
        %v3920 = vunpack.c.h.b16 %v3736
        %v3921 = vunpack.c.l.b16 %v3737
        %v3922 = vunpack.c.h.b16 %v3737
        %v3923 = vunpack.c.l.b16 %v3738
        %v3924 = vunpack.c.h.b16 %v3738
        %v3925 = vunpack.c.l.b16 %v3739
        %v3926 = vunpack.c.h.b16 %v3739
        %v3927 = vunpack.c.l.b16 %v3740
        %v3928 = vunpack.c.h.b16 %v3740
        %v3929 = vunpack.c.l.b16 %v3741
        %v3930 = vunpack.c.h.b16 %v3741
        %v3931 = vunpack.c.l.b16 %v3742
        %v3932 = vunpack.c.h.b16 %v3742
        %v3933 = vunpack.c.l.b16 %v3743
        %v3934 = vunpack.c.h.b16 %v3743
        %v3935 = vunpack.c.l.b16 %v3744
        %v3936 = vunpack.c.h.b16 %v3744
        %v3937 = vunpack.c.l.b16 %v3745
        %v3938 = vunpack.c.h.b16 %v3745
        %v3939 = vunpack.c.l.b16 %v3746
        %v3940 = vunpack.c.h.b16 %v3746
        %v3941 = vunpack.c.l.b16 %v3747
        %v3942 = vunpack.c.h.b16 %v3747
        %v3943 = vunpack.c.l.b16 %v3748
        %v3944 = vunpack.c.h.b16 %v3748
        %v3945 = vunpack.c.l.b16 %v3749
        %v3946 = vunpack.c.h.b16 %v3749
        %v3947 = vunpack.c.l.b16 %v3750
        %v3948 = vunpack.c.h.b16 %v3750
        %v3949 = vunpack.c.l.b16 %v3751
        %v3950 = vunpack.c.h.b16 %v3751
        %v3951 = vunpack.c.l.b16 %v3752
        %v3952 = vunpack.c.h.b16 %v3752
        %v3953 = vunpack.c.l.b16 %v3753
        %v3954 = vunpack.c.h.b16 %v3753
        %v3955 = vunpack.c.l.b16 %v3754
        %v3956 = vunpack.c.h.b16 %v3754
        %v3957 = vunpack.c.l.b16 %v3755
        %v3958 = vunpack.c.h.b16 %v3755
        %v3959 = vunpack.c.l.b16 %v3756
        %v3960 = vunpack.c.h.b16 %v3756
        %v3961 = vpack.c.b16 %v3835, %v3833
        %v3962 = vpack.c.b16 %v3836, %v3834
        %v3963 = vpack.c.b16 %v3839, %v3837
        %v3964 = vpack.c.b16 %v3840, %v3838
        %v3965 = vpack.c.b16 %v3843, %v3841
        %v3966 = vpack.c.b16 %v3844, %v3842
        %v3967 = vpack.c.b16 %v3847, %v3845
        %v3968 = vpack.c.b16 %v3848, %v3846
        %v3969 = vpack.c.b16 %v3851, %v3849
        %v3970 = vpack.c.b16 %v3852, %v3850
        %v3971 = vpack.c.b16 %v3855, %v3853
        %v3972 = vpack.c.b16 %v3856, %v3854
        %v3973 = vpack.c.b16 %v3859, %v3857
        %v3974 = vpack.c.b16 %v3860, %v3858
        %v3975 = vpack.c.b16 %v3863, %v3861
        %v3976 = vpack.c.b16 %v3864, %v3862
        %v3977 = vpack.c.b16 %v3867, %v3865
        %v3978 = vpack.c.b16 %v3868, %v3866
        %v3979 = vpack.c.b16 %v3871, %v3869
        %v3980 = vpack.c.b16 %v3872, %v3870
        %v3981 = vpack.c.b16 %v3875, %v3873
        %v3982 = vpack.c.b16 %v3876, %v3874
        %v3983 = vpack.c.b16 %v3879, %v3877
        %v3984 = vpack.c.b16 %v3880, %v3878
        %v3985 = vpack.c.b16 %v3883, %v3881
        %v3986 = vpack.c.b16 %v3884, %v3882
        %v3987 = vpack.c.b16 %v3887, %v3885
        %v3988 = vpack.c.b16 %v3888, %v3886
        %v3989 = vpack.c.b16 %v3891, %v3889
        %v3990 = vpack.c.b16 %v3892, %v3890
        %v3991 = vpack.c.b16 %v3895, %v3893
        %v3992 = vpack.c.b16 %v3896, %v3894
        %v3993 = vpack.c.b16 %v3899, %v3897
        %v3994 = vpack.c.b16 %v3900, %v3898
        %v3995 = vpack.c.b16 %v3903, %v3901
        %v3996 = vpack.c.b16 %v3904, %v3902
        %v3997 = vpack.c.b16 %v3907, %v3905
        %v3998 = vpack.c.b16 %v3908, %v3906
        %v3999 = vpack.c.b16 %v3911, %v3909
        %v4000 = vpack.c.b16 %v3912, %v3910
        %v4001 = vpack.c.b16 %v3915, %v3913
        %v4002 = vpack.c.b16 %v3916, %v3914
        %v4003 = vpack.c.b16 %v3919, %v3917
        %v4004 = vpack.c.b16 %v3920, %v3918
        %v4005 = vpack.c.b16 %v3923, %v3921
        %v4006 = vpack.c.b16 %v3924, %v3922
        %v4007 = vpack.c.b16 %v3927, %v3925
        %v4008 = vpack.c.b16 %v3928, %v3926
        %v4009 = vpack.c.b16 %v3931, %v3929
        %v4010 = vpack.c.b16 %v3932, %v3930
        %v4011 = vpack.c.b16 %v3935, %v3933
        %v4012 = vpack.c.b16 %v3936, %v3934
        %v4013 = vpack.c.b16 %v3939, %v3937
        %v4014 = vpack.c.b16 %v3940, %v3938
        %v4015 = vpack.c.b16 %v3943, %v3941
        %v4016 = vpack.c.b16 %v3944, %v3942
        %v4017 = vpack.c.b16 %v3947, %v3945
        %v4018 = vpack.c.b16 %v3948, %v3946
        %v4019 = vpack.c.b16 %v3951, %v3949
        %v4020 = vpack.c.b16 %v3952, %v3950
        %v4021 = vpack.c.b16 %v3955, %v3953
        %v4022 = vpack.c.b16 %v3956, %v3954
        %v4023 = vpack.c.b16 %v3959, %v3957
        %v4024 = vpack.c.b16 %v3960, %v3958
        %4089 = vmatprep.subr.bf16.mxu0 %v3962
        %4090 = vmatpush1.bf16.msra.mxu0 %v3961
        %4091 = vmatprep.subr.bf16.mxu0 %v3964
        %4092 = vmatpush1.bf16.msra.mxu0 %v3963
        %4093 = vmatprep.subr.bf16.mxu0 %v3966
        %4094 = vmatpush1.bf16.msra.mxu0 %v3965
        %4095 = vmatprep.subr.bf16.mxu0 %v3968
        %4096 = vmatpush1.bf16.msra.mxu0 %v3967
        %4097 = vmatprep.subr.bf16.mxu0 %v3970
        %4098 = vmatpush1.bf16.msra.mxu0 %v3969
        %4099 = vmatprep.subr.bf16.mxu0 %v3972
        %4100 = vmatpush1.bf16.msra.mxu0 %v3971
        %4101 = vmatprep.subr.bf16.mxu0 %v3974
        %4102 = vmatpush1.bf16.msra.mxu0 %v3973
        %4103 = vmatprep.subr.bf16.mxu0 %v3976
        %4104 = vmatpush1.bf16.msra.mxu0 %v3975
        %4105 = vmatprep.subr.bf16.mxu0 %v3978
        %4106 = vmatpush1.bf16.msra.mxu0 %v3977
        %4107 = vmatprep.subr.bf16.mxu0 %v3980
        %4108 = vmatpush1.bf16.msra.mxu0 %v3979
        %4109 = vmatprep.subr.bf16.mxu0 %v3982
        %4110 = vmatpush1.bf16.msra.mxu0 %v3981
        %4111 = vmatprep.subr.bf16.mxu0 %v3984
        %4112 = vmatpush1.bf16.msra.mxu0 %v3983
        %4113 = vmatprep.subr.bf16.mxu0 %v3986
        %4114 = vmatpush1.bf16.msra.mxu0 %v3985
        %4115 = vmatprep.subr.bf16.mxu0 %v3988
        %4116 = vmatpush1.bf16.msra.mxu0 %v3987
        %4117 = vmatprep.subr.bf16.mxu0 %v3990
        %4118 = vmatpush1.bf16.msra.mxu0 %v3989
        %4119 = vmatprep.subr.bf16.mxu0 %v3992
        %4120 = vmatpush1.bf16.msra.mxu0 %v3991
        %4121 = vmatprep.mubr.bf16.mxu0 %v3678
        %4122 = vmatmul.mubr.bf16.gmra.mrb[0].mxu0 %v3677
        %v4123 = vpop.f32.mrb[0].mxu0
        %v4124 = vadd.f32 %v3762, %v4123
        %v4125 = vpop.f32.mrb[0].mxu0
        %v4126 = vadd.f32 %v3766, %v4125
        %v4127 = vpop.f32.mrb[0].mxu0
        %v4128 = vadd.f32 %v3762, %v4127
        %v4129 = vpop.f32.mrb[0].mxu0
        %v4130 = vadd.f32 %v3766, %v4129
        %4131 = vmatprep.mubr.bf16.mxu0 %v3682
        %4132 = vmatmul.mubr.bf16.gmra.mrb[0].mxu0 %v3681
        %v4133 = vpop.f32.mrb[0].mxu0
        %v4134 = vadd.f32 %v3762, %v4133
        %v4135 = vpop.f32.mrb[0].mxu0
        %v4136 = vadd.f32 %v3766, %v4135
        %v4137 = vpop.f32.mrb[0].mxu0
        %v4138 = vadd.f32 %v3762, %v4137
        %v4139 = vpop.f32.mrb[0].mxu0
        %v4140 = vadd.f32 %v3766, %v4139
        %4141 = vmatprep.mubr.bf16.mxu0 %v3686
        %4142 = vmatmul.mubr.bf16.gmra.mrb[0].mxu0 %v3685
        %v4143 = vpop.f32.mrb[0].mxu0
        %v4144 = vadd.f32 %v3762, %v4143
        %v4145 = vpop.f32.mrb[0].mxu0
        %v4146 = vadd.f32 %v3766, %v4145
        %v4147 = vpop.f32.mrb[0].mxu0
        %v4148 = vadd.f32 %v3762, %v4147
        %v4149 = vpop.f32.mrb[0].mxu0
        %v4150 = vadd.f32 %v3766, %v4149
        %4151 = vmatprep.mubr.bf16.mxu0 %v3690
        %4152 = vmatmul.mubr.bf16.gmra.mrb[0].mxu0 %v3689
        %v4153 = vpop.f32.mrb[0].mxu0
        %v4154 = vadd.f32 %v3762, %v4153
        %v4155 = vpop.f32.mrb[0].mxu0
        %v4156 = vadd.f32 %v3766, %v4155
        %v4157 = vpop.f32.mrb[0].mxu0
        %v4158 = vadd.f32 %v3762, %v4157
        %v4159 = vpop.f32.mrb[0].mxu0
        %v4160 = vadd.f32 %v3766, %v4159
        %4161 = vdwg.mxu0
        %4162 = vmatprep.subr.bf16.mxu0 %v3994
        %4163 = vmatpush1.bf16.msra.mxu0 %v3993
        %4164 = vmatprep.subr.bf16.mxu0 %v3996
        %4165 = vmatpush1.bf16.msra.mxu0 %v3995
        %4166 = vmatprep.subr.bf16.mxu0 %v3998
        %4167 = vmatpush1.bf16.msra.mxu0 %v3997
        %4168 = vmatprep.subr.bf16.mxu0 %v4000
        %4169 = vmatpush1.bf16.msra.mxu0 %v3999
        %4170 = vmatprep.subr.bf16.mxu0 %v4002
        %4171 = vmatpush1.bf16.msra.mxu0 %v4001
        %4172 = vmatprep.subr.bf16.mxu0 %v4004
        %4173 = vmatpush1.bf16.msra.mxu0 %v4003
        %4174 = vmatprep.subr.bf16.mxu0 %v4006
        %4175 = vmatpush1.bf16.msra.mxu0 %v4005
        %4176 = vmatprep.subr.bf16.mxu0 %v4008
        %4177 = vmatpush1.bf16.msra.mxu0 %v4007
        %4178 = vmatprep.subr.bf16.mxu0 %v4010
        %4179 = vmatpush1.bf16.msra.mxu0 %v4009
        %4180 = vmatprep.subr.bf16.mxu0 %v4012
        %4181 = vmatpush1.bf16.msra.mxu0 %v4011
        %4182 = vmatprep.subr.bf16.mxu0 %v4014
        %4183 = vmatpush1.bf16.msra.mxu0 %v4013
        %4184 = vmatprep.subr.bf16.mxu0 %v4016
        %4185 = vmatpush1.bf16.msra.mxu0 %v4015
        %4186 = vmatprep.subr.bf16.mxu0 %v4018
        %4187 = vmatpush1.bf16.msra.mxu0 %v4017
        %4188 = vmatprep.subr.bf16.mxu0 %v4020
        %4189 = vmatpush1.bf16.msra.mxu0 %v4019
        %4190 = vmatprep.subr.bf16.mxu0 %v4022
        %4191 = vmatpush1.bf16.msra.mxu0 %v4021
        %4192 = vmatprep.subr.bf16.mxu0 %v4024
        %4193 = vmatpush1.bf16.msra.mxu0 %v4023
        %4194 = vmatprep.mubr.bf16.mxu0 %v3680
        %4195 = vmatmul.mubr.bf16.gmra.mrb[0].mxu0 %v3679
        %v4196 = vpop.f32.mrb[0].mxu0
        %v4197 = vadd.f32 %v4124, %v4196
        %v4198 = vpop.f32.mrb[0].mxu0
        %v4199 = vadd.f32 %v4126, %v4198
        %v4200 = vpop.f32.mrb[0].mxu0
        %v4201 = vadd.f32 %v4128, %v4200
        %v4202 = vpop.f32.mrb[0].mxu0
        %v4203 = vadd.f32 %v4130, %v4202
        %4204 = vmatprep.mubr.bf16.mxu0 %v3684
        %4205 = vmatmul.mubr.bf16.gmra.mrb[0].mxu0 %v3683
        %v4206 = vpop.f32.mrb[0].mxu0
        %v4207 = vadd.f32 %v4134, %v4206
        %v4208 = vpop.f32.mrb[0].mxu0
        %v4209 = vadd.f32 %v4136, %v4208
        %v4210 = vpop.f32.mrb[0].mxu0
        %v4211 = vadd.f32 %v4138, %v4210
        %v4212 = vpop.f32.mrb[0].mxu0
        %v4213 = vadd.f32 %v4140, %v4212
        %4214 = vmatprep.mubr.bf16.mxu0 %v3688
        %4215 = vmatmul.mubr.bf16.gmra.mrb[0].mxu0 %v3687
        %v4216 = vpop.f32.mrb[0].mxu0
        %v4217 = vadd.f32 %v4144, %v4216
        %v4218 = vpop.f32.mrb[0].mxu0
        %v4219 = vadd.f32 %v4146, %v4218
        %v4220 = vpop.f32.mrb[0].mxu0
        %v4221 = vadd.f32 %v4148, %v4220
        %v4222 = vpop.f32.mrb[0].mxu0
        %v4223 = vadd.f32 %v4150, %v4222
        %4224 = vmatprep.mubr.bf16.mxu0 %v3692
        %4225 = vmatmul.mubr.bf16.gmra.mrb[0].mxu0 %v3691
        %v4226 = vpop.f32.mrb[0].mxu0
        %v4227 = vadd.f32 %v4154, %v4226
        %v4228 = vpop.f32.mrb[0].mxu0
        %v4229 = vadd.f32 %v4156, %v4228
        %v4230 = vpop.f32.mrb[0].mxu0
        %v4231 = vadd.f32 %v4158, %v4230
        %v4232 = vpop.f32.mrb[0].mxu0
        %v4233 = vadd.f32 %v4160, %v4232
        %4234 = vdwg.mxu0
        %v4235 = vadd.f32 %v2884, %v4197
        %v4236 = vadd.f32 %v2885, %v4199
        %v4237 = vadd.f32 %v2886, %v4201
        %v4238 = vadd.f32 %v2887, %v4203
        %v4239 = vadd.f32 %v2888, %v4207
        %v4240 = vadd.f32 %v2889, %v4209
        %v4241 = vadd.f32 %v2890, %v4211
        %v4242 = vadd.f32 %v2891, %v4213
        %v4243 = vadd.f32 %v2892, %v4217
        %v4244 = vadd.f32 %v2893, %v4219
        %v4245 = vadd.f32 %v2894, %v4221
        %v4246 = vadd.f32 %v2895, %v4223
        %v4247 = vadd.f32 %v2896, %v4227
        %v4248 = vadd.f32 %v2897, %v4229
        %v4249 = vadd.f32 %v2898, %v4231
        %v4250 = vadd.f32 %v2899, %v4233
        %4251 = vst [vmem:[%s599] sm:$0xff] %v4235
        %4252 = vst [vmem:[%s599 + $0x8] sm:$0xff] %v4236
        %4253 = vst [vmem:[%s599 + $0x10] sm:$0xff] %v4237
        %4254 = vst [vmem:[%s599 + $0x18] sm:$0xff] %v4238
        %4255 = vst [vmem:[%s599 + $0x20] sm:$0xff] %v4239
        %4256 = vst [vmem:[%s599 + $0x28] sm:$0xff] %v4240
        %4257 = vst [vmem:[%s599 + $0x30] sm:$0xff] %v4241
        %4258 = vst [vmem:[%s599 + $0x38] sm:$0xff] %v4242
        %4259 = vst [vmem:[%s599 + $0x40] sm:$0xff] %v4243
        %4260 = vst [vmem:[%s599 + $0x48] sm:$0xff] %v4244
        %4261 = vst [vmem:[%s599 + $0x50] sm:$0xff] %v4245
        %4262 = vst [vmem:[%s599 + $0x58] sm:$0xff] %v4246
        %4263 = vst [vmem:[%s599 + $0x60] sm:$0xff] %v4247
        %4264 = vst [vmem:[%s599 + $0x68] sm:$0xff] %v4248
        %4265 = vst [vmem:[%s599 + $0x70] sm:$0xff] %v4249
        %4266 = vst [vmem:[%s599 + $0x78] sm:$0xff] %v4250
        %s4267 = sand.u32 %s356, 1
        %s4268 = scalar_lea.sflag [#allocation8], %s4267
        %s4269 = sand.u32 %s356, 1
        %s4270 = smul.addr %s4269, 128
        %s4271 = scalar_lea.vmem [#allocation20], %s4270
        // Predicated region
        $region113: #{tpu_custom_call.1} parent=75 // pred_check
          %p4272 = pneg %p366
        $region114: #{tpu_custom_call.1} parent=75 // pred_check_branch
          %4274 = sbr.rel (%p4272) target = $region116
        $region115: #{tpu_custom_call.1} parent=75 // pred_region
          %s4275 = smul.u32 8, %s40
          %s4277 = ssub.s32 2048, 2048
          %4278 = vsyncadd %s4268, %s4277
          %s4279 = smul.addr %s4275, 2
          %s4280 = smul.addr %s39, 16
          %s4281 = sadd.s32 %s4279, %s4280
          %s4282 = smul.addr %s4281, 128
          %s4283 = scalar_lea.hbm %s14, %s4282
          %s4284 = sshll.u32 %s4271, 4
          %s4285 = int_to_ptr.vmem [resolvable:$true] %s4284
          %4290 = dma.vmem_to_hbm [thread:$0]  %s4285, 2048, %s4283, %s4268, 256, 256, 16
        $region116: #{tpu_custom_call.1} parent=75 // pred_fallthru
          _
      $region76: #{tpu_custom_call.1} parent=5 // pred_fallthru
        _
      %p4291 = scmp.le.s32.totalorder 2, %s30
      // Predicated region
      $region117: #{tpu_custom_call.1} parent=5 // pred_check
        %p4292 = pneg %p4291
      $region118: #{tpu_custom_call.1} parent=5 // pred_check_branch
        %4294 = sbr.rel (%p4292) target = $region120
      $region119: #{tpu_custom_call.1} parent=5 // pred_region
        %s4295 = ssub.s32 %s30, 2
        // Predicated region
        $region121: #{tpu_custom_call.1} parent=119 // pred_check
          %p4296 = pneg %p372
        $region122: #{tpu_custom_call.1} parent=119 // pred_check_branch
          %4298 = sbr.rel (%p4296) target = $region124
        $region123: #{tpu_custom_call.1} parent=119 // pred_region
          %s4299 = sand.u32 %s357, 1
          %s4300 = scalar_lea.sflag [#allocation8], %s4299
          %s4301 = sand.u32 %s357, 1
          %s4302 = smul.addr %s4301, 128
          %s4303 = scalar_lea.vmem [#allocation20], %s4302
          %4304 = dma.done %s4300, 2048
        $region124: #{tpu_custom_call.1} parent=119 // pred_fallthru
          _
      $region120: #{tpu_custom_call.1} parent=5 // pred_fallthru
        _
    $region6: #{tpu_custom_call.1} parent=1 // loop_footer
      %s34 = sadd.s32 1, %s30
    $region7: #{tpu_custom_call.1} parent=1 // loop_footer_branch
      %29 = sbr.rel target = $region3
    $region8: #{tpu_custom_call.1} parent=1 // loop_exit
      _
    %4305 = vsyncpa [#allocation7], 1
    %s4306 = scalar_lea.sflag [#allocation7], 1
    %4307 = vsyncpa %s4306, 1
    %4308 = vsyncpa [#allocation10], 1
    %4309 = vsyncpa [#allocation13], 1
    %4310 = vsyncpa [#allocation16], 1
    %4311 = vsyncpa [#allocation19], 1
    %4312 = vsyncpa [#allocation8], 1
    %s4313 = scalar_lea.sflag [#allocation8], 1
    %4314 = vsyncpa %s4313, 1

</llo_original>
